<compile_context>
chip_gen: v7x
topology: tpu7x:2x2x1
jax: 0.10.0
libtpu: 0.0.40
codegen_flags: <defaults>
</compile_context>

<pallas_src>
import jax
import jax.numpy as jnp
import numpy as np
from jax.experimental import pallas as pl
from jax.experimental.pallas import tpu as pltpu

# ----------------------------- configuration --------------------------------
EYE_FEATURE_SIZE = 80        # eyeFeatureNum=2  -> eyeFeatureLength=40
HEAD_FEATURE_SIZE = 80       # headFeatureNum=2 -> headFeatureLength=40
GW_FEATURE_SIZE = 80         # gwFeatureNum=2   -> gwFeatureLength=40
NUM_CLASSES = 4
FEATURE_NUM = 2
CNN_CHANNELS = 16
KSIZE = 3
LSTM_HIDDEN = 64
NB = 3                       # branches: eye, head, gw
BN_EPS = 1e-5

EYE_LEN = EYE_FEATURE_SIZE // FEATURE_NUM
HEAD_LEN = HEAD_FEATURE_SIZE // FEATURE_NUM
GW_LEN = GW_FEATURE_SIZE // FEATURE_NUM
BRANCH_LENGTHS = (EYE_LEN, HEAD_LEN, GW_LEN)
TOTAL_FEATURES = EYE_FEATURE_SIZE + HEAD_FEATURE_SIZE + GW_FEATURE_SIZE


def _round_up(v, m):
    return ((v + m - 1) // m) * m


# Per-layer pooled lengths (identical for all three branches: 40 -> 19 -> 8 -> 3)
_LP = []
_l = EYE_LEN
for _ in range(3):
    _l = (_l - KSIZE + 1) // 2
    _LP.append(_l)
assert all(((L - KSIZE + 1) // 2) == _LP[0] for L in BRANCH_LENGTHS), \
    "fused (block-diagonal) packing assumes equal per-branch lengths"
T_STEPS = _LP[-1]                                     # LSTM sequence length (=3)
N_LAYERS = [NB * lp * CNN_CHANNELS for lp in _LP]     # [912, 384, 144]
NP_LAYERS = [_round_up(n, 128) for n in N_LAYERS]     # [1024, 384, 256]

GHP = _round_up(NB * LSTM_HIDDEN, 128)                # 192 -> 256 padded hidden
GATES_W = 4 * GHP                                     # 1024 fused gate width
FC_PAD = 128                                          # padded FC hidden width
OUT_PAD = _round_up(NUM_CLASSES, 128)                 # lane-dense output store


# ------------------------------- Pallas kernel -------------------------------
def _sigmoid(x):
    # logistic via EUP tanh (avoids a VALU divide on the serial LSTM chain)
    return 0.5 * jnp.tanh(0.5 * x) + 0.5


def ehtask_kernel(x_ref,
                  w1_ref, b1_ref, w2_ref, b2_ref, w3_ref, b3_ref,
                  wih_ref, whh_ref, blstm_ref,
                  wf1_ref, bf1_ref, wf2_ref, bf2_ref, wf3_ref, bf3_ref,
                  out_ref):
    f32 = jnp.float32
    bf16 = jnp.bfloat16

    def conv_block(a, w_ref, b_ref, half):
        # Conv1d(k=3, valid)+BN folded into fused [even|odd] Toeplitz columns
        # (each half padded to a 128-multiple); MaxPool1d(2) == max of the two
        # lane-aligned halves; bias once after the max; ReLU last.
        y = jnp.dot(a.astype(bf16), w_ref[...], preferred_element_type=f32)
        m = jnp.maximum(y[:, :half], y[:, half:]) + b_ref[...]
        return jnp.maximum(m, 0.0)

    a = conv_block(x_ref[...], w1_ref, b1_ref, NP_LAYERS[0])   # (Bt, 1024)
    a = conv_block(a, w2_ref, b2_ref, NP_LAYERS[1])            # (Bt, 384)
    z = conv_block(a, w3_ref, b3_ref, NP_LAYERS[2])            # (Bt, 256)

    bt = z.shape[0]
    # Hoisted input-side LSTM gemm for all T steps at once (+ fused biases):
    # columns are [t | gate(i,f,g,o) | branch-padded 256] -> (Bt, 3072).
    gates_x = (jnp.dot(z.astype(bf16), wih_ref[...], preferred_element_type=f32)
               + blstm_ref[...])
    whh = whh_ref[...]
    h = jnp.zeros((bt, GHP), f32)
    c = jnp.zeros((bt, GHP), f32)
    # Fused block-diagonal LSTM over the 3 branches; only h@Whh is serial.
    for t in range(T_STEPS):
        g_all = gates_x[:, t * GATES_W:(t + 1) * GATES_W]
        if t > 0:                      # h0 == 0 -> skip the first h-gemm
            g_all = g_all + jnp.dot(h.astype(bf16), whh,
                                    preferred_element_type=f32)
        i_g = _sigmoid(g_all[:, 0 * GHP:1 * GHP])
        f_g = _sigmoid(g_all[:, 1 * GHP:2 * GHP])
        g_g = jnp.tanh(g_all[:, 2 * GHP:3 * GHP])
        o_g = _sigmoid(g_all[:, 3 * GHP:4 * GHP])
        c = f_g * c + i_g * g_g
        h = o_g * jnp.tanh(c)

    # PrdFC: Linear+BN(folded)+ReLU, Dropout=identity, Linear+BN+ReLU, Linear.
    a1 = jnp.maximum(
        jnp.dot(h.astype(bf16), wf1_ref[...], preferred_element_type=f32)
        + bf1_ref[...], 0.0)
    a2 = jnp.maximum(
        jnp.dot(a1.astype(bf16), wf2_ref[...], preferred_element_type=f32)
        + bf2_ref[...], 0.0)
    out_ref[...] = (jnp.dot(a2.astype(bf16), wf3_ref[...],
                            preferred_element_type=f32) + bf3_ref[...])


# ------------------------------ wrapper (glue) --------------------------------
def ehtask_forward(x, packed, *, batch_tile=256):
    """Forward pass.  x: (B, 240) float32; packed: output of pack_params().

    batch_tile caps the per-grid-step batch; 256 is safe on every generation,
    512 is a good choice on v6e/v7x at large B.  The tile is also capped at
    ceil(B/2) so the grid has >=2 steps (both v7x TensorCores get work).
    """
    B = x.shape[0]
    xcat = x[:, :TOTAL_FEATURES].astype(jnp.float32)
    bt = _round_up(max(8, min(batch_tile, _round_up((B + 1) // 2, 8))), 8)
    b_pad = _round_up(B, bt)
    if b_pad != B:
        xcat = jnp.pad(xcat, ((0, b_pad - B), (0, 0)))
    grid = (b_pad // bt,)

    in_specs = [pl.BlockSpec((bt, TOTAL_FEATURES), lambda i: (i, 0))]
    for p in packed:   # constant-index weight slabs stay resident across steps
        in_specs.append(pl.BlockSpec(p.shape, (lambda i, _n=p.ndim: (0,) * _n)))
    out_specs = pl.BlockSpec((bt, OUT_PAD), lambda i: (i, 0))

    out = pl.pallas_call(
        ehtask_kernel,
        out_shape=jax.ShapeDtypeStruct((b_pad, OUT_PAD), jnp.float32),
        grid=grid,
        in_specs=in_specs,
        out_specs=out_specs,
        compiler_params=pltpu.CompilerParams(
            dimension_semantics=("parallel",),       # shard over 2 TCs on v7x
            vmem_limit_bytes=40 * 1024 * 1024),      # right-sized (<64MiB v7x)
    )(xcat, *packed)
    return out[:B, :NUM_CLASSES]


# -------------------------- host-side weight packing --------------------------
def _block_diag(mats):
    rows = sum(m.shape[0] for m in mats)
    cols = sum(m.shape[1] for m in mats)
    out = np.zeros((rows, cols), np.float32)
    r = c = 0
    for m in mats:
        out[r:r + m.shape[0], c:c + m.shape[1]] = m
        r += m.shape[0]
        c += m.shape[1]
    return out


def _conv_toeplitz_halves(Wf, bf, lin):
    """Folded conv (Cout,Cin,K) -> even/odd Toeplitz matrices + bias.

    Input rows are laid out t_in*Cin + c; output cols are p*Cout + o, where the
    even matrix produces conv output time 2p and the odd one time 2p+1.
    """
    cout, cin, k = Wf.shape
    lc = lin - k + 1
    lp = lc // 2
    we = np.zeros((lin * cin, lp * cout), np.float32)
    wo = np.zeros((lin * cin, lp * cout), np.float32)
    for p in range(lp):
        for kk in range(k):
            blk = Wf[:, :, kk].T                      # (Cin, Cout)
            te = 2 * p + kk
            to = 2 * p + 1 + kk
            we[te * cin:(te + 1) * cin, p * cout:(p + 1) * cout] = blk
            wo[to * cin:(to + 1) * cin, p * cout:(p + 1) * cout] = blk
    bias = np.tile(bf.astype(np.float32), lp)
    return we, wo, bias, lp


def pack_params(raw):
    """Fold eval-mode BN, build fused (lane-padded) [even|odd] Toeplitz conv
    slabs, block-diagonal everything across the three branches, fuse the three
    LSTMs into a 256-padded hidden, hoist all T input gemms, fold FC BN.
    Weight matrices are cast to bf16 (MXU single-pass); biases stay f32."""
    branches = ('eye', 'head', 'gw')

    def np32(a):
        return np.asarray(a, dtype=np.float32)

    lengths = list(BRANCH_LENGTHS)
    rows_pad_prev = TOTAL_FEATURES
    conv_slabs = []
    for layer in range(3):
        wes, wos, bs, next_lengths = [], [], [], []
        for bi, name in enumerate(branches):
            W, b, ga, be, mu, var = (np32(a) for a in raw[name]['conv'][layer])
            scale = ga / np.sqrt(var + BN_EPS)
            Wf = W * scale[:, None, None]
            bf = (b - mu) * scale + be
            we, wo, bias, lp = _conv_toeplitz_halves(Wf, bf, lengths[bi])
            wes.append(we); wos.append(wo); bs.append(bias)
            next_lengths.append(lp)
        We = _block_diag(wes)
        Wo = _block_diag(wos)
        rows_in, n = We.shape
        assert rows_in <= rows_pad_prev and n == N_LAYERS[layer]
        half = NP_LAYERS[layer]
        w_fused = np.zeros((rows_pad_prev, 2 * half), np.float32)
        w_fused[:rows_in, :n] = We
        w_fused[:rows_in, half:half + n] = Wo
        b_pad = np.zeros((1, half), np.float32)
        b_pad[0, :n] = np.concatenate(bs)
        conv_slabs.append((w_fused, b_pad))
        rows_pad_prev = half
        lengths = next_lengths
    T = lengths[0]
    assert all(l == T for l in lengths) and T == T_STEPS

    # Fused, 256-padded LSTM.  Gate columns per step: [i|f|g|o], each GHP=256
    # wide with layout [eye(64)|head(64)|gw(64)|pad(64)]; all T steps packed
    # side by side so the input gemm is hoisted out of the recurrence.
    H, I = LSTM_HIDDEN, CNN_CHANNELS
    branch_in = T_STEPS * I                              # 48
    wih_all = np.zeros((rows_pad_prev, T_STEPS * GATES_W), np.float32)
    whh_big = np.zeros((GHP, GATES_W), np.float32)
    b_all = np.zeros((1, T_STEPS * GATES_W), np.float32)
    for br, name in enumerate(branches):
        Wih, Whh_b, bih, bhh = (np32(a) for a in raw[name]['lstm'])
        for gate in range(4):
            wg_ih = Wih[gate * H:(gate + 1) * H, :]       # (H, I)
            wg_hh = Whh_b[gate * H:(gate + 1) * H, :]     # (H, H)
            bg = bih[gate * H:(gate + 1) * H] + bhh[gate * H:(gate + 1) * H]
            for t in range(T_STEPS):
                r0 = br * branch_in + t * I
                c0 = t * GATES_W + gate * GHP + br * H
                wih_all[r0:r0 + I, c0:c0 + H] = wg_ih.T
                b_all[0, c0:c0 + H] = bg
            whh_big[br * H:(br + 1) * H,
                    gate * GHP + br * H:gate * GHP + (br + 1) * H] = wg_hh.T

    def fold_linear_bn(p, in_pad, out_pad):
        W, b, ga, be, mu, var = (np32(a) for a in p)
        s = ga / np.sqrt(var + BN_EPS)
        Wf = np.zeros((in_pad, out_pad), np.float32)
        Wf[:W.shape[1], :W.shape[0]] = W.T * s[None, :]
        bf = np.zeros((1, out_pad), np.float32)
        bf[0, :W.shape[0]] = (b - mu) * s + be
        return Wf, bf

    wf1, bfc1 = fold_linear_bn(raw['fc'][0], GHP, FC_PAD)
    wf2, bfc2 = fold_linear_bn(raw['fc'][1], FC_PAD, FC_PAD)
    W3, b3 = (np32(a) for a in raw['fc'][2])
    wf3 = np.zeros((FC_PAD, OUT_PAD), np.float32)
    wf3[:W3.shape[1], :W3.shape[0]] = W3.T
    bfc3 = np.zeros((1, OUT_PAD), np.float32)
    bfc3[0, :b3.shape[0]] = b3

    def bf16(a):
        return jnp.asarray(a, dtype=jnp.bfloat16)

    def f32(a):
        return jnp.asarray(a, dtype=jnp.float32)

    packed = [bf16(conv_slabs[0][0]), f32(conv_slabs[0][1]),
              bf16(conv_slabs[1][0]), f32(conv_slabs[1][1]),
              bf16(conv_slabs[2][0]), f32(conv_slabs[2][1]),
              bf16(wih_all), bf16(whh_big), f32(b_all),
              bf16(wf1), f32(bfc1), bf16(wf2), f32(bfc2),
              bf16(wf3), f32(bfc3)]
    return packed


# ------------------------- deterministic parameter init ----------------------
def init_raw_params(key):
    """PyTorch-layout parameters: conv (Cout,Cin,K), Linear (out,in),
    LSTM weight_ih (4H,I) / weight_hh (4H,H) with gate order i,f,g,o."""
    ks = iter(jax.random.split(key, 100))

    def nrm(shape, scale=0.1):
        return (scale * jax.random.normal(next(ks), shape)).astype(jnp.float32)

    def conv_bn(cin, cout):
        W = nrm((cout, cin, KSIZE))
        b = nrm((cout,))
        gamma = 1.0 + nrm((cout,))
        beta = nrm((cout,))
        mean = nrm((cout,))
        var = jax.random.uniform(next(ks), (cout,), minval=0.5,
                                 maxval=1.5).astype(jnp.float32)
        return (W, b, gamma, beta, mean, var)

    def lstm(i, h):
        return (nrm((4 * h, i)), nrm((4 * h, h)), nrm((4 * h,)), nrm((4 * h,)))

    def linear_bn(fin, fout):
        W = nrm((fout, fin))
        b = nrm((fout,))
        gamma = 1.0 + nrm((fout,))
        beta = nrm((fout,))
        mean = nrm((fout,))
        var = jax.random.uniform(next(ks), (fout,), minval=0.5,
                                 maxval=1.5).astype(jnp.float32)
        return (W, b, gamma, beta, mean, var)

    raw = {}
    for name in ('eye', 'head', 'gw'):
        raw[name] = {
            'conv': [conv_bn(FEATURE_NUM, CNN_CHANNELS),
                     conv_bn(CNN_CHANNELS, CNN_CHANNELS),
                     conv_bn(CNN_CHANNELS, CNN_CHANNELS)],
            'lstm': lstm(CNN_CHANNELS, LSTM_HIDDEN),
        }
    raw['fc'] = [linear_bn(NB * LSTM_HIDDEN, 64),
                 linear_bn(64, 64),
                 (nrm((NUM_CLASSES, 64)), nrm((NUM_CLASSES,)))]
    return raw


# ----------------------- pure-NumPy float64 reference -------------------------
def _np_sigmoid(x):
    return 1.0 / (1.0 + np.exp(-x))


def ref_forward(x, raw):
    x = np.asarray(x, np.float64)
    B = x.shape[0]

    def f64(a):
        return np.asarray(a, np.float64)

    def branch(flat, L, p):
        y = flat.reshape(B, L, FEATURE_NUM)
        for prm in p['conv']:
            W, b, ga, be, mu, var = (f64(a) for a in prm)
            cout, cin, K = W.shape
            lc = y.shape[1] - K + 1
            acc = np.zeros((B, lc, cout))
            for k in range(K):
                acc = acc + np.einsum('blc,oc->blo', y[:, k:k + lc, :],
                                      W[:, :, k])
            acc = acc + b
            acc = (acc - mu) / np.sqrt(var + BN_EPS) * ga + be
            acc = np.maximum(acc, 0.0)
            lp = lc // 2
            y = acc[:, :2 * lp, :].reshape(B, lp, 2, cout).max(axis=2)
        Wih, Whh, bih, bhh = (f64(a) for a in p['lstm'])
        H = Whh.shape[1]
        h = np.zeros((B, H))
        c = np.zeros((B, H))
        for t in range(y.shape[1]):
            gates = y[:, t, :] @ Wih.T + bih + h @ Whh.T + bhh
            i = _np_sigmoid(gates[:, 0:H])
            f = _np_sigmoid(gates[:, H:2 * H])
            g = np.tanh(gates[:, 2 * H:3 * H])
            o = _np_sigmoid(gates[:, 3 * H:4 * H])
            c = f * c + i * g
            h = o * np.tanh(c)
        return h                      # == out[:, -1, :] for unidirectional LSTM

    i0 = 0
    h_eye = branch(x[:, i0:i0 + EYE_FEATURE_SIZE], EYE_LEN, raw['eye'])
    i0 += EYE_FEATURE_SIZE
    h_head = branch(x[:, i0:i0 + HEAD_FEATURE_SIZE], HEAD_LEN, raw['head'])
    i0 += HEAD_FEATURE_SIZE
    h_gw = branch(x[:, i0:i0 + GW_FEATURE_SIZE], GW_LEN, raw['gw'])

    z = np.concatenate([h_eye, h_head, h_gw], axis=1)
    for prm in raw['fc'][:2]:
        W, b, ga, be, mu, var = (f64(a) for a in prm)
        z = z @ W.T + b
        z = (z - mu) / np.sqrt(var + BN_EPS) * ga + be
        z = np.maximum(z, 0.0)        # Dropout -> identity (eval mode)
    W, b = (f64(a) for a in raw['fc'][2])
    return z @ W.T + b


# ----------------------------------- main -------------------------------------
if __name__ == "__main__":
    key = jax.random.PRNGKey(0)
    kx, kp = jax.random.split(key)
    B = 13                                   # small demo batch (tests padding)
    x = jax.random.normal(kx, (B, TOTAL_FEATURES), jnp.float32)

    raw = init_raw_params(kp)
    packed = pack_params(raw)

    out = ehtask_forward(x, packed)
    out = jax.block_until_ready(out)

    ref = ref_forward(np.asarray(x), raw)
    assert out.shape == (B, NUM_CLASSES)
    # bf16 (single-pass MXU) inputs with f32 accumulation vs float64 reference:
    # observed error is O(1e-3); 3e-2 still catches any structural bug.
    np.testing.assert_allclose(np.asarray(out, np.float64), ref,
                               rtol=3e-2, atol=3e-2)
    print("KERNEL_OK")
</pallas_src>

<mosaic_0001>
module attributes {stable_mosaic.version = 11 : i64} {
  func.func @ehtask_kernel(%arg0: i32, %arg1: memref<8x240xf32, #tpu.memory_space<vmem>>, %arg2: memref<240x2048xbf16, #tpu.memory_space<vmem>>, %arg3: memref<1x1024xf32, #tpu.memory_space<vmem>>, %arg4: memref<1024x768xbf16, #tpu.memory_space<vmem>>, %arg5: memref<1x384xf32, #tpu.memory_space<vmem>>, %arg6: memref<384x512xbf16, #tpu.memory_space<vmem>>, %arg7: memref<1x256xf32, #tpu.memory_space<vmem>>, %arg8: memref<256x3072xbf16, #tpu.memory_space<vmem>>, %arg9: memref<256x1024xbf16, #tpu.memory_space<vmem>>, %arg10: memref<1x3072xf32, #tpu.memory_space<vmem>>, %arg11: memref<256x128xbf16, #tpu.memory_space<vmem>>, %arg12: memref<1x128xf32, #tpu.memory_space<vmem>>, %arg13: memref<128x128xbf16, #tpu.memory_space<vmem>>, %arg14: memref<1x128xf32, #tpu.memory_space<vmem>>, %arg15: memref<128x128xbf16, #tpu.memory_space<vmem>>, %arg16: memref<1x128xf32, #tpu.memory_space<vmem>>, %arg17: memref<8x128xf32, #tpu.memory_space<vmem>>) attributes {dimension_semantics = [#tpu.dimension_semantics<parallel>], iteration_bounds = array<i64: 2>, scalar_prefetch = 0 : i64, scratch_operands = 0 : i64, tpu.core_type = #tpu.core_type<tc>, window_params = [{transform_indices = @transform_0, window_bounds = array<i64: 8, 240>}, {pipeline_mode = #tpu.pipeline_mode<synchronous>, transform_indices = @transform_1, window_bounds = array<i64: 240, 2048>}, {pipeline_mode = #tpu.pipeline_mode<synchronous>, transform_indices = @transform_2, window_bounds = array<i64: 1, 1024>}, {pipeline_mode = #tpu.pipeline_mode<synchronous>, transform_indices = @transform_3, window_bounds = array<i64: 1024, 768>}, {pipeline_mode = #tpu.pipeline_mode<synchronous>, transform_indices = @transform_4, window_bounds = array<i64: 1, 384>}, {pipeline_mode = #tpu.pipeline_mode<synchronous>, transform_indices = @transform_5, window_bounds = array<i64: 384, 512>}, {pipeline_mode = #tpu.pipeline_mode<synchronous>, transform_indices = @transform_6, window_bounds = array<i64: 1, 256>}, {pipeline_mode = #tpu.pipeline_mode<synchronous>, transform_indices = @transform_7, window_bounds = array<i64: 256, 3072>}, {pipeline_mode = #tpu.pipeline_mode<synchronous>, transform_indices = @transform_8, window_bounds = array<i64: 256, 1024>}, {pipeline_mode = #tpu.pipeline_mode<synchronous>, transform_indices = @transform_9, window_bounds = array<i64: 1, 3072>}, {pipeline_mode = #tpu.pipeline_mode<synchronous>, transform_indices = @transform_10, window_bounds = array<i64: 256, 128>}, {pipeline_mode = #tpu.pipeline_mode<synchronous>, transform_indices = @transform_11, window_bounds = array<i64: 1, 128>}, {pipeline_mode = #tpu.pipeline_mode<synchronous>, transform_indices = @transform_12, window_bounds = array<i64: 128, 128>}, {pipeline_mode = #tpu.pipeline_mode<synchronous>, transform_indices = @transform_13, window_bounds = array<i64: 1, 128>}, {pipeline_mode = #tpu.pipeline_mode<synchronous>, transform_indices = @transform_14, window_bounds = array<i64: 128, 128>}, {pipeline_mode = #tpu.pipeline_mode<synchronous>, transform_indices = @transform_15, window_bounds = array<i64: 1, 128>}, {transform_indices = @transform_16, window_bounds = array<i64: 8, 128>}]} {
    %c0 = arith.constant 0 : index
    %c0_0 = arith.constant 0 : index
    %0 = vector.load %arg1[%c0, %c0_0] : memref<8x240xf32, #tpu.memory_space<vmem>>, vector<8x240xf32>
    %1 = arith.truncf %0 : vector<8x240xf32> to vector<8x240xbf16>
    %c0_1 = arith.constant 0 : index
    %c0_2 = arith.constant 0 : index
    %2 = vector.load %arg2[%c0_1, %c0_2] : memref<240x2048xbf16, #tpu.memory_space<vmem>>, vector<240x2048xbf16>
    %cst = arith.constant dense<0.000000e+00> : vector<8x2048xf32>
    %3 = tpu.matmul %1, %2, %cst {dimension_numbers = #tpu.dot_dimension_numbers<[1], [0], [0], [1], [0, 0, 1, 1], [], []>} : vector<8x240xbf16>, vector<240x2048xbf16>, vector<8x2048xf32> -> vector<8x2048xf32>
    %4 = vector.extract_strided_slice %3 {offsets = [0, 0], sizes = [8, 1024], strides = [1, 1]} : vector<8x2048xf32> to vector<8x1024xf32>
    %5 = vector.extract_strided_slice %3 {offsets = [0, 1024], sizes = [8, 1024], strides = [1, 1]} : vector<8x2048xf32> to vector<8x1024xf32>
    %6 = arith.maximumf %4, %5 : vector<8x1024xf32>
    %c0_3 = arith.constant 0 : index
    %c0_4 = arith.constant 0 : index
    %7 = vector.load %arg3[%c0_3, %c0_4] : memref<1x1024xf32, #tpu.memory_space<vmem>>, vector<1x1024xf32>
    %8 = vector.broadcast %7 : vector<1x1024xf32> to vector<8x1024xf32>
    %9 = arith.addf %6, %8 : vector<8x1024xf32>
    %cst_5 = arith.constant 0.000000e+00 : f32
    %10 = vector.broadcast %cst_5 : f32 to vector<8x1024xf32>
    %11 = arith.maximumf %9, %10 : vector<8x1024xf32>
    %12 = arith.truncf %11 : vector<8x1024xf32> to vector<8x1024xbf16>
    %c0_6 = arith.constant 0 : index
    %c0_7 = arith.constant 0 : index
    %13 = vector.load %arg4[%c0_6, %c0_7] : memref<1024x768xbf16, #tpu.memory_space<vmem>>, vector<1024x768xbf16>
    %cst_8 = arith.constant dense<0.000000e+00> : vector<8x768xf32>
    %14 = tpu.matmul %12, %13, %cst_8 {dimension_numbers = #tpu.dot_dimension_numbers<[1], [0], [0], [1], [0, 0, 1, 1], [], []>} : vector<8x1024xbf16>, vector<1024x768xbf16>, vector<8x768xf32> -> vector<8x768xf32>
    %15 = vector.extract_strided_slice %14 {offsets = [0, 0], sizes = [8, 384], strides = [1, 1]} : vector<8x768xf32> to vector<8x384xf32>
    %16 = vector.extract_strided_slice %14 {offsets = [0, 384], sizes = [8, 384], strides = [1, 1]} : vector<8x768xf32> to vector<8x384xf32>
    %17 = arith.maximumf %15, %16 : vector<8x384xf32>
    %c0_9 = arith.constant 0 : index
    %c0_10 = arith.constant 0 : index
    %18 = vector.load %arg5[%c0_9, %c0_10] : memref<1x384xf32, #tpu.memory_space<vmem>>, vector<1x384xf32>
    %19 = vector.broadcast %18 : vector<1x384xf32> to vector<8x384xf32>
    %20 = arith.addf %17, %19 : vector<8x384xf32>
    %cst_11 = arith.constant 0.000000e+00 : f32
    %21 = vector.broadcast %cst_11 : f32 to vector<8x384xf32>
    %22 = arith.maximumf %20, %21 : vector<8x384xf32>
    %23 = arith.truncf %22 : vector<8x384xf32> to vector<8x384xbf16>
    %c0_12 = arith.constant 0 : index
    %c0_13 = arith.constant 0 : index
    %24 = vector.load %arg6[%c0_12, %c0_13] : memref<384x512xbf16, #tpu.memory_space<vmem>>, vector<384x512xbf16>
    %cst_14 = arith.constant dense<0.000000e+00> : vector<8x512xf32>
    %25 = tpu.matmul %23, %24, %cst_14 {dimension_numbers = #tpu.dot_dimension_numbers<[1], [0], [0], [1], [0, 0, 1, 1], [], []>} : vector<8x384xbf16>, vector<384x512xbf16>, vector<8x512xf32> -> vector<8x512xf32>
    %26 = vector.extract_strided_slice %25 {offsets = [0, 0], sizes = [8, 256], strides = [1, 1]} : vector<8x512xf32> to vector<8x256xf32>
    %27 = vector.extract_strided_slice %25 {offsets = [0, 256], sizes = [8, 256], strides = [1, 1]} : vector<8x512xf32> to vector<8x256xf32>
    %28 = arith.maximumf %26, %27 : vector<8x256xf32>
    %c0_15 = arith.constant 0 : index
    %c0_16 = arith.constant 0 : index
    %29 = vector.load %arg7[%c0_15, %c0_16] : memref<1x256xf32, #tpu.memory_space<vmem>>, vector<1x256xf32>
    %30 = vector.broadcast %29 : vector<1x256xf32> to vector<8x256xf32>
    %31 = arith.addf %28, %30 : vector<8x256xf32>
    %cst_17 = arith.constant 0.000000e+00 : f32
    %32 = vector.broadcast %cst_17 : f32 to vector<8x256xf32>
    %33 = arith.maximumf %31, %32 : vector<8x256xf32>
    %34 = arith.truncf %33 : vector<8x256xf32> to vector<8x256xbf16>
    %c0_18 = arith.constant 0 : index
    %c0_19 = arith.constant 0 : index
    %35 = vector.load %arg8[%c0_18, %c0_19] : memref<256x3072xbf16, #tpu.memory_space<vmem>>, vector<256x3072xbf16>
    %cst_20 = arith.constant dense<0.000000e+00> : vector<8x3072xf32>
    %36 = tpu.matmul %34, %35, %cst_20 {dimension_numbers = #tpu.dot_dimension_numbers<[1], [0], [0], [1], [0, 0, 1, 1], [], []>} : vector<8x256xbf16>, vector<256x3072xbf16>, vector<8x3072xf32> -> vector<8x3072xf32>
    %c0_21 = arith.constant 0 : index
    %c0_22 = arith.constant 0 : index
    %37 = vector.load %arg10[%c0_21, %c0_22] : memref<1x3072xf32, #tpu.memory_space<vmem>>, vector<1x3072xf32>
    %38 = vector.broadcast %37 : vector<1x3072xf32> to vector<8x3072xf32>
    %39 = arith.addf %36, %38 : vector<8x3072xf32>
    %c0_23 = arith.constant 0 : index
    %c0_24 = arith.constant 0 : index
    %40 = vector.load %arg9[%c0_23, %c0_24] : memref<256x1024xbf16, #tpu.memory_space<vmem>>, vector<256x1024xbf16>
    %cst_25 = arith.constant 0.000000e+00 : f32
    %41 = vector.broadcast %cst_25 : f32 to vector<8x256xf32>
    %42 = vector.extract_strided_slice %39 {offsets = [0, 0], sizes = [8, 1024], strides = [1, 1]} : vector<8x3072xf32> to vector<8x1024xf32>
    %43 = vector.extract_strided_slice %42 {offsets = [0, 0], sizes = [8, 256], strides = [1, 1]} : vector<8x1024xf32> to vector<8x256xf32>
    %cst_26 = arith.constant 5.000000e-01 : f32
    %44 = vector.broadcast %cst_26 : f32 to vector<8x256xf32>
    %45 = arith.mulf %44, %43 : vector<8x256xf32>
    %46 = math.tanh %45 : vector<8x256xf32>
    %cst_27 = arith.constant 5.000000e-01 : f32
    %47 = vector.broadcast %cst_27 : f32 to vector<8x256xf32>
    %48 = arith.mulf %47, %46 : vector<8x256xf32>
    %cst_28 = arith.constant 5.000000e-01 : f32
    %49 = vector.broadcast %cst_28 : f32 to vector<8x256xf32>
    %50 = arith.addf %48, %49 : vector<8x256xf32>
    %51 = vector.extract_strided_slice %42 {offsets = [0, 256], sizes = [8, 256], strides = [1, 1]} : vector<8x1024xf32> to vector<8x256xf32>
    %cst_29 = arith.constant 5.000000e-01 : f32
    %52 = vector.broadcast %cst_29 : f32 to vector<8x256xf32>
    %53 = arith.mulf %52, %51 : vector<8x256xf32>
    %54 = math.tanh %53 : vector<8x256xf32>
    %cst_30 = arith.constant 5.000000e-01 : f32
    %55 = vector.broadcast %cst_30 : f32 to vector<8x256xf32>
    %56 = arith.mulf %55, %54 : vector<8x256xf32>
    %cst_31 = arith.constant 5.000000e-01 : f32
    %57 = vector.broadcast %cst_31 : f32 to vector<8x256xf32>
    %58 = arith.addf %56, %57 : vector<8x256xf32>
    %59 = vector.extract_strided_slice %42 {offsets = [0, 512], sizes = [8, 256], strides = [1, 1]} : vector<8x1024xf32> to vector<8x256xf32>
    %60 = math.tanh %59 : vector<8x256xf32>
    %61 = vector.extract_strided_slice %42 {offsets = [0, 768], sizes = [8, 256], strides = [1, 1]} : vector<8x1024xf32> to vector<8x256xf32>
    %cst_32 = arith.constant 5.000000e-01 : f32
    %62 = vector.broadcast %cst_32 : f32 to vector<8x256xf32>
    %63 = arith.mulf %62, %61 : vector<8x256xf32>
    %64 = math.tanh %63 : vector<8x256xf32>
    %cst_33 = arith.constant 5.000000e-01 : f32
    %65 = vector.broadcast %cst_33 : f32 to vector<8x256xf32>
    %66 = arith.mulf %65, %64 : vector<8x256xf32>
    %cst_34 = arith.constant 5.000000e-01 : f32
    %67 = vector.broadcast %cst_34 : f32 to vector<8x256xf32>
    %68 = arith.addf %66, %67 : vector<8x256xf32>
    %69 = arith.mulf %58, %41 : vector<8x256xf32>
    %70 = arith.mulf %50, %60 : vector<8x256xf32>
    %71 = arith.addf %69, %70 : vector<8x256xf32>
    %72 = math.tanh %71 : vector<8x256xf32>
    %73 = arith.mulf %68, %72 : vector<8x256xf32>
    %74 = vector.extract_strided_slice %39 {offsets = [0, 1024], sizes = [8, 1024], strides = [1, 1]} : vector<8x3072xf32> to vector<8x1024xf32>
    %75 = arith.truncf %73 : vector<8x256xf32> to vector<8x256xbf16>
    %cst_35 = arith.constant dense<0.000000e+00> : vector<8x1024xf32>
    %76 = tpu.matmul %75, %40, %cst_35 {dimension_numbers = #tpu.dot_dimension_numbers<[1], [0], [0], [1], [0, 0, 1, 1], [], []>} : vector<8x256xbf16>, vector<256x1024xbf16>, vector<8x1024xf32> -> vector<8x1024xf32>
    %77 = arith.addf %74, %76 : vector<8x1024xf32>
    %78 = vector.extract_strided_slice %77 {offsets = [0, 0], sizes = [8, 256], strides = [1, 1]} : vector<8x1024xf32> to vector<8x256xf32>
    %cst_36 = arith.constant 5.000000e-01 : f32
    %79 = vector.broadcast %cst_36 : f32 to vector<8x256xf32>
    %80 = arith.mulf %79, %78 : vector<8x256xf32>
    %81 = math.tanh %80 : vector<8x256xf32>
    %cst_37 = arith.constant 5.000000e-01 : f32
    %82 = vector.broadcast %cst_37 : f32 to vector<8x256xf32>
    %83 = arith.mulf %82, %81 : vector<8x256xf32>
    %cst_38 = arith.constant 5.000000e-01 : f32
    %84 = vector.broadcast %cst_38 : f32 to vector<8x256xf32>
    %85 = arith.addf %83, %84 : vector<8x256xf32>
    %86 = vector.extract_strided_slice %77 {offsets = [0, 256], sizes = [8, 256], strides = [1, 1]} : vector<8x1024xf32> to vector<8x256xf32>
    %cst_39 = arith.constant 5.000000e-01 : f32
    %87 = vector.broadcast %cst_39 : f32 to vector<8x256xf32>
    %88 = arith.mulf %87, %86 : vector<8x256xf32>
    %89 = math.tanh %88 : vector<8x256xf32>
    %cst_40 = arith.constant 5.000000e-01 : f32
    %90 = vector.broadcast %cst_40 : f32 to vector<8x256xf32>
    %91 = arith.mulf %90, %89 : vector<8x256xf32>
    %cst_41 = arith.constant 5.000000e-01 : f32
    %92 = vector.broadcast %cst_41 : f32 to vector<8x256xf32>
    %93 = arith.addf %91, %92 : vector<8x256xf32>
    %94 = vector.extract_strided_slice %77 {offsets = [0, 512], sizes = [8, 256], strides = [1, 1]} : vector<8x1024xf32> to vector<8x256xf32>
    %95 = math.tanh %94 : vector<8x256xf32>
    %96 = vector.extract_strided_slice %77 {offsets = [0, 768], sizes = [8, 256], strides = [1, 1]} : vector<8x1024xf32> to vector<8x256xf32>
    %cst_42 = arith.constant 5.000000e-01 : f32
    %97 = vector.broadcast %cst_42 : f32 to vector<8x256xf32>
    %98 = arith.mulf %97, %96 : vector<8x256xf32>
    %99 = math.tanh %98 : vector<8x256xf32>
    %cst_43 = arith.constant 5.000000e-01 : f32
    %100 = vector.broadcast %cst_43 : f32 to vector<8x256xf32>
    %101 = arith.mulf %100, %99 : vector<8x256xf32>
    %cst_44 = arith.constant 5.000000e-01 : f32
    %102 = vector.broadcast %cst_44 : f32 to vector<8x256xf32>
    %103 = arith.addf %101, %102 : vector<8x256xf32>
    %104 = arith.mulf %93, %71 : vector<8x256xf32>
    %105 = arith.mulf %85, %95 : vector<8x256xf32>
    %106 = arith.addf %104, %105 : vector<8x256xf32>
    %107 = math.tanh %106 : vector<8x256xf32>
    %108 = arith.mulf %103, %107 : vector<8x256xf32>
    %109 = vector.extract_strided_slice %39 {offsets = [0, 2048], sizes = [8, 1024], strides = [1, 1]} : vector<8x3072xf32> to vector<8x1024xf32>
    %110 = arith.truncf %108 : vector<8x256xf32> to vector<8x256xbf16>
    %cst_45 = arith.constant dense<0.000000e+00> : vector<8x1024xf32>
    %111 = tpu.matmul %110, %40, %cst_45 {dimension_numbers = #tpu.dot_dimension_numbers<[1], [0], [0], [1], [0, 0, 1, 1], [], []>} : vector<8x256xbf16>, vector<256x1024xbf16>, vector<8x1024xf32> -> vector<8x1024xf32>
    %112 = arith.addf %109, %111 : vector<8x1024xf32>
    %113 = vector.extract_strided_slice %112 {offsets = [0, 0], sizes = [8, 256], strides = [1, 1]} : vector<8x1024xf32> to vector<8x256xf32>
    %cst_46 = arith.constant 5.000000e-01 : f32
    %114 = vector.broadcast %cst_46 : f32 to vector<8x256xf32>
    %115 = arith.mulf %114, %113 : vector<8x256xf32>
    %116 = math.tanh %115 : vector<8x256xf32>
    %cst_47 = arith.constant 5.000000e-01 : f32
    %117 = vector.broadcast %cst_47 : f32 to vector<8x256xf32>
    %118 = arith.mulf %117, %116 : vector<8x256xf32>
    %cst_48 = arith.constant 5.000000e-01 : f32
    %119 = vector.broadcast %cst_48 : f32 to vector<8x256xf32>
    %120 = arith.addf %118, %119 : vector<8x256xf32>
    %121 = vector.extract_strided_slice %112 {offsets = [0, 256], sizes = [8, 256], strides = [1, 1]} : vector<8x1024xf32> to vector<8x256xf32>
    %cst_49 = arith.constant 5.000000e-01 : f32
    %122 = vector.broadcast %cst_49 : f32 to vector<8x256xf32>
    %123 = arith.mulf %122, %121 : vector<8x256xf32>
    %124 = math.tanh %123 : vector<8x256xf32>
    %cst_50 = arith.constant 5.000000e-01 : f32
    %125 = vector.broadcast %cst_50 : f32 to vector<8x256xf32>
    %126 = arith.mulf %125, %124 : vector<8x256xf32>
    %cst_51 = arith.constant 5.000000e-01 : f32
    %127 = vector.broadcast %cst_51 : f32 to vector<8x256xf32>
    %128 = arith.addf %126, %127 : vector<8x256xf32>
    %129 = vector.extract_strided_slice %112 {offsets = [0, 512], sizes = [8, 256], strides = [1, 1]} : vector<8x1024xf32> to vector<8x256xf32>
    %130 = math.tanh %129 : vector<8x256xf32>
    %131 = vector.extract_strided_slice %112 {offsets = [0, 768], sizes = [8, 256], strides = [1, 1]} : vector<8x1024xf32> to vector<8x256xf32>
    %cst_52 = arith.constant 5.000000e-01 : f32
    %132 = vector.broadcast %cst_52 : f32 to vector<8x256xf32>
    %133 = arith.mulf %132, %131 : vector<8x256xf32>
    %134 = math.tanh %133 : vector<8x256xf32>
    %cst_53 = arith.constant 5.000000e-01 : f32
    %135 = vector.broadcast %cst_53 : f32 to vector<8x256xf32>
    %136 = arith.mulf %135, %134 : vector<8x256xf32>
    %cst_54 = arith.constant 5.000000e-01 : f32
    %137 = vector.broadcast %cst_54 : f32 to vector<8x256xf32>
    %138 = arith.addf %136, %137 : vector<8x256xf32>
    %139 = arith.mulf %128, %106 : vector<8x256xf32>
    %140 = arith.mulf %120, %130 : vector<8x256xf32>
    %141 = arith.addf %139, %140 : vector<8x256xf32>
    %142 = math.tanh %141 : vector<8x256xf32>
    %143 = arith.mulf %138, %142 : vector<8x256xf32>
    %144 = arith.truncf %143 : vector<8x256xf32> to vector<8x256xbf16>
    %c0_55 = arith.constant 0 : index
    %c0_56 = arith.constant 0 : index
    %145 = vector.load %arg11[%c0_55, %c0_56] : memref<256x128xbf16, #tpu.memory_space<vmem>>, vector<256x128xbf16>
    %cst_57 = arith.constant dense<0.000000e+00> : vector<8x128xf32>
    %146 = tpu.matmul %144, %145, %cst_57 {dimension_numbers = #tpu.dot_dimension_numbers<[1], [0], [0], [1], [0, 0, 1, 1], [], []>} : vector<8x256xbf16>, vector<256x128xbf16>, vector<8x128xf32> -> vector<8x128xf32>
    %c0_58 = arith.constant 0 : index
    %c0_59 = arith.constant 0 : index
    %147 = vector.load %arg12[%c0_58, %c0_59] : memref<1x128xf32, #tpu.memory_space<vmem>>, vector<1x128xf32>
    %148 = vector.broadcast %147 : vector<1x128xf32> to vector<8x128xf32>
    %149 = arith.addf %146, %148 : vector<8x128xf32>
    %cst_60 = arith.constant 0.000000e+00 : f32
    %150 = vector.broadcast %cst_60 : f32 to vector<8x128xf32>
    %151 = arith.maximumf %149, %150 : vector<8x128xf32>
    %152 = arith.truncf %151 : vector<8x128xf32> to vector<8x128xbf16>
    %c0_61 = arith.constant 0 : index
    %c0_62 = arith.constant 0 : index
    %153 = vector.load %arg13[%c0_61, %c0_62] : memref<128x128xbf16, #tpu.memory_space<vmem>>, vector<128x128xbf16>
    %cst_63 = arith.constant dense<0.000000e+00> : vector<8x128xf32>
    %154 = tpu.matmul %152, %153, %cst_63 {dimension_numbers = #tpu.dot_dimension_numbers<[1], [0], [0], [1], [0, 0, 1, 1], [], []>} : vector<8x128xbf16>, vector<128x128xbf16>, vector<8x128xf32> -> vector<8x128xf32>
    %c0_64 = arith.constant 0 : index
    %c0_65 = arith.constant 0 : index
    %155 = vector.load %arg14[%c0_64, %c0_65] : memref<1x128xf32, #tpu.memory_space<vmem>>, vector<1x128xf32>
    %156 = vector.broadcast %155 : vector<1x128xf32> to vector<8x128xf32>
    %157 = arith.addf %154, %156 : vector<8x128xf32>
    %cst_66 = arith.constant 0.000000e+00 : f32
    %158 = vector.broadcast %cst_66 : f32 to vector<8x128xf32>
    %159 = arith.maximumf %157, %158 : vector<8x128xf32>
    %160 = arith.truncf %159 : vector<8x128xf32> to vector<8x128xbf16>
    %c0_67 = arith.constant 0 : index
    %c0_68 = arith.constant 0 : index
    %161 = vector.load %arg15[%c0_67, %c0_68] : memref<128x128xbf16, #tpu.memory_space<vmem>>, vector<128x128xbf16>
    %cst_69 = arith.constant dense<0.000000e+00> : vector<8x128xf32>
    %162 = tpu.matmul %160, %161, %cst_69 {dimension_numbers = #tpu.dot_dimension_numbers<[1], [0], [0], [1], [0, 0, 1, 1], [], []>} : vector<8x128xbf16>, vector<128x128xbf16>, vector<8x128xf32> -> vector<8x128xf32>
    %c0_70 = arith.constant 0 : index
    %c0_71 = arith.constant 0 : index
    %163 = vector.load %arg16[%c0_70, %c0_71] : memref<1x128xf32, #tpu.memory_space<vmem>>, vector<1x128xf32>
    %164 = vector.broadcast %163 : vector<1x128xf32> to vector<8x128xf32>
    %165 = arith.addf %162, %164 : vector<8x128xf32>
    %c0_72 = arith.constant 0 : index
    %c0_73 = arith.constant 0 : index
    %166 = vector.load %arg17[%c0_72, %c0_73] : memref<8x128xf32, #tpu.memory_space<vmem>>, vector<8x128xf32>
    tpu.vector_store %arg17[%c0_72, %c0_73], %165 {strides = array<i32>} : memref<8x128xf32, #tpu.memory_space<vmem>>, vector<8x128xf32>,
    return
  }
  func.func @transform_0(%arg0: i32) -> (i32, i32) {
    %c0_i32 = arith.constant 0 : i32
    %c0_i32_0 = arith.constant 0 : i32
    return %arg0, %c0_i32 : i32, i32
  }
  func.func @transform_1(%arg0: i32) -> (i32, i32) {
    %c0_i32 = arith.constant 0 : i32
    %c0_i32_0 = arith.constant 0 : i32
    %c0_i32_1 = arith.constant 0 : i32
    return %c0_i32, %c0_i32_0 : i32, i32
  }
  func.func @transform_2(%arg0: i32) -> (i32, i32) {
    %c0_i32 = arith.constant 0 : i32
    %c0_i32_0 = arith.constant 0 : i32
    %c0_i32_1 = arith.constant 0 : i32
    return %c0_i32, %c0_i32_0 : i32, i32
  }
  func.func @transform_3(%arg0: i32) -> (i32, i32) {
    %c0_i32 = arith.constant 0 : i32
    %c0_i32_0 = arith.constant 0 : i32
    %c0_i32_1 = arith.constant 0 : i32
    return %c0_i32, %c0_i32_0 : i32, i32
  }
  func.func @transform_4(%arg0: i32) -> (i32, i32) {
    %c0_i32 = arith.constant 0 : i32
    %c0_i32_0 = arith.constant 0 : i32
    %c0_i32_1 = arith.constant 0 : i32
    return %c0_i32, %c0_i32_0 : i32, i32
  }
  func.func @transform_5(%arg0: i32) -> (i32, i32) {
    %c0_i32 = arith.constant 0 : i32
    %c0_i32_0 = arith.constant 0 : i32
    %c0_i32_1 = arith.constant 0 : i32
    return %c0_i32, %c0_i32_0 : i32, i32
  }
  func.func @transform_6(%arg0: i32) -> (i32, i32) {
    %c0_i32 = arith.constant 0 : i32
    %c0_i32_0 = arith.constant 0 : i32
    %c0_i32_1 = arith.constant 0 : i32
    return %c0_i32, %c0_i32_0 : i32, i32
  }
  func.func @transform_7(%arg0: i32) -> (i32, i32) {
    %c0_i32 = arith.constant 0 : i32
    %c0_i32_0 = arith.constant 0 : i32
    %c0_i32_1 = arith.constant 0 : i32
    return %c0_i32, %c0_i32_0 : i32, i32
  }
  func.func @transform_8(%arg0: i32) -> (i32, i32) {
    %c0_i32 = arith.constant 0 : i32
    %c0_i32_0 = arith.constant 0 : i32
    %c0_i32_1 = arith.constant 0 : i32
    return %c0_i32, %c0_i32_0 : i32, i32
  }
  func.func @transform_9(%arg0: i32) -> (i32, i32) {
    %c0_i32 = arith.constant 0 : i32
    %c0_i32_0 = arith.constant 0 : i32
    %c0_i32_1 = arith.constant 0 : i32
    return %c0_i32, %c0_i32_0 : i32, i32
  }
  func.func @transform_10(%arg0: i32) -> (i32, i32) {
    %c0_i32 = arith.constant 0 : i32
    %c0_i32_0 = arith.constant 0 : i32
    %c0_i32_1 = arith.constant 0 : i32
    return %c0_i32, %c0_i32_0 : i32, i32
  }
  func.func @transform_11(%arg0: i32) -> (i32, i32) {
    %c0_i32 = arith.constant 0 : i32
    %c0_i32_0 = arith.constant 0 : i32
    %c0_i32_1 = arith.constant 0 : i32
    return %c0_i32, %c0_i32_0 : i32, i32
  }
  func.func @transform_12(%arg0: i32) -> (i32, i32) {
    %c0_i32 = arith.constant 0 : i32
    %c0_i32_0 = arith.constant 0 : i32
    %c0_i32_1 = arith.constant 0 : i32
    return %c0_i32, %c0_i32_0 : i32, i32
  }
  func.func @transform_13(%arg0: i32) -> (i32, i32) {
    %c0_i32 = arith.constant 0 : i32
    %c0_i32_0 = arith.constant 0 : i32
    %c0_i32_1 = arith.constant 0 : i32
    return %c0_i32, %c0_i32_0 : i32, i32
  }
  func.func @transform_14(%arg0: i32) -> (i32, i32) {
    %c0_i32 = arith.constant 0 : i32
    %c0_i32_0 = arith.constant 0 : i32
    %c0_i32_1 = arith.constant 0 : i32
    return %c0_i32, %c0_i32_0 : i32, i32
  }
  func.func @transform_15(%arg0: i32) -> (i32, i32) {
    %c0_i32 = arith.constant 0 : i32
    %c0_i32_0 = arith.constant 0 : i32
    %c0_i32_1 = arith.constant 0 : i32
    return %c0_i32, %c0_i32_0 : i32, i32
  }
  func.func @transform_16(%arg0: i32) -> (i32, i32) {
    %c0_i32 = arith.constant 0 : i32
    %c0_i32_0 = arith.constant 0 : i32
    return %arg0, %c0_i32 : i32, i32
  }
}

</mosaic_0001>

<llo_original>
// kernel: tpu_custom_call.1
$region0: #{tpu_custom_call.1}
  #allocation0 [shape = 'u32[]', space=smem, size = 0x4, offset = 0x4, fixed_abs, tag = 'smem constant byte address 0x4 - core index']
  #allocation1 [shape = 'u32[144,128]{1,0:T(1,128)}', space=vmem, size = 0x12000, scoped, tag = 'internal scratch']
  %s0 = inlined_call_operand.hbm [shape: f32[16,240], index: 0, kind: input, shape index: {}]
  %s1 = inlined_call_operand.hbm [shape: bf16[240,2048], index: 1, kind: input, shape index: {}]
  %s2 = inlined_call_operand.hbm [shape: f32[1,1024], index: 2, kind: input, shape index: {}]
  %s3 = inlined_call_operand.hbm [shape: bf16[1024,768], index: 3, kind: input, shape index: {}]
  %s4 = inlined_call_operand.hbm [shape: f32[1,384], index: 4, kind: input, shape index: {}]
  %s5 = inlined_call_operand.hbm [shape: bf16[384,512], index: 5, kind: input, shape index: {}]
  %s6 = inlined_call_operand.hbm [shape: f32[1,256], index: 6, kind: input, shape index: {}]
  %s7 = inlined_call_operand.hbm [shape: bf16[256,3072], index: 7, kind: input, shape index: {}]
  %s8 = inlined_call_operand.hbm [shape: bf16[256,1024], index: 8, kind: input, shape index: {}]
  %s9 = inlined_call_operand.hbm [shape: f32[1,3072], index: 9, kind: input, shape index: {}]
  %s10 = inlined_call_operand.hbm [shape: bf16[256,128], index: 10, kind: input, shape index: {}]
  %s11 = inlined_call_operand.hbm [shape: f32[1,128], index: 11, kind: input, shape index: {}]
  %s12 = inlined_call_operand.hbm [shape: bf16[128,128], index: 12, kind: input, shape index: {}]
  %s13 = inlined_call_operand.hbm [shape: f32[1,128], index: 13, kind: input, shape index: {}]
  %s14 = inlined_call_operand.hbm [shape: bf16[128,128], index: 14, kind: input, shape index: {}]
  %s15 = inlined_call_operand.hbm [shape: f32[1,128], index: 15, kind: input, shape index: {}]
  %s16 = inlined_call_operand.hbm [shape: f32[16,128], index: 16, kind: output, shape index: {}]
  %s17 = sld [smem:[#allocation0]]
  $region161: #{tpu_custom_call.1} parent=0
    _
  %s19 = ssub.s32 1, %s17
  %s20 = scalar_select 0, %s19, %s17
  $region1: #{tpu_custom_call.1} parent=0
    #allocation2 [shape = 'u8[16384]{0}', space=vmem, size = 0x4000, scoped, tag = 'input window, operand 0']
    #allocation3 [shape = 's32[2]{0}', space=sflag, size = 0x8, scoped, tag = 'scoped memory for tpu_custom_call.1']
    #allocation4 [shape = 's32[2]{0}', space=sflag, size = 0x8, scoped, tag = 'scoped memory for tpu_custom_call.1']
    #allocation5 [shape = 'u8[983040]{0}', space=vmem, size = 0xf0000, scoped, tag = 'input window, operand 1, single buffered']
    #allocation6 [shape = 's32[1]{0}', space=sflag, size = 0x4, scoped, tag = 'scoped memory for tpu_custom_call.1']
    #allocation7 [shape = 'u8[4096]{0}', space=vmem, size = 0x1000, scoped, tag = 'input window, operand 2, single buffered']
    #allocation8 [shape = 'u8[1572864]{0}', space=vmem, size = 0x180000, scoped, tag = 'input window, operand 3, single buffered']
    #allocation9 [shape = 's32[1]{0}', space=sflag, size = 0x4, scoped, tag = 'scoped memory for tpu_custom_call.1']
    #allocation10 [shape = 'u8[1536]{0}', space=vmem, size = 0x800, scoped, tag = 'input window, operand 4, single buffered']
    #allocation11 [shape = 'u8[393216]{0}', space=vmem, size = 0x60000, scoped, tag = 'input window, operand 5, single buffered']
    #allocation12 [shape = 's32[1]{0}', space=sflag, size = 0x4, scoped, tag = 'scoped memory for tpu_custom_call.1']
    #allocation13 [shape = 'u8[1024]{0}', space=vmem, size = 0x400, scoped, tag = 'input window, operand 6, single buffered']
    #allocation14 [shape = 'u8[1572864]{0}', space=vmem, size = 0x180000, scoped, tag = 'input window, operand 7, single buffered']
    #allocation15 [shape = 's32[1]{0}', space=sflag, size = 0x4, scoped, tag = 'scoped memory for tpu_custom_call.1']
    #allocation16 [shape = 'u8[524288]{0}', space=vmem, size = 0x80000, scoped, tag = 'input window, operand 8, single buffered']
    #allocation17 [shape = 'u8[12288]{0}', space=vmem, size = 0x3000, scoped, tag = 'input window, operand 9, single buffered']
    #allocation18 [shape = 's32[1]{0}', space=sflag, size = 0x4, scoped, tag = 'scoped memory for tpu_custom_call.1']
    #allocation19 [shape = 'u8[65536]{0}', space=vmem, size = 0x10000, scoped, tag = 'input window, operand 10, single buffered']
    #allocation20 [shape = 'u8[512]{0}', space=vmem, size = 0x400, scoped, tag = 'input window, operand 11, single buffered']
    #allocation21 [shape = 's32[1]{0}', space=sflag, size = 0x4, scoped, tag = 'scoped memory for tpu_custom_call.1']
    #allocation22 [shape = 'u8[32768]{0}', space=vmem, size = 0x8000, scoped, tag = 'input window, operand 12, single buffered']
    #allocation23 [shape = 'u8[512]{0}', space=vmem, size = 0x400, scoped, tag = 'input window, operand 13, single buffered']
    #allocation24 [shape = 's32[1]{0}', space=sflag, size = 0x4, scoped, tag = 'scoped memory for tpu_custom_call.1']
    #allocation25 [shape = 'u8[32768]{0}', space=vmem, size = 0x8000, scoped, tag = 'input window, operand 14, single buffered']
    #allocation26 [shape = 'u8[512]{0}', space=vmem, size = 0x400, scoped, tag = 'input window, operand 15, single buffered']
    #allocation27 [shape = 's32[1]{0}', space=sflag, size = 0x4, scoped, tag = 'scoped memory for tpu_custom_call.1']
    #allocation28 [shape = 'u8[8192]{0}', space=vmem, size = 0x2000, scoped, tag = 'output window, operand 0']
    %21 = vsyncpa [#allocation3], 0
    %s22 = scalar_lea.sflag [#allocation3], 1
    %23 = vsyncpa %s22, 0
    %24 = vsyncpa [#allocation6], 0
    %25 = vsyncpa [#allocation9], 0
    %26 = vsyncpa [#allocation12], 0
    %27 = vsyncpa [#allocation15], 0
    %28 = vsyncpa [#allocation18], 0
    %29 = vsyncpa [#allocation21], 0
    %30 = vsyncpa [#allocation24], 0
    %31 = vsyncpa [#allocation27], 0
    %32 = vsyncpa [#allocation4], 0
    %s33 = scalar_lea.sflag [#allocation4], 1
    %34 = vsyncpa %s33, 0
    loop: start=0, step=1, limit=4
    $region2: #{tpu_custom_call.1} parent=1 // loop_pre_header
      _
    $region3: #{tpu_custom_call.1} parent=1 // loop_header
      %s36 = sphi 0, %s40
      %p37 = scmp.ge.s32.totalorder %s36, 4
      %s46 = sphi 0, %s48
      %s49 = sphi 0, %s46
      %s50 = sphi 0, %s49
      %s66 = sphi 0, %s50
      %s70 = sphi 0, %s70
      %s72 = sphi 0, %s70
      %s73 = sphi 0, %s72
      %s87 = sphi 0, %s73
      %s91 = sphi 0, %s91
      %s93 = sphi 0, %s91
      %s94 = sphi 0, %s93
      %s108 = sphi 0, %s94
      %s112 = sphi 0, %s112
      %s114 = sphi 0, %s112
      %s115 = sphi 0, %s114
      %s129 = sphi 0, %s115
      %s133 = sphi 0, %s133
      %s135 = sphi 0, %s133
      %s136 = sphi 0, %s135
      %s150 = sphi 0, %s136
      %s154 = sphi 0, %s154
      %s156 = sphi 0, %s154
      %s157 = sphi 0, %s156
      %s171 = sphi 0, %s157
      %s175 = sphi 0, %s175
      %s177 = sphi 0, %s175
      %s178 = sphi 0, %s177
      %s192 = sphi 0, %s178
      %s196 = sphi 0, %s196
      %s198 = sphi 0, %s196
      %s199 = sphi 0, %s198
      %s213 = sphi 0, %s199
      %s217 = sphi 0, %s217
      %s219 = sphi 0, %s217
      %s220 = sphi 0, %s219
      %s234 = sphi 0, %s220
      %s238 = sphi 0, %s238
      %s240 = sphi 0, %s238
      %s241 = sphi 0, %s240
      %s255 = sphi 0, %s241
      %s259 = sphi 0, %s259
      %s261 = sphi 0, %s259
      %s262 = sphi 0, %s261
      %s276 = sphi 0, %s262
      %s280 = sphi 0, %s280
      %s282 = sphi 0, %s280
      %s283 = sphi 0, %s282
      %s297 = sphi 0, %s283
      %s301 = sphi 0, %s301
      %s303 = sphi 0, %s301
      %s304 = sphi 0, %s303
      %s318 = sphi 0, %s304
      %s322 = sphi 0, %s322
      %s324 = sphi 0, %s322
      %s325 = sphi 0, %s324
      %s339 = sphi 0, %s325
      %s343 = sphi 0, %s343
      %s345 = sphi 0, %s343
      %s346 = sphi 0, %s345
      %s360 = sphi 0, %s346
      %s364 = sphi 0, %s364
      %s366 = sphi 0, %s364
      %s367 = sphi 0, %s366
      %s381 = sphi 0, %s367
      %s387 = sphi 0, %s389
      %s390 = sphi 0, %s387
      %s391 = sphi 0, %s390
      %s407 = sphi 0, %s391
    $region4: #{tpu_custom_call.1} parent=1 // loop_header_branch
      %39 = sbr.rel (%p37) target = $region8
    $region5: #{tpu_custom_call.1} parent=1 // loop_body
      %s41 = ssub.s32 %s36, 1
      %s42 = ssub.s32 %s36, 2
      %s43 = sadd.s32 %s36, 1
      %s44 = ssub.s32 %s36, %s43
      %p45 = scmp.eq.s32.totalorder %s44, 0
      %s47 = sadd.s32 %s46, 1
      %s48 = scalar_select %p45, %s46, %s47
      %p51 = pneg %p45
      %p52 = scmp.eq.s32.totalorder %s36, 1
      %p53 = por %p51, %p52
      %p54 = scmp.ne.s32.totalorder %s46, %s49
      %p55 = scmp.eq.s32.totalorder %s36, 0
      %p56 = por %p54, %p55
      %p57 = scmp.ne.s32.totalorder %s46, %s49
      %p58 = scmp.eq.s32.totalorder %s41, 1
      %p59 = por %p57, %p58
      %p60 = scmp.ne.s32.totalorder %s49, %s50
      %p61 = scmp.eq.s32.totalorder %s41, 0
      %p62 = por %p60, %p61
      %p63 = scmp.ne.s32.totalorder %s49, %s50
      %p64 = scmp.eq.s32.totalorder %s42, 1
      %p65 = por %p63, %p64
      %p67 = scmp.ne.s32.totalorder %s50, %s66
      %p68 = scmp.eq.s32.totalorder %s42, 0
      %p69 = por %p67, %p68
      %s71 = sadd.s32 %s70, 1
      %p74 = scmp.eq.s32.totalorder %s36, 1
      %p75 = scmp.ne.s32.totalorder %s70, %s72
      %p76 = scmp.eq.s32.totalorder %s36, 0
      %p77 = por %p75, %p76
      %p78 = scmp.ne.s32.totalorder %s70, %s72
      %p79 = scmp.eq.s32.totalorder %s41, 1
      %p80 = por %p78, %p79
      %p81 = scmp.ne.s32.totalorder %s72, %s73
      %p82 = scmp.eq.s32.totalorder %s41, 0
      %p83 = por %p81, %p82
      %p84 = scmp.ne.s32.totalorder %s72, %s73
      %p85 = scmp.eq.s32.totalorder %s42, 1
      %p86 = por %p84, %p85
      %p88 = scmp.ne.s32.totalorder %s73, %s87
      %p89 = scmp.eq.s32.totalorder %s42, 0
      %p90 = por %p88, %p89
      %s92 = sadd.s32 %s91, 1
      %p95 = scmp.eq.s32.totalorder %s36, 1
      %p96 = scmp.ne.s32.totalorder %s91, %s93
      %p97 = scmp.eq.s32.totalorder %s36, 0
      %p98 = por %p96, %p97
      %p99 = scmp.ne.s32.totalorder %s91, %s93
      %p100 = scmp.eq.s32.totalorder %s41, 1
      %p101 = por %p99, %p100
      %p102 = scmp.ne.s32.totalorder %s93, %s94
      %p103 = scmp.eq.s32.totalorder %s41, 0
      %p104 = por %p102, %p103
      %p105 = scmp.ne.s32.totalorder %s93, %s94
      %p106 = scmp.eq.s32.totalorder %s42, 1
      %p107 = por %p105, %p106
      %p109 = scmp.ne.s32.totalorder %s94, %s108
      %p110 = scmp.eq.s32.totalorder %s42, 0
      %p111 = por %p109, %p110
      %s113 = sadd.s32 %s112, 1
      %p116 = scmp.eq.s32.totalorder %s36, 1
      %p117 = scmp.ne.s32.totalorder %s112, %s114
      %p118 = scmp.eq.s32.totalorder %s36, 0
      %p119 = por %p117, %p118
      %p120 = scmp.ne.s32.totalorder %s112, %s114
      %p121 = scmp.eq.s32.totalorder %s41, 1
      %p122 = por %p120, %p121
      %p123 = scmp.ne.s32.totalorder %s114, %s115
      %p124 = scmp.eq.s32.totalorder %s41, 0
      %p125 = por %p123, %p124
      %p126 = scmp.ne.s32.totalorder %s114, %s115
      %p127 = scmp.eq.s32.totalorder %s42, 1
      %p128 = por %p126, %p127
      %p130 = scmp.ne.s32.totalorder %s115, %s129
      %p131 = scmp.eq.s32.totalorder %s42, 0
      %p132 = por %p130, %p131
      %s134 = sadd.s32 %s133, 1
      %p137 = scmp.eq.s32.totalorder %s36, 1
      %p138 = scmp.ne.s32.totalorder %s133, %s135
      %p139 = scmp.eq.s32.totalorder %s36, 0
      %p140 = por %p138, %p139
      %p141 = scmp.ne.s32.totalorder %s133, %s135
      %p142 = scmp.eq.s32.totalorder %s41, 1
      %p143 = por %p141, %p142
      %p144 = scmp.ne.s32.totalorder %s135, %s136
      %p145 = scmp.eq.s32.totalorder %s41, 0
      %p146 = por %p144, %p145
      %p147 = scmp.ne.s32.totalorder %s135, %s136
      %p148 = scmp.eq.s32.totalorder %s42, 1
      %p149 = por %p147, %p148
      %p151 = scmp.ne.s32.totalorder %s136, %s150
      %p152 = scmp.eq.s32.totalorder %s42, 0
      %p153 = por %p151, %p152
      %s155 = sadd.s32 %s154, 1
      %p158 = scmp.eq.s32.totalorder %s36, 1
      %p159 = scmp.ne.s32.totalorder %s154, %s156
      %p160 = scmp.eq.s32.totalorder %s36, 0
      %p161 = por %p159, %p160
      %p162 = scmp.ne.s32.totalorder %s154, %s156
      %p163 = scmp.eq.s32.totalorder %s41, 1
      %p164 = por %p162, %p163
      %p165 = scmp.ne.s32.totalorder %s156, %s157
      %p166 = scmp.eq.s32.totalorder %s41, 0
      %p167 = por %p165, %p166
      %p168 = scmp.ne.s32.totalorder %s156, %s157
      %p169 = scmp.eq.s32.totalorder %s42, 1
      %p170 = por %p168, %p169
      %p172 = scmp.ne.s32.totalorder %s157, %s171
      %p173 = scmp.eq.s32.totalorder %s42, 0
      %p174 = por %p172, %p173
      %s176 = sadd.s32 %s175, 1
      %p179 = scmp.eq.s32.totalorder %s36, 1
      %p180 = scmp.ne.s32.totalorder %s175, %s177
      %p181 = scmp.eq.s32.totalorder %s36, 0
      %p182 = por %p180, %p181
      %p183 = scmp.ne.s32.totalorder %s175, %s177
      %p184 = scmp.eq.s32.totalorder %s41, 1
      %p185 = por %p183, %p184
      %p186 = scmp.ne.s32.totalorder %s177, %s178
      %p187 = scmp.eq.s32.totalorder %s41, 0
      %p188 = por %p186, %p187
      %p189 = scmp.ne.s32.totalorder %s177, %s178
      %p190 = scmp.eq.s32.totalorder %s42, 1
      %p191 = por %p189, %p190
      %p193 = scmp.ne.s32.totalorder %s178, %s192
      %p194 = scmp.eq.s32.totalorder %s42, 0
      %p195 = por %p193, %p194
      %s197 = sadd.s32 %s196, 1
      %p200 = scmp.eq.s32.totalorder %s36, 1
      %p201 = scmp.ne.s32.totalorder %s196, %s198
      %p202 = scmp.eq.s32.totalorder %s36, 0
      %p203 = por %p201, %p202
      %p204 = scmp.ne.s32.totalorder %s196, %s198
      %p205 = scmp.eq.s32.totalorder %s41, 1
      %p206 = por %p204, %p205
      %p207 = scmp.ne.s32.totalorder %s198, %s199
      %p208 = scmp.eq.s32.totalorder %s41, 0
      %p209 = por %p207, %p208
      %p210 = scmp.ne.s32.totalorder %s198, %s199
      %p211 = scmp.eq.s32.totalorder %s42, 1
      %p212 = por %p210, %p211
      %p214 = scmp.ne.s32.totalorder %s199, %s213
      %p215 = scmp.eq.s32.totalorder %s42, 0
      %p216 = por %p214, %p215
      %s218 = sadd.s32 %s217, 1
      %p221 = scmp.eq.s32.totalorder %s36, 1
      %p222 = scmp.ne.s32.totalorder %s217, %s219
      %p223 = scmp.eq.s32.totalorder %s36, 0
      %p224 = por %p222, %p223
      %p225 = scmp.ne.s32.totalorder %s217, %s219
      %p226 = scmp.eq.s32.totalorder %s41, 1
      %p227 = por %p225, %p226
      %p228 = scmp.ne.s32.totalorder %s219, %s220
      %p229 = scmp.eq.s32.totalorder %s41, 0
      %p230 = por %p228, %p229
      %p231 = scmp.ne.s32.totalorder %s219, %s220
      %p232 = scmp.eq.s32.totalorder %s42, 1
      %p233 = por %p231, %p232
      %p235 = scmp.ne.s32.totalorder %s220, %s234
      %p236 = scmp.eq.s32.totalorder %s42, 0
      %p237 = por %p235, %p236
      %s239 = sadd.s32 %s238, 1
      %p242 = scmp.eq.s32.totalorder %s36, 1
      %p243 = scmp.ne.s32.totalorder %s238, %s240
      %p244 = scmp.eq.s32.totalorder %s36, 0
      %p245 = por %p243, %p244
      %p246 = scmp.ne.s32.totalorder %s238, %s240
      %p247 = scmp.eq.s32.totalorder %s41, 1
      %p248 = por %p246, %p247
      %p249 = scmp.ne.s32.totalorder %s240, %s241
      %p250 = scmp.eq.s32.totalorder %s41, 0
      %p251 = por %p249, %p250
      %p252 = scmp.ne.s32.totalorder %s240, %s241
      %p253 = scmp.eq.s32.totalorder %s42, 1
      %p254 = por %p252, %p253
      %p256 = scmp.ne.s32.totalorder %s241, %s255
      %p257 = scmp.eq.s32.totalorder %s42, 0
      %p258 = por %p256, %p257
      %s260 = sadd.s32 %s259, 1
      %p263 = scmp.eq.s32.totalorder %s36, 1
      %p264 = scmp.ne.s32.totalorder %s259, %s261
      %p265 = scmp.eq.s32.totalorder %s36, 0
      %p266 = por %p264, %p265
      %p267 = scmp.ne.s32.totalorder %s259, %s261
      %p268 = scmp.eq.s32.totalorder %s41, 1
      %p269 = por %p267, %p268
      %p270 = scmp.ne.s32.totalorder %s261, %s262
      %p271 = scmp.eq.s32.totalorder %s41, 0
      %p272 = por %p270, %p271
      %p273 = scmp.ne.s32.totalorder %s261, %s262
      %p274 = scmp.eq.s32.totalorder %s42, 1
      %p275 = por %p273, %p274
      %p277 = scmp.ne.s32.totalorder %s262, %s276
      %p278 = scmp.eq.s32.totalorder %s42, 0
      %p279 = por %p277, %p278
      %s281 = sadd.s32 %s280, 1
      %p284 = scmp.eq.s32.totalorder %s36, 1
      %p285 = scmp.ne.s32.totalorder %s280, %s282
      %p286 = scmp.eq.s32.totalorder %s36, 0
      %p287 = por %p285, %p286
      %p288 = scmp.ne.s32.totalorder %s280, %s282
      %p289 = scmp.eq.s32.totalorder %s41, 1
      %p290 = por %p288, %p289
      %p291 = scmp.ne.s32.totalorder %s282, %s283
      %p292 = scmp.eq.s32.totalorder %s41, 0
      %p293 = por %p291, %p292
      %p294 = scmp.ne.s32.totalorder %s282, %s283
      %p295 = scmp.eq.s32.totalorder %s42, 1
      %p296 = por %p294, %p295
      %p298 = scmp.ne.s32.totalorder %s283, %s297
      %p299 = scmp.eq.s32.totalorder %s42, 0
      %p300 = por %p298, %p299
      %s302 = sadd.s32 %s301, 1
      %p305 = scmp.eq.s32.totalorder %s36, 1
      %p306 = scmp.ne.s32.totalorder %s301, %s303
      %p307 = scmp.eq.s32.totalorder %s36, 0
      %p308 = por %p306, %p307
      %p309 = scmp.ne.s32.totalorder %s301, %s303
      %p310 = scmp.eq.s32.totalorder %s41, 1
      %p311 = por %p309, %p310
      %p312 = scmp.ne.s32.totalorder %s303, %s304
      %p313 = scmp.eq.s32.totalorder %s41, 0
      %p314 = por %p312, %p313
      %p315 = scmp.ne.s32.totalorder %s303, %s304
      %p316 = scmp.eq.s32.totalorder %s42, 1
      %p317 = por %p315, %p316
      %p319 = scmp.ne.s32.totalorder %s304, %s318
      %p320 = scmp.eq.s32.totalorder %s42, 0
      %p321 = por %p319, %p320
      %s323 = sadd.s32 %s322, 1
      %p326 = scmp.eq.s32.totalorder %s36, 1
      %p327 = scmp.ne.s32.totalorder %s322, %s324
      %p328 = scmp.eq.s32.totalorder %s36, 0
      %p329 = por %p327, %p328
      %p330 = scmp.ne.s32.totalorder %s322, %s324
      %p331 = scmp.eq.s32.totalorder %s41, 1
      %p332 = por %p330, %p331
      %p333 = scmp.ne.s32.totalorder %s324, %s325
      %p334 = scmp.eq.s32.totalorder %s41, 0
      %p335 = por %p333, %p334
      %p336 = scmp.ne.s32.totalorder %s324, %s325
      %p337 = scmp.eq.s32.totalorder %s42, 1
      %p338 = por %p336, %p337
      %p340 = scmp.ne.s32.totalorder %s325, %s339
      %p341 = scmp.eq.s32.totalorder %s42, 0
      %p342 = por %p340, %p341
      %s344 = sadd.s32 %s343, 1
      %p347 = scmp.eq.s32.totalorder %s36, 1
      %p348 = scmp.ne.s32.totalorder %s343, %s345
      %p349 = scmp.eq.s32.totalorder %s36, 0
      %p350 = por %p348, %p349
      %p351 = scmp.ne.s32.totalorder %s343, %s345
      %p352 = scmp.eq.s32.totalorder %s41, 1
      %p353 = por %p351, %p352
      %p354 = scmp.ne.s32.totalorder %s345, %s346
      %p355 = scmp.eq.s32.totalorder %s41, 0
      %p356 = por %p354, %p355
      %p357 = scmp.ne.s32.totalorder %s345, %s346
      %p358 = scmp.eq.s32.totalorder %s42, 1
      %p359 = por %p357, %p358
      %p361 = scmp.ne.s32.totalorder %s346, %s360
      %p362 = scmp.eq.s32.totalorder %s42, 0
      %p363 = por %p361, %p362
      %s365 = sadd.s32 %s364, 1
      %p368 = scmp.eq.s32.totalorder %s36, 1
      %p369 = scmp.ne.s32.totalorder %s364, %s366
      %p370 = scmp.eq.s32.totalorder %s36, 0
      %p371 = por %p369, %p370
      %p372 = scmp.ne.s32.totalorder %s364, %s366
      %p373 = scmp.eq.s32.totalorder %s41, 1
      %p374 = por %p372, %p373
      %p375 = scmp.ne.s32.totalorder %s366, %s367
      %p376 = scmp.eq.s32.totalorder %s41, 0
      %p377 = por %p375, %p376
      %p378 = scmp.ne.s32.totalorder %s366, %s367
      %p379 = scmp.eq.s32.totalorder %s42, 1
      %p380 = por %p378, %p379
      %p382 = scmp.ne.s32.totalorder %s367, %s381
      %p383 = scmp.eq.s32.totalorder %s42, 0
      %p384 = por %p382, %p383
      %s385 = ssub.s32 %s36, %s43
      %p386 = scmp.eq.s32.totalorder %s385, 0
      %s388 = sadd.s32 %s387, 1
      %s389 = scalar_select %p386, %s387, %s388
      %p392 = pneg %p386
      %p393 = scmp.eq.s32.totalorder %s36, 1
      %p394 = por %p392, %p393
      %p395 = scmp.ne.s32.totalorder %s387, %s390
      %p396 = scmp.eq.s32.totalorder %s36, 0
      %p397 = por %p395, %p396
      %p398 = scmp.ne.s32.totalorder %s387, %s390
      %p399 = scmp.eq.s32.totalorder %s41, 1
      %p400 = por %p398, %p399
      %p401 = scmp.ne.s32.totalorder %s390, %s391
      %p402 = scmp.eq.s32.totalorder %s41, 0
      %p403 = por %p401, %p402
      %p404 = scmp.ne.s32.totalorder %s390, %s391
      %p405 = scmp.eq.s32.totalorder %s42, 1
      %p406 = por %p404, %p405
      %p408 = scmp.ne.s32.totalorder %s391, %s407
      %p409 = scmp.eq.s32.totalorder %s42, 0
      %p410 = por %p408, %p409
      %p411 = scmp.le.s32.totalorder 1, %s36
      %p412 = scmp.lt.s32.totalorder %s36, 3
      %p413 = pnand %p411, %p412
      %p414 = pneg %p413
      // Predicated region
      $region9: #{tpu_custom_call.1} parent=5 // pred_check
        _
      $region10: #{tpu_custom_call.1} parent=5 // pred_check_branch
        %416 = sbr.rel (%p413) target = $region12
      $region11: #{tpu_custom_call.1} parent=5 // pred_region
        %s417 = ssub.s32 %s36, 1
        // Predicated region
        $region13: #{tpu_custom_call.1} parent=11 // pred_check
          %p418 = pneg %p83
        $region14: #{tpu_custom_call.1} parent=11 // pred_check_branch
          %420 = sbr.rel (%p418) target = $region16
        $region15: #{tpu_custom_call.1} parent=11 // pred_region
          %s422 = ssub.s32 30720, 30720
          %423 = vsyncadd [#allocation6], %s422
          %s424 = sshll.u32 [#allocation5], 4
          %s425 = int_to_ptr.vmem [resolvable:$true] %s424
          %430 = dma.hbm_to_vmem [thread:$0]  %s1, 30720, %s425, [#allocation6], 1024, 1024, 64
        $region16: #{tpu_custom_call.1} parent=11 // pred_fallthru
          _
        // Predicated region
        $region17: #{tpu_custom_call.1} parent=11 // pred_check
          %p431 = pneg %p104
        $region18: #{tpu_custom_call.1} parent=11 // pred_check_branch
          %433 = sbr.rel (%p431) target = $region20
        $region19: #{tpu_custom_call.1} parent=11 // pred_region
          %s435 = ssub.s32 128, 128
          %436 = vsyncadd [#allocation6], %s435
          %s438 = sshll.u32 [#allocation7], 4
          %s439 = int_to_ptr.vmem [resolvable:$true] %s438
          %441 = dma.hbm_to_vmem [thread:$0]  %s2, 128, %s439, [#allocation6]
        $region20: #{tpu_custom_call.1} parent=11 // pred_fallthru
          _
        // Predicated region
        $region21: #{tpu_custom_call.1} parent=11 // pred_check
          %p442 = pneg %p125
        $region22: #{tpu_custom_call.1} parent=11 // pred_check_branch
          %444 = sbr.rel (%p442) target = $region24
        $region23: #{tpu_custom_call.1} parent=11 // pred_region
          %s446 = ssub.s32 49152, 49152
          %447 = vsyncadd [#allocation9], %s446
          %s448 = sshll.u32 [#allocation8], 4
          %s449 = int_to_ptr.vmem [resolvable:$true] %s448
          %454 = dma.hbm_to_vmem [thread:$0]  %s3, 49152, %s449, [#allocation9], 384, 384, 24
        $region24: #{tpu_custom_call.1} parent=11 // pred_fallthru
          _
        // Predicated region
        $region25: #{tpu_custom_call.1} parent=11 // pred_check
          %p455 = pneg %p146
        $region26: #{tpu_custom_call.1} parent=11 // pred_check_branch
          %457 = sbr.rel (%p455) target = $region28
        $region27: #{tpu_custom_call.1} parent=11 // pred_region
          %s459 = ssub.s32 48, 48
          %460 = vsyncadd [#allocation9], %s459
          %s462 = sshll.u32 [#allocation10], 4
          %s463 = int_to_ptr.vmem [resolvable:$true] %s462
          %465 = dma.hbm_to_vmem [thread:$0]  %s4, 48, %s463, [#allocation9]
        $region28: #{tpu_custom_call.1} parent=11 // pred_fallthru
          _
        // Predicated region
        $region29: #{tpu_custom_call.1} parent=11 // pred_check
          %p466 = pneg %p167
        $region30: #{tpu_custom_call.1} parent=11 // pred_check_branch
          %468 = sbr.rel (%p466) target = $region32
        $region31: #{tpu_custom_call.1} parent=11 // pred_region
          %s470 = ssub.s32 12288, 12288
          %471 = vsyncadd [#allocation12], %s470
          %s472 = sshll.u32 [#allocation11], 4
          %s473 = int_to_ptr.vmem [resolvable:$true] %s472
          %478 = dma.hbm_to_vmem [thread:$0]  %s5, 12288, %s473, [#allocation12], 256, 256, 16
        $region32: #{tpu_custom_call.1} parent=11 // pred_fallthru
          _
        // Predicated region
        $region33: #{tpu_custom_call.1} parent=11 // pred_check
          %p479 = pneg %p188
        $region34: #{tpu_custom_call.1} parent=11 // pred_check_branch
          %481 = sbr.rel (%p479) target = $region36
        $region35: #{tpu_custom_call.1} parent=11 // pred_region
          %s483 = ssub.s32 32, 32
          %484 = vsyncadd [#allocation12], %s483
          %s486 = sshll.u32 [#allocation13], 4
          %s487 = int_to_ptr.vmem [resolvable:$true] %s486
          %489 = dma.hbm_to_vmem [thread:$0]  %s6, 32, %s487, [#allocation12]
        $region36: #{tpu_custom_call.1} parent=11 // pred_fallthru
          _
        // Predicated region
        $region37: #{tpu_custom_call.1} parent=11 // pred_check
          %p490 = pneg %p209
        $region38: #{tpu_custom_call.1} parent=11 // pred_check_branch
          %492 = sbr.rel (%p490) target = $region40
        $region39: #{tpu_custom_call.1} parent=11 // pred_region
          %s494 = ssub.s32 49152, 49152
          %495 = vsyncadd [#allocation15], %s494
          %s496 = sshll.u32 [#allocation14], 4
          %s497 = int_to_ptr.vmem [resolvable:$true] %s496
          %502 = dma.hbm_to_vmem [thread:$0]  %s7, 49152, %s497, [#allocation15], 1536, 1536, 96
        $region40: #{tpu_custom_call.1} parent=11 // pred_fallthru
          _
        // Predicated region
        $region41: #{tpu_custom_call.1} parent=11 // pred_check
          %p503 = pneg %p230
        $region42: #{tpu_custom_call.1} parent=11 // pred_check_branch
          %505 = sbr.rel (%p503) target = $region44
        $region43: #{tpu_custom_call.1} parent=11 // pred_region
          %s507 = ssub.s32 16384, 16384
          %508 = vsyncadd [#allocation15], %s507
          %s509 = sshll.u32 [#allocation16], 4
          %s510 = int_to_ptr.vmem [resolvable:$true] %s509
          %515 = dma.hbm_to_vmem [thread:$0]  %s8, 16384, %s510, [#allocation15], 512, 512, 32
        $region44: #{tpu_custom_call.1} parent=11 // pred_fallthru
          _
        // Predicated region
        $region45: #{tpu_custom_call.1} parent=11 // pred_check
          %p516 = pneg %p251
        $region46: #{tpu_custom_call.1} parent=11 // pred_check_branch
          %518 = sbr.rel (%p516) target = $region48
        $region47: #{tpu_custom_call.1} parent=11 // pred_region
          %s520 = ssub.s32 384, 384
          %521 = vsyncadd [#allocation18], %s520
          %s523 = sshll.u32 [#allocation17], 4
          %s524 = int_to_ptr.vmem [resolvable:$true] %s523
          %526 = dma.hbm_to_vmem [thread:$0]  %s9, 384, %s524, [#allocation18]
        $region48: #{tpu_custom_call.1} parent=11 // pred_fallthru
          _
        // Predicated region
        $region49: #{tpu_custom_call.1} parent=11 // pred_check
          %p527 = pneg %p272
        $region50: #{tpu_custom_call.1} parent=11 // pred_check_branch
          %529 = sbr.rel (%p527) target = $region52
        $region51: #{tpu_custom_call.1} parent=11 // pred_region
          %s531 = ssub.s32 2048, 2048
          %532 = vsyncadd [#allocation18], %s531
          %s533 = sshll.u32 [#allocation19], 4
          %s534 = int_to_ptr.vmem [resolvable:$true] %s533
          %539 = dma.hbm_to_vmem [thread:$0]  %s10, 2048, %s534, [#allocation18], 64, 64, 4
        $region52: #{tpu_custom_call.1} parent=11 // pred_fallthru
          _
        // Predicated region
        $region53: #{tpu_custom_call.1} parent=11 // pred_check
          %p540 = pneg %p293
        $region54: #{tpu_custom_call.1} parent=11 // pred_check_branch
          %542 = sbr.rel (%p540) target = $region56
        $region55: #{tpu_custom_call.1} parent=11 // pred_region
          %s544 = ssub.s32 16, 16
          %545 = vsyncadd [#allocation21], %s544
          %s547 = sshll.u32 [#allocation20], 4
          %s548 = int_to_ptr.vmem [resolvable:$true] %s547
          %550 = dma.hbm_to_vmem [thread:$0]  %s11, 16, %s548, [#allocation21]
        $region56: #{tpu_custom_call.1} parent=11 // pred_fallthru
          _
        // Predicated region
        $region57: #{tpu_custom_call.1} parent=11 // pred_check
          %p551 = pneg %p314
        $region58: #{tpu_custom_call.1} parent=11 // pred_check_branch
          %553 = sbr.rel (%p551) target = $region60
        $region59: #{tpu_custom_call.1} parent=11 // pred_region
          %s555 = ssub.s32 1024, 1024
          %556 = vsyncadd [#allocation21], %s555
          %s557 = sshll.u32 [#allocation22], 4
          %s558 = int_to_ptr.vmem [resolvable:$true] %s557
          %563 = dma.hbm_to_vmem [thread:$0]  %s12, 1024, %s558, [#allocation21], 64, 64, 4
        $region60: #{tpu_custom_call.1} parent=11 // pred_fallthru
          _
        // Predicated region
        $region61: #{tpu_custom_call.1} parent=11 // pred_check
          %p564 = pneg %p335
        $region62: #{tpu_custom_call.1} parent=11 // pred_check_branch
          %566 = sbr.rel (%p564) target = $region64
        $region63: #{tpu_custom_call.1} parent=11 // pred_region
          %s568 = ssub.s32 16, 16
          %569 = vsyncadd [#allocation24], %s568
          %s571 = sshll.u32 [#allocation23], 4
          %s572 = int_to_ptr.vmem [resolvable:$true] %s571
          %574 = dma.hbm_to_vmem [thread:$0]  %s13, 16, %s572, [#allocation24]
        $region64: #{tpu_custom_call.1} parent=11 // pred_fallthru
          _
        // Predicated region
        $region65: #{tpu_custom_call.1} parent=11 // pred_check
          %p575 = pneg %p356
        $region66: #{tpu_custom_call.1} parent=11 // pred_check_branch
          %577 = sbr.rel (%p575) target = $region68
        $region67: #{tpu_custom_call.1} parent=11 // pred_region
          %s579 = ssub.s32 1024, 1024
          %580 = vsyncadd [#allocation24], %s579
          %s581 = sshll.u32 [#allocation25], 4
          %s582 = int_to_ptr.vmem [resolvable:$true] %s581
          %587 = dma.hbm_to_vmem [thread:$0]  %s14, 1024, %s582, [#allocation24], 64, 64, 4
        $region68: #{tpu_custom_call.1} parent=11 // pred_fallthru
          _
        // Predicated region
        $region69: #{tpu_custom_call.1} parent=11 // pred_check
          %p588 = pneg %p377
        $region70: #{tpu_custom_call.1} parent=11 // pred_check_branch
          %590 = sbr.rel (%p588) target = $region72
        $region71: #{tpu_custom_call.1} parent=11 // pred_region
          %s592 = ssub.s32 16, 16
          %593 = vsyncadd [#allocation27], %s592
          %s595 = sshll.u32 [#allocation26], 4
          %s596 = int_to_ptr.vmem [resolvable:$true] %s595
          %598 = dma.hbm_to_vmem [thread:$0]  %s15, 16, %s596, [#allocation27]
        $region72: #{tpu_custom_call.1} parent=11 // pred_fallthru
          _
      $region12: #{tpu_custom_call.1} parent=5 // pred_fallthru
        _
      %p599 = scmp.lt.s32.totalorder %s36, 2
      // Predicated region
      $region73: #{tpu_custom_call.1} parent=5 // pred_check
        %p600 = pneg %p599
      $region74: #{tpu_custom_call.1} parent=5 // pred_check_branch
        %602 = sbr.rel (%p600) target = $region76
      $region75: #{tpu_custom_call.1} parent=5 // pred_region
        // Predicated region
        $region77: #{tpu_custom_call.1} parent=75 // pred_check
          %p603 = pneg %p56
        $region78: #{tpu_custom_call.1} parent=75 // pred_check_branch
          %605 = sbr.rel (%p603) target = $region80
        $region79: #{tpu_custom_call.1} parent=75 // pred_region
          %s606 = sand.u32 %s46, 1
          %s607 = scalar_lea.sflag [#allocation3], %s606
          %s608 = sand.u32 %s46, 1
          %s609 = smul.addr %s608, 16
          %s610 = scalar_lea.vmem [#allocation2], %s609
          %s612 = ssub.s32 256, 256
          %613 = vsyncadd %s607, %s612
          %s614 = smul.addr %s36, 2
          %s615 = smul.addr %s614, 128
          %s616 = scalar_lea.hbm %s0, %s615
          %s618 = sshll.u32 %s610, 4
          %s619 = int_to_ptr.vmem [resolvable:$true] %s618
          %621 = dma.hbm_to_vmem [thread:$0]  %s616, 256, %s619, %s607
        $region80: #{tpu_custom_call.1} parent=75 // pred_fallthru
          _
      $region76: #{tpu_custom_call.1} parent=5 // pred_fallthru
        _
      %p622 = scmp.le.s32.totalorder 1, %s36
      %p623 = scmp.lt.s32.totalorder %s36, 3
      %p624 = pnand %p622, %p623
      %p625 = pneg %p624
      // Predicated region
      $region81: #{tpu_custom_call.1} parent=5 // pred_check
        _
      $region82: #{tpu_custom_call.1} parent=5 // pred_check_branch
        %627 = sbr.rel (%p624) target = $region84
      $region83: #{tpu_custom_call.1} parent=5 // pred_region
        %s628 = ssub.s32 %s36, 1
        %s629 = sand.u32 %s49, 1
        %s630 = scalar_lea.sflag [#allocation3], %s629
        %s631 = sand.u32 %s49, 1
        %s632 = smul.addr %s631, 16
        %s633 = scalar_lea.vmem [#allocation2], %s632
        // Predicated region
        $region85: #{tpu_custom_call.1} parent=83 // pred_check
          %p634 = pneg %p62
        $region86: #{tpu_custom_call.1} parent=83 // pred_check_branch
          %636 = sbr.rel (%p634) target = $region88
        $region87: #{tpu_custom_call.1} parent=83 // pred_region
          %637 = dma.done %s630, 256
        $region88: #{tpu_custom_call.1} parent=83 // pred_fallthru
          _
        // Predicated region
        $region89: #{tpu_custom_call.1} parent=83 // pred_check
          %p638 = pneg %p83
        $region90: #{tpu_custom_call.1} parent=83 // pred_check_branch
          %640 = sbr.rel (%p638) target = $region92
        $region91: #{tpu_custom_call.1} parent=83 // pred_region
          %641 = dma.done [#allocation6], 30720
        $region92: #{tpu_custom_call.1} parent=83 // pred_fallthru
          _
        // Predicated region
        $region93: #{tpu_custom_call.1} parent=83 // pred_check
          %p642 = pneg %p104
        $region94: #{tpu_custom_call.1} parent=83 // pred_check_branch
          %644 = sbr.rel (%p642) target = $region96
        $region95: #{tpu_custom_call.1} parent=83 // pred_region
          %645 = dma.done [#allocation6], 128
        $region96: #{tpu_custom_call.1} parent=83 // pred_fallthru
          _
        // Predicated region
        $region97: #{tpu_custom_call.1} parent=83 // pred_check
          %p646 = pneg %p125
        $region98: #{tpu_custom_call.1} parent=83 // pred_check_branch
          %648 = sbr.rel (%p646) target = $region100
        $region99: #{tpu_custom_call.1} parent=83 // pred_region
          %649 = dma.done [#allocation9], 49152
        $region100: #{tpu_custom_call.1} parent=83 // pred_fallthru
          _
        // Predicated region
        $region101: #{tpu_custom_call.1} parent=83 // pred_check
          %p650 = pneg %p146
        $region102: #{tpu_custom_call.1} parent=83 // pred_check_branch
          %652 = sbr.rel (%p650) target = $region104
        $region103: #{tpu_custom_call.1} parent=83 // pred_region
          %653 = dma.done [#allocation9], 48
        $region104: #{tpu_custom_call.1} parent=83 // pred_fallthru
          _
        // Predicated region
        $region105: #{tpu_custom_call.1} parent=83 // pred_check
          %p654 = pneg %p167
        $region106: #{tpu_custom_call.1} parent=83 // pred_check_branch
          %656 = sbr.rel (%p654) target = $region108
        $region107: #{tpu_custom_call.1} parent=83 // pred_region
          %657 = dma.done [#allocation12], 12288
        $region108: #{tpu_custom_call.1} parent=83 // pred_fallthru
          _
        // Predicated region
        $region109: #{tpu_custom_call.1} parent=83 // pred_check
          %p658 = pneg %p188
        $region110: #{tpu_custom_call.1} parent=83 // pred_check_branch
          %660 = sbr.rel (%p658) target = $region112
        $region111: #{tpu_custom_call.1} parent=83 // pred_region
          %661 = dma.done [#allocation12], 32
        $region112: #{tpu_custom_call.1} parent=83 // pred_fallthru
          _
        // Predicated region
        $region113: #{tpu_custom_call.1} parent=83 // pred_check
          %p662 = pneg %p209
        $region114: #{tpu_custom_call.1} parent=83 // pred_check_branch
          %664 = sbr.rel (%p662) target = $region116
        $region115: #{tpu_custom_call.1} parent=83 // pred_region
          %665 = dma.done [#allocation15], 49152
        $region116: #{tpu_custom_call.1} parent=83 // pred_fallthru
          _
        // Predicated region
        $region117: #{tpu_custom_call.1} parent=83 // pred_check
          %p666 = pneg %p230
        $region118: #{tpu_custom_call.1} parent=83 // pred_check_branch
          %668 = sbr.rel (%p666) target = $region120
        $region119: #{tpu_custom_call.1} parent=83 // pred_region
          %669 = dma.done [#allocation15], 16384
        $region120: #{tpu_custom_call.1} parent=83 // pred_fallthru
          _
        // Predicated region
        $region121: #{tpu_custom_call.1} parent=83 // pred_check
          %p670 = pneg %p251
        $region122: #{tpu_custom_call.1} parent=83 // pred_check_branch
          %672 = sbr.rel (%p670) target = $region124
        $region123: #{tpu_custom_call.1} parent=83 // pred_region
          %673 = dma.done [#allocation18], 384
        $region124: #{tpu_custom_call.1} parent=83 // pred_fallthru
          _
        // Predicated region
        $region125: #{tpu_custom_call.1} parent=83 // pred_check
          %p674 = pneg %p272
        $region126: #{tpu_custom_call.1} parent=83 // pred_check_branch
          %676 = sbr.rel (%p674) target = $region128
        $region127: #{tpu_custom_call.1} parent=83 // pred_region
          %677 = dma.done [#allocation18], 2048
        $region128: #{tpu_custom_call.1} parent=83 // pred_fallthru
          _
        // Predicated region
        $region129: #{tpu_custom_call.1} parent=83 // pred_check
          %p678 = pneg %p293
        $region130: #{tpu_custom_call.1} parent=83 // pred_check_branch
          %680 = sbr.rel (%p678) target = $region132
        $region131: #{tpu_custom_call.1} parent=83 // pred_region
          %681 = dma.done [#allocation21], 16
        $region132: #{tpu_custom_call.1} parent=83 // pred_fallthru
          _
        // Predicated region
        $region133: #{tpu_custom_call.1} parent=83 // pred_check
          %p682 = pneg %p314
        $region134: #{tpu_custom_call.1} parent=83 // pred_check_branch
          %684 = sbr.rel (%p682) target = $region136
        $region135: #{tpu_custom_call.1} parent=83 // pred_region
          %685 = dma.done [#allocation21], 1024
        $region136: #{tpu_custom_call.1} parent=83 // pred_fallthru
          _
        // Predicated region
        $region137: #{tpu_custom_call.1} parent=83 // pred_check
          %p686 = pneg %p335
        $region138: #{tpu_custom_call.1} parent=83 // pred_check_branch
          %688 = sbr.rel (%p686) target = $region140
        $region139: #{tpu_custom_call.1} parent=83 // pred_region
          %689 = dma.done [#allocation24], 16
        $region140: #{tpu_custom_call.1} parent=83 // pred_fallthru
          _
        // Predicated region
        $region141: #{tpu_custom_call.1} parent=83 // pred_check
          %p690 = pneg %p356
        $region142: #{tpu_custom_call.1} parent=83 // pred_check_branch
          %692 = sbr.rel (%p690) target = $region144
        $region143: #{tpu_custom_call.1} parent=83 // pred_region
          %693 = dma.done [#allocation24], 1024
        $region144: #{tpu_custom_call.1} parent=83 // pred_fallthru
          _
        // Predicated region
        $region145: #{tpu_custom_call.1} parent=83 // pred_check
          %p694 = pneg %p377
        $region146: #{tpu_custom_call.1} parent=83 // pred_check_branch
          %696 = sbr.rel (%p694) target = $region148
        $region147: #{tpu_custom_call.1} parent=83 // pred_region
          %697 = dma.done [#allocation27], 16
        $region148: #{tpu_custom_call.1} parent=83 // pred_fallthru
          _
        %s698 = sand.u32 %s49, 1
        %s699 = scalar_lea.sflag [#allocation3], %s698
        %s700 = sand.u32 %s49, 1
        %s701 = smul.addr %s700, 16
        %s702 = scalar_lea.vmem [#allocation2], %s701
        %p703 = pneg %p62
        %p704 = pneg %p59
        %p705 = pneg %p83
        %p706 = pneg %p80
        %p707 = pneg %p104
        %p708 = pneg %p101
        %p709 = pneg %p125
        %p710 = pneg %p122
        %p711 = pneg %p146
        %p712 = pneg %p143
        %p713 = pneg %p167
        %p714 = pneg %p164
        %p715 = pneg %p188
        %p716 = pneg %p185
        %p717 = pneg %p209
        %p718 = pneg %p206
        %p719 = pneg %p230
        %p720 = pneg %p227
        %p721 = pneg %p251
        %p722 = pneg %p248
        %p723 = pneg %p272
        %p724 = pneg %p269
        %p725 = pneg %p293
        %p726 = pneg %p290
        %p727 = pneg %p314
        %p728 = pneg %p311
        %p729 = pneg %p335
        %p730 = pneg %p332
        %p731 = pneg %p356
        %p732 = pneg %p353
        %p733 = pneg %p377
        %p734 = pneg %p374
        %p735 = pneg %p403
        %p736 = pneg %p400
        %s737 = sand.u32 %s390, 1
        %s738 = scalar_lea.sflag [#allocation4], %s737
        %s739 = sand.u32 %s390, 1
        %s740 = smul.addr %s739, 8
        %s741 = scalar_lea.vmem [#allocation28], %s740
        %v743 = vld [vmem:[%s633] sm:$0xff]
        %v744 = vld [vmem:[%s633 + $0x8] sm:$0xff]
        %v745 = vpack.c.bf16 %v743, %v743
        %v746 = vpack.c.bf16 %v744, %v744
        %v747 = vld [vmem:[#allocation5] sm:$0xff]
        %v748 = vld [vmem:[#allocation5 + $0x8] sm:$0xff]
        %v749 = vld [vmem:[#allocation5 + $0x10] sm:$0xff]
        %v750 = vld [vmem:[#allocation5 + $0x18] sm:$0xff]
        %v751 = vld [vmem:[#allocation5 + $0x20] sm:$0xff]
        %v752 = vld [vmem:[#allocation5 + $0x28] sm:$0xff]
        %v753 = vld [vmem:[#allocation5 + $0x30] sm:$0xff]
        %v754 = vld [vmem:[#allocation5 + $0x38] sm:$0xff]
        %v755 = vld [vmem:[#allocation5 + $0x40] sm:$0xff]
        %v756 = vld [vmem:[#allocation5 + $0x48] sm:$0xff]
        %v757 = vld [vmem:[#allocation5 + $0x50] sm:$0xff]
        %v758 = vld [vmem:[#allocation5 + $0x58] sm:$0xff]
        %v759 = vld [vmem:[#allocation5 + $0x60] sm:$0xff]
        %v760 = vld [vmem:[#allocation5 + $0x68] sm:$0xff]
        %v761 = vld [vmem:[#allocation5 + $0x70] sm:$0xff]
        %v762 = vld [vmem:[#allocation5 + $0x78] sm:$0xff]
        %v763 = vld [vmem:[#allocation5 + $0x80] sm:$0xff]
        %v764 = vld [vmem:[#allocation5 + $0x88] sm:$0xff]
        %v765 = vld [vmem:[#allocation5 + $0x90] sm:$0xff]
        %v766 = vld [vmem:[#allocation5 + $0x98] sm:$0xff]
        %v767 = vld [vmem:[#allocation5 + $0xa0] sm:$0xff]
        %v768 = vld [vmem:[#allocation5 + $0xa8] sm:$0xff]
        %v769 = vld [vmem:[#allocation5 + $0xb0] sm:$0xff]
        %v770 = vld [vmem:[#allocation5 + $0xb8] sm:$0xff]
        %v771 = vld [vmem:[#allocation5 + $0xc0] sm:$0xff]
        %v772 = vld [vmem:[#allocation5 + $0xc8] sm:$0xff]
        %v773 = vld [vmem:[#allocation5 + $0xd0] sm:$0xff]
        %v774 = vld [vmem:[#allocation5 + $0xd8] sm:$0xff]
        %v775 = vld [vmem:[#allocation5 + $0xe0] sm:$0xff]
        %v776 = vld [vmem:[#allocation5 + $0xe8] sm:$0xff]
        %v777 = vld [vmem:[#allocation5 + $0xf0] sm:$0xff]
        %v778 = vld [vmem:[#allocation5 + $0xf8] sm:$0xff]
        %v779 = vld [vmem:[#allocation5 + $0x100] sm:$0xff]
        %v780 = vld [vmem:[#allocation5 + $0x108] sm:$0xff]
        %v781 = vld [vmem:[#allocation5 + $0x110] sm:$0xff]
        %v782 = vld [vmem:[#allocation5 + $0x118] sm:$0xff]
        %v783 = vld [vmem:[#allocation5 + $0x120] sm:$0xff]
        %v784 = vld [vmem:[#allocation5 + $0x128] sm:$0xff]
        %v785 = vld [vmem:[#allocation5 + $0x130] sm:$0xff]
        %v786 = vld [vmem:[#allocation5 + $0x138] sm:$0xff]
        %v787 = vld [vmem:[#allocation5 + $0x140] sm:$0xff]
        %v788 = vld [vmem:[#allocation5 + $0x148] sm:$0xff]
        %v789 = vld [vmem:[#allocation5 + $0x150] sm:$0xff]
        %v790 = vld [vmem:[#allocation5 + $0x158] sm:$0xff]
        %v791 = vld [vmem:[#allocation5 + $0x160] sm:$0xff]
        %v792 = vld [vmem:[#allocation5 + $0x168] sm:$0xff]
        %v793 = vld [vmem:[#allocation5 + $0x170] sm:$0xff]
        %v794 = vld [vmem:[#allocation5 + $0x178] sm:$0xff]
        %v795 = vld [vmem:[#allocation5 + $0x180] sm:$0xff]
        %v796 = vld [vmem:[#allocation5 + $0x188] sm:$0xff]
        %v797 = vld [vmem:[#allocation5 + $0x190] sm:$0xff]
        %v798 = vld [vmem:[#allocation5 + $0x198] sm:$0xff]
        %v799 = vld [vmem:[#allocation5 + $0x1a0] sm:$0xff]
        %v800 = vld [vmem:[#allocation5 + $0x1a8] sm:$0xff]
        %v801 = vld [vmem:[#allocation5 + $0x1b0] sm:$0xff]
        %v802 = vld [vmem:[#allocation5 + $0x1b8] sm:$0xff]
        %v803 = vld [vmem:[#allocation5 + $0x1c0] sm:$0xff]
        %v804 = vld [vmem:[#allocation5 + $0x1c8] sm:$0xff]
        %v805 = vld [vmem:[#allocation5 + $0x1d0] sm:$0xff]
        %v806 = vld [vmem:[#allocation5 + $0x1d8] sm:$0xff]
        %v807 = vld [vmem:[#allocation5 + $0x1e0] sm:$0xff]
        %v808 = vld [vmem:[#allocation5 + $0x1e8] sm:$0xff]
        %v809 = vld [vmem:[#allocation5 + $0x1f0] sm:$0xff]
        %v810 = vld [vmem:[#allocation5 + $0x1f8] sm:$0xff]
        %v811 = vld [vmem:[#allocation5 + $0x200] sm:$0xff]
        %v812 = vld [vmem:[#allocation5 + $0x208] sm:$0xff]
        %v813 = vld [vmem:[#allocation5 + $0x210] sm:$0xff]
        %v814 = vld [vmem:[#allocation5 + $0x218] sm:$0xff]
        %v815 = vld [vmem:[#allocation5 + $0x220] sm:$0xff]
        %v816 = vld [vmem:[#allocation5 + $0x228] sm:$0xff]
        %v817 = vld [vmem:[#allocation5 + $0x230] sm:$0xff]
        %v818 = vld [vmem:[#allocation5 + $0x238] sm:$0xff]
        %v819 = vld [vmem:[#allocation5 + $0x240] sm:$0xff]
        %v820 = vld [vmem:[#allocation5 + $0x248] sm:$0xff]
        %v821 = vld [vmem:[#allocation5 + $0x250] sm:$0xff]
        %v822 = vld [vmem:[#allocation5 + $0x258] sm:$0xff]
        %v823 = vld [vmem:[#allocation5 + $0x260] sm:$0xff]
        %v824 = vld [vmem:[#allocation5 + $0x268] sm:$0xff]
        %v825 = vld [vmem:[#allocation5 + $0x270] sm:$0xff]
        %v826 = vld [vmem:[#allocation5 + $0x278] sm:$0xff]
        %v827 = vld [vmem:[#allocation5 + $0x280] sm:$0xff]
        %v828 = vld [vmem:[#allocation5 + $0x288] sm:$0xff]
        %v829 = vld [vmem:[#allocation5 + $0x290] sm:$0xff]
        %v830 = vld [vmem:[#allocation5 + $0x298] sm:$0xff]
        %v831 = vld [vmem:[#allocation5 + $0x2a0] sm:$0xff]
        %v832 = vld [vmem:[#allocation5 + $0x2a8] sm:$0xff]
        %v833 = vld [vmem:[#allocation5 + $0x2b0] sm:$0xff]
        %v834 = vld [vmem:[#allocation5 + $0x2b8] sm:$0xff]
        %v835 = vld [vmem:[#allocation5 + $0x2c0] sm:$0xff]
        %v836 = vld [vmem:[#allocation5 + $0x2c8] sm:$0xff]
        %v837 = vld [vmem:[#allocation5 + $0x2d0] sm:$0xff]
        %v838 = vld [vmem:[#allocation5 + $0x2d8] sm:$0xff]
        %v839 = vld [vmem:[#allocation5 + $0x2e0] sm:$0xff]
        %v840 = vld [vmem:[#allocation5 + $0x2e8] sm:$0xff]
        %v841 = vld [vmem:[#allocation5 + $0x2f0] sm:$0xff]
        %v842 = vld [vmem:[#allocation5 + $0x2f8] sm:$0xff]
        %v843 = vld [vmem:[#allocation5 + $0x300] sm:$0xff]
        %v844 = vld [vmem:[#allocation5 + $0x308] sm:$0xff]
        %v845 = vld [vmem:[#allocation5 + $0x310] sm:$0xff]
        %v846 = vld [vmem:[#allocation5 + $0x318] sm:$0xff]
        %v847 = vld [vmem:[#allocation5 + $0x320] sm:$0xff]
        %v848 = vld [vmem:[#allocation5 + $0x328] sm:$0xff]
        %v849 = vld [vmem:[#allocation5 + $0x330] sm:$0xff]
        %v850 = vld [vmem:[#allocation5 + $0x338] sm:$0xff]
        %v851 = vld [vmem:[#allocation5 + $0x340] sm:$0xff]
        %v852 = vld [vmem:[#allocation5 + $0x348] sm:$0xff]
        %v853 = vld [vmem:[#allocation5 + $0x350] sm:$0xff]
        %v854 = vld [vmem:[#allocation5 + $0x358] sm:$0xff]
        %v855 = vld [vmem:[#allocation5 + $0x360] sm:$0xff]
        %v856 = vld [vmem:[#allocation5 + $0x368] sm:$0xff]
        %v857 = vld [vmem:[#allocation5 + $0x370] sm:$0xff]
        %v858 = vld [vmem:[#allocation5 + $0x378] sm:$0xff]
        %v859 = vld [vmem:[#allocation5 + $0x380] sm:$0xff]
        %v860 = vld [vmem:[#allocation5 + $0x388] sm:$0xff]
        %v861 = vld [vmem:[#allocation5 + $0x390] sm:$0xff]
        %v862 = vld [vmem:[#allocation5 + $0x398] sm:$0xff]
        %v863 = vld [vmem:[#allocation5 + $0x3a0] sm:$0xff]
        %v864 = vld [vmem:[#allocation5 + $0x3a8] sm:$0xff]
        %v865 = vld [vmem:[#allocation5 + $0x3b0] sm:$0xff]
        %v866 = vld [vmem:[#allocation5 + $0x3b8] sm:$0xff]
        %v867 = vld [vmem:[#allocation5 + $0x3c0] sm:$0xff]
        %v868 = vld [vmem:[#allocation5 + $0x3c8] sm:$0xff]
        %v869 = vld [vmem:[#allocation5 + $0x3d0] sm:$0xff]
        %v870 = vld [vmem:[#allocation5 + $0x3d8] sm:$0xff]
        %v871 = vld [vmem:[#allocation5 + $0x3e0] sm:$0xff]
        %v872 = vld [vmem:[#allocation5 + $0x3e8] sm:$0xff]
        %v873 = vld [vmem:[#allocation5 + $0x3f0] sm:$0xff]
        %v874 = vld [vmem:[#allocation5 + $0x3f8] sm:$0xff]
        %v875 = vld [vmem:[#allocation5 + $0x400] sm:$0xff]
        %v876 = vld [vmem:[#allocation5 + $0x408] sm:$0xff]
        %v877 = vld [vmem:[#allocation5 + $0x410] sm:$0xff]
        %v878 = vld [vmem:[#allocation5 + $0x418] sm:$0xff]
        %v879 = vld [vmem:[#allocation5 + $0x420] sm:$0xff]
        %v880 = vld [vmem:[#allocation5 + $0x428] sm:$0xff]
        %v881 = vld [vmem:[#allocation5 + $0x430] sm:$0xff]
        %v882 = vld [vmem:[#allocation5 + $0x438] sm:$0xff]
        %v883 = vld [vmem:[#allocation5 + $0x440] sm:$0xff]
        %v884 = vld [vmem:[#allocation5 + $0x448] sm:$0xff]
        %v885 = vld [vmem:[#allocation5 + $0x450] sm:$0xff]
        %v886 = vld [vmem:[#allocation5 + $0x458] sm:$0xff]
        %v887 = vld [vmem:[#allocation5 + $0x460] sm:$0xff]
        %v888 = vld [vmem:[#allocation5 + $0x468] sm:$0xff]
        %v889 = vld [vmem:[#allocation5 + $0x470] sm:$0xff]
        %v890 = vld [vmem:[#allocation5 + $0x478] sm:$0xff]
        %v891 = vld [vmem:[#allocation5 + $0x480] sm:$0xff]
        %v892 = vld [vmem:[#allocation5 + $0x488] sm:$0xff]
        %v893 = vld [vmem:[#allocation5 + $0x490] sm:$0xff]
        %v894 = vld [vmem:[#allocation5 + $0x498] sm:$0xff]
        %v895 = vld [vmem:[#allocation5 + $0x4a0] sm:$0xff]
        %v896 = vld [vmem:[#allocation5 + $0x4a8] sm:$0xff]
        %v897 = vld [vmem:[#allocation5 + $0x4b0] sm:$0xff]
        %v898 = vld [vmem:[#allocation5 + $0x4b8] sm:$0xff]
        %v899 = vld [vmem:[#allocation5 + $0x4c0] sm:$0xff]
        %v900 = vld [vmem:[#allocation5 + $0x4c8] sm:$0xff]
        %v901 = vld [vmem:[#allocation5 + $0x4d0] sm:$0xff]
        %v902 = vld [vmem:[#allocation5 + $0x4d8] sm:$0xff]
        %v903 = vld [vmem:[#allocation5 + $0x4e0] sm:$0xff]
        %v904 = vld [vmem:[#allocation5 + $0x4e8] sm:$0xff]
        %v905 = vld [vmem:[#allocation5 + $0x4f0] sm:$0xff]
        %v906 = vld [vmem:[#allocation5 + $0x4f8] sm:$0xff]
        %v907 = vld [vmem:[#allocation5 + $0x500] sm:$0xff]
        %v908 = vld [vmem:[#allocation5 + $0x508] sm:$0xff]
        %v909 = vld [vmem:[#allocation5 + $0x510] sm:$0xff]
        %v910 = vld [vmem:[#allocation5 + $0x518] sm:$0xff]
        %v911 = vld [vmem:[#allocation5 + $0x520] sm:$0xff]
        %v912 = vld [vmem:[#allocation5 + $0x528] sm:$0xff]
        %v913 = vld [vmem:[#allocation5 + $0x530] sm:$0xff]
        %v914 = vld [vmem:[#allocation5 + $0x538] sm:$0xff]
        %v915 = vld [vmem:[#allocation5 + $0x540] sm:$0xff]
        %v916 = vld [vmem:[#allocation5 + $0x548] sm:$0xff]
        %v917 = vld [vmem:[#allocation5 + $0x550] sm:$0xff]
        %v918 = vld [vmem:[#allocation5 + $0x558] sm:$0xff]
        %v919 = vld [vmem:[#allocation5 + $0x560] sm:$0xff]
        %v920 = vld [vmem:[#allocation5 + $0x568] sm:$0xff]
        %v921 = vld [vmem:[#allocation5 + $0x570] sm:$0xff]
        %v922 = vld [vmem:[#allocation5 + $0x578] sm:$0xff]
        %v923 = vld [vmem:[#allocation5 + $0x580] sm:$0xff]
        %v924 = vld [vmem:[#allocation5 + $0x588] sm:$0xff]
        %v925 = vld [vmem:[#allocation5 + $0x590] sm:$0xff]
        %v926 = vld [vmem:[#allocation5 + $0x598] sm:$0xff]
        %v927 = vld [vmem:[#allocation5 + $0x5a0] sm:$0xff]
        %v928 = vld [vmem:[#allocation5 + $0x5a8] sm:$0xff]
        %v929 = vld [vmem:[#allocation5 + $0x5b0] sm:$0xff]
        %v930 = vld [vmem:[#allocation5 + $0x5b8] sm:$0xff]
        %v931 = vld [vmem:[#allocation5 + $0x5c0] sm:$0xff]
        %v932 = vld [vmem:[#allocation5 + $0x5c8] sm:$0xff]
        %v933 = vld [vmem:[#allocation5 + $0x5d0] sm:$0xff]
        %v934 = vld [vmem:[#allocation5 + $0x5d8] sm:$0xff]
        %v935 = vld [vmem:[#allocation5 + $0x5e0] sm:$0xff]
        %v936 = vld [vmem:[#allocation5 + $0x5e8] sm:$0xff]
        %v937 = vld [vmem:[#allocation5 + $0x5f0] sm:$0xff]
        %v938 = vld [vmem:[#allocation5 + $0x5f8] sm:$0xff]
        %v939 = vld [vmem:[#allocation5 + $0x600] sm:$0xff]
        %v940 = vld [vmem:[#allocation5 + $0x608] sm:$0xff]
        %v941 = vld [vmem:[#allocation5 + $0x610] sm:$0xff]
        %v942 = vld [vmem:[#allocation5 + $0x618] sm:$0xff]
        %v943 = vld [vmem:[#allocation5 + $0x620] sm:$0xff]
        %v944 = vld [vmem:[#allocation5 + $0x628] sm:$0xff]
        %v945 = vld [vmem:[#allocation5 + $0x630] sm:$0xff]
        %v946 = vld [vmem:[#allocation5 + $0x638] sm:$0xff]
        %v947 = vld [vmem:[#allocation5 + $0x640] sm:$0xff]
        %v948 = vld [vmem:[#allocation5 + $0x648] sm:$0xff]
        %v949 = vld [vmem:[#allocation5 + $0x650] sm:$0xff]
        %v950 = vld [vmem:[#allocation5 + $0x658] sm:$0xff]
        %v951 = vld [vmem:[#allocation5 + $0x660] sm:$0xff]
        %v952 = vld [vmem:[#allocation5 + $0x668] sm:$0xff]
        %v953 = vld [vmem:[#allocation5 + $0x670] sm:$0xff]
        %v954 = vld [vmem:[#allocation5 + $0x678] sm:$0xff]
        %v955 = vld [vmem:[#allocation5 + $0x680] sm:$0xff]
        %v956 = vld [vmem:[#allocation5 + $0x688] sm:$0xff]
        %v957 = vld [vmem:[#allocation5 + $0x690] sm:$0xff]
        %v958 = vld [vmem:[#allocation5 + $0x698] sm:$0xff]
        %v959 = vld [vmem:[#allocation5 + $0x6a0] sm:$0xff]
        %v960 = vld [vmem:[#allocation5 + $0x6a8] sm:$0xff]
        %v961 = vld [vmem:[#allocation5 + $0x6b0] sm:$0xff]
        %v962 = vld [vmem:[#allocation5 + $0x6b8] sm:$0xff]
        %v963 = vld [vmem:[#allocation5 + $0x6c0] sm:$0xff]
        %v964 = vld [vmem:[#allocation5 + $0x6c8] sm:$0xff]
        %v965 = vld [vmem:[#allocation5 + $0x6d0] sm:$0xff]
        %v966 = vld [vmem:[#allocation5 + $0x6d8] sm:$0xff]
        %v967 = vld [vmem:[#allocation5 + $0x6e0] sm:$0xff]
        %v968 = vld [vmem:[#allocation5 + $0x6e8] sm:$0xff]
        %v969 = vld [vmem:[#allocation5 + $0x6f0] sm:$0xff]
        %v970 = vld [vmem:[#allocation5 + $0x6f8] sm:$0xff]
        %v971 = vld [vmem:[#allocation5 + $0x700] sm:$0xff]
        %v972 = vld [vmem:[#allocation5 + $0x708] sm:$0xff]
        %v973 = vld [vmem:[#allocation5 + $0x710] sm:$0xff]
        %v974 = vld [vmem:[#allocation5 + $0x718] sm:$0xff]
        %v975 = vld [vmem:[#allocation5 + $0x720] sm:$0xff]
        %v976 = vld [vmem:[#allocation5 + $0x728] sm:$0xff]
        %v977 = vld [vmem:[#allocation5 + $0x730] sm:$0xff]
        %v978 = vld [vmem:[#allocation5 + $0x738] sm:$0xff]
        %v979 = vld [vmem:[#allocation5 + $0x740] sm:$0xff]
        %v980 = vld [vmem:[#allocation5 + $0x748] sm:$0xff]
        %v981 = vld [vmem:[#allocation5 + $0x750] sm:$0xff]
        %v982 = vld [vmem:[#allocation5 + $0x758] sm:$0xff]
        %v983 = vld [vmem:[#allocation5 + $0x760] sm:$0xff]
        %v984 = vld [vmem:[#allocation5 + $0x768] sm:$0xff]
        %v985 = vld [vmem:[#allocation5 + $0x770] sm:$0xff]
        %v986 = vld [vmem:[#allocation5 + $0x778] sm:$0xff]
        %v1227 = vunpack.c.l.b16 %v747
        %v1228 = vunpack.c.h.b16 %v747
        %v1229 = vunpack.c.l.b16 %v748
        %v1230 = vunpack.c.h.b16 %v748
        %v1231 = vunpack.c.l.b16 %v749
        %v1232 = vunpack.c.h.b16 %v749
        %v1233 = vunpack.c.l.b16 %v750
        %v1234 = vunpack.c.h.b16 %v750
        %v1235 = vunpack.c.l.b16 %v751
        %v1236 = vunpack.c.h.b16 %v751
        %v1237 = vunpack.c.l.b16 %v752
        %v1238 = vunpack.c.h.b16 %v752
        %v1239 = vunpack.c.l.b16 %v753
        %v1240 = vunpack.c.h.b16 %v753
        %v1241 = vunpack.c.l.b16 %v754
        %v1242 = vunpack.c.h.b16 %v754
        %v1243 = vunpack.c.l.b16 %v755
        %v1244 = vunpack.c.h.b16 %v755
        %v1245 = vunpack.c.l.b16 %v756
        %v1246 = vunpack.c.h.b16 %v756
        %v1247 = vunpack.c.l.b16 %v757
        %v1248 = vunpack.c.h.b16 %v757
        %v1249 = vunpack.c.l.b16 %v758
        %v1250 = vunpack.c.h.b16 %v758
        %v1251 = vunpack.c.l.b16 %v759
        %v1252 = vunpack.c.h.b16 %v759
        %v1253 = vunpack.c.l.b16 %v760
        %v1254 = vunpack.c.h.b16 %v760
        %v1255 = vunpack.c.l.b16 %v761
        %v1256 = vunpack.c.h.b16 %v761
        %v1257 = vunpack.c.l.b16 %v762
        %v1258 = vunpack.c.h.b16 %v762
        %v1259 = vunpack.c.l.b16 %v763
        %v1260 = vunpack.c.h.b16 %v763
        %v1261 = vunpack.c.l.b16 %v764
        %v1262 = vunpack.c.h.b16 %v764
        %v1263 = vunpack.c.l.b16 %v765
        %v1264 = vunpack.c.h.b16 %v765
        %v1265 = vunpack.c.l.b16 %v766
        %v1266 = vunpack.c.h.b16 %v766
        %v1267 = vunpack.c.l.b16 %v767
        %v1268 = vunpack.c.h.b16 %v767
        %v1269 = vunpack.c.l.b16 %v768
        %v1270 = vunpack.c.h.b16 %v768
        %v1271 = vunpack.c.l.b16 %v769
        %v1272 = vunpack.c.h.b16 %v769
        %v1273 = vunpack.c.l.b16 %v770
        %v1274 = vunpack.c.h.b16 %v770
        %v1275 = vunpack.c.l.b16 %v771
        %v1276 = vunpack.c.h.b16 %v771
        %v1277 = vunpack.c.l.b16 %v772
        %v1278 = vunpack.c.h.b16 %v772
        %v1279 = vunpack.c.l.b16 %v773
        %v1280 = vunpack.c.h.b16 %v773
        %v1281 = vunpack.c.l.b16 %v774
        %v1282 = vunpack.c.h.b16 %v774
        %v1283 = vunpack.c.l.b16 %v775
        %v1284 = vunpack.c.h.b16 %v775
        %v1285 = vunpack.c.l.b16 %v776
        %v1286 = vunpack.c.h.b16 %v776
        %v1287 = vunpack.c.l.b16 %v777
        %v1288 = vunpack.c.h.b16 %v777
        %v1289 = vunpack.c.l.b16 %v778
        %v1290 = vunpack.c.h.b16 %v778
        %v1291 = vunpack.c.l.b16 %v779
        %v1292 = vunpack.c.h.b16 %v779
        %v1293 = vunpack.c.l.b16 %v780
        %v1294 = vunpack.c.h.b16 %v780
        %v1295 = vunpack.c.l.b16 %v781
        %v1296 = vunpack.c.h.b16 %v781
        %v1297 = vunpack.c.l.b16 %v782
        %v1298 = vunpack.c.h.b16 %v782
        %v1299 = vunpack.c.l.b16 %v783
        %v1300 = vunpack.c.h.b16 %v783
        %v1301 = vunpack.c.l.b16 %v784
        %v1302 = vunpack.c.h.b16 %v784
        %v1303 = vunpack.c.l.b16 %v785
        %v1304 = vunpack.c.h.b16 %v785
        %v1305 = vunpack.c.l.b16 %v786
        %v1306 = vunpack.c.h.b16 %v786
        %v1307 = vunpack.c.l.b16 %v787
        %v1308 = vunpack.c.h.b16 %v787
        %v1309 = vunpack.c.l.b16 %v788
        %v1310 = vunpack.c.h.b16 %v788
        %v1311 = vunpack.c.l.b16 %v789
        %v1312 = vunpack.c.h.b16 %v789
        %v1313 = vunpack.c.l.b16 %v790
        %v1314 = vunpack.c.h.b16 %v790
        %v1315 = vunpack.c.l.b16 %v791
        %v1316 = vunpack.c.h.b16 %v791
        %v1317 = vunpack.c.l.b16 %v792
        %v1318 = vunpack.c.h.b16 %v792
        %v1319 = vunpack.c.l.b16 %v793
        %v1320 = vunpack.c.h.b16 %v793
        %v1321 = vunpack.c.l.b16 %v794
        %v1322 = vunpack.c.h.b16 %v794
        %v1323 = vunpack.c.l.b16 %v795
        %v1324 = vunpack.c.h.b16 %v795
        %v1325 = vunpack.c.l.b16 %v796
        %v1326 = vunpack.c.h.b16 %v796
        %v1327 = vunpack.c.l.b16 %v797
        %v1328 = vunpack.c.h.b16 %v797
        %v1329 = vunpack.c.l.b16 %v798
        %v1330 = vunpack.c.h.b16 %v798
        %v1331 = vunpack.c.l.b16 %v799
        %v1332 = vunpack.c.h.b16 %v799
        %v1333 = vunpack.c.l.b16 %v800
        %v1334 = vunpack.c.h.b16 %v800
        %v1335 = vunpack.c.l.b16 %v801
        %v1336 = vunpack.c.h.b16 %v801
        %v1337 = vunpack.c.l.b16 %v802
        %v1338 = vunpack.c.h.b16 %v802
        %v1339 = vunpack.c.l.b16 %v803
        %v1340 = vunpack.c.h.b16 %v803
        %v1341 = vunpack.c.l.b16 %v804
        %v1342 = vunpack.c.h.b16 %v804
        %v1343 = vunpack.c.l.b16 %v805
        %v1344 = vunpack.c.h.b16 %v805
        %v1345 = vunpack.c.l.b16 %v806
        %v1346 = vunpack.c.h.b16 %v806
        %v1347 = vunpack.c.l.b16 %v807
        %v1348 = vunpack.c.h.b16 %v807
        %v1349 = vunpack.c.l.b16 %v808
        %v1350 = vunpack.c.h.b16 %v808
        %v1351 = vunpack.c.l.b16 %v809
        %v1352 = vunpack.c.h.b16 %v809
        %v1353 = vunpack.c.l.b16 %v810
        %v1354 = vunpack.c.h.b16 %v810
        %v1355 = vunpack.c.l.b16 %v811
        %v1356 = vunpack.c.h.b16 %v811
        %v1357 = vunpack.c.l.b16 %v812
        %v1358 = vunpack.c.h.b16 %v812
        %v1359 = vunpack.c.l.b16 %v813
        %v1360 = vunpack.c.h.b16 %v813
        %v1361 = vunpack.c.l.b16 %v814
        %v1362 = vunpack.c.h.b16 %v814
        %v1363 = vunpack.c.l.b16 %v815
        %v1364 = vunpack.c.h.b16 %v815
        %v1365 = vunpack.c.l.b16 %v816
        %v1366 = vunpack.c.h.b16 %v816
        %v1367 = vunpack.c.l.b16 %v817
        %v1368 = vunpack.c.h.b16 %v817
        %v1369 = vunpack.c.l.b16 %v818
        %v1370 = vunpack.c.h.b16 %v818
        %v1371 = vunpack.c.l.b16 %v819
        %v1372 = vunpack.c.h.b16 %v819
        %v1373 = vunpack.c.l.b16 %v820
        %v1374 = vunpack.c.h.b16 %v820
        %v1375 = vunpack.c.l.b16 %v821
        %v1376 = vunpack.c.h.b16 %v821
        %v1377 = vunpack.c.l.b16 %v822
        %v1378 = vunpack.c.h.b16 %v822
        %v1379 = vunpack.c.l.b16 %v823
        %v1380 = vunpack.c.h.b16 %v823
        %v1381 = vunpack.c.l.b16 %v824
        %v1382 = vunpack.c.h.b16 %v824
        %v1383 = vunpack.c.l.b16 %v825
        %v1384 = vunpack.c.h.b16 %v825
        %v1385 = vunpack.c.l.b16 %v826
        %v1386 = vunpack.c.h.b16 %v826
        %v1387 = vunpack.c.l.b16 %v827
        %v1388 = vunpack.c.h.b16 %v827
        %v1389 = vunpack.c.l.b16 %v828
        %v1390 = vunpack.c.h.b16 %v828
        %v1391 = vunpack.c.l.b16 %v829
        %v1392 = vunpack.c.h.b16 %v829
        %v1393 = vunpack.c.l.b16 %v830
        %v1394 = vunpack.c.h.b16 %v830
        %v1395 = vunpack.c.l.b16 %v831
        %v1396 = vunpack.c.h.b16 %v831
        %v1397 = vunpack.c.l.b16 %v832
        %v1398 = vunpack.c.h.b16 %v832
        %v1399 = vunpack.c.l.b16 %v833
        %v1400 = vunpack.c.h.b16 %v833
        %v1401 = vunpack.c.l.b16 %v834
        %v1402 = vunpack.c.h.b16 %v834
        %v1403 = vunpack.c.l.b16 %v835
        %v1404 = vunpack.c.h.b16 %v835
        %v1405 = vunpack.c.l.b16 %v836
        %v1406 = vunpack.c.h.b16 %v836
        %v1407 = vunpack.c.l.b16 %v837
        %v1408 = vunpack.c.h.b16 %v837
        %v1409 = vunpack.c.l.b16 %v838
        %v1410 = vunpack.c.h.b16 %v838
        %v1411 = vunpack.c.l.b16 %v839
        %v1412 = vunpack.c.h.b16 %v839
        %v1413 = vunpack.c.l.b16 %v840
        %v1414 = vunpack.c.h.b16 %v840
        %v1415 = vunpack.c.l.b16 %v841
        %v1416 = vunpack.c.h.b16 %v841
        %v1417 = vunpack.c.l.b16 %v842
        %v1418 = vunpack.c.h.b16 %v842
        %v1419 = vunpack.c.l.b16 %v843
        %v1420 = vunpack.c.h.b16 %v843
        %v1421 = vunpack.c.l.b16 %v844
        %v1422 = vunpack.c.h.b16 %v844
        %v1423 = vunpack.c.l.b16 %v845
        %v1424 = vunpack.c.h.b16 %v845
        %v1425 = vunpack.c.l.b16 %v846
        %v1426 = vunpack.c.h.b16 %v846
        %v1427 = vunpack.c.l.b16 %v847
        %v1428 = vunpack.c.h.b16 %v847
        %v1429 = vunpack.c.l.b16 %v848
        %v1430 = vunpack.c.h.b16 %v848
        %v1431 = vunpack.c.l.b16 %v849
        %v1432 = vunpack.c.h.b16 %v849
        %v1433 = vunpack.c.l.b16 %v850
        %v1434 = vunpack.c.h.b16 %v850
        %v1435 = vunpack.c.l.b16 %v851
        %v1436 = vunpack.c.h.b16 %v851
        %v1437 = vunpack.c.l.b16 %v852
        %v1438 = vunpack.c.h.b16 %v852
        %v1439 = vunpack.c.l.b16 %v853
        %v1440 = vunpack.c.h.b16 %v853
        %v1441 = vunpack.c.l.b16 %v854
        %v1442 = vunpack.c.h.b16 %v854
        %v1443 = vunpack.c.l.b16 %v855
        %v1444 = vunpack.c.h.b16 %v855
        %v1445 = vunpack.c.l.b16 %v856
        %v1446 = vunpack.c.h.b16 %v856
        %v1447 = vunpack.c.l.b16 %v857
        %v1448 = vunpack.c.h.b16 %v857
        %v1449 = vunpack.c.l.b16 %v858
        %v1450 = vunpack.c.h.b16 %v858
        %v1451 = vunpack.c.l.b16 %v859
        %v1452 = vunpack.c.h.b16 %v859
        %v1453 = vunpack.c.l.b16 %v860
        %v1454 = vunpack.c.h.b16 %v860
        %v1455 = vunpack.c.l.b16 %v861
        %v1456 = vunpack.c.h.b16 %v861
        %v1457 = vunpack.c.l.b16 %v862
        %v1458 = vunpack.c.h.b16 %v862
        %v1459 = vunpack.c.l.b16 %v863
        %v1460 = vunpack.c.h.b16 %v863
        %v1461 = vunpack.c.l.b16 %v864
        %v1462 = vunpack.c.h.b16 %v864
        %v1463 = vunpack.c.l.b16 %v865
        %v1464 = vunpack.c.h.b16 %v865
        %v1465 = vunpack.c.l.b16 %v866
        %v1466 = vunpack.c.h.b16 %v866
        %v1467 = vunpack.c.l.b16 %v867
        %v1468 = vunpack.c.h.b16 %v867
        %v1469 = vunpack.c.l.b16 %v868
        %v1470 = vunpack.c.h.b16 %v868
        %v1471 = vunpack.c.l.b16 %v869
        %v1472 = vunpack.c.h.b16 %v869
        %v1473 = vunpack.c.l.b16 %v870
        %v1474 = vunpack.c.h.b16 %v870
        %v1475 = vunpack.c.l.b16 %v871
        %v1476 = vunpack.c.h.b16 %v871
        %v1477 = vunpack.c.l.b16 %v872
        %v1478 = vunpack.c.h.b16 %v872
        %v1479 = vunpack.c.l.b16 %v873
        %v1480 = vunpack.c.h.b16 %v873
        %v1481 = vunpack.c.l.b16 %v874
        %v1482 = vunpack.c.h.b16 %v874
        %v1483 = vunpack.c.l.b16 %v875
        %v1484 = vunpack.c.h.b16 %v875
        %v1485 = vunpack.c.l.b16 %v876
        %v1486 = vunpack.c.h.b16 %v876
        %v1487 = vunpack.c.l.b16 %v877
        %v1488 = vunpack.c.h.b16 %v877
        %v1489 = vunpack.c.l.b16 %v878
        %v1490 = vunpack.c.h.b16 %v878
        %v1491 = vunpack.c.l.b16 %v879
        %v1492 = vunpack.c.h.b16 %v879
        %v1493 = vunpack.c.l.b16 %v880
        %v1494 = vunpack.c.h.b16 %v880
        %v1495 = vunpack.c.l.b16 %v881
        %v1496 = vunpack.c.h.b16 %v881
        %v1497 = vunpack.c.l.b16 %v882
        %v1498 = vunpack.c.h.b16 %v882
        %v1499 = vunpack.c.l.b16 %v883
        %v1500 = vunpack.c.h.b16 %v883
        %v1501 = vunpack.c.l.b16 %v884
        %v1502 = vunpack.c.h.b16 %v884
        %v1503 = vunpack.c.l.b16 %v885
        %v1504 = vunpack.c.h.b16 %v885
        %v1505 = vunpack.c.l.b16 %v886
        %v1506 = vunpack.c.h.b16 %v886
        %v1507 = vunpack.c.l.b16 %v887
        %v1508 = vunpack.c.h.b16 %v887
        %v1509 = vunpack.c.l.b16 %v888
        %v1510 = vunpack.c.h.b16 %v888
        %v1511 = vunpack.c.l.b16 %v889
        %v1512 = vunpack.c.h.b16 %v889
        %v1513 = vunpack.c.l.b16 %v890
        %v1514 = vunpack.c.h.b16 %v890
        %v1515 = vunpack.c.l.b16 %v891
        %v1516 = vunpack.c.h.b16 %v891
        %v1517 = vunpack.c.l.b16 %v892
        %v1518 = vunpack.c.h.b16 %v892
        %v1519 = vunpack.c.l.b16 %v893
        %v1520 = vunpack.c.h.b16 %v893
        %v1521 = vunpack.c.l.b16 %v894
        %v1522 = vunpack.c.h.b16 %v894
        %v1523 = vunpack.c.l.b16 %v895
        %v1524 = vunpack.c.h.b16 %v895
        %v1525 = vunpack.c.l.b16 %v896
        %v1526 = vunpack.c.h.b16 %v896
        %v1527 = vunpack.c.l.b16 %v897
        %v1528 = vunpack.c.h.b16 %v897
        %v1529 = vunpack.c.l.b16 %v898
        %v1530 = vunpack.c.h.b16 %v898
        %v1531 = vunpack.c.l.b16 %v899
        %v1532 = vunpack.c.h.b16 %v899
        %v1533 = vunpack.c.l.b16 %v900
        %v1534 = vunpack.c.h.b16 %v900
        %v1535 = vunpack.c.l.b16 %v901
        %v1536 = vunpack.c.h.b16 %v901
        %v1537 = vunpack.c.l.b16 %v902
        %v1538 = vunpack.c.h.b16 %v902
        %v1539 = vunpack.c.l.b16 %v903
        %v1540 = vunpack.c.h.b16 %v903
        %v1541 = vunpack.c.l.b16 %v904
        %v1542 = vunpack.c.h.b16 %v904
        %v1543 = vunpack.c.l.b16 %v905
        %v1544 = vunpack.c.h.b16 %v905
        %v1545 = vunpack.c.l.b16 %v906
        %v1546 = vunpack.c.h.b16 %v906
        %v1547 = vunpack.c.l.b16 %v907
        %v1548 = vunpack.c.h.b16 %v907
        %v1549 = vunpack.c.l.b16 %v908
        %v1550 = vunpack.c.h.b16 %v908
        %v1551 = vunpack.c.l.b16 %v909
        %v1552 = vunpack.c.h.b16 %v909
        %v1553 = vunpack.c.l.b16 %v910
        %v1554 = vunpack.c.h.b16 %v910
        %v1555 = vunpack.c.l.b16 %v911
        %v1556 = vunpack.c.h.b16 %v911
        %v1557 = vunpack.c.l.b16 %v912
        %v1558 = vunpack.c.h.b16 %v912
        %v1559 = vunpack.c.l.b16 %v913
        %v1560 = vunpack.c.h.b16 %v913
        %v1561 = vunpack.c.l.b16 %v914
        %v1562 = vunpack.c.h.b16 %v914
        %v1563 = vunpack.c.l.b16 %v915
        %v1564 = vunpack.c.h.b16 %v915
        %v1565 = vunpack.c.l.b16 %v916
        %v1566 = vunpack.c.h.b16 %v916
        %v1567 = vunpack.c.l.b16 %v917
        %v1568 = vunpack.c.h.b16 %v917
        %v1569 = vunpack.c.l.b16 %v918
        %v1570 = vunpack.c.h.b16 %v918
        %v1571 = vunpack.c.l.b16 %v919
        %v1572 = vunpack.c.h.b16 %v919
        %v1573 = vunpack.c.l.b16 %v920
        %v1574 = vunpack.c.h.b16 %v920
        %v1575 = vunpack.c.l.b16 %v921
        %v1576 = vunpack.c.h.b16 %v921
        %v1577 = vunpack.c.l.b16 %v922
        %v1578 = vunpack.c.h.b16 %v922
        %v1579 = vunpack.c.l.b16 %v923
        %v1580 = vunpack.c.h.b16 %v923
        %v1581 = vunpack.c.l.b16 %v924
        %v1582 = vunpack.c.h.b16 %v924
        %v1583 = vunpack.c.l.b16 %v925
        %v1584 = vunpack.c.h.b16 %v925
        %v1585 = vunpack.c.l.b16 %v926
        %v1586 = vunpack.c.h.b16 %v926
        %v1587 = vunpack.c.l.b16 %v927
        %v1588 = vunpack.c.h.b16 %v927
        %v1589 = vunpack.c.l.b16 %v928
        %v1590 = vunpack.c.h.b16 %v928
        %v1591 = vunpack.c.l.b16 %v929
        %v1592 = vunpack.c.h.b16 %v929
        %v1593 = vunpack.c.l.b16 %v930
        %v1594 = vunpack.c.h.b16 %v930
        %v1595 = vunpack.c.l.b16 %v931
        %v1596 = vunpack.c.h.b16 %v931
        %v1597 = vunpack.c.l.b16 %v932
        %v1598 = vunpack.c.h.b16 %v932
        %v1599 = vunpack.c.l.b16 %v933
        %v1600 = vunpack.c.h.b16 %v933
        %v1601 = vunpack.c.l.b16 %v934
        %v1602 = vunpack.c.h.b16 %v934
        %v1603 = vunpack.c.l.b16 %v935
        %v1604 = vunpack.c.h.b16 %v935
        %v1605 = vunpack.c.l.b16 %v936
        %v1606 = vunpack.c.h.b16 %v936
        %v1607 = vunpack.c.l.b16 %v937
        %v1608 = vunpack.c.h.b16 %v937
        %v1609 = vunpack.c.l.b16 %v938
        %v1610 = vunpack.c.h.b16 %v938
        %v1611 = vunpack.c.l.b16 %v939
        %v1612 = vunpack.c.h.b16 %v939
        %v1613 = vunpack.c.l.b16 %v940
        %v1614 = vunpack.c.h.b16 %v940
        %v1615 = vunpack.c.l.b16 %v941
        %v1616 = vunpack.c.h.b16 %v941
        %v1617 = vunpack.c.l.b16 %v942
        %v1618 = vunpack.c.h.b16 %v942
        %v1619 = vunpack.c.l.b16 %v943
        %v1620 = vunpack.c.h.b16 %v943
        %v1621 = vunpack.c.l.b16 %v944
        %v1622 = vunpack.c.h.b16 %v944
        %v1623 = vunpack.c.l.b16 %v945
        %v1624 = vunpack.c.h.b16 %v945
        %v1625 = vunpack.c.l.b16 %v946
        %v1626 = vunpack.c.h.b16 %v946
        %v1627 = vunpack.c.l.b16 %v947
        %v1628 = vunpack.c.h.b16 %v947
        %v1629 = vunpack.c.l.b16 %v948
        %v1630 = vunpack.c.h.b16 %v948
        %v1631 = vunpack.c.l.b16 %v949
        %v1632 = vunpack.c.h.b16 %v949
        %v1633 = vunpack.c.l.b16 %v950
        %v1634 = vunpack.c.h.b16 %v950
        %v1635 = vunpack.c.l.b16 %v951
        %v1636 = vunpack.c.h.b16 %v951
        %v1637 = vunpack.c.l.b16 %v952
        %v1638 = vunpack.c.h.b16 %v952
        %v1639 = vunpack.c.l.b16 %v953
        %v1640 = vunpack.c.h.b16 %v953
        %v1641 = vunpack.c.l.b16 %v954
        %v1642 = vunpack.c.h.b16 %v954
        %v1643 = vunpack.c.l.b16 %v955
        %v1644 = vunpack.c.h.b16 %v955
        %v1645 = vunpack.c.l.b16 %v956
        %v1646 = vunpack.c.h.b16 %v956
        %v1647 = vunpack.c.l.b16 %v957
        %v1648 = vunpack.c.h.b16 %v957
        %v1649 = vunpack.c.l.b16 %v958
        %v1650 = vunpack.c.h.b16 %v958
        %v1651 = vunpack.c.l.b16 %v959
        %v1652 = vunpack.c.h.b16 %v959
        %v1653 = vunpack.c.l.b16 %v960
        %v1654 = vunpack.c.h.b16 %v960
        %v1655 = vunpack.c.l.b16 %v961
        %v1656 = vunpack.c.h.b16 %v961
        %v1657 = vunpack.c.l.b16 %v962
        %v1658 = vunpack.c.h.b16 %v962
        %v1659 = vunpack.c.l.b16 %v963
        %v1660 = vunpack.c.h.b16 %v963
        %v1661 = vunpack.c.l.b16 %v964
        %v1662 = vunpack.c.h.b16 %v964
        %v1663 = vunpack.c.l.b16 %v965
        %v1664 = vunpack.c.h.b16 %v965
        %v1665 = vunpack.c.l.b16 %v966
        %v1666 = vunpack.c.h.b16 %v966
        %v1667 = vunpack.c.l.b16 %v967
        %v1668 = vunpack.c.h.b16 %v967
        %v1669 = vunpack.c.l.b16 %v968
        %v1670 = vunpack.c.h.b16 %v968
        %v1671 = vunpack.c.l.b16 %v969
        %v1672 = vunpack.c.h.b16 %v969
        %v1673 = vunpack.c.l.b16 %v970
        %v1674 = vunpack.c.h.b16 %v970
        %v1675 = vunpack.c.l.b16 %v971
        %v1676 = vunpack.c.h.b16 %v971
        %v1677 = vunpack.c.l.b16 %v972
        %v1678 = vunpack.c.h.b16 %v972
        %v1679 = vunpack.c.l.b16 %v973
        %v1680 = vunpack.c.h.b16 %v973
        %v1681 = vunpack.c.l.b16 %v974
        %v1682 = vunpack.c.h.b16 %v974
        %v1683 = vunpack.c.l.b16 %v975
        %v1684 = vunpack.c.h.b16 %v975
        %v1685 = vunpack.c.l.b16 %v976
        %v1686 = vunpack.c.h.b16 %v976
        %v1687 = vunpack.c.l.b16 %v977
        %v1688 = vunpack.c.h.b16 %v977
        %v1689 = vunpack.c.l.b16 %v978
        %v1690 = vunpack.c.h.b16 %v978
        %v1691 = vunpack.c.l.b16 %v979
        %v1692 = vunpack.c.h.b16 %v979
        %v1693 = vunpack.c.l.b16 %v980
        %v1694 = vunpack.c.h.b16 %v980
        %v1695 = vunpack.c.l.b16 %v981
        %v1696 = vunpack.c.h.b16 %v981
        %v1697 = vunpack.c.l.b16 %v982
        %v1698 = vunpack.c.h.b16 %v982
        %v1699 = vunpack.c.l.b16 %v983
        %v1700 = vunpack.c.h.b16 %v983
        %v1701 = vunpack.c.l.b16 %v984
        %v1702 = vunpack.c.h.b16 %v984
        %v1703 = vunpack.c.l.b16 %v985
        %v1704 = vunpack.c.h.b16 %v985
        %v1705 = vunpack.c.l.b16 %v986
        %v1706 = vunpack.c.h.b16 %v986
        %v1707 = vpack.c.b16 %v1243, %v1227
        %v1708 = vpack.c.b16 %v1244, %v1228
        %v1709 = vpack.c.b16 %v1245, %v1229
        %v1710 = vpack.c.b16 %v1246, %v1230
        %v1711 = vpack.c.b16 %v1247, %v1231
        %v1712 = vpack.c.b16 %v1248, %v1232
        %v1713 = vpack.c.b16 %v1249, %v1233
        %v1714 = vpack.c.b16 %v1250, %v1234
        %v1715 = vpack.c.b16 %v1251, %v1235
        %v1716 = vpack.c.b16 %v1252, %v1236
        %v1717 = vpack.c.b16 %v1253, %v1237
        %v1718 = vpack.c.b16 %v1254, %v1238
        %v1719 = vpack.c.b16 %v1255, %v1239
        %v1720 = vpack.c.b16 %v1256, %v1240
        %v1721 = vpack.c.b16 %v1257, %v1241
        %v1722 = vpack.c.b16 %v1258, %v1242
        %v1723 = vpack.c.b16 %v1275, %v1259
        %v1724 = vpack.c.b16 %v1276, %v1260
        %v1725 = vpack.c.b16 %v1277, %v1261
        %v1726 = vpack.c.b16 %v1278, %v1262
        %v1727 = vpack.c.b16 %v1279, %v1263
        %v1728 = vpack.c.b16 %v1280, %v1264
        %v1729 = vpack.c.b16 %v1281, %v1265
        %v1730 = vpack.c.b16 %v1282, %v1266
        %v1731 = vpack.c.b16 %v1283, %v1267
        %v1732 = vpack.c.b16 %v1284, %v1268
        %v1733 = vpack.c.b16 %v1285, %v1269
        %v1734 = vpack.c.b16 %v1286, %v1270
        %v1735 = vpack.c.b16 %v1287, %v1271
        %v1736 = vpack.c.b16 %v1288, %v1272
        %v1737 = vpack.c.b16 %v1289, %v1273
        %v1738 = vpack.c.b16 %v1290, %v1274
        %v1739 = vpack.c.b16 %v1307, %v1291
        %v1740 = vpack.c.b16 %v1308, %v1292
        %v1741 = vpack.c.b16 %v1309, %v1293
        %v1742 = vpack.c.b16 %v1310, %v1294
        %v1743 = vpack.c.b16 %v1311, %v1295
        %v1744 = vpack.c.b16 %v1312, %v1296
        %v1745 = vpack.c.b16 %v1313, %v1297
        %v1746 = vpack.c.b16 %v1314, %v1298
        %v1747 = vpack.c.b16 %v1315, %v1299
        %v1748 = vpack.c.b16 %v1316, %v1300
        %v1749 = vpack.c.b16 %v1317, %v1301
        %v1750 = vpack.c.b16 %v1318, %v1302
        %v1751 = vpack.c.b16 %v1319, %v1303
        %v1752 = vpack.c.b16 %v1320, %v1304
        %v1753 = vpack.c.b16 %v1321, %v1305
        %v1754 = vpack.c.b16 %v1322, %v1306
        %v1755 = vpack.c.b16 %v1339, %v1323
        %v1756 = vpack.c.b16 %v1340, %v1324
        %v1757 = vpack.c.b16 %v1341, %v1325
        %v1758 = vpack.c.b16 %v1342, %v1326
        %v1759 = vpack.c.b16 %v1343, %v1327
        %v1760 = vpack.c.b16 %v1344, %v1328
        %v1761 = vpack.c.b16 %v1345, %v1329
        %v1762 = vpack.c.b16 %v1346, %v1330
        %v1763 = vpack.c.b16 %v1347, %v1331
        %v1764 = vpack.c.b16 %v1348, %v1332
        %v1765 = vpack.c.b16 %v1349, %v1333
        %v1766 = vpack.c.b16 %v1350, %v1334
        %v1767 = vpack.c.b16 %v1351, %v1335
        %v1768 = vpack.c.b16 %v1352, %v1336
        %v1769 = vpack.c.b16 %v1353, %v1337
        %v1770 = vpack.c.b16 %v1354, %v1338
        %v1771 = vpack.c.b16 %v1371, %v1355
        %v1772 = vpack.c.b16 %v1372, %v1356
        %v1773 = vpack.c.b16 %v1373, %v1357
        %v1774 = vpack.c.b16 %v1374, %v1358
        %v1775 = vpack.c.b16 %v1375, %v1359
        %v1776 = vpack.c.b16 %v1376, %v1360
        %v1777 = vpack.c.b16 %v1377, %v1361
        %v1778 = vpack.c.b16 %v1378, %v1362
        %v1779 = vpack.c.b16 %v1379, %v1363
        %v1780 = vpack.c.b16 %v1380, %v1364
        %v1781 = vpack.c.b16 %v1381, %v1365
        %v1782 = vpack.c.b16 %v1382, %v1366
        %v1783 = vpack.c.b16 %v1383, %v1367
        %v1784 = vpack.c.b16 %v1384, %v1368
        %v1785 = vpack.c.b16 %v1385, %v1369
        %v1786 = vpack.c.b16 %v1386, %v1370
        %v1787 = vpack.c.b16 %v1403, %v1387
        %v1788 = vpack.c.b16 %v1404, %v1388
        %v1789 = vpack.c.b16 %v1405, %v1389
        %v1790 = vpack.c.b16 %v1406, %v1390
        %v1791 = vpack.c.b16 %v1407, %v1391
        %v1792 = vpack.c.b16 %v1408, %v1392
        %v1793 = vpack.c.b16 %v1409, %v1393
        %v1794 = vpack.c.b16 %v1410, %v1394
        %v1795 = vpack.c.b16 %v1411, %v1395
        %v1796 = vpack.c.b16 %v1412, %v1396
        %v1797 = vpack.c.b16 %v1413, %v1397
        %v1798 = vpack.c.b16 %v1414, %v1398
        %v1799 = vpack.c.b16 %v1415, %v1399
        %v1800 = vpack.c.b16 %v1416, %v1400
        %v1801 = vpack.c.b16 %v1417, %v1401
        %v1802 = vpack.c.b16 %v1418, %v1402
        %v1803 = vpack.c.b16 %v1435, %v1419
        %v1804 = vpack.c.b16 %v1436, %v1420
        %v1805 = vpack.c.b16 %v1437, %v1421
        %v1806 = vpack.c.b16 %v1438, %v1422
        %v1807 = vpack.c.b16 %v1439, %v1423
        %v1808 = vpack.c.b16 %v1440, %v1424
        %v1809 = vpack.c.b16 %v1441, %v1425
        %v1810 = vpack.c.b16 %v1442, %v1426
        %v1811 = vpack.c.b16 %v1443, %v1427
        %v1812 = vpack.c.b16 %v1444, %v1428
        %v1813 = vpack.c.b16 %v1445, %v1429
        %v1814 = vpack.c.b16 %v1446, %v1430
        %v1815 = vpack.c.b16 %v1447, %v1431
        %v1816 = vpack.c.b16 %v1448, %v1432
        %v1817 = vpack.c.b16 %v1449, %v1433
        %v1818 = vpack.c.b16 %v1450, %v1434
        %v1819 = vpack.c.b16 %v1467, %v1451
        %v1820 = vpack.c.b16 %v1468, %v1452
        %v1821 = vpack.c.b16 %v1469, %v1453
        %v1822 = vpack.c.b16 %v1470, %v1454
        %v1823 = vpack.c.b16 %v1471, %v1455
        %v1824 = vpack.c.b16 %v1472, %v1456
        %v1825 = vpack.c.b16 %v1473, %v1457
        %v1826 = vpack.c.b16 %v1474, %v1458
        %v1827 = vpack.c.b16 %v1475, %v1459
        %v1828 = vpack.c.b16 %v1476, %v1460
        %v1829 = vpack.c.b16 %v1477, %v1461
        %v1830 = vpack.c.b16 %v1478, %v1462
        %v1831 = vpack.c.b16 %v1479, %v1463
        %v1832 = vpack.c.b16 %v1480, %v1464
        %v1833 = vpack.c.b16 %v1481, %v1465
        %v1834 = vpack.c.b16 %v1482, %v1466
        %v1835 = vpack.c.b16 %v1499, %v1483
        %v1836 = vpack.c.b16 %v1500, %v1484
        %v1837 = vpack.c.b16 %v1501, %v1485
        %v1838 = vpack.c.b16 %v1502, %v1486
        %v1839 = vpack.c.b16 %v1503, %v1487
        %v1840 = vpack.c.b16 %v1504, %v1488
        %v1841 = vpack.c.b16 %v1505, %v1489
        %v1842 = vpack.c.b16 %v1506, %v1490
        %v1843 = vpack.c.b16 %v1507, %v1491
        %v1844 = vpack.c.b16 %v1508, %v1492
        %v1845 = vpack.c.b16 %v1509, %v1493
        %v1846 = vpack.c.b16 %v1510, %v1494
        %v1847 = vpack.c.b16 %v1511, %v1495
        %v1848 = vpack.c.b16 %v1512, %v1496
        %v1849 = vpack.c.b16 %v1513, %v1497
        %v1850 = vpack.c.b16 %v1514, %v1498
        %v1851 = vpack.c.b16 %v1531, %v1515
        %v1852 = vpack.c.b16 %v1532, %v1516
        %v1853 = vpack.c.b16 %v1533, %v1517
        %v1854 = vpack.c.b16 %v1534, %v1518
        %v1855 = vpack.c.b16 %v1535, %v1519
        %v1856 = vpack.c.b16 %v1536, %v1520
        %v1857 = vpack.c.b16 %v1537, %v1521
        %v1858 = vpack.c.b16 %v1538, %v1522
        %v1859 = vpack.c.b16 %v1539, %v1523
        %v1860 = vpack.c.b16 %v1540, %v1524
        %v1861 = vpack.c.b16 %v1541, %v1525
        %v1862 = vpack.c.b16 %v1542, %v1526
        %v1863 = vpack.c.b16 %v1543, %v1527
        %v1864 = vpack.c.b16 %v1544, %v1528
        %v1865 = vpack.c.b16 %v1545, %v1529
        %v1866 = vpack.c.b16 %v1546, %v1530
        %v1867 = vpack.c.b16 %v1563, %v1547
        %v1868 = vpack.c.b16 %v1564, %v1548
        %v1869 = vpack.c.b16 %v1565, %v1549
        %v1870 = vpack.c.b16 %v1566, %v1550
        %v1871 = vpack.c.b16 %v1567, %v1551
        %v1872 = vpack.c.b16 %v1568, %v1552
        %v1873 = vpack.c.b16 %v1569, %v1553
        %v1874 = vpack.c.b16 %v1570, %v1554
        %v1875 = vpack.c.b16 %v1571, %v1555
        %v1876 = vpack.c.b16 %v1572, %v1556
        %v1877 = vpack.c.b16 %v1573, %v1557
        %v1878 = vpack.c.b16 %v1574, %v1558
        %v1879 = vpack.c.b16 %v1575, %v1559
        %v1880 = vpack.c.b16 %v1576, %v1560
        %v1881 = vpack.c.b16 %v1577, %v1561
        %v1882 = vpack.c.b16 %v1578, %v1562
        %v1883 = vpack.c.b16 %v1595, %v1579
        %v1884 = vpack.c.b16 %v1596, %v1580
        %v1885 = vpack.c.b16 %v1597, %v1581
        %v1886 = vpack.c.b16 %v1598, %v1582
        %v1887 = vpack.c.b16 %v1599, %v1583
        %v1888 = vpack.c.b16 %v1600, %v1584
        %v1889 = vpack.c.b16 %v1601, %v1585
        %v1890 = vpack.c.b16 %v1602, %v1586
        %v1891 = vpack.c.b16 %v1603, %v1587
        %v1892 = vpack.c.b16 %v1604, %v1588
        %v1893 = vpack.c.b16 %v1605, %v1589
        %v1894 = vpack.c.b16 %v1606, %v1590
        %v1895 = vpack.c.b16 %v1607, %v1591
        %v1896 = vpack.c.b16 %v1608, %v1592
        %v1897 = vpack.c.b16 %v1609, %v1593
        %v1898 = vpack.c.b16 %v1610, %v1594
        %v1899 = vpack.c.b16 %v1627, %v1611
        %v1900 = vpack.c.b16 %v1628, %v1612
        %v1901 = vpack.c.b16 %v1629, %v1613
        %v1902 = vpack.c.b16 %v1630, %v1614
        %v1903 = vpack.c.b16 %v1631, %v1615
        %v1904 = vpack.c.b16 %v1632, %v1616
        %v1905 = vpack.c.b16 %v1633, %v1617
        %v1906 = vpack.c.b16 %v1634, %v1618
        %v1907 = vpack.c.b16 %v1635, %v1619
        %v1908 = vpack.c.b16 %v1636, %v1620
        %v1909 = vpack.c.b16 %v1637, %v1621
        %v1910 = vpack.c.b16 %v1638, %v1622
        %v1911 = vpack.c.b16 %v1639, %v1623
        %v1912 = vpack.c.b16 %v1640, %v1624
        %v1913 = vpack.c.b16 %v1641, %v1625
        %v1914 = vpack.c.b16 %v1642, %v1626
        %v1915 = vpack.c.b16 %v1659, %v1643
        %v1916 = vpack.c.b16 %v1660, %v1644
        %v1917 = vpack.c.b16 %v1661, %v1645
        %v1918 = vpack.c.b16 %v1662, %v1646
        %v1919 = vpack.c.b16 %v1663, %v1647
        %v1920 = vpack.c.b16 %v1664, %v1648
        %v1921 = vpack.c.b16 %v1665, %v1649
        %v1922 = vpack.c.b16 %v1666, %v1650
        %v1923 = vpack.c.b16 %v1667, %v1651
        %v1924 = vpack.c.b16 %v1668, %v1652
        %v1925 = vpack.c.b16 %v1669, %v1653
        %v1926 = vpack.c.b16 %v1670, %v1654
        %v1927 = vpack.c.b16 %v1671, %v1655
        %v1928 = vpack.c.b16 %v1672, %v1656
        %v1929 = vpack.c.b16 %v1673, %v1657
        %v1930 = vpack.c.b16 %v1674, %v1658
        %v1931 = vpack.c.b16 %v1691, %v1675
        %v1932 = vpack.c.b16 %v1692, %v1676
        %v1933 = vpack.c.b16 %v1693, %v1677
        %v1934 = vpack.c.b16 %v1694, %v1678
        %v1935 = vpack.c.b16 %v1695, %v1679
        %v1936 = vpack.c.b16 %v1696, %v1680
        %v1937 = vpack.c.b16 %v1697, %v1681
        %v1938 = vpack.c.b16 %v1698, %v1682
        %v1939 = vpack.c.b16 %v1699, %v1683
        %v1940 = vpack.c.b16 %v1700, %v1684
        %v1941 = vpack.c.b16 %v1701, %v1685
        %v1942 = vpack.c.b16 %v1702, %v1686
        %v1943 = vpack.c.b16 %v1703, %v1687
        %v1944 = vpack.c.b16 %v1704, %v1688
        %v1945 = vpack.c.b16 %v1705, %v1689
        %v1946 = vpack.c.b16 %v1706, %v1690
        %vm2187 = vcmask 916480
        %v2189 = vsel %vm2187, %v746, 0
        %2191 = vmatprep.subr.bf16.mxu0 %v1708
        %2192 = vmatpush1.bf16.msra.mxu0 %v1707
        %2193 = vmatprep.subr.bf16.mxu0 %v1724
        %2194 = vmatpush1.bf16.msra.mxu0 %v1723
        %2195 = vmatprep.subr.bf16.mxu0 %v1740
        %2196 = vmatpush1.bf16.msra.mxu0 %v1739
        %2197 = vmatprep.subr.bf16.mxu0 %v1756
        %2198 = vmatpush1.bf16.msra.mxu0 %v1755
        %2199 = vmatprep.subr.bf16.mxu0 %v1772
        %2200 = vmatpush1.bf16.msra.mxu0 %v1771
        %2201 = vmatprep.subr.bf16.mxu0 %v1788
        %2202 = vmatpush1.bf16.msra.mxu0 %v1787
        %2203 = vmatprep.subr.bf16.mxu0 %v1804
        %2204 = vmatpush1.bf16.msra.mxu0 %v1803
        %2205 = vmatprep.subr.bf16.mxu0 %v1820
        %2206 = vmatpush1.bf16.msra.mxu0 %v1819
        %2207 = vmatprep.subr.bf16.mxu0 %v1836
        %2208 = vmatpush1.bf16.msra.mxu0 %v1835
        %2209 = vmatprep.subr.bf16.mxu0 %v1852
        %2210 = vmatpush1.bf16.msra.mxu0 %v1851
        %2211 = vmatprep.subr.bf16.mxu0 %v1868
        %2212 = vmatpush1.bf16.msra.mxu0 %v1867
        %2213 = vmatprep.subr.bf16.mxu0 %v1884
        %2214 = vmatpush1.bf16.msra.mxu0 %v1883
        %2215 = vmatprep.subr.bf16.mxu0 %v1900
        %2216 = vmatpush1.bf16.msra.mxu0 %v1899
        %2217 = vmatprep.subr.bf16.mxu0 %v1916
        %2218 = vmatpush1.bf16.msra.mxu0 %v1915
        %2219 = vmatprep.subr.bf16.mxu0 %v1932
        %2220 = vmatpush1.bf16.msra.mxu0 %v1931
        %2221 = vmatprep.subr.bf16.mxu0 0
        %2222 = vmatpush1.bf16.msra.mxu0 0
        %2223 = vmatprep.mubr.bf16.mxu0 %v2189
        %2224 = vmatmul.mubr.bf16.gmra.mrb[0].mxu0 %v745
        %v2225 = vpop.f32.mrb[0].mxu0
        %v2226 = vadd.f32 0.0, %v2225
        %v2227 = vpop.f32.mrb[0].mxu0
        %v2228 = vadd.f32 0.0, %v2227
        %v2229 = vpop.f32.mrb[0].mxu0
        %v2230 = vpop.f32.mrb[0].mxu0
        %2231 = vdwg.mxu0
        %2232 = vmatprep.subr.bf16.mxu0 %v1710
        %2233 = vmatpush1.bf16.msra.mxu0 %v1709
        %2234 = vmatprep.subr.bf16.mxu0 %v1726
        %2235 = vmatpush1.bf16.msra.mxu0 %v1725
        %2236 = vmatprep.subr.bf16.mxu0 %v1742
        %2237 = vmatpush1.bf16.msra.mxu0 %v1741
        %2238 = vmatprep.subr.bf16.mxu0 %v1758
        %2239 = vmatpush1.bf16.msra.mxu0 %v1757
        %2240 = vmatprep.subr.bf16.mxu0 %v1774
        %2241 = vmatpush1.bf16.msra.mxu0 %v1773
        %2242 = vmatprep.subr.bf16.mxu0 %v1790
        %2243 = vmatpush1.bf16.msra.mxu0 %v1789
        %2244 = vmatprep.subr.bf16.mxu0 %v1806
        %2245 = vmatpush1.bf16.msra.mxu0 %v1805
        %2246 = vmatprep.subr.bf16.mxu0 %v1822
        %2247 = vmatpush1.bf16.msra.mxu0 %v1821
        %2248 = vmatprep.subr.bf16.mxu0 %v1838
        %2249 = vmatpush1.bf16.msra.mxu0 %v1837
        %2250 = vmatprep.subr.bf16.mxu0 %v1854
        %2251 = vmatpush1.bf16.msra.mxu0 %v1853
        %2252 = vmatprep.subr.bf16.mxu0 %v1870
        %2253 = vmatpush1.bf16.msra.mxu0 %v1869
        %2254 = vmatprep.subr.bf16.mxu0 %v1886
        %2255 = vmatpush1.bf16.msra.mxu0 %v1885
        %2256 = vmatprep.subr.bf16.mxu0 %v1902
        %2257 = vmatpush1.bf16.msra.mxu0 %v1901
        %2258 = vmatprep.subr.bf16.mxu0 %v1918
        %2259 = vmatpush1.bf16.msra.mxu0 %v1917
        %2260 = vmatprep.subr.bf16.mxu0 %v1934
        %2261 = vmatpush1.bf16.msra.mxu0 %v1933
        %2262 = vmatprep.subr.bf16.mxu0 0
        %2263 = vmatpush1.bf16.msra.mxu0 0
        %2264 = vmatprep.mubr.bf16.mxu0 %v2189
        %2265 = vmatmul.mubr.bf16.gmra.mrb[0].mxu0 %v745
        %v2266 = vpop.f32.mrb[0].mxu0
        %v2267 = vadd.f32 0.0, %v2266
        %v2268 = vpop.f32.mrb[0].mxu0
        %v2269 = vadd.f32 0.0, %v2268
        %v2270 = vpop.f32.mrb[0].mxu0
        %v2271 = vpop.f32.mrb[0].mxu0
        %2272 = vdwg.mxu0
        %2273 = vmatprep.subr.bf16.mxu0 %v1712
        %2274 = vmatpush1.bf16.msra.mxu0 %v1711
        %2275 = vmatprep.subr.bf16.mxu0 %v1728
        %2276 = vmatpush1.bf16.msra.mxu0 %v1727
        %2277 = vmatprep.subr.bf16.mxu0 %v1744
        %2278 = vmatpush1.bf16.msra.mxu0 %v1743
        %2279 = vmatprep.subr.bf16.mxu0 %v1760
        %2280 = vmatpush1.bf16.msra.mxu0 %v1759
        %2281 = vmatprep.subr.bf16.mxu0 %v1776
        %2282 = vmatpush1.bf16.msra.mxu0 %v1775
        %2283 = vmatprep.subr.bf16.mxu0 %v1792
        %2284 = vmatpush1.bf16.msra.mxu0 %v1791
        %2285 = vmatprep.subr.bf16.mxu0 %v1808
        %2286 = vmatpush1.bf16.msra.mxu0 %v1807
        %2287 = vmatprep.subr.bf16.mxu0 %v1824
        %2288 = vmatpush1.bf16.msra.mxu0 %v1823
        %2289 = vmatprep.subr.bf16.mxu0 %v1840
        %2290 = vmatpush1.bf16.msra.mxu0 %v1839
        %2291 = vmatprep.subr.bf16.mxu0 %v1856
        %2292 = vmatpush1.bf16.msra.mxu0 %v1855
        %2293 = vmatprep.subr.bf16.mxu0 %v1872
        %2294 = vmatpush1.bf16.msra.mxu0 %v1871
        %2295 = vmatprep.subr.bf16.mxu0 %v1888
        %2296 = vmatpush1.bf16.msra.mxu0 %v1887
        %2297 = vmatprep.subr.bf16.mxu0 %v1904
        %2298 = vmatpush1.bf16.msra.mxu0 %v1903
        %2299 = vmatprep.subr.bf16.mxu0 %v1920
        %2300 = vmatpush1.bf16.msra.mxu0 %v1919
        %2301 = vmatprep.subr.bf16.mxu0 %v1936
        %2302 = vmatpush1.bf16.msra.mxu0 %v1935
        %2303 = vmatprep.subr.bf16.mxu0 0
        %2304 = vmatpush1.bf16.msra.mxu0 0
        %2305 = vmatprep.mubr.bf16.mxu0 %v2189
        %2306 = vmatmul.mubr.bf16.gmra.mrb[0].mxu0 %v745
        %v2307 = vpop.f32.mrb[0].mxu0
        %v2308 = vadd.f32 0.0, %v2307
        %v2309 = vpop.f32.mrb[0].mxu0
        %v2310 = vadd.f32 0.0, %v2309
        %v2311 = vpop.f32.mrb[0].mxu0
        %v2312 = vpop.f32.mrb[0].mxu0
        %2313 = vdwg.mxu0
        %2314 = vmatprep.subr.bf16.mxu0 %v1714
        %2315 = vmatpush1.bf16.msra.mxu0 %v1713
        %2316 = vmatprep.subr.bf16.mxu0 %v1730
        %2317 = vmatpush1.bf16.msra.mxu0 %v1729
        %2318 = vmatprep.subr.bf16.mxu0 %v1746
        %2319 = vmatpush1.bf16.msra.mxu0 %v1745
        %2320 = vmatprep.subr.bf16.mxu0 %v1762
        %2321 = vmatpush1.bf16.msra.mxu0 %v1761
        %2322 = vmatprep.subr.bf16.mxu0 %v1778
        %2323 = vmatpush1.bf16.msra.mxu0 %v1777
        %2324 = vmatprep.subr.bf16.mxu0 %v1794
        %2325 = vmatpush1.bf16.msra.mxu0 %v1793
        %2326 = vmatprep.subr.bf16.mxu0 %v1810
        %2327 = vmatpush1.bf16.msra.mxu0 %v1809
        %2328 = vmatprep.subr.bf16.mxu0 %v1826
        %2329 = vmatpush1.bf16.msra.mxu0 %v1825
        %2330 = vmatprep.subr.bf16.mxu0 %v1842
        %2331 = vmatpush1.bf16.msra.mxu0 %v1841
        %2332 = vmatprep.subr.bf16.mxu0 %v1858
        %2333 = vmatpush1.bf16.msra.mxu0 %v1857
        %2334 = vmatprep.subr.bf16.mxu0 %v1874
        %2335 = vmatpush1.bf16.msra.mxu0 %v1873
        %2336 = vmatprep.subr.bf16.mxu0 %v1890
        %2337 = vmatpush1.bf16.msra.mxu0 %v1889
        %2338 = vmatprep.subr.bf16.mxu0 %v1906
        %2339 = vmatpush1.bf16.msra.mxu0 %v1905
        %2340 = vmatprep.subr.bf16.mxu0 %v1922
        %2341 = vmatpush1.bf16.msra.mxu0 %v1921
        %2342 = vmatprep.subr.bf16.mxu0 %v1938
        %2343 = vmatpush1.bf16.msra.mxu0 %v1937
        %2344 = vmatprep.subr.bf16.mxu0 0
        %2345 = vmatpush1.bf16.msra.mxu0 0
        %2346 = vmatprep.mubr.bf16.mxu0 %v2189
        %2347 = vmatmul.mubr.bf16.gmra.mrb[0].mxu0 %v745
        %v2348 = vpop.f32.mrb[0].mxu0
        %v2349 = vadd.f32 0.0, %v2348
        %v2350 = vpop.f32.mrb[0].mxu0
        %v2351 = vadd.f32 0.0, %v2350
        %v2352 = vpop.f32.mrb[0].mxu0
        %v2353 = vpop.f32.mrb[0].mxu0
        %2354 = vdwg.mxu0
        %2355 = vmatprep.subr.bf16.mxu0 %v1716
        %2356 = vmatpush1.bf16.msra.mxu0 %v1715
        %2357 = vmatprep.subr.bf16.mxu0 %v1732
        %2358 = vmatpush1.bf16.msra.mxu0 %v1731
        %2359 = vmatprep.subr.bf16.mxu0 %v1748
        %2360 = vmatpush1.bf16.msra.mxu0 %v1747
        %2361 = vmatprep.subr.bf16.mxu0 %v1764
        %2362 = vmatpush1.bf16.msra.mxu0 %v1763
        %2363 = vmatprep.subr.bf16.mxu0 %v1780
        %2364 = vmatpush1.bf16.msra.mxu0 %v1779
        %2365 = vmatprep.subr.bf16.mxu0 %v1796
        %2366 = vmatpush1.bf16.msra.mxu0 %v1795
        %2367 = vmatprep.subr.bf16.mxu0 %v1812
        %2368 = vmatpush1.bf16.msra.mxu0 %v1811
        %2369 = vmatprep.subr.bf16.mxu0 %v1828
        %2370 = vmatpush1.bf16.msra.mxu0 %v1827
        %2371 = vmatprep.subr.bf16.mxu0 %v1844
        %2372 = vmatpush1.bf16.msra.mxu0 %v1843
        %2373 = vmatprep.subr.bf16.mxu0 %v1860
        %2374 = vmatpush1.bf16.msra.mxu0 %v1859
        %2375 = vmatprep.subr.bf16.mxu0 %v1876
        %2376 = vmatpush1.bf16.msra.mxu0 %v1875
        %2377 = vmatprep.subr.bf16.mxu0 %v1892
        %2378 = vmatpush1.bf16.msra.mxu0 %v1891
        %2379 = vmatprep.subr.bf16.mxu0 %v1908
        %2380 = vmatpush1.bf16.msra.mxu0 %v1907
        %2381 = vmatprep.subr.bf16.mxu0 %v1924
        %2382 = vmatpush1.bf16.msra.mxu0 %v1923
        %2383 = vmatprep.subr.bf16.mxu0 %v1940
        %2384 = vmatpush1.bf16.msra.mxu0 %v1939
        %2385 = vmatprep.subr.bf16.mxu0 0
        %2386 = vmatpush1.bf16.msra.mxu0 0
        %2387 = vmatprep.mubr.bf16.mxu0 %v2189
        %2388 = vmatmul.mubr.bf16.gmra.mrb[0].mxu0 %v745
        %v2389 = vpop.f32.mrb[0].mxu0
        %v2390 = vadd.f32 0.0, %v2389
        %v2391 = vpop.f32.mrb[0].mxu0
        %v2392 = vadd.f32 0.0, %v2391
        %v2393 = vpop.f32.mrb[0].mxu0
        %v2394 = vpop.f32.mrb[0].mxu0
        %2395 = vdwg.mxu0
        %2396 = vmatprep.subr.bf16.mxu0 %v1718
        %2397 = vmatpush1.bf16.msra.mxu0 %v1717
        %2398 = vmatprep.subr.bf16.mxu0 %v1734
        %2399 = vmatpush1.bf16.msra.mxu0 %v1733
        %2400 = vmatprep.subr.bf16.mxu0 %v1750
        %2401 = vmatpush1.bf16.msra.mxu0 %v1749
        %2402 = vmatprep.subr.bf16.mxu0 %v1766
        %2403 = vmatpush1.bf16.msra.mxu0 %v1765
        %2404 = vmatprep.subr.bf16.mxu0 %v1782
        %2405 = vmatpush1.bf16.msra.mxu0 %v1781
        %2406 = vmatprep.subr.bf16.mxu0 %v1798
        %2407 = vmatpush1.bf16.msra.mxu0 %v1797
        %2408 = vmatprep.subr.bf16.mxu0 %v1814
        %2409 = vmatpush1.bf16.msra.mxu0 %v1813
        %2410 = vmatprep.subr.bf16.mxu0 %v1830
        %2411 = vmatpush1.bf16.msra.mxu0 %v1829
        %2412 = vmatprep.subr.bf16.mxu0 %v1846
        %2413 = vmatpush1.bf16.msra.mxu0 %v1845
        %2414 = vmatprep.subr.bf16.mxu0 %v1862
        %2415 = vmatpush1.bf16.msra.mxu0 %v1861
        %2416 = vmatprep.subr.bf16.mxu0 %v1878
        %2417 = vmatpush1.bf16.msra.mxu0 %v1877
        %2418 = vmatprep.subr.bf16.mxu0 %v1894
        %2419 = vmatpush1.bf16.msra.mxu0 %v1893
        %2420 = vmatprep.subr.bf16.mxu0 %v1910
        %2421 = vmatpush1.bf16.msra.mxu0 %v1909
        %2422 = vmatprep.subr.bf16.mxu0 %v1926
        %2423 = vmatpush1.bf16.msra.mxu0 %v1925
        %2424 = vmatprep.subr.bf16.mxu0 %v1942
        %2425 = vmatpush1.bf16.msra.mxu0 %v1941
        %2426 = vmatprep.subr.bf16.mxu0 0
        %2427 = vmatpush1.bf16.msra.mxu0 0
        %2428 = vmatprep.mubr.bf16.mxu0 %v2189
        %2429 = vmatmul.mubr.bf16.gmra.mrb[0].mxu0 %v745
        %v2430 = vpop.f32.mrb[0].mxu0
        %v2431 = vadd.f32 0.0, %v2430
        %v2432 = vpop.f32.mrb[0].mxu0
        %v2433 = vadd.f32 0.0, %v2432
        %v2434 = vpop.f32.mrb[0].mxu0
        %v2435 = vpop.f32.mrb[0].mxu0
        %2436 = vdwg.mxu0
        %2437 = vmatprep.subr.bf16.mxu0 %v1720
        %2438 = vmatpush1.bf16.msra.mxu0 %v1719
        %2439 = vmatprep.subr.bf16.mxu0 %v1736
        %2440 = vmatpush1.bf16.msra.mxu0 %v1735
        %2441 = vmatprep.subr.bf16.mxu0 %v1752
        %2442 = vmatpush1.bf16.msra.mxu0 %v1751
        %2443 = vmatprep.subr.bf16.mxu0 %v1768
        %2444 = vmatpush1.bf16.msra.mxu0 %v1767
        %2445 = vmatprep.subr.bf16.mxu0 %v1784
        %2446 = vmatpush1.bf16.msra.mxu0 %v1783
        %2447 = vmatprep.subr.bf16.mxu0 %v1800
        %2448 = vmatpush1.bf16.msra.mxu0 %v1799
        %2449 = vmatprep.subr.bf16.mxu0 %v1816
        %2450 = vmatpush1.bf16.msra.mxu0 %v1815
        %2451 = vmatprep.subr.bf16.mxu0 %v1832
        %2452 = vmatpush1.bf16.msra.mxu0 %v1831
        %2453 = vmatprep.subr.bf16.mxu0 %v1848
        %2454 = vmatpush1.bf16.msra.mxu0 %v1847
        %2455 = vmatprep.subr.bf16.mxu0 %v1864
        %2456 = vmatpush1.bf16.msra.mxu0 %v1863
        %2457 = vmatprep.subr.bf16.mxu0 %v1880
        %2458 = vmatpush1.bf16.msra.mxu0 %v1879
        %2459 = vmatprep.subr.bf16.mxu0 %v1896
        %2460 = vmatpush1.bf16.msra.mxu0 %v1895
        %2461 = vmatprep.subr.bf16.mxu0 %v1912
        %2462 = vmatpush1.bf16.msra.mxu0 %v1911
        %2463 = vmatprep.subr.bf16.mxu0 %v1928
        %2464 = vmatpush1.bf16.msra.mxu0 %v1927
        %2465 = vmatprep.subr.bf16.mxu0 %v1944
        %2466 = vmatpush1.bf16.msra.mxu0 %v1943
        %2467 = vmatprep.subr.bf16.mxu0 0
        %2468 = vmatpush1.bf16.msra.mxu0 0
        %2469 = vmatprep.mubr.bf16.mxu0 %v2189
        %2470 = vmatmul.mubr.bf16.gmra.mrb[0].mxu0 %v745
        %v2471 = vpop.f32.mrb[0].mxu0
        %v2472 = vadd.f32 0.0, %v2471
        %v2473 = vpop.f32.mrb[0].mxu0
        %v2474 = vadd.f32 0.0, %v2473
        %v2475 = vpop.f32.mrb[0].mxu0
        %v2476 = vpop.f32.mrb[0].mxu0
        %2477 = vdwg.mxu0
        %2478 = vmatprep.subr.bf16.mxu0 %v1722
        %2479 = vmatpush1.bf16.msra.mxu0 %v1721
        %2480 = vmatprep.subr.bf16.mxu0 %v1738
        %2481 = vmatpush1.bf16.msra.mxu0 %v1737
        %2482 = vmatprep.subr.bf16.mxu0 %v1754
        %2483 = vmatpush1.bf16.msra.mxu0 %v1753
        %2484 = vmatprep.subr.bf16.mxu0 %v1770
        %2485 = vmatpush1.bf16.msra.mxu0 %v1769
        %2486 = vmatprep.subr.bf16.mxu0 %v1786
        %2487 = vmatpush1.bf16.msra.mxu0 %v1785
        %2488 = vmatprep.subr.bf16.mxu0 %v1802
        %2489 = vmatpush1.bf16.msra.mxu0 %v1801
        %2490 = vmatprep.subr.bf16.mxu0 %v1818
        %2491 = vmatpush1.bf16.msra.mxu0 %v1817
        %2492 = vmatprep.subr.bf16.mxu0 %v1834
        %2493 = vmatpush1.bf16.msra.mxu0 %v1833
        %2494 = vmatprep.subr.bf16.mxu0 %v1850
        %2495 = vmatpush1.bf16.msra.mxu0 %v1849
        %2496 = vmatprep.subr.bf16.mxu0 %v1866
        %2497 = vmatpush1.bf16.msra.mxu0 %v1865
        %2498 = vmatprep.subr.bf16.mxu0 %v1882
        %2499 = vmatpush1.bf16.msra.mxu0 %v1881
        %2500 = vmatprep.subr.bf16.mxu0 %v1898
        %2501 = vmatpush1.bf16.msra.mxu0 %v1897
        %2502 = vmatprep.subr.bf16.mxu0 %v1914
        %2503 = vmatpush1.bf16.msra.mxu0 %v1913
        %2504 = vmatprep.subr.bf16.mxu0 %v1930
        %2505 = vmatpush1.bf16.msra.mxu0 %v1929
        %2506 = vmatprep.subr.bf16.mxu0 %v1946
        %2507 = vmatpush1.bf16.msra.mxu0 %v1945
        %2508 = vmatprep.subr.bf16.mxu0 0
        %2509 = vmatpush1.bf16.msra.mxu0 0
        %2510 = vmatprep.mubr.bf16.mxu0 %v2189
        %2511 = vmatmul.mubr.bf16.gmra.mrb[0].mxu0 %v745
        %v2512 = vpop.f32.mrb[0].mxu0
        %v2513 = vadd.f32 0.0, %v2512
        %v2514 = vpop.f32.mrb[0].mxu0
        %v2515 = vadd.f32 0.0, %v2514
        %v2516 = vpop.f32.mrb[0].mxu0
        %v2517 = vpop.f32.mrb[0].mxu0
        %2518 = vdwg.mxu0
        %v2519 = vmax.f32 %v2226, %v2390
        %v2520 = vmax.f32 %v2228, %v2392
        %v2521 = vmax.f32 %v2267, %v2431
        %v2522 = vmax.f32 %v2269, %v2433
        %v2523 = vmax.f32 %v2308, %v2472
        %v2524 = vmax.f32 %v2310, %v2474
        %v2525 = vmax.f32 %v2349, %v2513
        %v2526 = vmax.f32 %v2351, %v2515
        %v2527 = vld [vmem:[#allocation7] sm:$0xff]
        %v2529 = vlaneseq
        %v2530 = vshrl.u32 %v2529, 7
        %v2531 = vsub.s32 0, %v2530
        %v2532 = vrot.slane %v2527, %v2531
        %v2533 = vlaneseq
        %v2534 = vshrl.u32 %v2533, 7
        %v2535 = vsub.s32 1, %v2534
        %v2536 = vrot.slane %v2527, %v2535
        %v2537 = vlaneseq
        %v2538 = vshrl.u32 %v2537, 7
        %v2539 = vsub.s32 2, %v2538
        %v2540 = vrot.slane %v2527, %v2539
        %v2541 = vlaneseq
        %v2542 = vshrl.u32 %v2541, 7
        %v2543 = vsub.s32 3, %v2542
        %v2544 = vrot.slane %v2527, %v2543
        %v2545 = vlaneseq
        %v2546 = vshrl.u32 %v2545, 7
        %v2547 = vsub.s32 4, %v2546
        %v2548 = vrot.slane %v2527, %v2547
        %v2549 = vlaneseq
        %v2550 = vshrl.u32 %v2549, 7
        %v2551 = vsub.s32 5, %v2550
        %v2552 = vrot.slane %v2527, %v2551
        %v2553 = vlaneseq
        %v2554 = vshrl.u32 %v2553, 7
        %v2555 = vsub.s32 6, %v2554
        %v2556 = vrot.slane %v2527, %v2555
        %v2557 = vlaneseq
        %v2558 = vshrl.u32 %v2557, 7
        %v2559 = vsub.s32 7, %v2558
        %v2560 = vrot.slane %v2527, %v2559
        %v2569 = vadd.f32 %v2519, %v2532
        %v2570 = vadd.f32 %v2520, %v2536
        %v2571 = vadd.f32 %v2521, %v2540
        %v2572 = vadd.f32 %v2522, %v2544
        %v2573 = vadd.f32 %v2523, %v2548
        %v2574 = vadd.f32 %v2524, %v2552
        %v2575 = vadd.f32 %v2525, %v2556
        %v2576 = vadd.f32 %v2526, %v2560
        %v2577 = vmax.f32 %v2569, 0.0
        %v2578 = vmax.f32 %v2570, 0.0
        %v2579 = vmax.f32 %v2571, 0.0
        %v2580 = vmax.f32 %v2572, 0.0
        %v2581 = vmax.f32 %v2573, 0.0
        %v2582 = vmax.f32 %v2574, 0.0
        %v2583 = vmax.f32 %v2575, 0.0
        %v2584 = vmax.f32 %v2576, 0.0
        %v2585 = vpack.c.bf16 %v2577, %v2577
        %v2586 = vpack.c.bf16 %v2578, %v2578
        %v2587 = vpack.c.bf16 %v2579, %v2579
        %v2588 = vpack.c.bf16 %v2580, %v2580
        %v2589 = vpack.c.bf16 %v2581, %v2581
        %v2590 = vpack.c.bf16 %v2582, %v2582
        %v2591 = vpack.c.bf16 %v2583, %v2583
        %v2592 = vpack.c.bf16 %v2584, %v2584
        %v2593 = vld [vmem:[#allocation8] sm:$0xff]
        %v2594 = vld [vmem:[#allocation8 + $0x8] sm:$0xff]
        %v2595 = vld [vmem:[#allocation8 + $0x10] sm:$0xff]
        %v2596 = vld [vmem:[#allocation8 + $0x18] sm:$0xff]
        %v2597 = vld [vmem:[#allocation8 + $0x20] sm:$0xff]
        %v2598 = vld [vmem:[#allocation8 + $0x28] sm:$0xff]
        %v2599 = vld [vmem:[#allocation8 + $0x30] sm:$0xff]
        %v2600 = vld [vmem:[#allocation8 + $0x38] sm:$0xff]
        %v2601 = vld [vmem:[#allocation8 + $0x40] sm:$0xff]
        %v2602 = vld [vmem:[#allocation8 + $0x48] sm:$0xff]
        %v2603 = vld [vmem:[#allocation8 + $0x50] sm:$0xff]
        %v2604 = vld [vmem:[#allocation8 + $0x58] sm:$0xff]
        %v2605 = vld [vmem:[#allocation8 + $0x60] sm:$0xff]
        %v2606 = vld [vmem:[#allocation8 + $0x68] sm:$0xff]
        %v2607 = vld [vmem:[#allocation8 + $0x70] sm:$0xff]
        %v2608 = vld [vmem:[#allocation8 + $0x78] sm:$0xff]
        %v2609 = vld [vmem:[#allocation8 + $0x80] sm:$0xff]
        %v2610 = vld [vmem:[#allocation8 + $0x88] sm:$0xff]
        %v2611 = vld [vmem:[#allocation8 + $0x90] sm:$0xff]
        %v2612 = vld [vmem:[#allocation8 + $0x98] sm:$0xff]
        %v2613 = vld [vmem:[#allocation8 + $0xa0] sm:$0xff]
        %v2614 = vld [vmem:[#allocation8 + $0xa8] sm:$0xff]
        %v2615 = vld [vmem:[#allocation8 + $0xb0] sm:$0xff]
        %v2616 = vld [vmem:[#allocation8 + $0xb8] sm:$0xff]
        %v2617 = vld [vmem:[#allocation8 + $0xc0] sm:$0xff]
        %v2618 = vld [vmem:[#allocation8 + $0xc8] sm:$0xff]
        %v2619 = vld [vmem:[#allocation8 + $0xd0] sm:$0xff]
        %v2620 = vld [vmem:[#allocation8 + $0xd8] sm:$0xff]
        %v2621 = vld [vmem:[#allocation8 + $0xe0] sm:$0xff]
        %v2622 = vld [vmem:[#allocation8 + $0xe8] sm:$0xff]
        %v2623 = vld [vmem:[#allocation8 + $0xf0] sm:$0xff]
        %v2624 = vld [vmem:[#allocation8 + $0xf8] sm:$0xff]
        %v2625 = vld [vmem:[#allocation8 + $0x100] sm:$0xff]
        %v2626 = vld [vmem:[#allocation8 + $0x108] sm:$0xff]
        %v2627 = vld [vmem:[#allocation8 + $0x110] sm:$0xff]
        %v2628 = vld [vmem:[#allocation8 + $0x118] sm:$0xff]
        %v2629 = vld [vmem:[#allocation8 + $0x120] sm:$0xff]
        %v2630 = vld [vmem:[#allocation8 + $0x128] sm:$0xff]
        %v2631 = vld [vmem:[#allocation8 + $0x130] sm:$0xff]
        %v2632 = vld [vmem:[#allocation8 + $0x138] sm:$0xff]
        %v2633 = vld [vmem:[#allocation8 + $0x140] sm:$0xff]
        %v2634 = vld [vmem:[#allocation8 + $0x148] sm:$0xff]
        %v2635 = vld [vmem:[#allocation8 + $0x150] sm:$0xff]
        %v2636 = vld [vmem:[#allocation8 + $0x158] sm:$0xff]
        %v2637 = vld [vmem:[#allocation8 + $0x160] sm:$0xff]
        %v2638 = vld [vmem:[#allocation8 + $0x168] sm:$0xff]
        %v2639 = vld [vmem:[#allocation8 + $0x170] sm:$0xff]
        %v2640 = vld [vmem:[#allocation8 + $0x178] sm:$0xff]
        %v2641 = vld [vmem:[#allocation8 + $0x180] sm:$0xff]
        %v2642 = vld [vmem:[#allocation8 + $0x188] sm:$0xff]
        %v2643 = vld [vmem:[#allocation8 + $0x190] sm:$0xff]
        %v2644 = vld [vmem:[#allocation8 + $0x198] sm:$0xff]
        %v2645 = vld [vmem:[#allocation8 + $0x1a0] sm:$0xff]
        %v2646 = vld [vmem:[#allocation8 + $0x1a8] sm:$0xff]
        %v2647 = vld [vmem:[#allocation8 + $0x1b0] sm:$0xff]
        %v2648 = vld [vmem:[#allocation8 + $0x1b8] sm:$0xff]
        %v2649 = vld [vmem:[#allocation8 + $0x1c0] sm:$0xff]
        %v2650 = vld [vmem:[#allocation8 + $0x1c8] sm:$0xff]
        %v2651 = vld [vmem:[#allocation8 + $0x1d0] sm:$0xff]
        %v2652 = vld [vmem:[#allocation8 + $0x1d8] sm:$0xff]
        %v2653 = vld [vmem:[#allocation8 + $0x1e0] sm:$0xff]
        %v2654 = vld [vmem:[#allocation8 + $0x1e8] sm:$0xff]
        %v2655 = vld [vmem:[#allocation8 + $0x1f0] sm:$0xff]
        %v2656 = vld [vmem:[#allocation8 + $0x1f8] sm:$0xff]
        %v2657 = vld [vmem:[#allocation8 + $0x200] sm:$0xff]
        %v2658 = vld [vmem:[#allocation8 + $0x208] sm:$0xff]
        %v2659 = vld [vmem:[#allocation8 + $0x210] sm:$0xff]
        %v2660 = vld [vmem:[#allocation8 + $0x218] sm:$0xff]
        %v2661 = vld [vmem:[#allocation8 + $0x220] sm:$0xff]
        %v2662 = vld [vmem:[#allocation8 + $0x228] sm:$0xff]
        %v2663 = vld [vmem:[#allocation8 + $0x230] sm:$0xff]
        %v2664 = vld [vmem:[#allocation8 + $0x238] sm:$0xff]
        %v2665 = vld [vmem:[#allocation8 + $0x240] sm:$0xff]
        %v2666 = vld [vmem:[#allocation8 + $0x248] sm:$0xff]
        %v2667 = vld [vmem:[#allocation8 + $0x250] sm:$0xff]
        %v2668 = vld [vmem:[#allocation8 + $0x258] sm:$0xff]
        %v2669 = vld [vmem:[#allocation8 + $0x260] sm:$0xff]
        %v2670 = vld [vmem:[#allocation8 + $0x268] sm:$0xff]
        %v2671 = vld [vmem:[#allocation8 + $0x270] sm:$0xff]
        %v2672 = vld [vmem:[#allocation8 + $0x278] sm:$0xff]
        %v2673 = vld [vmem:[#allocation8 + $0x280] sm:$0xff]
        %v2674 = vld [vmem:[#allocation8 + $0x288] sm:$0xff]
        %v2675 = vld [vmem:[#allocation8 + $0x290] sm:$0xff]
        %v2676 = vld [vmem:[#allocation8 + $0x298] sm:$0xff]
        %v2677 = vld [vmem:[#allocation8 + $0x2a0] sm:$0xff]
        %v2678 = vld [vmem:[#allocation8 + $0x2a8] sm:$0xff]
        %v2679 = vld [vmem:[#allocation8 + $0x2b0] sm:$0xff]
        %v2680 = vld [vmem:[#allocation8 + $0x2b8] sm:$0xff]
        %v2681 = vld [vmem:[#allocation8 + $0x2c0] sm:$0xff]
        %v2682 = vld [vmem:[#allocation8 + $0x2c8] sm:$0xff]
        %v2683 = vld [vmem:[#allocation8 + $0x2d0] sm:$0xff]
        %v2684 = vld [vmem:[#allocation8 + $0x2d8] sm:$0xff]
        %v2685 = vld [vmem:[#allocation8 + $0x2e0] sm:$0xff]
        %v2686 = vld [vmem:[#allocation8 + $0x2e8] sm:$0xff]
        %v2687 = vld [vmem:[#allocation8 + $0x2f0] sm:$0xff]
        %v2688 = vld [vmem:[#allocation8 + $0x2f8] sm:$0xff]
        %v2689 = vld [vmem:[#allocation8 + $0x300] sm:$0xff]
        %v2690 = vld [vmem:[#allocation8 + $0x308] sm:$0xff]
        %v2691 = vld [vmem:[#allocation8 + $0x310] sm:$0xff]
        %v2692 = vld [vmem:[#allocation8 + $0x318] sm:$0xff]
        %v2693 = vld [vmem:[#allocation8 + $0x320] sm:$0xff]
        %v2694 = vld [vmem:[#allocation8 + $0x328] sm:$0xff]
        %v2695 = vld [vmem:[#allocation8 + $0x330] sm:$0xff]
        %v2696 = vld [vmem:[#allocation8 + $0x338] sm:$0xff]
        %v2697 = vld [vmem:[#allocation8 + $0x340] sm:$0xff]
        %v2698 = vld [vmem:[#allocation8 + $0x348] sm:$0xff]
        %v2699 = vld [vmem:[#allocation8 + $0x350] sm:$0xff]
        %v2700 = vld [vmem:[#allocation8 + $0x358] sm:$0xff]
        %v2701 = vld [vmem:[#allocation8 + $0x360] sm:$0xff]
        %v2702 = vld [vmem:[#allocation8 + $0x368] sm:$0xff]
        %v2703 = vld [vmem:[#allocation8 + $0x370] sm:$0xff]
        %v2704 = vld [vmem:[#allocation8 + $0x378] sm:$0xff]
        %v2705 = vld [vmem:[#allocation8 + $0x380] sm:$0xff]
        %v2706 = vld [vmem:[#allocation8 + $0x388] sm:$0xff]
        %v2707 = vld [vmem:[#allocation8 + $0x390] sm:$0xff]
        %v2708 = vld [vmem:[#allocation8 + $0x398] sm:$0xff]
        %v2709 = vld [vmem:[#allocation8 + $0x3a0] sm:$0xff]
        %v2710 = vld [vmem:[#allocation8 + $0x3a8] sm:$0xff]
        %v2711 = vld [vmem:[#allocation8 + $0x3b0] sm:$0xff]
        %v2712 = vld [vmem:[#allocation8 + $0x3b8] sm:$0xff]
        %v2713 = vld [vmem:[#allocation8 + $0x3c0] sm:$0xff]
        %v2714 = vld [vmem:[#allocation8 + $0x3c8] sm:$0xff]
        %v2715 = vld [vmem:[#allocation8 + $0x3d0] sm:$0xff]
        %v2716 = vld [vmem:[#allocation8 + $0x3d8] sm:$0xff]
        %v2717 = vld [vmem:[#allocation8 + $0x3e0] sm:$0xff]
        %v2718 = vld [vmem:[#allocation8 + $0x3e8] sm:$0xff]
        %v2719 = vld [vmem:[#allocation8 + $0x3f0] sm:$0xff]
        %v2720 = vld [vmem:[#allocation8 + $0x3f8] sm:$0xff]
        %v2721 = vld [vmem:[#allocation8 + $0x400] sm:$0xff]
        %v2722 = vld [vmem:[#allocation8 + $0x408] sm:$0xff]
        %v2723 = vld [vmem:[#allocation8 + $0x410] sm:$0xff]
        %v2724 = vld [vmem:[#allocation8 + $0x418] sm:$0xff]
        %v2725 = vld [vmem:[#allocation8 + $0x420] sm:$0xff]
        %v2726 = vld [vmem:[#allocation8 + $0x428] sm:$0xff]
        %v2727 = vld [vmem:[#allocation8 + $0x430] sm:$0xff]
        %v2728 = vld [vmem:[#allocation8 + $0x438] sm:$0xff]
        %v2729 = vld [vmem:[#allocation8 + $0x440] sm:$0xff]
        %v2730 = vld [vmem:[#allocation8 + $0x448] sm:$0xff]
        %v2731 = vld [vmem:[#allocation8 + $0x450] sm:$0xff]
        %v2732 = vld [vmem:[#allocation8 + $0x458] sm:$0xff]
        %v2733 = vld [vmem:[#allocation8 + $0x460] sm:$0xff]
        %v2734 = vld [vmem:[#allocation8 + $0x468] sm:$0xff]
        %v2735 = vld [vmem:[#allocation8 + $0x470] sm:$0xff]
        %v2736 = vld [vmem:[#allocation8 + $0x478] sm:$0xff]
        %v2737 = vld [vmem:[#allocation8 + $0x480] sm:$0xff]
        %v2738 = vld [vmem:[#allocation8 + $0x488] sm:$0xff]
        %v2739 = vld [vmem:[#allocation8 + $0x490] sm:$0xff]
        %v2740 = vld [vmem:[#allocation8 + $0x498] sm:$0xff]
        %v2741 = vld [vmem:[#allocation8 + $0x4a0] sm:$0xff]
        %v2742 = vld [vmem:[#allocation8 + $0x4a8] sm:$0xff]
        %v2743 = vld [vmem:[#allocation8 + $0x4b0] sm:$0xff]
        %v2744 = vld [vmem:[#allocation8 + $0x4b8] sm:$0xff]
        %v2745 = vld [vmem:[#allocation8 + $0x4c0] sm:$0xff]
        %v2746 = vld [vmem:[#allocation8 + $0x4c8] sm:$0xff]
        %v2747 = vld [vmem:[#allocation8 + $0x4d0] sm:$0xff]
        %v2748 = vld [vmem:[#allocation8 + $0x4d8] sm:$0xff]
        %v2749 = vld [vmem:[#allocation8 + $0x4e0] sm:$0xff]
        %v2750 = vld [vmem:[#allocation8 + $0x4e8] sm:$0xff]
        %v2751 = vld [vmem:[#allocation8 + $0x4f0] sm:$0xff]
        %v2752 = vld [vmem:[#allocation8 + $0x4f8] sm:$0xff]
        %v2753 = vld [vmem:[#allocation8 + $0x500] sm:$0xff]
        %v2754 = vld [vmem:[#allocation8 + $0x508] sm:$0xff]
        %v2755 = vld [vmem:[#allocation8 + $0x510] sm:$0xff]
        %v2756 = vld [vmem:[#allocation8 + $0x518] sm:$0xff]
        %v2757 = vld [vmem:[#allocation8 + $0x520] sm:$0xff]
        %v2758 = vld [vmem:[#allocation8 + $0x528] sm:$0xff]
        %v2759 = vld [vmem:[#allocation8 + $0x530] sm:$0xff]
        %v2760 = vld [vmem:[#allocation8 + $0x538] sm:$0xff]
        %v2761 = vld [vmem:[#allocation8 + $0x540] sm:$0xff]
        %v2762 = vld [vmem:[#allocation8 + $0x548] sm:$0xff]
        %v2763 = vld [vmem:[#allocation8 + $0x550] sm:$0xff]
        %v2764 = vld [vmem:[#allocation8 + $0x558] sm:$0xff]
        %v2765 = vld [vmem:[#allocation8 + $0x560] sm:$0xff]
        %v2766 = vld [vmem:[#allocation8 + $0x568] sm:$0xff]
        %v2767 = vld [vmem:[#allocation8 + $0x570] sm:$0xff]
        %v2768 = vld [vmem:[#allocation8 + $0x578] sm:$0xff]
        %v2769 = vld [vmem:[#allocation8 + $0x580] sm:$0xff]
        %v2770 = vld [vmem:[#allocation8 + $0x588] sm:$0xff]
        %v2771 = vld [vmem:[#allocation8 + $0x590] sm:$0xff]
        %v2772 = vld [vmem:[#allocation8 + $0x598] sm:$0xff]
        %v2773 = vld [vmem:[#allocation8 + $0x5a0] sm:$0xff]
        %v2774 = vld [vmem:[#allocation8 + $0x5a8] sm:$0xff]
        %v2775 = vld [vmem:[#allocation8 + $0x5b0] sm:$0xff]
        %v2776 = vld [vmem:[#allocation8 + $0x5b8] sm:$0xff]
        %v2777 = vld [vmem:[#allocation8 + $0x5c0] sm:$0xff]
        %v2778 = vld [vmem:[#allocation8 + $0x5c8] sm:$0xff]
        %v2779 = vld [vmem:[#allocation8 + $0x5d0] sm:$0xff]
        %v2780 = vld [vmem:[#allocation8 + $0x5d8] sm:$0xff]
        %v2781 = vld [vmem:[#allocation8 + $0x5e0] sm:$0xff]
        %v2782 = vld [vmem:[#allocation8 + $0x5e8] sm:$0xff]
        %v2783 = vld [vmem:[#allocation8 + $0x5f0] sm:$0xff]
        %v2784 = vld [vmem:[#allocation8 + $0x5f8] sm:$0xff]
        %v2785 = vld [vmem:[#allocation8 + $0x600] sm:$0xff]
        %v2786 = vld [vmem:[#allocation8 + $0x608] sm:$0xff]
        %v2787 = vld [vmem:[#allocation8 + $0x610] sm:$0xff]
        %v2788 = vld [vmem:[#allocation8 + $0x618] sm:$0xff]
        %v2789 = vld [vmem:[#allocation8 + $0x620] sm:$0xff]
        %v2790 = vld [vmem:[#allocation8 + $0x628] sm:$0xff]
        %v2791 = vld [vmem:[#allocation8 + $0x630] sm:$0xff]
        %v2792 = vld [vmem:[#allocation8 + $0x638] sm:$0xff]
        %v2793 = vld [vmem:[#allocation8 + $0x640] sm:$0xff]
        %v2794 = vld [vmem:[#allocation8 + $0x648] sm:$0xff]
        %v2795 = vld [vmem:[#allocation8 + $0x650] sm:$0xff]
        %v2796 = vld [vmem:[#allocation8 + $0x658] sm:$0xff]
        %v2797 = vld [vmem:[#allocation8 + $0x660] sm:$0xff]
        %v2798 = vld [vmem:[#allocation8 + $0x668] sm:$0xff]
        %v2799 = vld [vmem:[#allocation8 + $0x670] sm:$0xff]
        %v2800 = vld [vmem:[#allocation8 + $0x678] sm:$0xff]
        %v2801 = vld [vmem:[#allocation8 + $0x680] sm:$0xff]
        %v2802 = vld [vmem:[#allocation8 + $0x688] sm:$0xff]
        %v2803 = vld [vmem:[#allocation8 + $0x690] sm:$0xff]
        %v2804 = vld [vmem:[#allocation8 + $0x698] sm:$0xff]
        %v2805 = vld [vmem:[#allocation8 + $0x6a0] sm:$0xff]
        %v2806 = vld [vmem:[#allocation8 + $0x6a8] sm:$0xff]
        %v2807 = vld [vmem:[#allocation8 + $0x6b0] sm:$0xff]
        %v2808 = vld [vmem:[#allocation8 + $0x6b8] sm:$0xff]
        %v2809 = vld [vmem:[#allocation8 + $0x6c0] sm:$0xff]
        %v2810 = vld [vmem:[#allocation8 + $0x6c8] sm:$0xff]
        %v2811 = vld [vmem:[#allocation8 + $0x6d0] sm:$0xff]
        %v2812 = vld [vmem:[#allocation8 + $0x6d8] sm:$0xff]
        %v2813 = vld [vmem:[#allocation8 + $0x6e0] sm:$0xff]
        %v2814 = vld [vmem:[#allocation8 + $0x6e8] sm:$0xff]
        %v2815 = vld [vmem:[#allocation8 + $0x6f0] sm:$0xff]
        %v2816 = vld [vmem:[#allocation8 + $0x6f8] sm:$0xff]
        %v2817 = vld [vmem:[#allocation8 + $0x700] sm:$0xff]
        %v2818 = vld [vmem:[#allocation8 + $0x708] sm:$0xff]
        %v2819 = vld [vmem:[#allocation8 + $0x710] sm:$0xff]
        %v2820 = vld [vmem:[#allocation8 + $0x718] sm:$0xff]
        %v2821 = vld [vmem:[#allocation8 + $0x720] sm:$0xff]
        %v2822 = vld [vmem:[#allocation8 + $0x728] sm:$0xff]
        %v2823 = vld [vmem:[#allocation8 + $0x730] sm:$0xff]
        %v2824 = vld [vmem:[#allocation8 + $0x738] sm:$0xff]
        %v2825 = vld [vmem:[#allocation8 + $0x740] sm:$0xff]
        %v2826 = vld [vmem:[#allocation8 + $0x748] sm:$0xff]
        %v2827 = vld [vmem:[#allocation8 + $0x750] sm:$0xff]
        %v2828 = vld [vmem:[#allocation8 + $0x758] sm:$0xff]
        %v2829 = vld [vmem:[#allocation8 + $0x760] sm:$0xff]
        %v2830 = vld [vmem:[#allocation8 + $0x768] sm:$0xff]
        %v2831 = vld [vmem:[#allocation8 + $0x770] sm:$0xff]
        %v2832 = vld [vmem:[#allocation8 + $0x778] sm:$0xff]
        %v2833 = vld [vmem:[#allocation8 + $0x780] sm:$0xff]
        %v2834 = vld [vmem:[#allocation8 + $0x788] sm:$0xff]
        %v2835 = vld [vmem:[#allocation8 + $0x790] sm:$0xff]
        %v2836 = vld [vmem:[#allocation8 + $0x798] sm:$0xff]
        %v2837 = vld [vmem:[#allocation8 + $0x7a0] sm:$0xff]
        %v2838 = vld [vmem:[#allocation8 + $0x7a8] sm:$0xff]
        %v2839 = vld [vmem:[#allocation8 + $0x7b0] sm:$0xff]
        %v2840 = vld [vmem:[#allocation8 + $0x7b8] sm:$0xff]
        %v2841 = vld [vmem:[#allocation8 + $0x7c0] sm:$0xff]
        %v2842 = vld [vmem:[#allocation8 + $0x7c8] sm:$0xff]
        %v2843 = vld [vmem:[#allocation8 + $0x7d0] sm:$0xff]
        %v2844 = vld [vmem:[#allocation8 + $0x7d8] sm:$0xff]
        %v2845 = vld [vmem:[#allocation8 + $0x7e0] sm:$0xff]
        %v2846 = vld [vmem:[#allocation8 + $0x7e8] sm:$0xff]
        %v2847 = vld [vmem:[#allocation8 + $0x7f0] sm:$0xff]
        %v2848 = vld [vmem:[#allocation8 + $0x7f8] sm:$0xff]
        %v2849 = vld [vmem:[#allocation8 + $0x800] sm:$0xff]
        %v2850 = vld [vmem:[#allocation8 + $0x808] sm:$0xff]
        %v2851 = vld [vmem:[#allocation8 + $0x810] sm:$0xff]
        %v2852 = vld [vmem:[#allocation8 + $0x818] sm:$0xff]
        %v2853 = vld [vmem:[#allocation8 + $0x820] sm:$0xff]
        %v2854 = vld [vmem:[#allocation8 + $0x828] sm:$0xff]
        %v2855 = vld [vmem:[#allocation8 + $0x830] sm:$0xff]
        %v2856 = vld [vmem:[#allocation8 + $0x838] sm:$0xff]
        %v2857 = vld [vmem:[#allocation8 + $0x840] sm:$0xff]
        %v2858 = vld [vmem:[#allocation8 + $0x848] sm:$0xff]
        %v2859 = vld [vmem:[#allocation8 + $0x850] sm:$0xff]
        %v2860 = vld [vmem:[#allocation8 + $0x858] sm:$0xff]
        %v2861 = vld [vmem:[#allocation8 + $0x860] sm:$0xff]
        %v2862 = vld [vmem:[#allocation8 + $0x868] sm:$0xff]
        %v2863 = vld [vmem:[#allocation8 + $0x870] sm:$0xff]
        %v2864 = vld [vmem:[#allocation8 + $0x878] sm:$0xff]
        %v2865 = vld [vmem:[#allocation8 + $0x880] sm:$0xff]
        %v2866 = vld [vmem:[#allocation8 + $0x888] sm:$0xff]
        %v2867 = vld [vmem:[#allocation8 + $0x890] sm:$0xff]
        %v2868 = vld [vmem:[#allocation8 + $0x898] sm:$0xff]
        %v2869 = vld [vmem:[#allocation8 + $0x8a0] sm:$0xff]
        %v2870 = vld [vmem:[#allocation8 + $0x8a8] sm:$0xff]
        %v2871 = vld [vmem:[#allocation8 + $0x8b0] sm:$0xff]
        %v2872 = vld [vmem:[#allocation8 + $0x8b8] sm:$0xff]
        %v2873 = vld [vmem:[#allocation8 + $0x8c0] sm:$0xff]
        %v2874 = vld [vmem:[#allocation8 + $0x8c8] sm:$0xff]
        %v2875 = vld [vmem:[#allocation8 + $0x8d0] sm:$0xff]
        %v2876 = vld [vmem:[#allocation8 + $0x8d8] sm:$0xff]
        %v2877 = vld [vmem:[#allocation8 + $0x8e0] sm:$0xff]
        %v2878 = vld [vmem:[#allocation8 + $0x8e8] sm:$0xff]
        %v2879 = vld [vmem:[#allocation8 + $0x8f0] sm:$0xff]
        %v2880 = vld [vmem:[#allocation8 + $0x8f8] sm:$0xff]
        %v2881 = vld [vmem:[#allocation8 + $0x900] sm:$0xff]
        %v2882 = vld [vmem:[#allocation8 + $0x908] sm:$0xff]
        %v2883 = vld [vmem:[#allocation8 + $0x910] sm:$0xff]
        %v2884 = vld [vmem:[#allocation8 + $0x918] sm:$0xff]
        %v2885 = vld [vmem:[#allocation8 + $0x920] sm:$0xff]
        %v2886 = vld [vmem:[#allocation8 + $0x928] sm:$0xff]
        %v2887 = vld [vmem:[#allocation8 + $0x930] sm:$0xff]
        %v2888 = vld [vmem:[#allocation8 + $0x938] sm:$0xff]
        %v2889 = vld [vmem:[#allocation8 + $0x940] sm:$0xff]
        %v2890 = vld [vmem:[#allocation8 + $0x948] sm:$0xff]
        %v2891 = vld [vmem:[#allocation8 + $0x950] sm:$0xff]
        %v2892 = vld [vmem:[#allocation8 + $0x958] sm:$0xff]
        %v2893 = vld [vmem:[#allocation8 + $0x960] sm:$0xff]
        %v2894 = vld [vmem:[#allocation8 + $0x968] sm:$0xff]
        %v2895 = vld [vmem:[#allocation8 + $0x970] sm:$0xff]
        %v2896 = vld [vmem:[#allocation8 + $0x978] sm:$0xff]
        %v2897 = vld [vmem:[#allocation8 + $0x980] sm:$0xff]
        %v2898 = vld [vmem:[#allocation8 + $0x988] sm:$0xff]
        %v2899 = vld [vmem:[#allocation8 + $0x990] sm:$0xff]
        %v2900 = vld [vmem:[#allocation8 + $0x998] sm:$0xff]
        %v2901 = vld [vmem:[#allocation8 + $0x9a0] sm:$0xff]
        %v2902 = vld [vmem:[#allocation8 + $0x9a8] sm:$0xff]
        %v2903 = vld [vmem:[#allocation8 + $0x9b0] sm:$0xff]
        %v2904 = vld [vmem:[#allocation8 + $0x9b8] sm:$0xff]
        %v2905 = vld [vmem:[#allocation8 + $0x9c0] sm:$0xff]
        %v2906 = vld [vmem:[#allocation8 + $0x9c8] sm:$0xff]
        %v2907 = vld [vmem:[#allocation8 + $0x9d0] sm:$0xff]
        %v2908 = vld [vmem:[#allocation8 + $0x9d8] sm:$0xff]
        %v2909 = vld [vmem:[#allocation8 + $0x9e0] sm:$0xff]
        %v2910 = vld [vmem:[#allocation8 + $0x9e8] sm:$0xff]
        %v2911 = vld [vmem:[#allocation8 + $0x9f0] sm:$0xff]
        %v2912 = vld [vmem:[#allocation8 + $0x9f8] sm:$0xff]
        %v2913 = vld [vmem:[#allocation8 + $0xa00] sm:$0xff]
        %v2914 = vld [vmem:[#allocation8 + $0xa08] sm:$0xff]
        %v2915 = vld [vmem:[#allocation8 + $0xa10] sm:$0xff]
        %v2916 = vld [vmem:[#allocation8 + $0xa18] sm:$0xff]
        %v2917 = vld [vmem:[#allocation8 + $0xa20] sm:$0xff]
        %v2918 = vld [vmem:[#allocation8 + $0xa28] sm:$0xff]
        %v2919 = vld [vmem:[#allocation8 + $0xa30] sm:$0xff]
        %v2920 = vld [vmem:[#allocation8 + $0xa38] sm:$0xff]
        %v2921 = vld [vmem:[#allocation8 + $0xa40] sm:$0xff]
        %v2922 = vld [vmem:[#allocation8 + $0xa48] sm:$0xff]
        %v2923 = vld [vmem:[#allocation8 + $0xa50] sm:$0xff]
        %v2924 = vld [vmem:[#allocation8 + $0xa58] sm:$0xff]
        %v2925 = vld [vmem:[#allocation8 + $0xa60] sm:$0xff]
        %v2926 = vld [vmem:[#allocation8 + $0xa68] sm:$0xff]
        %v2927 = vld [vmem:[#allocation8 + $0xa70] sm:$0xff]
        %v2928 = vld [vmem:[#allocation8 + $0xa78] sm:$0xff]
        %v2929 = vld [vmem:[#allocation8 + $0xa80] sm:$0xff]
        %v2930 = vld [vmem:[#allocation8 + $0xa88] sm:$0xff]
        %v2931 = vld [vmem:[#allocation8 + $0xa90] sm:$0xff]
        %v2932 = vld [vmem:[#allocation8 + $0xa98] sm:$0xff]
        %v2933 = vld [vmem:[#allocation8 + $0xaa0] sm:$0xff]
        %v2934 = vld [vmem:[#allocation8 + $0xaa8] sm:$0xff]
        %v2935 = vld [vmem:[#allocation8 + $0xab0] sm:$0xff]
        %v2936 = vld [vmem:[#allocation8 + $0xab8] sm:$0xff]
        %v2937 = vld [vmem:[#allocation8 + $0xac0] sm:$0xff]
        %v2938 = vld [vmem:[#allocation8 + $0xac8] sm:$0xff]
        %v2939 = vld [vmem:[#allocation8 + $0xad0] sm:$0xff]
        %v2940 = vld [vmem:[#allocation8 + $0xad8] sm:$0xff]
        %v2941 = vld [vmem:[#allocation8 + $0xae0] sm:$0xff]
        %v2942 = vld [vmem:[#allocation8 + $0xae8] sm:$0xff]
        %v2943 = vld [vmem:[#allocation8 + $0xaf0] sm:$0xff]
        %v2944 = vld [vmem:[#allocation8 + $0xaf8] sm:$0xff]
        %v2945 = vld [vmem:[#allocation8 + $0xb00] sm:$0xff]
        %v2946 = vld [vmem:[#allocation8 + $0xb08] sm:$0xff]
        %v2947 = vld [vmem:[#allocation8 + $0xb10] sm:$0xff]
        %v2948 = vld [vmem:[#allocation8 + $0xb18] sm:$0xff]
        %v2949 = vld [vmem:[#allocation8 + $0xb20] sm:$0xff]
        %v2950 = vld [vmem:[#allocation8 + $0xb28] sm:$0xff]
        %v2951 = vld [vmem:[#allocation8 + $0xb30] sm:$0xff]
        %v2952 = vld [vmem:[#allocation8 + $0xb38] sm:$0xff]
        %v2953 = vld [vmem:[#allocation8 + $0xb40] sm:$0xff]
        %v2954 = vld [vmem:[#allocation8 + $0xb48] sm:$0xff]
        %v2955 = vld [vmem:[#allocation8 + $0xb50] sm:$0xff]
        %v2956 = vld [vmem:[#allocation8 + $0xb58] sm:$0xff]
        %v2957 = vld [vmem:[#allocation8 + $0xb60] sm:$0xff]
        %v2958 = vld [vmem:[#allocation8 + $0xb68] sm:$0xff]
        %v2959 = vld [vmem:[#allocation8 + $0xb70] sm:$0xff]
        %v2960 = vld [vmem:[#allocation8 + $0xb78] sm:$0xff]
        %v2961 = vld [vmem:[#allocation8 + $0xb80] sm:$0xff]
        %v2962 = vld [vmem:[#allocation8 + $0xb88] sm:$0xff]
        %v2963 = vld [vmem:[#allocation8 + $0xb90] sm:$0xff]
        %v2964 = vld [vmem:[#allocation8 + $0xb98] sm:$0xff]
        %v2965 = vld [vmem:[#allocation8 + $0xba0] sm:$0xff]
        %v2966 = vld [vmem:[#allocation8 + $0xba8] sm:$0xff]
        %v2967 = vld [vmem:[#allocation8 + $0xbb0] sm:$0xff]
        %v2968 = vld [vmem:[#allocation8 + $0xbb8] sm:$0xff]
        %v2969 = vld [vmem:[#allocation8 + $0xbc0] sm:$0xff]
        %v2970 = vld [vmem:[#allocation8 + $0xbc8] sm:$0xff]
        %v2971 = vld [vmem:[#allocation8 + $0xbd0] sm:$0xff]
        %v2972 = vld [vmem:[#allocation8 + $0xbd8] sm:$0xff]
        %v2973 = vld [vmem:[#allocation8 + $0xbe0] sm:$0xff]
        %v2974 = vld [vmem:[#allocation8 + $0xbe8] sm:$0xff]
        %v2975 = vld [vmem:[#allocation8 + $0xbf0] sm:$0xff]
        %v2976 = vld [vmem:[#allocation8 + $0xbf8] sm:$0xff]
        %v3361 = vunpack.c.l.b16 %v2593
        %v3362 = vunpack.c.h.b16 %v2593
        %v3363 = vunpack.c.l.b16 %v2594
        %v3364 = vunpack.c.h.b16 %v2594
        %v3365 = vunpack.c.l.b16 %v2595
        %v3366 = vunpack.c.h.b16 %v2595
        %v3367 = vunpack.c.l.b16 %v2596
        %v3368 = vunpack.c.h.b16 %v2596
        %v3369 = vunpack.c.l.b16 %v2597
        %v3370 = vunpack.c.h.b16 %v2597
        %v3371 = vunpack.c.l.b16 %v2598
        %v3372 = vunpack.c.h.b16 %v2598
        %v3373 = vunpack.c.l.b16 %v2599
        %v3374 = vunpack.c.h.b16 %v2599
        %v3375 = vunpack.c.l.b16 %v2600
        %v3376 = vunpack.c.h.b16 %v2600
        %v3377 = vunpack.c.l.b16 %v2601
        %v3378 = vunpack.c.h.b16 %v2601
        %v3379 = vunpack.c.l.b16 %v2602
        %v3380 = vunpack.c.h.b16 %v2602
        %v3381 = vunpack.c.l.b16 %v2603
        %v3382 = vunpack.c.h.b16 %v2603
        %v3383 = vunpack.c.l.b16 %v2604
        %v3384 = vunpack.c.h.b16 %v2604
        %v3385 = vunpack.c.l.b16 %v2605
        %v3386 = vunpack.c.h.b16 %v2605
        %v3387 = vunpack.c.l.b16 %v2606
        %v3388 = vunpack.c.h.b16 %v2606
        %v3389 = vunpack.c.l.b16 %v2607
        %v3390 = vunpack.c.h.b16 %v2607
        %v3391 = vunpack.c.l.b16 %v2608
        %v3392 = vunpack.c.h.b16 %v2608
        %v3393 = vunpack.c.l.b16 %v2609
        %v3394 = vunpack.c.h.b16 %v2609
        %v3395 = vunpack.c.l.b16 %v2610
        %v3396 = vunpack.c.h.b16 %v2610
        %v3397 = vunpack.c.l.b16 %v2611
        %v3398 = vunpack.c.h.b16 %v2611
        %v3399 = vunpack.c.l.b16 %v2612
        %v3400 = vunpack.c.h.b16 %v2612
        %v3401 = vunpack.c.l.b16 %v2613
        %v3402 = vunpack.c.h.b16 %v2613
        %v3403 = vunpack.c.l.b16 %v2614
        %v3404 = vunpack.c.h.b16 %v2614
        %v3405 = vunpack.c.l.b16 %v2615
        %v3406 = vunpack.c.h.b16 %v2615
        %v3407 = vunpack.c.l.b16 %v2616
        %v3408 = vunpack.c.h.b16 %v2616
        %v3409 = vunpack.c.l.b16 %v2617
        %v3410 = vunpack.c.h.b16 %v2617
        %v3411 = vunpack.c.l.b16 %v2618
        %v3412 = vunpack.c.h.b16 %v2618
        %v3413 = vunpack.c.l.b16 %v2619
        %v3414 = vunpack.c.h.b16 %v2619
        %v3415 = vunpack.c.l.b16 %v2620
        %v3416 = vunpack.c.h.b16 %v2620
        %v3417 = vunpack.c.l.b16 %v2621
        %v3418 = vunpack.c.h.b16 %v2621
        %v3419 = vunpack.c.l.b16 %v2622
        %v3420 = vunpack.c.h.b16 %v2622
        %v3421 = vunpack.c.l.b16 %v2623
        %v3422 = vunpack.c.h.b16 %v2623
        %v3423 = vunpack.c.l.b16 %v2624
        %v3424 = vunpack.c.h.b16 %v2624
        %v3425 = vunpack.c.l.b16 %v2625
        %v3426 = vunpack.c.h.b16 %v2625
        %v3427 = vunpack.c.l.b16 %v2626
        %v3428 = vunpack.c.h.b16 %v2626
        %v3429 = vunpack.c.l.b16 %v2627
        %v3430 = vunpack.c.h.b16 %v2627
        %v3431 = vunpack.c.l.b16 %v2628
        %v3432 = vunpack.c.h.b16 %v2628
        %v3433 = vunpack.c.l.b16 %v2629
        %v3434 = vunpack.c.h.b16 %v2629
        %v3435 = vunpack.c.l.b16 %v2630
        %v3436 = vunpack.c.h.b16 %v2630
        %v3437 = vunpack.c.l.b16 %v2631
        %v3438 = vunpack.c.h.b16 %v2631
        %v3439 = vunpack.c.l.b16 %v2632
        %v3440 = vunpack.c.h.b16 %v2632
        %v3441 = vunpack.c.l.b16 %v2633
        %v3442 = vunpack.c.h.b16 %v2633
        %v3443 = vunpack.c.l.b16 %v2634
        %v3444 = vunpack.c.h.b16 %v2634
        %v3445 = vunpack.c.l.b16 %v2635
        %v3446 = vunpack.c.h.b16 %v2635
        %v3447 = vunpack.c.l.b16 %v2636
        %v3448 = vunpack.c.h.b16 %v2636
        %v3449 = vunpack.c.l.b16 %v2637
        %v3450 = vunpack.c.h.b16 %v2637
        %v3451 = vunpack.c.l.b16 %v2638
        %v3452 = vunpack.c.h.b16 %v2638
        %v3453 = vunpack.c.l.b16 %v2639
        %v3454 = vunpack.c.h.b16 %v2639
        %v3455 = vunpack.c.l.b16 %v2640
        %v3456 = vunpack.c.h.b16 %v2640
        %v3457 = vunpack.c.l.b16 %v2641
        %v3458 = vunpack.c.h.b16 %v2641
        %v3459 = vunpack.c.l.b16 %v2642
        %v3460 = vunpack.c.h.b16 %v2642
        %v3461 = vunpack.c.l.b16 %v2643
        %v3462 = vunpack.c.h.b16 %v2643
        %v3463 = vunpack.c.l.b16 %v2644
        %v3464 = vunpack.c.h.b16 %v2644
        %v3465 = vunpack.c.l.b16 %v2645
        %v3466 = vunpack.c.h.b16 %v2645
        %v3467 = vunpack.c.l.b16 %v2646
        %v3468 = vunpack.c.h.b16 %v2646
        %v3469 = vunpack.c.l.b16 %v2647
        %v3470 = vunpack.c.h.b16 %v2647
        %v3471 = vunpack.c.l.b16 %v2648
        %v3472 = vunpack.c.h.b16 %v2648
        %v3473 = vunpack.c.l.b16 %v2649
        %v3474 = vunpack.c.h.b16 %v2649
        %v3475 = vunpack.c.l.b16 %v2650
        %v3476 = vunpack.c.h.b16 %v2650
        %v3477 = vunpack.c.l.b16 %v2651
        %v3478 = vunpack.c.h.b16 %v2651
        %v3479 = vunpack.c.l.b16 %v2652
        %v3480 = vunpack.c.h.b16 %v2652
        %v3481 = vunpack.c.l.b16 %v2653
        %v3482 = vunpack.c.h.b16 %v2653
        %v3483 = vunpack.c.l.b16 %v2654
        %v3484 = vunpack.c.h.b16 %v2654
        %v3485 = vunpack.c.l.b16 %v2655
        %v3486 = vunpack.c.h.b16 %v2655
        %v3487 = vunpack.c.l.b16 %v2656
        %v3488 = vunpack.c.h.b16 %v2656
        %v3489 = vunpack.c.l.b16 %v2657
        %v3490 = vunpack.c.h.b16 %v2657
        %v3491 = vunpack.c.l.b16 %v2658
        %v3492 = vunpack.c.h.b16 %v2658
        %v3493 = vunpack.c.l.b16 %v2659
        %v3494 = vunpack.c.h.b16 %v2659
        %v3495 = vunpack.c.l.b16 %v2660
        %v3496 = vunpack.c.h.b16 %v2660
        %v3497 = vunpack.c.l.b16 %v2661
        %v3498 = vunpack.c.h.b16 %v2661
        %v3499 = vunpack.c.l.b16 %v2662
        %v3500 = vunpack.c.h.b16 %v2662
        %v3501 = vunpack.c.l.b16 %v2663
        %v3502 = vunpack.c.h.b16 %v2663
        %v3503 = vunpack.c.l.b16 %v2664
        %v3504 = vunpack.c.h.b16 %v2664
        %v3505 = vunpack.c.l.b16 %v2665
        %v3506 = vunpack.c.h.b16 %v2665
        %v3507 = vunpack.c.l.b16 %v2666
        %v3508 = vunpack.c.h.b16 %v2666
        %v3509 = vunpack.c.l.b16 %v2667
        %v3510 = vunpack.c.h.b16 %v2667
        %v3511 = vunpack.c.l.b16 %v2668
        %v3512 = vunpack.c.h.b16 %v2668
        %v3513 = vunpack.c.l.b16 %v2669
        %v3514 = vunpack.c.h.b16 %v2669
        %v3515 = vunpack.c.l.b16 %v2670
        %v3516 = vunpack.c.h.b16 %v2670
        %v3517 = vunpack.c.l.b16 %v2671
        %v3518 = vunpack.c.h.b16 %v2671
        %v3519 = vunpack.c.l.b16 %v2672
        %v3520 = vunpack.c.h.b16 %v2672
        %v3521 = vunpack.c.l.b16 %v2673
        %v3522 = vunpack.c.h.b16 %v2673
        %v3523 = vunpack.c.l.b16 %v2674
        %v3524 = vunpack.c.h.b16 %v2674
        %v3525 = vunpack.c.l.b16 %v2675
        %v3526 = vunpack.c.h.b16 %v2675
        %v3527 = vunpack.c.l.b16 %v2676
        %v3528 = vunpack.c.h.b16 %v2676
        %v3529 = vunpack.c.l.b16 %v2677
        %v3530 = vunpack.c.h.b16 %v2677
        %v3531 = vunpack.c.l.b16 %v2678
        %v3532 = vunpack.c.h.b16 %v2678
        %v3533 = vunpack.c.l.b16 %v2679
        %v3534 = vunpack.c.h.b16 %v2679
        %v3535 = vunpack.c.l.b16 %v2680
        %v3536 = vunpack.c.h.b16 %v2680
        %v3537 = vunpack.c.l.b16 %v2681
        %v3538 = vunpack.c.h.b16 %v2681
        %v3539 = vunpack.c.l.b16 %v2682
        %v3540 = vunpack.c.h.b16 %v2682
        %v3541 = vunpack.c.l.b16 %v2683
        %v3542 = vunpack.c.h.b16 %v2683
        %v3543 = vunpack.c.l.b16 %v2684
        %v3544 = vunpack.c.h.b16 %v2684
        %v3545 = vunpack.c.l.b16 %v2685
        %v3546 = vunpack.c.h.b16 %v2685
        %v3547 = vunpack.c.l.b16 %v2686
        %v3548 = vunpack.c.h.b16 %v2686
        %v3549 = vunpack.c.l.b16 %v2687
        %v3550 = vunpack.c.h.b16 %v2687
        %v3551 = vunpack.c.l.b16 %v2688
        %v3552 = vunpack.c.h.b16 %v2688
        %v3553 = vunpack.c.l.b16 %v2689
        %v3554 = vunpack.c.h.b16 %v2689
        %v3555 = vunpack.c.l.b16 %v2690
        %v3556 = vunpack.c.h.b16 %v2690
        %v3557 = vunpack.c.l.b16 %v2691
        %v3558 = vunpack.c.h.b16 %v2691
        %v3559 = vunpack.c.l.b16 %v2692
        %v3560 = vunpack.c.h.b16 %v2692
        %v3561 = vunpack.c.l.b16 %v2693
        %v3562 = vunpack.c.h.b16 %v2693
        %v3563 = vunpack.c.l.b16 %v2694
        %v3564 = vunpack.c.h.b16 %v2694
        %v3565 = vunpack.c.l.b16 %v2695
        %v3566 = vunpack.c.h.b16 %v2695
        %v3567 = vunpack.c.l.b16 %v2696
        %v3568 = vunpack.c.h.b16 %v2696
        %v3569 = vunpack.c.l.b16 %v2697
        %v3570 = vunpack.c.h.b16 %v2697
        %v3571 = vunpack.c.l.b16 %v2698
        %v3572 = vunpack.c.h.b16 %v2698
        %v3573 = vunpack.c.l.b16 %v2699
        %v3574 = vunpack.c.h.b16 %v2699
        %v3575 = vunpack.c.l.b16 %v2700
        %v3576 = vunpack.c.h.b16 %v2700
        %v3577 = vunpack.c.l.b16 %v2701
        %v3578 = vunpack.c.h.b16 %v2701
        %v3579 = vunpack.c.l.b16 %v2702
        %v3580 = vunpack.c.h.b16 %v2702
        %v3581 = vunpack.c.l.b16 %v2703
        %v3582 = vunpack.c.h.b16 %v2703
        %v3583 = vunpack.c.l.b16 %v2704
        %v3584 = vunpack.c.h.b16 %v2704
        %v3585 = vunpack.c.l.b16 %v2705
        %v3586 = vunpack.c.h.b16 %v2705
        %v3587 = vunpack.c.l.b16 %v2706
        %v3588 = vunpack.c.h.b16 %v2706
        %v3589 = vunpack.c.l.b16 %v2707
        %v3590 = vunpack.c.h.b16 %v2707
        %v3591 = vunpack.c.l.b16 %v2708
        %v3592 = vunpack.c.h.b16 %v2708
        %v3593 = vunpack.c.l.b16 %v2709
        %v3594 = vunpack.c.h.b16 %v2709
        %v3595 = vunpack.c.l.b16 %v2710
        %v3596 = vunpack.c.h.b16 %v2710
        %v3597 = vunpack.c.l.b16 %v2711
        %v3598 = vunpack.c.h.b16 %v2711
        %v3599 = vunpack.c.l.b16 %v2712
        %v3600 = vunpack.c.h.b16 %v2712
        %v3601 = vunpack.c.l.b16 %v2713
        %v3602 = vunpack.c.h.b16 %v2713
        %v3603 = vunpack.c.l.b16 %v2714
        %v3604 = vunpack.c.h.b16 %v2714
        %v3605 = vunpack.c.l.b16 %v2715
        %v3606 = vunpack.c.h.b16 %v2715
        %v3607 = vunpack.c.l.b16 %v2716
        %v3608 = vunpack.c.h.b16 %v2716
        %v3609 = vunpack.c.l.b16 %v2717
        %v3610 = vunpack.c.h.b16 %v2717
        %v3611 = vunpack.c.l.b16 %v2718
        %v3612 = vunpack.c.h.b16 %v2718
        %v3613 = vunpack.c.l.b16 %v2719
        %v3614 = vunpack.c.h.b16 %v2719
        %v3615 = vunpack.c.l.b16 %v2720
        %v3616 = vunpack.c.h.b16 %v2720
        %v3617 = vunpack.c.l.b16 %v2721
        %v3618 = vunpack.c.h.b16 %v2721
        %v3619 = vunpack.c.l.b16 %v2722
        %v3620 = vunpack.c.h.b16 %v2722
        %v3621 = vunpack.c.l.b16 %v2723
        %v3622 = vunpack.c.h.b16 %v2723
        %v3623 = vunpack.c.l.b16 %v2724
        %v3624 = vunpack.c.h.b16 %v2724
        %v3625 = vunpack.c.l.b16 %v2725
        %v3626 = vunpack.c.h.b16 %v2725
        %v3627 = vunpack.c.l.b16 %v2726
        %v3628 = vunpack.c.h.b16 %v2726
        %v3629 = vunpack.c.l.b16 %v2727
        %v3630 = vunpack.c.h.b16 %v2727
        %v3631 = vunpack.c.l.b16 %v2728
        %v3632 = vunpack.c.h.b16 %v2728
        %v3633 = vunpack.c.l.b16 %v2729
        %v3634 = vunpack.c.h.b16 %v2729
        %v3635 = vunpack.c.l.b16 %v2730
        %v3636 = vunpack.c.h.b16 %v2730
        %v3637 = vunpack.c.l.b16 %v2731
        %v3638 = vunpack.c.h.b16 %v2731
        %v3639 = vunpack.c.l.b16 %v2732
        %v3640 = vunpack.c.h.b16 %v2732
        %v3641 = vunpack.c.l.b16 %v2733
        %v3642 = vunpack.c.h.b16 %v2733
        %v3643 = vunpack.c.l.b16 %v2734
        %v3644 = vunpack.c.h.b16 %v2734
        %v3645 = vunpack.c.l.b16 %v2735
        %v3646 = vunpack.c.h.b16 %v2735
        %v3647 = vunpack.c.l.b16 %v2736
        %v3648 = vunpack.c.h.b16 %v2736
        %v3649 = vunpack.c.l.b16 %v2737
        %v3650 = vunpack.c.h.b16 %v2737
        %v3651 = vunpack.c.l.b16 %v2738
        %v3652 = vunpack.c.h.b16 %v2738
        %v3653 = vunpack.c.l.b16 %v2739
        %v3654 = vunpack.c.h.b16 %v2739
        %v3655 = vunpack.c.l.b16 %v2740
        %v3656 = vunpack.c.h.b16 %v2740
        %v3657 = vunpack.c.l.b16 %v2741
        %v3658 = vunpack.c.h.b16 %v2741
        %v3659 = vunpack.c.l.b16 %v2742
        %v3660 = vunpack.c.h.b16 %v2742
        %v3661 = vunpack.c.l.b16 %v2743
        %v3662 = vunpack.c.h.b16 %v2743
        %v3663 = vunpack.c.l.b16 %v2744
        %v3664 = vunpack.c.h.b16 %v2744
        %v3665 = vunpack.c.l.b16 %v2745
        %v3666 = vunpack.c.h.b16 %v2745
        %v3667 = vunpack.c.l.b16 %v2746
        %v3668 = vunpack.c.h.b16 %v2746
        %v3669 = vunpack.c.l.b16 %v2747
        %v3670 = vunpack.c.h.b16 %v2747
        %v3671 = vunpack.c.l.b16 %v2748
        %v3672 = vunpack.c.h.b16 %v2748
        %v3673 = vunpack.c.l.b16 %v2749
        %v3674 = vunpack.c.h.b16 %v2749
        %v3675 = vunpack.c.l.b16 %v2750
        %v3676 = vunpack.c.h.b16 %v2750
        %v3677 = vunpack.c.l.b16 %v2751
        %v3678 = vunpack.c.h.b16 %v2751
        %v3679 = vunpack.c.l.b16 %v2752
        %v3680 = vunpack.c.h.b16 %v2752
        %v3681 = vunpack.c.l.b16 %v2753
        %v3682 = vunpack.c.h.b16 %v2753
        %v3683 = vunpack.c.l.b16 %v2754
        %v3684 = vunpack.c.h.b16 %v2754
        %v3685 = vunpack.c.l.b16 %v2755
        %v3686 = vunpack.c.h.b16 %v2755
        %v3687 = vunpack.c.l.b16 %v2756
        %v3688 = vunpack.c.h.b16 %v2756
        %v3689 = vunpack.c.l.b16 %v2757
        %v3690 = vunpack.c.h.b16 %v2757
        %v3691 = vunpack.c.l.b16 %v2758
        %v3692 = vunpack.c.h.b16 %v2758
        %v3693 = vunpack.c.l.b16 %v2759
        %v3694 = vunpack.c.h.b16 %v2759
        %v3695 = vunpack.c.l.b16 %v2760
        %v3696 = vunpack.c.h.b16 %v2760
        %v3697 = vunpack.c.l.b16 %v2761
        %v3698 = vunpack.c.h.b16 %v2761
        %v3699 = vunpack.c.l.b16 %v2762
        %v3700 = vunpack.c.h.b16 %v2762
        %v3701 = vunpack.c.l.b16 %v2763
        %v3702 = vunpack.c.h.b16 %v2763
        %v3703 = vunpack.c.l.b16 %v2764
        %v3704 = vunpack.c.h.b16 %v2764
        %v3705 = vunpack.c.l.b16 %v2765
        %v3706 = vunpack.c.h.b16 %v2765
        %v3707 = vunpack.c.l.b16 %v2766
        %v3708 = vunpack.c.h.b16 %v2766
        %v3709 = vunpack.c.l.b16 %v2767
        %v3710 = vunpack.c.h.b16 %v2767
        %v3711 = vunpack.c.l.b16 %v2768
        %v3712 = vunpack.c.h.b16 %v2768
        %v3713 = vunpack.c.l.b16 %v2769
        %v3714 = vunpack.c.h.b16 %v2769
        %v3715 = vunpack.c.l.b16 %v2770
        %v3716 = vunpack.c.h.b16 %v2770
        %v3717 = vunpack.c.l.b16 %v2771
        %v3718 = vunpack.c.h.b16 %v2771
        %v3719 = vunpack.c.l.b16 %v2772
        %v3720 = vunpack.c.h.b16 %v2772
        %v3721 = vunpack.c.l.b16 %v2773
        %v3722 = vunpack.c.h.b16 %v2773
        %v3723 = vunpack.c.l.b16 %v2774
        %v3724 = vunpack.c.h.b16 %v2774
        %v3725 = vunpack.c.l.b16 %v2775
        %v3726 = vunpack.c.h.b16 %v2775
        %v3727 = vunpack.c.l.b16 %v2776
        %v3728 = vunpack.c.h.b16 %v2776
        %v3729 = vunpack.c.l.b16 %v2777
        %v3730 = vunpack.c.h.b16 %v2777
        %v3731 = vunpack.c.l.b16 %v2778
        %v3732 = vunpack.c.h.b16 %v2778
        %v3733 = vunpack.c.l.b16 %v2779
        %v3734 = vunpack.c.h.b16 %v2779
        %v3735 = vunpack.c.l.b16 %v2780
        %v3736 = vunpack.c.h.b16 %v2780
        %v3737 = vunpack.c.l.b16 %v2781
        %v3738 = vunpack.c.h.b16 %v2781
        %v3739 = vunpack.c.l.b16 %v2782
        %v3740 = vunpack.c.h.b16 %v2782
        %v3741 = vunpack.c.l.b16 %v2783
        %v3742 = vunpack.c.h.b16 %v2783
        %v3743 = vunpack.c.l.b16 %v2784
        %v3744 = vunpack.c.h.b16 %v2784
        %v3745 = vunpack.c.l.b16 %v2785
        %v3746 = vunpack.c.h.b16 %v2785
        %v3747 = vunpack.c.l.b16 %v2786
        %v3748 = vunpack.c.h.b16 %v2786
        %v3749 = vunpack.c.l.b16 %v2787
        %v3750 = vunpack.c.h.b16 %v2787
        %v3751 = vunpack.c.l.b16 %v2788
        %v3752 = vunpack.c.h.b16 %v2788
        %v3753 = vunpack.c.l.b16 %v2789
        %v3754 = vunpack.c.h.b16 %v2789
        %v3755 = vunpack.c.l.b16 %v2790
        %v3756 = vunpack.c.h.b16 %v2790
        %v3757 = vunpack.c.l.b16 %v2791
        %v3758 = vunpack.c.h.b16 %v2791
        %v3759 = vunpack.c.l.b16 %v2792
        %v3760 = vunpack.c.h.b16 %v2792
        %v3761 = vunpack.c.l.b16 %v2793
        %v3762 = vunpack.c.h.b16 %v2793
        %v3763 = vunpack.c.l.b16 %v2794
        %v3764 = vunpack.c.h.b16 %v2794
        %v3765 = vunpack.c.l.b16 %v2795
        %v3766 = vunpack.c.h.b16 %v2795
        %v3767 = vunpack.c.l.b16 %v2796
        %v3768 = vunpack.c.h.b16 %v2796
        %v3769 = vunpack.c.l.b16 %v2797
        %v3770 = vunpack.c.h.b16 %v2797
        %v3771 = vunpack.c.l.b16 %v2798
        %v3772 = vunpack.c.h.b16 %v2798
        %v3773 = vunpack.c.l.b16 %v2799
        %v3774 = vunpack.c.h.b16 %v2799
        %v3775 = vunpack.c.l.b16 %v2800
        %v3776 = vunpack.c.h.b16 %v2800
        %v3777 = vunpack.c.l.b16 %v2801
        %v3778 = vunpack.c.h.b16 %v2801
        %v3779 = vunpack.c.l.b16 %v2802
        %v3780 = vunpack.c.h.b16 %v2802
        %v3781 = vunpack.c.l.b16 %v2803
        %v3782 = vunpack.c.h.b16 %v2803
        %v3783 = vunpack.c.l.b16 %v2804
        %v3784 = vunpack.c.h.b16 %v2804
        %v3785 = vunpack.c.l.b16 %v2805
        %v3786 = vunpack.c.h.b16 %v2805
        %v3787 = vunpack.c.l.b16 %v2806
        %v3788 = vunpack.c.h.b16 %v2806
        %v3789 = vunpack.c.l.b16 %v2807
        %v3790 = vunpack.c.h.b16 %v2807
        %v3791 = vunpack.c.l.b16 %v2808
        %v3792 = vunpack.c.h.b16 %v2808
        %v3793 = vunpack.c.l.b16 %v2809
        %v3794 = vunpack.c.h.b16 %v2809
        %v3795 = vunpack.c.l.b16 %v2810
        %v3796 = vunpack.c.h.b16 %v2810
        %v3797 = vunpack.c.l.b16 %v2811
        %v3798 = vunpack.c.h.b16 %v2811
        %v3799 = vunpack.c.l.b16 %v2812
        %v3800 = vunpack.c.h.b16 %v2812
        %v3801 = vunpack.c.l.b16 %v2813
        %v3802 = vunpack.c.h.b16 %v2813
        %v3803 = vunpack.c.l.b16 %v2814
        %v3804 = vunpack.c.h.b16 %v2814
        %v3805 = vunpack.c.l.b16 %v2815
        %v3806 = vunpack.c.h.b16 %v2815
        %v3807 = vunpack.c.l.b16 %v2816
        %v3808 = vunpack.c.h.b16 %v2816
        %v3809 = vunpack.c.l.b16 %v2817
        %v3810 = vunpack.c.h.b16 %v2817
        %v3811 = vunpack.c.l.b16 %v2818
        %v3812 = vunpack.c.h.b16 %v2818
        %v3813 = vunpack.c.l.b16 %v2819
        %v3814 = vunpack.c.h.b16 %v2819
        %v3815 = vunpack.c.l.b16 %v2820
        %v3816 = vunpack.c.h.b16 %v2820
        %v3817 = vunpack.c.l.b16 %v2821
        %v3818 = vunpack.c.h.b16 %v2821
        %v3819 = vunpack.c.l.b16 %v2822
        %v3820 = vunpack.c.h.b16 %v2822
        %v3821 = vunpack.c.l.b16 %v2823
        %v3822 = vunpack.c.h.b16 %v2823
        %v3823 = vunpack.c.l.b16 %v2824
        %v3824 = vunpack.c.h.b16 %v2824
        %v3825 = vunpack.c.l.b16 %v2825
        %v3826 = vunpack.c.h.b16 %v2825
        %v3827 = vunpack.c.l.b16 %v2826
        %v3828 = vunpack.c.h.b16 %v2826
        %v3829 = vunpack.c.l.b16 %v2827
        %v3830 = vunpack.c.h.b16 %v2827
        %v3831 = vunpack.c.l.b16 %v2828
        %v3832 = vunpack.c.h.b16 %v2828
        %v3833 = vunpack.c.l.b16 %v2829
        %v3834 = vunpack.c.h.b16 %v2829
        %v3835 = vunpack.c.l.b16 %v2830
        %v3836 = vunpack.c.h.b16 %v2830
        %v3837 = vunpack.c.l.b16 %v2831
        %v3838 = vunpack.c.h.b16 %v2831
        %v3839 = vunpack.c.l.b16 %v2832
        %v3840 = vunpack.c.h.b16 %v2832
        %v3841 = vunpack.c.l.b16 %v2833
        %v3842 = vunpack.c.h.b16 %v2833
        %v3843 = vunpack.c.l.b16 %v2834
        %v3844 = vunpack.c.h.b16 %v2834
        %v3845 = vunpack.c.l.b16 %v2835
        %v3846 = vunpack.c.h.b16 %v2835
        %v3847 = vunpack.c.l.b16 %v2836
        %v3848 = vunpack.c.h.b16 %v2836
        %v3849 = vunpack.c.l.b16 %v2837
        %v3850 = vunpack.c.h.b16 %v2837
        %v3851 = vunpack.c.l.b16 %v2838
        %v3852 = vunpack.c.h.b16 %v2838
        %v3853 = vunpack.c.l.b16 %v2839
        %v3854 = vunpack.c.h.b16 %v2839
        %v3855 = vunpack.c.l.b16 %v2840
        %v3856 = vunpack.c.h.b16 %v2840
        %v3857 = vunpack.c.l.b16 %v2841
        %v3858 = vunpack.c.h.b16 %v2841
        %v3859 = vunpack.c.l.b16 %v2842
        %v3860 = vunpack.c.h.b16 %v2842
        %v3861 = vunpack.c.l.b16 %v2843
        %v3862 = vunpack.c.h.b16 %v2843
        %v3863 = vunpack.c.l.b16 %v2844
        %v3864 = vunpack.c.h.b16 %v2844
        %v3865 = vunpack.c.l.b16 %v2845
        %v3866 = vunpack.c.h.b16 %v2845
        %v3867 = vunpack.c.l.b16 %v2846
        %v3868 = vunpack.c.h.b16 %v2846
        %v3869 = vunpack.c.l.b16 %v2847
        %v3870 = vunpack.c.h.b16 %v2847
        %v3871 = vunpack.c.l.b16 %v2848
        %v3872 = vunpack.c.h.b16 %v2848
        %v3873 = vunpack.c.l.b16 %v2849
        %v3874 = vunpack.c.h.b16 %v2849
        %v3875 = vunpack.c.l.b16 %v2850
        %v3876 = vunpack.c.h.b16 %v2850
        %v3877 = vunpack.c.l.b16 %v2851
        %v3878 = vunpack.c.h.b16 %v2851
        %v3879 = vunpack.c.l.b16 %v2852
        %v3880 = vunpack.c.h.b16 %v2852
        %v3881 = vunpack.c.l.b16 %v2853
        %v3882 = vunpack.c.h.b16 %v2853
        %v3883 = vunpack.c.l.b16 %v2854
        %v3884 = vunpack.c.h.b16 %v2854
        %v3885 = vunpack.c.l.b16 %v2855
        %v3886 = vunpack.c.h.b16 %v2855
        %v3887 = vunpack.c.l.b16 %v2856
        %v3888 = vunpack.c.h.b16 %v2856
        %v3889 = vunpack.c.l.b16 %v2857
        %v3890 = vunpack.c.h.b16 %v2857
        %v3891 = vunpack.c.l.b16 %v2858
        %v3892 = vunpack.c.h.b16 %v2858
        %v3893 = vunpack.c.l.b16 %v2859
        %v3894 = vunpack.c.h.b16 %v2859
        %v3895 = vunpack.c.l.b16 %v2860
        %v3896 = vunpack.c.h.b16 %v2860
        %v3897 = vunpack.c.l.b16 %v2861
        %v3898 = vunpack.c.h.b16 %v2861
        %v3899 = vunpack.c.l.b16 %v2862
        %v3900 = vunpack.c.h.b16 %v2862
        %v3901 = vunpack.c.l.b16 %v2863
        %v3902 = vunpack.c.h.b16 %v2863
        %v3903 = vunpack.c.l.b16 %v2864
        %v3904 = vunpack.c.h.b16 %v2864
        %v3905 = vunpack.c.l.b16 %v2865
        %v3906 = vunpack.c.h.b16 %v2865
        %v3907 = vunpack.c.l.b16 %v2866
        %v3908 = vunpack.c.h.b16 %v2866
        %v3909 = vunpack.c.l.b16 %v2867
        %v3910 = vunpack.c.h.b16 %v2867
        %v3911 = vunpack.c.l.b16 %v2868
        %v3912 = vunpack.c.h.b16 %v2868
        %v3913 = vunpack.c.l.b16 %v2869
        %v3914 = vunpack.c.h.b16 %v2869
        %v3915 = vunpack.c.l.b16 %v2870
        %v3916 = vunpack.c.h.b16 %v2870
        %v3917 = vunpack.c.l.b16 %v2871
        %v3918 = vunpack.c.h.b16 %v2871
        %v3919 = vunpack.c.l.b16 %v2872
        %v3920 = vunpack.c.h.b16 %v2872
        %v3921 = vunpack.c.l.b16 %v2873
        %v3922 = vunpack.c.h.b16 %v2873
        %v3923 = vunpack.c.l.b16 %v2874
        %v3924 = vunpack.c.h.b16 %v2874
        %v3925 = vunpack.c.l.b16 %v2875
        %v3926 = vunpack.c.h.b16 %v2875
        %v3927 = vunpack.c.l.b16 %v2876
        %v3928 = vunpack.c.h.b16 %v2876
        %v3929 = vunpack.c.l.b16 %v2877
        %v3930 = vunpack.c.h.b16 %v2877
        %v3931 = vunpack.c.l.b16 %v2878
        %v3932 = vunpack.c.h.b16 %v2878
        %v3933 = vunpack.c.l.b16 %v2879
        %v3934 = vunpack.c.h.b16 %v2879
        %v3935 = vunpack.c.l.b16 %v2880
        %v3936 = vunpack.c.h.b16 %v2880
        %v3937 = vunpack.c.l.b16 %v2881
        %v3938 = vunpack.c.h.b16 %v2881
        %v3939 = vunpack.c.l.b16 %v2882
        %v3940 = vunpack.c.h.b16 %v2882
        %v3941 = vunpack.c.l.b16 %v2883
        %v3942 = vunpack.c.h.b16 %v2883
        %v3943 = vunpack.c.l.b16 %v2884
        %v3944 = vunpack.c.h.b16 %v2884
        %v3945 = vunpack.c.l.b16 %v2885
        %v3946 = vunpack.c.h.b16 %v2885
        %v3947 = vunpack.c.l.b16 %v2886
        %v3948 = vunpack.c.h.b16 %v2886
        %v3949 = vunpack.c.l.b16 %v2887
        %v3950 = vunpack.c.h.b16 %v2887
        %v3951 = vunpack.c.l.b16 %v2888
        %v3952 = vunpack.c.h.b16 %v2888
        %v3953 = vunpack.c.l.b16 %v2889
        %v3954 = vunpack.c.h.b16 %v2889
        %v3955 = vunpack.c.l.b16 %v2890
        %v3956 = vunpack.c.h.b16 %v2890
        %v3957 = vunpack.c.l.b16 %v2891
        %v3958 = vunpack.c.h.b16 %v2891
        %v3959 = vunpack.c.l.b16 %v2892
        %v3960 = vunpack.c.h.b16 %v2892
        %v3961 = vunpack.c.l.b16 %v2893
        %v3962 = vunpack.c.h.b16 %v2893
        %v3963 = vunpack.c.l.b16 %v2894
        %v3964 = vunpack.c.h.b16 %v2894
        %v3965 = vunpack.c.l.b16 %v2895
        %v3966 = vunpack.c.h.b16 %v2895
        %v3967 = vunpack.c.l.b16 %v2896
        %v3968 = vunpack.c.h.b16 %v2896
        %v3969 = vunpack.c.l.b16 %v2897
        %v3970 = vunpack.c.h.b16 %v2897
        %v3971 = vunpack.c.l.b16 %v2898
        %v3972 = vunpack.c.h.b16 %v2898
        %v3973 = vunpack.c.l.b16 %v2899
        %v3974 = vunpack.c.h.b16 %v2899
        %v3975 = vunpack.c.l.b16 %v2900
        %v3976 = vunpack.c.h.b16 %v2900
        %v3977 = vunpack.c.l.b16 %v2901
        %v3978 = vunpack.c.h.b16 %v2901
        %v3979 = vunpack.c.l.b16 %v2902
        %v3980 = vunpack.c.h.b16 %v2902
        %v3981 = vunpack.c.l.b16 %v2903
        %v3982 = vunpack.c.h.b16 %v2903
        %v3983 = vunpack.c.l.b16 %v2904
        %v3984 = vunpack.c.h.b16 %v2904
        %v3985 = vunpack.c.l.b16 %v2905
        %v3986 = vunpack.c.h.b16 %v2905
        %v3987 = vunpack.c.l.b16 %v2906
        %v3988 = vunpack.c.h.b16 %v2906
        %v3989 = vunpack.c.l.b16 %v2907
        %v3990 = vunpack.c.h.b16 %v2907
        %v3991 = vunpack.c.l.b16 %v2908
        %v3992 = vunpack.c.h.b16 %v2908
        %v3993 = vunpack.c.l.b16 %v2909
        %v3994 = vunpack.c.h.b16 %v2909
        %v3995 = vunpack.c.l.b16 %v2910
        %v3996 = vunpack.c.h.b16 %v2910
        %v3997 = vunpack.c.l.b16 %v2911
        %v3998 = vunpack.c.h.b16 %v2911
        %v3999 = vunpack.c.l.b16 %v2912
        %v4000 = vunpack.c.h.b16 %v2912
        %v4001 = vunpack.c.l.b16 %v2913
        %v4002 = vunpack.c.h.b16 %v2913
        %v4003 = vunpack.c.l.b16 %v2914
        %v4004 = vunpack.c.h.b16 %v2914
        %v4005 = vunpack.c.l.b16 %v2915
        %v4006 = vunpack.c.h.b16 %v2915
        %v4007 = vunpack.c.l.b16 %v2916
        %v4008 = vunpack.c.h.b16 %v2916
        %v4009 = vunpack.c.l.b16 %v2917
        %v4010 = vunpack.c.h.b16 %v2917
        %v4011 = vunpack.c.l.b16 %v2918
        %v4012 = vunpack.c.h.b16 %v2918
        %v4013 = vunpack.c.l.b16 %v2919
        %v4014 = vunpack.c.h.b16 %v2919
        %v4015 = vunpack.c.l.b16 %v2920
        %v4016 = vunpack.c.h.b16 %v2920
        %v4017 = vunpack.c.l.b16 %v2921
        %v4018 = vunpack.c.h.b16 %v2921
        %v4019 = vunpack.c.l.b16 %v2922
        %v4020 = vunpack.c.h.b16 %v2922
        %v4021 = vunpack.c.l.b16 %v2923
        %v4022 = vunpack.c.h.b16 %v2923
        %v4023 = vunpack.c.l.b16 %v2924
        %v4024 = vunpack.c.h.b16 %v2924
        %v4025 = vunpack.c.l.b16 %v2925
        %v4026 = vunpack.c.h.b16 %v2925
        %v4027 = vunpack.c.l.b16 %v2926
        %v4028 = vunpack.c.h.b16 %v2926
        %v4029 = vunpack.c.l.b16 %v2927
        %v4030 = vunpack.c.h.b16 %v2927
        %v4031 = vunpack.c.l.b16 %v2928
        %v4032 = vunpack.c.h.b16 %v2928
        %v4033 = vunpack.c.l.b16 %v2929
        %v4034 = vunpack.c.h.b16 %v2929
        %v4035 = vunpack.c.l.b16 %v2930
        %v4036 = vunpack.c.h.b16 %v2930
        %v4037 = vunpack.c.l.b16 %v2931
        %v4038 = vunpack.c.h.b16 %v2931
        %v4039 = vunpack.c.l.b16 %v2932
        %v4040 = vunpack.c.h.b16 %v2932
        %v4041 = vunpack.c.l.b16 %v2933
        %v4042 = vunpack.c.h.b16 %v2933
        %v4043 = vunpack.c.l.b16 %v2934
        %v4044 = vunpack.c.h.b16 %v2934
        %v4045 = vunpack.c.l.b16 %v2935
        %v4046 = vunpack.c.h.b16 %v2935
        %v4047 = vunpack.c.l.b16 %v2936
        %v4048 = vunpack.c.h.b16 %v2936
        %v4049 = vunpack.c.l.b16 %v2937
        %v4050 = vunpack.c.h.b16 %v2937
        %v4051 = vunpack.c.l.b16 %v2938
        %v4052 = vunpack.c.h.b16 %v2938
        %v4053 = vunpack.c.l.b16 %v2939
        %v4054 = vunpack.c.h.b16 %v2939
        %v4055 = vunpack.c.l.b16 %v2940
        %v4056 = vunpack.c.h.b16 %v2940
        %v4057 = vunpack.c.l.b16 %v2941
        %v4058 = vunpack.c.h.b16 %v2941
        %v4059 = vunpack.c.l.b16 %v2942
        %v4060 = vunpack.c.h.b16 %v2942
        %v4061 = vunpack.c.l.b16 %v2943
        %v4062 = vunpack.c.h.b16 %v2943
        %v4063 = vunpack.c.l.b16 %v2944
        %v4064 = vunpack.c.h.b16 %v2944
        %v4065 = vunpack.c.l.b16 %v2945
        %v4066 = vunpack.c.h.b16 %v2945
        %v4067 = vunpack.c.l.b16 %v2946
        %v4068 = vunpack.c.h.b16 %v2946
        %v4069 = vunpack.c.l.b16 %v2947
        %v4070 = vunpack.c.h.b16 %v2947
        %v4071 = vunpack.c.l.b16 %v2948
        %v4072 = vunpack.c.h.b16 %v2948
        %v4073 = vunpack.c.l.b16 %v2949
        %v4074 = vunpack.c.h.b16 %v2949
        %v4075 = vunpack.c.l.b16 %v2950
        %v4076 = vunpack.c.h.b16 %v2950
        %v4077 = vunpack.c.l.b16 %v2951
        %v4078 = vunpack.c.h.b16 %v2951
        %v4079 = vunpack.c.l.b16 %v2952
        %v4080 = vunpack.c.h.b16 %v2952
        %v4081 = vunpack.c.l.b16 %v2953
        %v4082 = vunpack.c.h.b16 %v2953
        %v4083 = vunpack.c.l.b16 %v2954
        %v4084 = vunpack.c.h.b16 %v2954
        %v4085 = vunpack.c.l.b16 %v2955
        %v4086 = vunpack.c.h.b16 %v2955
        %v4087 = vunpack.c.l.b16 %v2956
        %v4088 = vunpack.c.h.b16 %v2956
        %v4089 = vunpack.c.l.b16 %v2957
        %v4090 = vunpack.c.h.b16 %v2957
        %v4091 = vunpack.c.l.b16 %v2958
        %v4092 = vunpack.c.h.b16 %v2958
        %v4093 = vunpack.c.l.b16 %v2959
        %v4094 = vunpack.c.h.b16 %v2959
        %v4095 = vunpack.c.l.b16 %v2960
        %v4096 = vunpack.c.h.b16 %v2960
        %v4097 = vunpack.c.l.b16 %v2961
        %v4098 = vunpack.c.h.b16 %v2961
        %v4099 = vunpack.c.l.b16 %v2962
        %v4100 = vunpack.c.h.b16 %v2962
        %v4101 = vunpack.c.l.b16 %v2963
        %v4102 = vunpack.c.h.b16 %v2963
        %v4103 = vunpack.c.l.b16 %v2964
        %v4104 = vunpack.c.h.b16 %v2964
        %v4105 = vunpack.c.l.b16 %v2965
        %v4106 = vunpack.c.h.b16 %v2965
        %v4107 = vunpack.c.l.b16 %v2966
        %v4108 = vunpack.c.h.b16 %v2966
        %v4109 = vunpack.c.l.b16 %v2967
        %v4110 = vunpack.c.h.b16 %v2967
        %v4111 = vunpack.c.l.b16 %v2968
        %v4112 = vunpack.c.h.b16 %v2968
        %v4113 = vunpack.c.l.b16 %v2969
        %v4114 = vunpack.c.h.b16 %v2969
        %v4115 = vunpack.c.l.b16 %v2970
        %v4116 = vunpack.c.h.b16 %v2970
        %v4117 = vunpack.c.l.b16 %v2971
        %v4118 = vunpack.c.h.b16 %v2971
        %v4119 = vunpack.c.l.b16 %v2972
        %v4120 = vunpack.c.h.b16 %v2972
        %v4121 = vunpack.c.l.b16 %v2973
        %v4122 = vunpack.c.h.b16 %v2973
        %v4123 = vunpack.c.l.b16 %v2974
        %v4124 = vunpack.c.h.b16 %v2974
        %v4125 = vunpack.c.l.b16 %v2975
        %v4126 = vunpack.c.h.b16 %v2975
        %v4127 = vunpack.c.l.b16 %v2976
        %v4128 = vunpack.c.h.b16 %v2976
        %v4129 = vpack.c.b16 %v3367, %v3361
        %v4130 = vpack.c.b16 %v3368, %v3362
        %v4131 = vpack.c.b16 %v3369, %v3363
        %v4132 = vpack.c.b16 %v3370, %v3364
        %v4133 = vpack.c.b16 %v3371, %v3365
        %v4134 = vpack.c.b16 %v3372, %v3366
        %v4135 = vpack.c.b16 %v3379, %v3373
        %v4136 = vpack.c.b16 %v3380, %v3374
        %v4137 = vpack.c.b16 %v3381, %v3375
        %v4138 = vpack.c.b16 %v3382, %v3376
        %v4139 = vpack.c.b16 %v3383, %v3377
        %v4140 = vpack.c.b16 %v3384, %v3378
        %v4141 = vpack.c.b16 %v3391, %v3385
        %v4142 = vpack.c.b16 %v3392, %v3386
        %v4143 = vpack.c.b16 %v3393, %v3387
        %v4144 = vpack.c.b16 %v3394, %v3388
        %v4145 = vpack.c.b16 %v3395, %v3389
        %v4146 = vpack.c.b16 %v3396, %v3390
        %v4147 = vpack.c.b16 %v3403, %v3397
        %v4148 = vpack.c.b16 %v3404, %v3398
        %v4149 = vpack.c.b16 %v3405, %v3399
        %v4150 = vpack.c.b16 %v3406, %v3400
        %v4151 = vpack.c.b16 %v3407, %v3401
        %v4152 = vpack.c.b16 %v3408, %v3402
        %v4153 = vpack.c.b16 %v3415, %v3409
        %v4154 = vpack.c.b16 %v3416, %v3410
        %v4155 = vpack.c.b16 %v3417, %v3411
        %v4156 = vpack.c.b16 %v3418, %v3412
        %v4157 = vpack.c.b16 %v3419, %v3413
        %v4158 = vpack.c.b16 %v3420, %v3414
        %v4159 = vpack.c.b16 %v3427, %v3421
        %v4160 = vpack.c.b16 %v3428, %v3422
        %v4161 = vpack.c.b16 %v3429, %v3423
        %v4162 = vpack.c.b16 %v3430, %v3424
        %v4163 = vpack.c.b16 %v3431, %v3425
        %v4164 = vpack.c.b16 %v3432, %v3426
        %v4165 = vpack.c.b16 %v3439, %v3433
        %v4166 = vpack.c.b16 %v3440, %v3434
        %v4167 = vpack.c.b16 %v3441, %v3435
        %v4168 = vpack.c.b16 %v3442, %v3436
        %v4169 = vpack.c.b16 %v3443, %v3437
        %v4170 = vpack.c.b16 %v3444, %v3438
        %v4171 = vpack.c.b16 %v3451, %v3445
        %v4172 = vpack.c.b16 %v3452, %v3446
        %v4173 = vpack.c.b16 %v3453, %v3447
        %v4174 = vpack.c.b16 %v3454, %v3448
        %v4175 = vpack.c.b16 %v3455, %v3449
        %v4176 = vpack.c.b16 %v3456, %v3450
        %v4177 = vpack.c.b16 %v3463, %v3457
        %v4178 = vpack.c.b16 %v3464, %v3458
        %v4179 = vpack.c.b16 %v3465, %v3459
        %v4180 = vpack.c.b16 %v3466, %v3460
        %v4181 = vpack.c.b16 %v3467, %v3461
        %v4182 = vpack.c.b16 %v3468, %v3462
        %v4183 = vpack.c.b16 %v3475, %v3469
        %v4184 = vpack.c.b16 %v3476, %v3470
        %v4185 = vpack.c.b16 %v3477, %v3471
        %v4186 = vpack.c.b16 %v3478, %v3472
        %v4187 = vpack.c.b16 %v3479, %v3473
        %v4188 = vpack.c.b16 %v3480, %v3474
        %v4189 = vpack.c.b16 %v3487, %v3481
        %v4190 = vpack.c.b16 %v3488, %v3482
        %v4191 = vpack.c.b16 %v3489, %v3483
        %v4192 = vpack.c.b16 %v3490, %v3484
        %v4193 = vpack.c.b16 %v3491, %v3485
        %v4194 = vpack.c.b16 %v3492, %v3486
        %v4195 = vpack.c.b16 %v3499, %v3493
        %v4196 = vpack.c.b16 %v3500, %v3494
        %v4197 = vpack.c.b16 %v3501, %v3495
        %v4198 = vpack.c.b16 %v3502, %v3496
        %v4199 = vpack.c.b16 %v3503, %v3497
        %v4200 = vpack.c.b16 %v3504, %v3498
        %v4201 = vpack.c.b16 %v3511, %v3505
        %v4202 = vpack.c.b16 %v3512, %v3506
        %v4203 = vpack.c.b16 %v3513, %v3507
        %v4204 = vpack.c.b16 %v3514, %v3508
        %v4205 = vpack.c.b16 %v3515, %v3509
        %v4206 = vpack.c.b16 %v3516, %v3510
        %v4207 = vpack.c.b16 %v3523, %v3517
        %v4208 = vpack.c.b16 %v3524, %v3518
        %v4209 = vpack.c.b16 %v3525, %v3519
        %v4210 = vpack.c.b16 %v3526, %v3520
        %v4211 = vpack.c.b16 %v3527, %v3521
        %v4212 = vpack.c.b16 %v3528, %v3522
        %v4213 = vpack.c.b16 %v3535, %v3529
        %v4214 = vpack.c.b16 %v3536, %v3530
        %v4215 = vpack.c.b16 %v3537, %v3531
        %v4216 = vpack.c.b16 %v3538, %v3532
        %v4217 = vpack.c.b16 %v3539, %v3533
        %v4218 = vpack.c.b16 %v3540, %v3534
        %v4219 = vpack.c.b16 %v3547, %v3541
        %v4220 = vpack.c.b16 %v3548, %v3542
        %v4221 = vpack.c.b16 %v3549, %v3543
        %v4222 = vpack.c.b16 %v3550, %v3544
        %v4223 = vpack.c.b16 %v3551, %v3545
        %v4224 = vpack.c.b16 %v3552, %v3546
        %v4225 = vpack.c.b16 %v3559, %v3553
        %v4226 = vpack.c.b16 %v3560, %v3554
        %v4227 = vpack.c.b16 %v3561, %v3555
        %v4228 = vpack.c.b16 %v3562, %v3556
        %v4229 = vpack.c.b16 %v3563, %v3557
        %v4230 = vpack.c.b16 %v3564, %v3558
        %v4231 = vpack.c.b16 %v3571, %v3565
        %v4232 = vpack.c.b16 %v3572, %v3566
        %v4233 = vpack.c.b16 %v3573, %v3567
        %v4234 = vpack.c.b16 %v3574, %v3568
        %v4235 = vpack.c.b16 %v3575, %v3569
        %v4236 = vpack.c.b16 %v3576, %v3570
        %v4237 = vpack.c.b16 %v3583, %v3577
        %v4238 = vpack.c.b16 %v3584, %v3578
        %v4239 = vpack.c.b16 %v3585, %v3579
        %v4240 = vpack.c.b16 %v3586, %v3580
        %v4241 = vpack.c.b16 %v3587, %v3581
        %v4242 = vpack.c.b16 %v3588, %v3582
        %v4243 = vpack.c.b16 %v3595, %v3589
        %v4244 = vpack.c.b16 %v3596, %v3590
        %v4245 = vpack.c.b16 %v3597, %v3591
        %v4246 = vpack.c.b16 %v3598, %v3592
        %v4247 = vpack.c.b16 %v3599, %v3593
        %v4248 = vpack.c.b16 %v3600, %v3594
        %v4249 = vpack.c.b16 %v3607, %v3601
        %v4250 = vpack.c.b16 %v3608, %v3602
        %v4251 = vpack.c.b16 %v3609, %v3603
        %v4252 = vpack.c.b16 %v3610, %v3604
        %v4253 = vpack.c.b16 %v3611, %v3605
        %v4254 = vpack.c.b16 %v3612, %v3606
        %v4255 = vpack.c.b16 %v3619, %v3613
        %v4256 = vpack.c.b16 %v3620, %v3614
        %v4257 = vpack.c.b16 %v3621, %v3615
        %v4258 = vpack.c.b16 %v3622, %v3616
        %v4259 = vpack.c.b16 %v3623, %v3617
        %v4260 = vpack.c.b16 %v3624, %v3618
        %v4261 = vpack.c.b16 %v3631, %v3625
        %v4262 = vpack.c.b16 %v3632, %v3626
        %v4263 = vpack.c.b16 %v3633, %v3627
        %v4264 = vpack.c.b16 %v3634, %v3628
        %v4265 = vpack.c.b16 %v3635, %v3629
        %v4266 = vpack.c.b16 %v3636, %v3630
        %v4267 = vpack.c.b16 %v3643, %v3637
        %v4268 = vpack.c.b16 %v3644, %v3638
        %v4269 = vpack.c.b16 %v3645, %v3639
        %v4270 = vpack.c.b16 %v3646, %v3640
        %v4271 = vpack.c.b16 %v3647, %v3641
        %v4272 = vpack.c.b16 %v3648, %v3642
        %v4273 = vpack.c.b16 %v3655, %v3649
        %v4274 = vpack.c.b16 %v3656, %v3650
        %v4275 = vpack.c.b16 %v3657, %v3651
        %v4276 = vpack.c.b16 %v3658, %v3652
        %v4277 = vpack.c.b16 %v3659, %v3653
        %v4278 = vpack.c.b16 %v3660, %v3654
        %v4279 = vpack.c.b16 %v3667, %v3661
        %v4280 = vpack.c.b16 %v3668, %v3662
        %v4281 = vpack.c.b16 %v3669, %v3663
        %v4282 = vpack.c.b16 %v3670, %v3664
        %v4283 = vpack.c.b16 %v3671, %v3665
        %v4284 = vpack.c.b16 %v3672, %v3666
        %v4285 = vpack.c.b16 %v3679, %v3673
        %v4286 = vpack.c.b16 %v3680, %v3674
        %v4287 = vpack.c.b16 %v3681, %v3675
        %v4288 = vpack.c.b16 %v3682, %v3676
        %v4289 = vpack.c.b16 %v3683, %v3677
        %v4290 = vpack.c.b16 %v3684, %v3678
        %v4291 = vpack.c.b16 %v3691, %v3685
        %v4292 = vpack.c.b16 %v3692, %v3686
        %v4293 = vpack.c.b16 %v3693, %v3687
        %v4294 = vpack.c.b16 %v3694, %v3688
        %v4295 = vpack.c.b16 %v3695, %v3689
        %v4296 = vpack.c.b16 %v3696, %v3690
        %v4297 = vpack.c.b16 %v3703, %v3697
        %v4298 = vpack.c.b16 %v3704, %v3698
        %v4299 = vpack.c.b16 %v3705, %v3699
        %v4300 = vpack.c.b16 %v3706, %v3700
        %v4301 = vpack.c.b16 %v3707, %v3701
        %v4302 = vpack.c.b16 %v3708, %v3702
        %v4303 = vpack.c.b16 %v3715, %v3709
        %v4304 = vpack.c.b16 %v3716, %v3710
        %v4305 = vpack.c.b16 %v3717, %v3711
        %v4306 = vpack.c.b16 %v3718, %v3712
        %v4307 = vpack.c.b16 %v3719, %v3713
        %v4308 = vpack.c.b16 %v3720, %v3714
        %v4309 = vpack.c.b16 %v3727, %v3721
        %v4310 = vpack.c.b16 %v3728, %v3722
        %v4311 = vpack.c.b16 %v3729, %v3723
        %v4312 = vpack.c.b16 %v3730, %v3724
        %v4313 = vpack.c.b16 %v3731, %v3725
        %v4314 = vpack.c.b16 %v3732, %v3726
        %v4315 = vpack.c.b16 %v3739, %v3733
        %v4316 = vpack.c.b16 %v3740, %v3734
        %v4317 = vpack.c.b16 %v3741, %v3735
        %v4318 = vpack.c.b16 %v3742, %v3736
        %v4319 = vpack.c.b16 %v3743, %v3737
        %v4320 = vpack.c.b16 %v3744, %v3738
        %v4321 = vpack.c.b16 %v3751, %v3745
        %v4322 = vpack.c.b16 %v3752, %v3746
        %v4323 = vpack.c.b16 %v3753, %v3747
        %v4324 = vpack.c.b16 %v3754, %v3748
        %v4325 = vpack.c.b16 %v3755, %v3749
        %v4326 = vpack.c.b16 %v3756, %v3750
        %v4327 = vpack.c.b16 %v3763, %v3757
        %v4328 = vpack.c.b16 %v3764, %v3758
        %v4329 = vpack.c.b16 %v3765, %v3759
        %v4330 = vpack.c.b16 %v3766, %v3760
        %v4331 = vpack.c.b16 %v3767, %v3761
        %v4332 = vpack.c.b16 %v3768, %v3762
        %v4333 = vpack.c.b16 %v3775, %v3769
        %v4334 = vpack.c.b16 %v3776, %v3770
        %v4335 = vpack.c.b16 %v3777, %v3771
        %v4336 = vpack.c.b16 %v3778, %v3772
        %v4337 = vpack.c.b16 %v3779, %v3773
        %v4338 = vpack.c.b16 %v3780, %v3774
        %v4339 = vpack.c.b16 %v3787, %v3781
        %v4340 = vpack.c.b16 %v3788, %v3782
        %v4341 = vpack.c.b16 %v3789, %v3783
        %v4342 = vpack.c.b16 %v3790, %v3784
        %v4343 = vpack.c.b16 %v3791, %v3785
        %v4344 = vpack.c.b16 %v3792, %v3786
        %v4345 = vpack.c.b16 %v3799, %v3793
        %v4346 = vpack.c.b16 %v3800, %v3794
        %v4347 = vpack.c.b16 %v3801, %v3795
        %v4348 = vpack.c.b16 %v3802, %v3796
        %v4349 = vpack.c.b16 %v3803, %v3797
        %v4350 = vpack.c.b16 %v3804, %v3798
        %v4351 = vpack.c.b16 %v3811, %v3805
        %v4352 = vpack.c.b16 %v3812, %v3806
        %v4353 = vpack.c.b16 %v3813, %v3807
        %v4354 = vpack.c.b16 %v3814, %v3808
        %v4355 = vpack.c.b16 %v3815, %v3809
        %v4356 = vpack.c.b16 %v3816, %v3810
        %v4357 = vpack.c.b16 %v3823, %v3817
        %v4358 = vpack.c.b16 %v3824, %v3818
        %v4359 = vpack.c.b16 %v3825, %v3819
        %v4360 = vpack.c.b16 %v3826, %v3820
        %v4361 = vpack.c.b16 %v3827, %v3821
        %v4362 = vpack.c.b16 %v3828, %v3822
        %v4363 = vpack.c.b16 %v3835, %v3829
        %v4364 = vpack.c.b16 %v3836, %v3830
        %v4365 = vpack.c.b16 %v3837, %v3831
        %v4366 = vpack.c.b16 %v3838, %v3832
        %v4367 = vpack.c.b16 %v3839, %v3833
        %v4368 = vpack.c.b16 %v3840, %v3834
        %v4369 = vpack.c.b16 %v3847, %v3841
        %v4370 = vpack.c.b16 %v3848, %v3842
        %v4371 = vpack.c.b16 %v3849, %v3843
        %v4372 = vpack.c.b16 %v3850, %v3844
        %v4373 = vpack.c.b16 %v3851, %v3845
        %v4374 = vpack.c.b16 %v3852, %v3846
        %v4375 = vpack.c.b16 %v3859, %v3853
        %v4376 = vpack.c.b16 %v3860, %v3854
        %v4377 = vpack.c.b16 %v3861, %v3855
        %v4378 = vpack.c.b16 %v3862, %v3856
        %v4379 = vpack.c.b16 %v3863, %v3857
        %v4380 = vpack.c.b16 %v3864, %v3858
        %v4381 = vpack.c.b16 %v3871, %v3865
        %v4382 = vpack.c.b16 %v3872, %v3866
        %v4383 = vpack.c.b16 %v3873, %v3867
        %v4384 = vpack.c.b16 %v3874, %v3868
        %v4385 = vpack.c.b16 %v3875, %v3869
        %v4386 = vpack.c.b16 %v3876, %v3870
        %v4387 = vpack.c.b16 %v3883, %v3877
        %v4388 = vpack.c.b16 %v3884, %v3878
        %v4389 = vpack.c.b16 %v3885, %v3879
        %v4390 = vpack.c.b16 %v3886, %v3880
        %v4391 = vpack.c.b16 %v3887, %v3881
        %v4392 = vpack.c.b16 %v3888, %v3882
        %v4393 = vpack.c.b16 %v3895, %v3889
        %v4394 = vpack.c.b16 %v3896, %v3890
        %v4395 = vpack.c.b16 %v3897, %v3891
        %v4396 = vpack.c.b16 %v3898, %v3892
        %v4397 = vpack.c.b16 %v3899, %v3893
        %v4398 = vpack.c.b16 %v3900, %v3894
        %v4399 = vpack.c.b16 %v3907, %v3901
        %v4400 = vpack.c.b16 %v3908, %v3902
        %v4401 = vpack.c.b16 %v3909, %v3903
        %v4402 = vpack.c.b16 %v3910, %v3904
        %v4403 = vpack.c.b16 %v3911, %v3905
        %v4404 = vpack.c.b16 %v3912, %v3906
        %v4405 = vpack.c.b16 %v3919, %v3913
        %v4406 = vpack.c.b16 %v3920, %v3914
        %v4407 = vpack.c.b16 %v3921, %v3915
        %v4408 = vpack.c.b16 %v3922, %v3916
        %v4409 = vpack.c.b16 %v3923, %v3917
        %v4410 = vpack.c.b16 %v3924, %v3918
        %v4411 = vpack.c.b16 %v3931, %v3925
        %v4412 = vpack.c.b16 %v3932, %v3926
        %v4413 = vpack.c.b16 %v3933, %v3927
        %v4414 = vpack.c.b16 %v3934, %v3928
        %v4415 = vpack.c.b16 %v3935, %v3929
        %v4416 = vpack.c.b16 %v3936, %v3930
        %v4417 = vpack.c.b16 %v3943, %v3937
        %v4418 = vpack.c.b16 %v3944, %v3938
        %v4419 = vpack.c.b16 %v3945, %v3939
        %v4420 = vpack.c.b16 %v3946, %v3940
        %v4421 = vpack.c.b16 %v3947, %v3941
        %v4422 = vpack.c.b16 %v3948, %v3942
        %v4423 = vpack.c.b16 %v3955, %v3949
        %v4424 = vpack.c.b16 %v3956, %v3950
        %v4425 = vpack.c.b16 %v3957, %v3951
        %v4426 = vpack.c.b16 %v3958, %v3952
        %v4427 = vpack.c.b16 %v3959, %v3953
        %v4428 = vpack.c.b16 %v3960, %v3954
        %v4429 = vpack.c.b16 %v3967, %v3961
        %v4430 = vpack.c.b16 %v3968, %v3962
        %v4431 = vpack.c.b16 %v3969, %v3963
        %v4432 = vpack.c.b16 %v3970, %v3964
        %v4433 = vpack.c.b16 %v3971, %v3965
        %v4434 = vpack.c.b16 %v3972, %v3966
        %v4435 = vpack.c.b16 %v3979, %v3973
        %v4436 = vpack.c.b16 %v3980, %v3974
        %v4437 = vpack.c.b16 %v3981, %v3975
        %v4438 = vpack.c.b16 %v3982, %v3976
        %v4439 = vpack.c.b16 %v3983, %v3977
        %v4440 = vpack.c.b16 %v3984, %v3978
        %v4441 = vpack.c.b16 %v3991, %v3985
        %v4442 = vpack.c.b16 %v3992, %v3986
        %v4443 = vpack.c.b16 %v3993, %v3987
        %v4444 = vpack.c.b16 %v3994, %v3988
        %v4445 = vpack.c.b16 %v3995, %v3989
        %v4446 = vpack.c.b16 %v3996, %v3990
        %v4447 = vpack.c.b16 %v4003, %v3997
        %v4448 = vpack.c.b16 %v4004, %v3998
        %v4449 = vpack.c.b16 %v4005, %v3999
        %v4450 = vpack.c.b16 %v4006, %v4000
        %v4451 = vpack.c.b16 %v4007, %v4001
        %v4452 = vpack.c.b16 %v4008, %v4002
        %v4453 = vpack.c.b16 %v4015, %v4009
        %v4454 = vpack.c.b16 %v4016, %v4010
        %v4455 = vpack.c.b16 %v4017, %v4011
        %v4456 = vpack.c.b16 %v4018, %v4012
        %v4457 = vpack.c.b16 %v4019, %v4013
        %v4458 = vpack.c.b16 %v4020, %v4014
        %v4459 = vpack.c.b16 %v4027, %v4021
        %v4460 = vpack.c.b16 %v4028, %v4022
        %v4461 = vpack.c.b16 %v4029, %v4023
        %v4462 = vpack.c.b16 %v4030, %v4024
        %v4463 = vpack.c.b16 %v4031, %v4025
        %v4464 = vpack.c.b16 %v4032, %v4026
        %v4465 = vpack.c.b16 %v4039, %v4033
        %v4466 = vpack.c.b16 %v4040, %v4034
        %v4467 = vpack.c.b16 %v4041, %v4035
        %v4468 = vpack.c.b16 %v4042, %v4036
        %v4469 = vpack.c.b16 %v4043, %v4037
        %v4470 = vpack.c.b16 %v4044, %v4038
        %v4471 = vpack.c.b16 %v4051, %v4045
        %v4472 = vpack.c.b16 %v4052, %v4046
        %v4473 = vpack.c.b16 %v4053, %v4047
        %v4474 = vpack.c.b16 %v4054, %v4048
        %v4475 = vpack.c.b16 %v4055, %v4049
        %v4476 = vpack.c.b16 %v4056, %v4050
        %v4477 = vpack.c.b16 %v4063, %v4057
        %v4478 = vpack.c.b16 %v4064, %v4058
        %v4479 = vpack.c.b16 %v4065, %v4059
        %v4480 = vpack.c.b16 %v4066, %v4060
        %v4481 = vpack.c.b16 %v4067, %v4061
        %v4482 = vpack.c.b16 %v4068, %v4062
        %v4483 = vpack.c.b16 %v4075, %v4069
        %v4484 = vpack.c.b16 %v4076, %v4070
        %v4485 = vpack.c.b16 %v4077, %v4071
        %v4486 = vpack.c.b16 %v4078, %v4072
        %v4487 = vpack.c.b16 %v4079, %v4073
        %v4488 = vpack.c.b16 %v4080, %v4074
        %v4489 = vpack.c.b16 %v4087, %v4081
        %v4490 = vpack.c.b16 %v4088, %v4082
        %v4491 = vpack.c.b16 %v4089, %v4083
        %v4492 = vpack.c.b16 %v4090, %v4084
        %v4493 = vpack.c.b16 %v4091, %v4085
        %v4494 = vpack.c.b16 %v4092, %v4086
        %v4495 = vpack.c.b16 %v4099, %v4093
        %v4496 = vpack.c.b16 %v4100, %v4094
        %v4497 = vpack.c.b16 %v4101, %v4095
        %v4498 = vpack.c.b16 %v4102, %v4096
        %v4499 = vpack.c.b16 %v4103, %v4097
        %v4500 = vpack.c.b16 %v4104, %v4098
        %v4501 = vpack.c.b16 %v4111, %v4105
        %v4502 = vpack.c.b16 %v4112, %v4106
        %v4503 = vpack.c.b16 %v4113, %v4107
        %v4504 = vpack.c.b16 %v4114, %v4108
        %v4505 = vpack.c.b16 %v4115, %v4109
        %v4506 = vpack.c.b16 %v4116, %v4110
        %v4507 = vpack.c.b16 %v4123, %v4117
        %v4508 = vpack.c.b16 %v4124, %v4118
        %v4509 = vpack.c.b16 %v4125, %v4119
        %v4510 = vpack.c.b16 %v4126, %v4120
        %v4511 = vpack.c.b16 %v4127, %v4121
        %v4512 = vpack.c.b16 %v4128, %v4122
        %4897 = vmatprep.subr.bf16.mxu0 %v4130
        %4898 = vmatpush1.bf16.msra.mxu0 %v4129
        %4899 = vmatprep.subr.bf16.mxu0 %v4136
        %4900 = vmatpush1.bf16.msra.mxu0 %v4135
        %4901 = vmatprep.subr.bf16.mxu0 %v4142
        %4902 = vmatpush1.bf16.msra.mxu0 %v4141
        %4903 = vmatprep.subr.bf16.mxu0 %v4148
        %4904 = vmatpush1.bf16.msra.mxu0 %v4147
        %4905 = vmatprep.subr.bf16.mxu0 %v4154
        %4906 = vmatpush1.bf16.msra.mxu0 %v4153
        %4907 = vmatprep.subr.bf16.mxu0 %v4160
        %4908 = vmatpush1.bf16.msra.mxu0 %v4159
        %4909 = vmatprep.subr.bf16.mxu0 %v4166
        %4910 = vmatpush1.bf16.msra.mxu0 %v4165
        %4911 = vmatprep.subr.bf16.mxu0 %v4172
        %4912 = vmatpush1.bf16.msra.mxu0 %v4171
        %4913 = vmatprep.subr.bf16.mxu0 %v4178
        %4914 = vmatpush1.bf16.msra.mxu0 %v4177
        %4915 = vmatprep.subr.bf16.mxu0 %v4184
        %4916 = vmatpush1.bf16.msra.mxu0 %v4183
        %4917 = vmatprep.subr.bf16.mxu0 %v4190
        %4918 = vmatpush1.bf16.msra.mxu0 %v4189
        %4919 = vmatprep.subr.bf16.mxu0 %v4196
        %4920 = vmatpush1.bf16.msra.mxu0 %v4195
        %4921 = vmatprep.subr.bf16.mxu0 %v4202
        %4922 = vmatpush1.bf16.msra.mxu0 %v4201
        %4923 = vmatprep.subr.bf16.mxu0 %v4208
        %4924 = vmatpush1.bf16.msra.mxu0 %v4207
        %4925 = vmatprep.subr.bf16.mxu0 %v4214
        %4926 = vmatpush1.bf16.msra.mxu0 %v4213
        %4927 = vmatprep.subr.bf16.mxu0 %v4220
        %4928 = vmatpush1.bf16.msra.mxu0 %v4219
        %4929 = vmatprep.mubr.bf16.mxu0 %v2586
        %4930 = vmatmul.mubr.bf16.gmra.mrb[0].mxu0 %v2585
        %v4931 = vpop.f32.mrb[0].mxu0
        %v4932 = vadd.f32 0.0, %v4931
        %v4933 = vpop.f32.mrb[0].mxu0
        %v4934 = vadd.f32 0.0, %v4933
        %v4935 = vpop.f32.mrb[0].mxu0
        %v4936 = vpop.f32.mrb[0].mxu0
        %4937 = vdwg.mxu0
        %4938 = vmatprep.subr.bf16.mxu0 %v4226
        %4939 = vmatpush1.bf16.msra.mxu0 %v4225
        %4940 = vmatprep.subr.bf16.mxu0 %v4232
        %4941 = vmatpush1.bf16.msra.mxu0 %v4231
        %4942 = vmatprep.subr.bf16.mxu0 %v4238
        %4943 = vmatpush1.bf16.msra.mxu0 %v4237
        %4944 = vmatprep.subr.bf16.mxu0 %v4244
        %4945 = vmatpush1.bf16.msra.mxu0 %v4243
        %4946 = vmatprep.subr.bf16.mxu0 %v4250
        %4947 = vmatpush1.bf16.msra.mxu0 %v4249
        %4948 = vmatprep.subr.bf16.mxu0 %v4256
        %4949 = vmatpush1.bf16.msra.mxu0 %v4255
        %4950 = vmatprep.subr.bf16.mxu0 %v4262
        %4951 = vmatpush1.bf16.msra.mxu0 %v4261
        %4952 = vmatprep.subr.bf16.mxu0 %v4268
        %4953 = vmatpush1.bf16.msra.mxu0 %v4267
        %4954 = vmatprep.subr.bf16.mxu0 %v4274
        %4955 = vmatpush1.bf16.msra.mxu0 %v4273
        %4956 = vmatprep.subr.bf16.mxu0 %v4280
        %4957 = vmatpush1.bf16.msra.mxu0 %v4279
        %4958 = vmatprep.subr.bf16.mxu0 %v4286
        %4959 = vmatpush1.bf16.msra.mxu0 %v4285
        %4960 = vmatprep.subr.bf16.mxu0 %v4292
        %4961 = vmatpush1.bf16.msra.mxu0 %v4291
        %4962 = vmatprep.subr.bf16.mxu0 %v4298
        %4963 = vmatpush1.bf16.msra.mxu0 %v4297
        %4964 = vmatprep.subr.bf16.mxu0 %v4304
        %4965 = vmatpush1.bf16.msra.mxu0 %v4303
        %4966 = vmatprep.subr.bf16.mxu0 %v4310
        %4967 = vmatpush1.bf16.msra.mxu0 %v4309
        %4968 = vmatprep.subr.bf16.mxu0 %v4316
        %4969 = vmatpush1.bf16.msra.mxu0 %v4315
        %4970 = vmatprep.mubr.bf16.mxu0 %v2588
        %4971 = vmatmul.mubr.bf16.gmra.mrb[0].mxu0 %v2587
        %v4972 = vpop.f32.mrb[0].mxu0
        %v4973 = vadd.f32 %v4932, %v4972
        %v4974 = vpop.f32.mrb[0].mxu0
        %v4975 = vadd.f32 %v4934, %v4974
        %v4976 = vpop.f32.mrb[0].mxu0
        %v4977 = vpop.f32.mrb[0].mxu0
        %4978 = vdwg.mxu0
        %4979 = vmatprep.subr.bf16.mxu0 %v4322
        %4980 = vmatpush1.bf16.msra.mxu0 %v4321
        %4981 = vmatprep.subr.bf16.mxu0 %v4328
        %4982 = vmatpush1.bf16.msra.mxu0 %v4327
        %4983 = vmatprep.subr.bf16.mxu0 %v4334
        %4984 = vmatpush1.bf16.msra.mxu0 %v4333
        %4985 = vmatprep.subr.bf16.mxu0 %v4340
        %4986 = vmatpush1.bf16.msra.mxu0 %v4339
        %4987 = vmatprep.subr.bf16.mxu0 %v4346
        %4988 = vmatpush1.bf16.msra.mxu0 %v4345
        %4989 = vmatprep.subr.bf16.mxu0 %v4352
        %4990 = vmatpush1.bf16.msra.mxu0 %v4351
        %4991 = vmatprep.subr.bf16.mxu0 %v4358
        %4992 = vmatpush1.bf16.msra.mxu0 %v4357
        %4993 = vmatprep.subr.bf16.mxu0 %v4364
        %4994 = vmatpush1.bf16.msra.mxu0 %v4363
        %4995 = vmatprep.subr.bf16.mxu0 %v4370
        %4996 = vmatpush1.bf16.msra.mxu0 %v4369
        %4997 = vmatprep.subr.bf16.mxu0 %v4376
        %4998 = vmatpush1.bf16.msra.mxu0 %v4375
        %4999 = vmatprep.subr.bf16.mxu0 %v4382
        %5000 = vmatpush1.bf16.msra.mxu0 %v4381
        %5001 = vmatprep.subr.bf16.mxu0 %v4388
        %5002 = vmatpush1.bf16.msra.mxu0 %v4387
        %5003 = vmatprep.subr.bf16.mxu0 %v4394
        %5004 = vmatpush1.bf16.msra.mxu0 %v4393
        %5005 = vmatprep.subr.bf16.mxu0 %v4400
        %5006 = vmatpush1.bf16.msra.mxu0 %v4399
        %5007 = vmatprep.subr.bf16.mxu0 %v4406
        %5008 = vmatpush1.bf16.msra.mxu0 %v4405
        %5009 = vmatprep.subr.bf16.mxu0 %v4412
        %5010 = vmatpush1.bf16.msra.mxu0 %v4411
        %5011 = vmatprep.mubr.bf16.mxu0 %v2590
        %5012 = vmatmul.mubr.bf16.gmra.mrb[0].mxu0 %v2589
        %v5013 = vpop.f32.mrb[0].mxu0
        %v5014 = vadd.f32 %v4973, %v5013
        %v5015 = vpop.f32.mrb[0].mxu0
        %v5016 = vadd.f32 %v4975, %v5015
        %v5017 = vpop.f32.mrb[0].mxu0
        %v5018 = vpop.f32.mrb[0].mxu0
        %5019 = vdwg.mxu0
        %5020 = vmatprep.subr.bf16.mxu0 %v4418
        %5021 = vmatpush1.bf16.msra.mxu0 %v4417
        %5022 = vmatprep.subr.bf16.mxu0 %v4424
        %5023 = vmatpush1.bf16.msra.mxu0 %v4423
        %5024 = vmatprep.subr.bf16.mxu0 %v4430
        %5025 = vmatpush1.bf16.msra.mxu0 %v4429
        %5026 = vmatprep.subr.bf16.mxu0 %v4436
        %5027 = vmatpush1.bf16.msra.mxu0 %v4435
        %5028 = vmatprep.subr.bf16.mxu0 %v4442
        %5029 = vmatpush1.bf16.msra.mxu0 %v4441
        %5030 = vmatprep.subr.bf16.mxu0 %v4448
        %5031 = vmatpush1.bf16.msra.mxu0 %v4447
        %5032 = vmatprep.subr.bf16.mxu0 %v4454
        %5033 = vmatpush1.bf16.msra.mxu0 %v4453
        %5034 = vmatprep.subr.bf16.mxu0 %v4460
        %5035 = vmatpush1.bf16.msra.mxu0 %v4459
        %5036 = vmatprep.subr.bf16.mxu0 %v4466
        %5037 = vmatpush1.bf16.msra.mxu0 %v4465
        %5038 = vmatprep.subr.bf16.mxu0 %v4472
        %5039 = vmatpush1.bf16.msra.mxu0 %v4471
        %5040 = vmatprep.subr.bf16.mxu0 %v4478
        %5041 = vmatpush1.bf16.msra.mxu0 %v4477
        %5042 = vmatprep.subr.bf16.mxu0 %v4484
        %5043 = vmatpush1.bf16.msra.mxu0 %v4483
        %5044 = vmatprep.subr.bf16.mxu0 %v4490
        %5045 = vmatpush1.bf16.msra.mxu0 %v4489
        %5046 = vmatprep.subr.bf16.mxu0 %v4496
        %5047 = vmatpush1.bf16.msra.mxu0 %v4495
        %5048 = vmatprep.subr.bf16.mxu0 %v4502
        %5049 = vmatpush1.bf16.msra.mxu0 %v4501
        %5050 = vmatprep.subr.bf16.mxu0 %v4508
        %5051 = vmatpush1.bf16.msra.mxu0 %v4507
        %5052 = vmatprep.mubr.bf16.mxu0 %v2592
        %5053 = vmatmul.mubr.bf16.gmra.mrb[0].mxu0 %v2591
        %v5054 = vpop.f32.mrb[0].mxu0
        %v5055 = vadd.f32 %v5014, %v5054
        %v5056 = vpop.f32.mrb[0].mxu0
        %v5057 = vadd.f32 %v5016, %v5056
        %v5058 = vpop.f32.mrb[0].mxu0
        %v5059 = vpop.f32.mrb[0].mxu0
        %5060 = vdwg.mxu0
        %5061 = vmatprep.subr.bf16.mxu0 %v4132
        %5062 = vmatpush1.bf16.msra.mxu0 %v4131
        %5063 = vmatprep.subr.bf16.mxu0 %v4138
        %5064 = vmatpush1.bf16.msra.mxu0 %v4137
        %5065 = vmatprep.subr.bf16.mxu0 %v4144
        %5066 = vmatpush1.bf16.msra.mxu0 %v4143
        %5067 = vmatprep.subr.bf16.mxu0 %v4150
        %5068 = vmatpush1.bf16.msra.mxu0 %v4149
        %5069 = vmatprep.subr.bf16.mxu0 %v4156
        %5070 = vmatpush1.bf16.msra.mxu0 %v4155
        %5071 = vmatprep.subr.bf16.mxu0 %v4162
        %5072 = vmatpush1.bf16.msra.mxu0 %v4161
        %5073 = vmatprep.subr.bf16.mxu0 %v4168
        %5074 = vmatpush1.bf16.msra.mxu0 %v4167
        %5075 = vmatprep.subr.bf16.mxu0 %v4174
        %5076 = vmatpush1.bf16.msra.mxu0 %v4173
        %5077 = vmatprep.subr.bf16.mxu0 %v4180
        %5078 = vmatpush1.bf16.msra.mxu0 %v4179
        %5079 = vmatprep.subr.bf16.mxu0 %v4186
        %5080 = vmatpush1.bf16.msra.mxu0 %v4185
        %5081 = vmatprep.subr.bf16.mxu0 %v4192
        %5082 = vmatpush1.bf16.msra.mxu0 %v4191
        %5083 = vmatprep.subr.bf16.mxu0 %v4198
        %5084 = vmatpush1.bf16.msra.mxu0 %v4197
        %5085 = vmatprep.subr.bf16.mxu0 %v4204
        %5086 = vmatpush1.bf16.msra.mxu0 %v4203
        %5087 = vmatprep.subr.bf16.mxu0 %v4210
        %5088 = vmatpush1.bf16.msra.mxu0 %v4209
        %5089 = vmatprep.subr.bf16.mxu0 %v4216
        %5090 = vmatpush1.bf16.msra.mxu0 %v4215
        %5091 = vmatprep.subr.bf16.mxu0 %v4222
        %5092 = vmatpush1.bf16.msra.mxu0 %v4221
        %5093 = vmatprep.mubr.bf16.mxu0 %v2586
        %5094 = vmatmul.mubr.bf16.gmra.mrb[0].mxu0 %v2585
        %v5095 = vpop.f32.mrb[0].mxu0
        %v5096 = vadd.f32 0.0, %v5095
        %v5097 = vpop.f32.mrb[0].mxu0
        %v5098 = vadd.f32 0.0, %v5097
        %v5099 = vpop.f32.mrb[0].mxu0
        %v5100 = vpop.f32.mrb[0].mxu0
        %5101 = vdwg.mxu0
        %5102 = vmatprep.subr.bf16.mxu0 %v4228
        %5103 = vmatpush1.bf16.msra.mxu0 %v4227
        %5104 = vmatprep.subr.bf16.mxu0 %v4234
        %5105 = vmatpush1.bf16.msra.mxu0 %v4233
        %5106 = vmatprep.subr.bf16.mxu0 %v4240
        %5107 = vmatpush1.bf16.msra.mxu0 %v4239
        %5108 = vmatprep.subr.bf16.mxu0 %v4246
        %5109 = vmatpush1.bf16.msra.mxu0 %v4245
        %5110 = vmatprep.subr.bf16.mxu0 %v4252
        %5111 = vmatpush1.bf16.msra.mxu0 %v4251
        %5112 = vmatprep.subr.bf16.mxu0 %v4258
        %5113 = vmatpush1.bf16.msra.mxu0 %v4257
        %5114 = vmatprep.subr.bf16.mxu0 %v4264
        %5115 = vmatpush1.bf16.msra.mxu0 %v4263
        %5116 = vmatprep.subr.bf16.mxu0 %v4270
        %5117 = vmatpush1.bf16.msra.mxu0 %v4269
        %5118 = vmatprep.subr.bf16.mxu0 %v4276
        %5119 = vmatpush1.bf16.msra.mxu0 %v4275
        %5120 = vmatprep.subr.bf16.mxu0 %v4282
        %5121 = vmatpush1.bf16.msra.mxu0 %v4281
        %5122 = vmatprep.subr.bf16.mxu0 %v4288
        %5123 = vmatpush1.bf16.msra.mxu0 %v4287
        %5124 = vmatprep.subr.bf16.mxu0 %v4294
        %5125 = vmatpush1.bf16.msra.mxu0 %v4293
        %5126 = vmatprep.subr.bf16.mxu0 %v4300
        %5127 = vmatpush1.bf16.msra.mxu0 %v4299
        %5128 = vmatprep.subr.bf16.mxu0 %v4306
        %5129 = vmatpush1.bf16.msra.mxu0 %v4305
        %5130 = vmatprep.subr.bf16.mxu0 %v4312
        %5131 = vmatpush1.bf16.msra.mxu0 %v4311
        %5132 = vmatprep.subr.bf16.mxu0 %v4318
        %5133 = vmatpush1.bf16.msra.mxu0 %v4317
        %5134 = vmatprep.mubr.bf16.mxu0 %v2588
        %5135 = vmatmul.mubr.bf16.gmra.mrb[0].mxu0 %v2587
        %v5136 = vpop.f32.mrb[0].mxu0
        %v5137 = vadd.f32 %v5096, %v5136
        %v5138 = vpop.f32.mrb[0].mxu0
        %v5139 = vadd.f32 %v5098, %v5138
        %v5140 = vpop.f32.mrb[0].mxu0
        %v5141 = vpop.f32.mrb[0].mxu0
        %5142 = vdwg.mxu0
        %5143 = vmatprep.subr.bf16.mxu0 %v4324
        %5144 = vmatpush1.bf16.msra.mxu0 %v4323
        %5145 = vmatprep.subr.bf16.mxu0 %v4330
        %5146 = vmatpush1.bf16.msra.mxu0 %v4329
        %5147 = vmatprep.subr.bf16.mxu0 %v4336
        %5148 = vmatpush1.bf16.msra.mxu0 %v4335
        %5149 = vmatprep.subr.bf16.mxu0 %v4342
        %5150 = vmatpush1.bf16.msra.mxu0 %v4341
        %5151 = vmatprep.subr.bf16.mxu0 %v4348
        %5152 = vmatpush1.bf16.msra.mxu0 %v4347
        %5153 = vmatprep.subr.bf16.mxu0 %v4354
        %5154 = vmatpush1.bf16.msra.mxu0 %v4353
        %5155 = vmatprep.subr.bf16.mxu0 %v4360
        %5156 = vmatpush1.bf16.msra.mxu0 %v4359
        %5157 = vmatprep.subr.bf16.mxu0 %v4366
        %5158 = vmatpush1.bf16.msra.mxu0 %v4365
        %5159 = vmatprep.subr.bf16.mxu0 %v4372
        %5160 = vmatpush1.bf16.msra.mxu0 %v4371
        %5161 = vmatprep.subr.bf16.mxu0 %v4378
        %5162 = vmatpush1.bf16.msra.mxu0 %v4377
        %5163 = vmatprep.subr.bf16.mxu0 %v4384
        %5164 = vmatpush1.bf16.msra.mxu0 %v4383
        %5165 = vmatprep.subr.bf16.mxu0 %v4390
        %5166 = vmatpush1.bf16.msra.mxu0 %v4389
        %5167 = vmatprep.subr.bf16.mxu0 %v4396
        %5168 = vmatpush1.bf16.msra.mxu0 %v4395
        %5169 = vmatprep.subr.bf16.mxu0 %v4402
        %5170 = vmatpush1.bf16.msra.mxu0 %v4401
        %5171 = vmatprep.subr.bf16.mxu0 %v4408
        %5172 = vmatpush1.bf16.msra.mxu0 %v4407
        %5173 = vmatprep.subr.bf16.mxu0 %v4414
        %5174 = vmatpush1.bf16.msra.mxu0 %v4413
        %5175 = vmatprep.mubr.bf16.mxu0 %v2590
        %5176 = vmatmul.mubr.bf16.gmra.mrb[0].mxu0 %v2589
        %v5177 = vpop.f32.mrb[0].mxu0
        %v5178 = vadd.f32 %v5137, %v5177
        %v5179 = vpop.f32.mrb[0].mxu0
        %v5180 = vadd.f32 %v5139, %v5179
        %v5181 = vpop.f32.mrb[0].mxu0
        %v5182 = vpop.f32.mrb[0].mxu0
        %5183 = vdwg.mxu0
        %5184 = vmatprep.subr.bf16.mxu0 %v4420
        %5185 = vmatpush1.bf16.msra.mxu0 %v4419
        %5186 = vmatprep.subr.bf16.mxu0 %v4426
        %5187 = vmatpush1.bf16.msra.mxu0 %v4425
        %5188 = vmatprep.subr.bf16.mxu0 %v4432
        %5189 = vmatpush1.bf16.msra.mxu0 %v4431
        %5190 = vmatprep.subr.bf16.mxu0 %v4438
        %5191 = vmatpush1.bf16.msra.mxu0 %v4437
        %5192 = vmatprep.subr.bf16.mxu0 %v4444
        %5193 = vmatpush1.bf16.msra.mxu0 %v4443
        %5194 = vmatprep.subr.bf16.mxu0 %v4450
        %5195 = vmatpush1.bf16.msra.mxu0 %v4449
        %5196 = vmatprep.subr.bf16.mxu0 %v4456
        %5197 = vmatpush1.bf16.msra.mxu0 %v4455
        %5198 = vmatprep.subr.bf16.mxu0 %v4462
        %5199 = vmatpush1.bf16.msra.mxu0 %v4461
        %5200 = vmatprep.subr.bf16.mxu0 %v4468
        %5201 = vmatpush1.bf16.msra.mxu0 %v4467
        %5202 = vmatprep.subr.bf16.mxu0 %v4474
        %5203 = vmatpush1.bf16.msra.mxu0 %v4473
        %5204 = vmatprep.subr.bf16.mxu0 %v4480
        %5205 = vmatpush1.bf16.msra.mxu0 %v4479
        %5206 = vmatprep.subr.bf16.mxu0 %v4486
        %5207 = vmatpush1.bf16.msra.mxu0 %v4485
        %5208 = vmatprep.subr.bf16.mxu0 %v4492
        %5209 = vmatpush1.bf16.msra.mxu0 %v4491
        %5210 = vmatprep.subr.bf16.mxu0 %v4498
        %5211 = vmatpush1.bf16.msra.mxu0 %v4497
        %5212 = vmatprep.subr.bf16.mxu0 %v4504
        %5213 = vmatpush1.bf16.msra.mxu0 %v4503
        %5214 = vmatprep.subr.bf16.mxu0 %v4510
        %5215 = vmatpush1.bf16.msra.mxu0 %v4509
        %5216 = vmatprep.mubr.bf16.mxu0 %v2592
        %5217 = vmatmul.mubr.bf16.gmra.mrb[0].mxu0 %v2591
        %v5218 = vpop.f32.mrb[0].mxu0
        %v5219 = vadd.f32 %v5178, %v5218
        %v5220 = vpop.f32.mrb[0].mxu0
        %v5221 = vadd.f32 %v5180, %v5220
        %v5222 = vpop.f32.mrb[0].mxu0
        %v5223 = vpop.f32.mrb[0].mxu0
        %5224 = vdwg.mxu0
        %5225 = vmatprep.subr.bf16.mxu0 %v4134
        %5226 = vmatpush1.bf16.msra.mxu0 %v4133
        %5227 = vmatprep.subr.bf16.mxu0 %v4140
        %5228 = vmatpush1.bf16.msra.mxu0 %v4139
        %5229 = vmatprep.subr.bf16.mxu0 %v4146
        %5230 = vmatpush1.bf16.msra.mxu0 %v4145
        %5231 = vmatprep.subr.bf16.mxu0 %v4152
        %5232 = vmatpush1.bf16.msra.mxu0 %v4151
        %5233 = vmatprep.subr.bf16.mxu0 %v4158
        %5234 = vmatpush1.bf16.msra.mxu0 %v4157
        %5235 = vmatprep.subr.bf16.mxu0 %v4164
        %5236 = vmatpush1.bf16.msra.mxu0 %v4163
        %5237 = vmatprep.subr.bf16.mxu0 %v4170
        %5238 = vmatpush1.bf16.msra.mxu0 %v4169
        %5239 = vmatprep.subr.bf16.mxu0 %v4176
        %5240 = vmatpush1.bf16.msra.mxu0 %v4175
        %5241 = vmatprep.subr.bf16.mxu0 %v4182
        %5242 = vmatpush1.bf16.msra.mxu0 %v4181
        %5243 = vmatprep.subr.bf16.mxu0 %v4188
        %5244 = vmatpush1.bf16.msra.mxu0 %v4187
        %5245 = vmatprep.subr.bf16.mxu0 %v4194
        %5246 = vmatpush1.bf16.msra.mxu0 %v4193
        %5247 = vmatprep.subr.bf16.mxu0 %v4200
        %5248 = vmatpush1.bf16.msra.mxu0 %v4199
        %5249 = vmatprep.subr.bf16.mxu0 %v4206
        %5250 = vmatpush1.bf16.msra.mxu0 %v4205
        %5251 = vmatprep.subr.bf16.mxu0 %v4212
        %5252 = vmatpush1.bf16.msra.mxu0 %v4211
        %5253 = vmatprep.subr.bf16.mxu0 %v4218
        %5254 = vmatpush1.bf16.msra.mxu0 %v4217
        %5255 = vmatprep.subr.bf16.mxu0 %v4224
        %5256 = vmatpush1.bf16.msra.mxu0 %v4223
        %5257 = vmatprep.mubr.bf16.mxu0 %v2586
        %5258 = vmatmul.mubr.bf16.gmra.mrb[0].mxu0 %v2585
        %v5259 = vpop.f32.mrb[0].mxu0
        %v5260 = vadd.f32 0.0, %v5259
        %v5261 = vpop.f32.mrb[0].mxu0
        %v5262 = vadd.f32 0.0, %v5261
        %v5263 = vpop.f32.mrb[0].mxu0
        %v5264 = vpop.f32.mrb[0].mxu0
        %5265 = vdwg.mxu0
        %5266 = vmatprep.subr.bf16.mxu0 %v4230
        %5267 = vmatpush1.bf16.msra.mxu0 %v4229
        %5268 = vmatprep.subr.bf16.mxu0 %v4236
        %5269 = vmatpush1.bf16.msra.mxu0 %v4235
        %5270 = vmatprep.subr.bf16.mxu0 %v4242
        %5271 = vmatpush1.bf16.msra.mxu0 %v4241
        %5272 = vmatprep.subr.bf16.mxu0 %v4248
        %5273 = vmatpush1.bf16.msra.mxu0 %v4247
        %5274 = vmatprep.subr.bf16.mxu0 %v4254
        %5275 = vmatpush1.bf16.msra.mxu0 %v4253
        %5276 = vmatprep.subr.bf16.mxu0 %v4260
        %5277 = vmatpush1.bf16.msra.mxu0 %v4259
        %5278 = vmatprep.subr.bf16.mxu0 %v4266
        %5279 = vmatpush1.bf16.msra.mxu0 %v4265
        %5280 = vmatprep.subr.bf16.mxu0 %v4272
        %5281 = vmatpush1.bf16.msra.mxu0 %v4271
        %5282 = vmatprep.subr.bf16.mxu0 %v4278
        %5283 = vmatpush1.bf16.msra.mxu0 %v4277
        %5284 = vmatprep.subr.bf16.mxu0 %v4284
        %5285 = vmatpush1.bf16.msra.mxu0 %v4283
        %5286 = vmatprep.subr.bf16.mxu0 %v4290
        %5287 = vmatpush1.bf16.msra.mxu0 %v4289
        %5288 = vmatprep.subr.bf16.mxu0 %v4296
        %5289 = vmatpush1.bf16.msra.mxu0 %v4295
        %5290 = vmatprep.subr.bf16.mxu0 %v4302
        %5291 = vmatpush1.bf16.msra.mxu0 %v4301
        %5292 = vmatprep.subr.bf16.mxu0 %v4308
        %5293 = vmatpush1.bf16.msra.mxu0 %v4307
        %5294 = vmatprep.subr.bf16.mxu0 %v4314
        %5295 = vmatpush1.bf16.msra.mxu0 %v4313
        %5296 = vmatprep.subr.bf16.mxu0 %v4320
        %5297 = vmatpush1.bf16.msra.mxu0 %v4319
        %5298 = vmatprep.mubr.bf16.mxu0 %v2588
        %5299 = vmatmul.mubr.bf16.gmra.mrb[0].mxu0 %v2587
        %v5300 = vpop.f32.mrb[0].mxu0
        %v5301 = vadd.f32 %v5260, %v5300
        %v5302 = vpop.f32.mrb[0].mxu0
        %v5303 = vadd.f32 %v5262, %v5302
        %v5304 = vpop.f32.mrb[0].mxu0
        %v5305 = vpop.f32.mrb[0].mxu0
        %5306 = vdwg.mxu0
        %5307 = vmatprep.subr.bf16.mxu0 %v4326
        %5308 = vmatpush1.bf16.msra.mxu0 %v4325
        %5309 = vmatprep.subr.bf16.mxu0 %v4332
        %5310 = vmatpush1.bf16.msra.mxu0 %v4331
        %5311 = vmatprep.subr.bf16.mxu0 %v4338
        %5312 = vmatpush1.bf16.msra.mxu0 %v4337
        %5313 = vmatprep.subr.bf16.mxu0 %v4344
        %5314 = vmatpush1.bf16.msra.mxu0 %v4343
        %5315 = vmatprep.subr.bf16.mxu0 %v4350
        %5316 = vmatpush1.bf16.msra.mxu0 %v4349
        %5317 = vmatprep.subr.bf16.mxu0 %v4356
        %5318 = vmatpush1.bf16.msra.mxu0 %v4355
        %5319 = vmatprep.subr.bf16.mxu0 %v4362
        %5320 = vmatpush1.bf16.msra.mxu0 %v4361
        %5321 = vmatprep.subr.bf16.mxu0 %v4368
        %5322 = vmatpush1.bf16.msra.mxu0 %v4367
        %5323 = vmatprep.subr.bf16.mxu0 %v4374
        %5324 = vmatpush1.bf16.msra.mxu0 %v4373
        %5325 = vmatprep.subr.bf16.mxu0 %v4380
        %5326 = vmatpush1.bf16.msra.mxu0 %v4379
        %5327 = vmatprep.subr.bf16.mxu0 %v4386
        %5328 = vmatpush1.bf16.msra.mxu0 %v4385
        %5329 = vmatprep.subr.bf16.mxu0 %v4392
        %5330 = vmatpush1.bf16.msra.mxu0 %v4391
        %5331 = vmatprep.subr.bf16.mxu0 %v4398
        %5332 = vmatpush1.bf16.msra.mxu0 %v4397
        %5333 = vmatprep.subr.bf16.mxu0 %v4404
        %5334 = vmatpush1.bf16.msra.mxu0 %v4403
        %5335 = vmatprep.subr.bf16.mxu0 %v4410
        %5336 = vmatpush1.bf16.msra.mxu0 %v4409
        %5337 = vmatprep.subr.bf16.mxu0 %v4416
        %5338 = vmatpush1.bf16.msra.mxu0 %v4415
        %5339 = vmatprep.mubr.bf16.mxu0 %v2590
        %5340 = vmatmul.mubr.bf16.gmra.mrb[0].mxu0 %v2589
        %v5341 = vpop.f32.mrb[0].mxu0
        %v5342 = vadd.f32 %v5301, %v5341
        %v5343 = vpop.f32.mrb[0].mxu0
        %v5344 = vadd.f32 %v5303, %v5343
        %v5345 = vpop.f32.mrb[0].mxu0
        %v5346 = vpop.f32.mrb[0].mxu0
        %5347 = vdwg.mxu0
        %5348 = vmatprep.subr.bf16.mxu0 %v4422
        %5349 = vmatpush1.bf16.msra.mxu0 %v4421
        %5350 = vmatprep.subr.bf16.mxu0 %v4428
        %5351 = vmatpush1.bf16.msra.mxu0 %v4427
        %5352 = vmatprep.subr.bf16.mxu0 %v4434
        %5353 = vmatpush1.bf16.msra.mxu0 %v4433
        %5354 = vmatprep.subr.bf16.mxu0 %v4440
        %5355 = vmatpush1.bf16.msra.mxu0 %v4439
        %5356 = vmatprep.subr.bf16.mxu0 %v4446
        %5357 = vmatpush1.bf16.msra.mxu0 %v4445
        %5358 = vmatprep.subr.bf16.mxu0 %v4452
        %5359 = vmatpush1.bf16.msra.mxu0 %v4451
        %5360 = vmatprep.subr.bf16.mxu0 %v4458
        %5361 = vmatpush1.bf16.msra.mxu0 %v4457
        %5362 = vmatprep.subr.bf16.mxu0 %v4464
        %5363 = vmatpush1.bf16.msra.mxu0 %v4463
        %5364 = vmatprep.subr.bf16.mxu0 %v4470
        %5365 = vmatpush1.bf16.msra.mxu0 %v4469
        %5366 = vmatprep.subr.bf16.mxu0 %v4476
        %5367 = vmatpush1.bf16.msra.mxu0 %v4475
        %5368 = vmatprep.subr.bf16.mxu0 %v4482
        %5369 = vmatpush1.bf16.msra.mxu0 %v4481
        %5370 = vmatprep.subr.bf16.mxu0 %v4488
        %5371 = vmatpush1.bf16.msra.mxu0 %v4487
        %5372 = vmatprep.subr.bf16.mxu0 %v4494
        %5373 = vmatpush1.bf16.msra.mxu0 %v4493
        %5374 = vmatprep.subr.bf16.mxu0 %v4500
        %5375 = vmatpush1.bf16.msra.mxu0 %v4499
        %5376 = vmatprep.subr.bf16.mxu0 %v4506
        %5377 = vmatpush1.bf16.msra.mxu0 %v4505
        %5378 = vmatprep.subr.bf16.mxu0 %v4512
        %5379 = vmatpush1.bf16.msra.mxu0 %v4511
        %5380 = vmatprep.mubr.bf16.mxu0 %v2592
        %5381 = vmatmul.mubr.bf16.gmra.mrb[0].mxu0 %v2591
        %v5382 = vpop.f32.mrb[0].mxu0
        %v5383 = vadd.f32 %v5342, %v5382
        %v5384 = vpop.f32.mrb[0].mxu0
        %v5385 = vadd.f32 %v5344, %v5384
        %v5386 = vpop.f32.mrb[0].mxu0
        %v5387 = vpop.f32.mrb[0].mxu0
        %5388 = vdwg.mxu0
        %v5389 = vmax.f32 %v5055, %v5221
        %v5390 = vmax.f32 %v5057, %v5383
        %v5391 = vmax.f32 %v5219, %v5385
        %v5392 = vld [vmem:[#allocation10] sm:$0x7]
        %v5394 = vlaneseq
        %v5395 = vshrl.u32 %v5394, 7
        %v5396 = vsub.s32 0, %v5395
        %v5397 = vrot.slane %v5392, %v5396
        %v5398 = vlaneseq
        %v5399 = vshrl.u32 %v5398, 7
        %v5400 = vsub.s32 1, %v5399
        %v5401 = vrot.slane %v5392, %v5400
        %v5402 = vlaneseq
        %v5403 = vshrl.u32 %v5402, 7
        %v5404 = vsub.s32 2, %v5403
        %v5405 = vrot.slane %v5392, %v5404
        %v5409 = vadd.f32 %v5389, %v5397
        %v5410 = vadd.f32 %v5390, %v5401
        %v5411 = vadd.f32 %v5391, %v5405
        %v5412 = vmax.f32 %v5409, 0.0
        %v5413 = vmax.f32 %v5410, 0.0
        %v5414 = vmax.f32 %v5411, 0.0
        %v5415 = vpack.c.bf16 %v5412, %v5412
        %v5416 = vpack.c.bf16 %v5413, %v5413
        %v5417 = vpack.c.bf16 %v5414, %v5414
        %v5418 = vld [vmem:[#allocation11] sm:$0xff]
        %v5419 = vld [vmem:[#allocation11 + $0x8] sm:$0xff]
        %v5420 = vld [vmem:[#allocation11 + $0x10] sm:$0xff]
        %v5421 = vld [vmem:[#allocation11 + $0x18] sm:$0xff]
        %v5422 = vld [vmem:[#allocation11 + $0x20] sm:$0xff]
        %v5423 = vld [vmem:[#allocation11 + $0x28] sm:$0xff]
        %v5424 = vld [vmem:[#allocation11 + $0x30] sm:$0xff]
        %v5425 = vld [vmem:[#allocation11 + $0x38] sm:$0xff]
        %v5426 = vld [vmem:[#allocation11 + $0x40] sm:$0xff]
        %v5427 = vld [vmem:[#allocation11 + $0x48] sm:$0xff]
        %v5428 = vld [vmem:[#allocation11 + $0x50] sm:$0xff]
        %v5429 = vld [vmem:[#allocation11 + $0x58] sm:$0xff]
        %v5430 = vld [vmem:[#allocation11 + $0x60] sm:$0xff]
        %v5431 = vld [vmem:[#allocation11 + $0x68] sm:$0xff]
        %v5432 = vld [vmem:[#allocation11 + $0x70] sm:$0xff]
        %v5433 = vld [vmem:[#allocation11 + $0x78] sm:$0xff]
        %v5434 = vld [vmem:[#allocation11 + $0x80] sm:$0xff]
        %v5435 = vld [vmem:[#allocation11 + $0x88] sm:$0xff]
        %v5436 = vld [vmem:[#allocation11 + $0x90] sm:$0xff]
        %v5437 = vld [vmem:[#allocation11 + $0x98] sm:$0xff]
        %v5438 = vld [vmem:[#allocation11 + $0xa0] sm:$0xff]
        %v5439 = vld [vmem:[#allocation11 + $0xa8] sm:$0xff]
        %v5440 = vld [vmem:[#allocation11 + $0xb0] sm:$0xff]
        %v5441 = vld [vmem:[#allocation11 + $0xb8] sm:$0xff]
        %v5442 = vld [vmem:[#allocation11 + $0xc0] sm:$0xff]
        %v5443 = vld [vmem:[#allocation11 + $0xc8] sm:$0xff]
        %v5444 = vld [vmem:[#allocation11 + $0xd0] sm:$0xff]
        %v5445 = vld [vmem:[#allocation11 + $0xd8] sm:$0xff]
        %v5446 = vld [vmem:[#allocation11 + $0xe0] sm:$0xff]
        %v5447 = vld [vmem:[#allocation11 + $0xe8] sm:$0xff]
        %v5448 = vld [vmem:[#allocation11 + $0xf0] sm:$0xff]
        %v5449 = vld [vmem:[#allocation11 + $0xf8] sm:$0xff]
        %v5450 = vld [vmem:[#allocation11 + $0x100] sm:$0xff]
        %v5451 = vld [vmem:[#allocation11 + $0x108] sm:$0xff]
        %v5452 = vld [vmem:[#allocation11 + $0x110] sm:$0xff]
        %v5453 = vld [vmem:[#allocation11 + $0x118] sm:$0xff]
        %v5454 = vld [vmem:[#allocation11 + $0x120] sm:$0xff]
        %v5455 = vld [vmem:[#allocation11 + $0x128] sm:$0xff]
        %v5456 = vld [vmem:[#allocation11 + $0x130] sm:$0xff]
        %v5457 = vld [vmem:[#allocation11 + $0x138] sm:$0xff]
        %v5458 = vld [vmem:[#allocation11 + $0x140] sm:$0xff]
        %v5459 = vld [vmem:[#allocation11 + $0x148] sm:$0xff]
        %v5460 = vld [vmem:[#allocation11 + $0x150] sm:$0xff]
        %v5461 = vld [vmem:[#allocation11 + $0x158] sm:$0xff]
        %v5462 = vld [vmem:[#allocation11 + $0x160] sm:$0xff]
        %v5463 = vld [vmem:[#allocation11 + $0x168] sm:$0xff]
        %v5464 = vld [vmem:[#allocation11 + $0x170] sm:$0xff]
        %v5465 = vld [vmem:[#allocation11 + $0x178] sm:$0xff]
        %v5466 = vld [vmem:[#allocation11 + $0x180] sm:$0xff]
        %v5467 = vld [vmem:[#allocation11 + $0x188] sm:$0xff]
        %v5468 = vld [vmem:[#allocation11 + $0x190] sm:$0xff]
        %v5469 = vld [vmem:[#allocation11 + $0x198] sm:$0xff]
        %v5470 = vld [vmem:[#allocation11 + $0x1a0] sm:$0xff]
        %v5471 = vld [vmem:[#allocation11 + $0x1a8] sm:$0xff]
        %v5472 = vld [vmem:[#allocation11 + $0x1b0] sm:$0xff]
        %v5473 = vld [vmem:[#allocation11 + $0x1b8] sm:$0xff]
        %v5474 = vld [vmem:[#allocation11 + $0x1c0] sm:$0xff]
        %v5475 = vld [vmem:[#allocation11 + $0x1c8] sm:$0xff]
        %v5476 = vld [vmem:[#allocation11 + $0x1d0] sm:$0xff]
        %v5477 = vld [vmem:[#allocation11 + $0x1d8] sm:$0xff]
        %v5478 = vld [vmem:[#allocation11 + $0x1e0] sm:$0xff]
        %v5479 = vld [vmem:[#allocation11 + $0x1e8] sm:$0xff]
        %v5480 = vld [vmem:[#allocation11 + $0x1f0] sm:$0xff]
        %v5481 = vld [vmem:[#allocation11 + $0x1f8] sm:$0xff]
        %v5482 = vld [vmem:[#allocation11 + $0x200] sm:$0xff]
        %v5483 = vld [vmem:[#allocation11 + $0x208] sm:$0xff]
        %v5484 = vld [vmem:[#allocation11 + $0x210] sm:$0xff]
        %v5485 = vld [vmem:[#allocation11 + $0x218] sm:$0xff]
        %v5486 = vld [vmem:[#allocation11 + $0x220] sm:$0xff]
        %v5487 = vld [vmem:[#allocation11 + $0x228] sm:$0xff]
        %v5488 = vld [vmem:[#allocation11 + $0x230] sm:$0xff]
        %v5489 = vld [vmem:[#allocation11 + $0x238] sm:$0xff]
        %v5490 = vld [vmem:[#allocation11 + $0x240] sm:$0xff]
        %v5491 = vld [vmem:[#allocation11 + $0x248] sm:$0xff]
        %v5492 = vld [vmem:[#allocation11 + $0x250] sm:$0xff]
        %v5493 = vld [vmem:[#allocation11 + $0x258] sm:$0xff]
        %v5494 = vld [vmem:[#allocation11 + $0x260] sm:$0xff]
        %v5495 = vld [vmem:[#allocation11 + $0x268] sm:$0xff]
        %v5496 = vld [vmem:[#allocation11 + $0x270] sm:$0xff]
        %v5497 = vld [vmem:[#allocation11 + $0x278] sm:$0xff]
        %v5498 = vld [vmem:[#allocation11 + $0x280] sm:$0xff]
        %v5499 = vld [vmem:[#allocation11 + $0x288] sm:$0xff]
        %v5500 = vld [vmem:[#allocation11 + $0x290] sm:$0xff]
        %v5501 = vld [vmem:[#allocation11 + $0x298] sm:$0xff]
        %v5502 = vld [vmem:[#allocation11 + $0x2a0] sm:$0xff]
        %v5503 = vld [vmem:[#allocation11 + $0x2a8] sm:$0xff]
        %v5504 = vld [vmem:[#allocation11 + $0x2b0] sm:$0xff]
        %v5505 = vld [vmem:[#allocation11 + $0x2b8] sm:$0xff]
        %v5506 = vld [vmem:[#allocation11 + $0x2c0] sm:$0xff]
        %v5507 = vld [vmem:[#allocation11 + $0x2c8] sm:$0xff]
        %v5508 = vld [vmem:[#allocation11 + $0x2d0] sm:$0xff]
        %v5509 = vld [vmem:[#allocation11 + $0x2d8] sm:$0xff]
        %v5510 = vld [vmem:[#allocation11 + $0x2e0] sm:$0xff]
        %v5511 = vld [vmem:[#allocation11 + $0x2e8] sm:$0xff]
        %v5512 = vld [vmem:[#allocation11 + $0x2f0] sm:$0xff]
        %v5513 = vld [vmem:[#allocation11 + $0x2f8] sm:$0xff]
        %v5610 = vunpack.c.l.b16 %v5418
        %v5611 = vunpack.c.h.b16 %v5418
        %v5612 = vunpack.c.l.b16 %v5419
        %v5613 = vunpack.c.h.b16 %v5419
        %v5614 = vunpack.c.l.b16 %v5420
        %v5615 = vunpack.c.h.b16 %v5420
        %v5616 = vunpack.c.l.b16 %v5421
        %v5617 = vunpack.c.h.b16 %v5421
        %v5618 = vunpack.c.l.b16 %v5422
        %v5619 = vunpack.c.h.b16 %v5422
        %v5620 = vunpack.c.l.b16 %v5423
        %v5621 = vunpack.c.h.b16 %v5423
        %v5622 = vunpack.c.l.b16 %v5424
        %v5623 = vunpack.c.h.b16 %v5424
        %v5624 = vunpack.c.l.b16 %v5425
        %v5625 = vunpack.c.h.b16 %v5425
        %v5626 = vunpack.c.l.b16 %v5426
        %v5627 = vunpack.c.h.b16 %v5426
        %v5628 = vunpack.c.l.b16 %v5427
        %v5629 = vunpack.c.h.b16 %v5427
        %v5630 = vunpack.c.l.b16 %v5428
        %v5631 = vunpack.c.h.b16 %v5428
        %v5632 = vunpack.c.l.b16 %v5429
        %v5633 = vunpack.c.h.b16 %v5429
        %v5634 = vunpack.c.l.b16 %v5430
        %v5635 = vunpack.c.h.b16 %v5430
        %v5636 = vunpack.c.l.b16 %v5431
        %v5637 = vunpack.c.h.b16 %v5431
        %v5638 = vunpack.c.l.b16 %v5432
        %v5639 = vunpack.c.h.b16 %v5432
        %v5640 = vunpack.c.l.b16 %v5433
        %v5641 = vunpack.c.h.b16 %v5433
        %v5642 = vunpack.c.l.b16 %v5434
        %v5643 = vunpack.c.h.b16 %v5434
        %v5644 = vunpack.c.l.b16 %v5435
        %v5645 = vunpack.c.h.b16 %v5435
        %v5646 = vunpack.c.l.b16 %v5436
        %v5647 = vunpack.c.h.b16 %v5436
        %v5648 = vunpack.c.l.b16 %v5437
        %v5649 = vunpack.c.h.b16 %v5437
        %v5650 = vunpack.c.l.b16 %v5438
        %v5651 = vunpack.c.h.b16 %v5438
        %v5652 = vunpack.c.l.b16 %v5439
        %v5653 = vunpack.c.h.b16 %v5439
        %v5654 = vunpack.c.l.b16 %v5440
        %v5655 = vunpack.c.h.b16 %v5440
        %v5656 = vunpack.c.l.b16 %v5441
        %v5657 = vunpack.c.h.b16 %v5441
        %v5658 = vunpack.c.l.b16 %v5442
        %v5659 = vunpack.c.h.b16 %v5442
        %v5660 = vunpack.c.l.b16 %v5443
        %v5661 = vunpack.c.h.b16 %v5443
        %v5662 = vunpack.c.l.b16 %v5444
        %v5663 = vunpack.c.h.b16 %v5444
        %v5664 = vunpack.c.l.b16 %v5445
        %v5665 = vunpack.c.h.b16 %v5445
        %v5666 = vunpack.c.l.b16 %v5446
        %v5667 = vunpack.c.h.b16 %v5446
        %v5668 = vunpack.c.l.b16 %v5447
        %v5669 = vunpack.c.h.b16 %v5447
        %v5670 = vunpack.c.l.b16 %v5448
        %v5671 = vunpack.c.h.b16 %v5448
        %v5672 = vunpack.c.l.b16 %v5449
        %v5673 = vunpack.c.h.b16 %v5449
        %v5674 = vunpack.c.l.b16 %v5450
        %v5675 = vunpack.c.h.b16 %v5450
        %v5676 = vunpack.c.l.b16 %v5451
        %v5677 = vunpack.c.h.b16 %v5451
        %v5678 = vunpack.c.l.b16 %v5452
        %v5679 = vunpack.c.h.b16 %v5452
        %v5680 = vunpack.c.l.b16 %v5453
        %v5681 = vunpack.c.h.b16 %v5453
        %v5682 = vunpack.c.l.b16 %v5454
        %v5683 = vunpack.c.h.b16 %v5454
        %v5684 = vunpack.c.l.b16 %v5455
        %v5685 = vunpack.c.h.b16 %v5455
        %v5686 = vunpack.c.l.b16 %v5456
        %v5687 = vunpack.c.h.b16 %v5456
        %v5688 = vunpack.c.l.b16 %v5457
        %v5689 = vunpack.c.h.b16 %v5457
        %v5690 = vunpack.c.l.b16 %v5458
        %v5691 = vunpack.c.h.b16 %v5458
        %v5692 = vunpack.c.l.b16 %v5459
        %v5693 = vunpack.c.h.b16 %v5459
        %v5694 = vunpack.c.l.b16 %v5460
        %v5695 = vunpack.c.h.b16 %v5460
        %v5696 = vunpack.c.l.b16 %v5461
        %v5697 = vunpack.c.h.b16 %v5461
        %v5698 = vunpack.c.l.b16 %v5462
        %v5699 = vunpack.c.h.b16 %v5462
        %v5700 = vunpack.c.l.b16 %v5463
        %v5701 = vunpack.c.h.b16 %v5463
        %v5702 = vunpack.c.l.b16 %v5464
        %v5703 = vunpack.c.h.b16 %v5464
        %v5704 = vunpack.c.l.b16 %v5465
        %v5705 = vunpack.c.h.b16 %v5465
        %v5706 = vunpack.c.l.b16 %v5466
        %v5707 = vunpack.c.h.b16 %v5466
        %v5708 = vunpack.c.l.b16 %v5467
        %v5709 = vunpack.c.h.b16 %v5467
        %v5710 = vunpack.c.l.b16 %v5468
        %v5711 = vunpack.c.h.b16 %v5468
        %v5712 = vunpack.c.l.b16 %v5469
        %v5713 = vunpack.c.h.b16 %v5469
        %v5714 = vunpack.c.l.b16 %v5470
        %v5715 = vunpack.c.h.b16 %v5470
        %v5716 = vunpack.c.l.b16 %v5471
        %v5717 = vunpack.c.h.b16 %v5471
        %v5718 = vunpack.c.l.b16 %v5472
        %v5719 = vunpack.c.h.b16 %v5472
        %v5720 = vunpack.c.l.b16 %v5473
        %v5721 = vunpack.c.h.b16 %v5473
        %v5722 = vunpack.c.l.b16 %v5474
        %v5723 = vunpack.c.h.b16 %v5474
        %v5724 = vunpack.c.l.b16 %v5475
        %v5725 = vunpack.c.h.b16 %v5475
        %v5726 = vunpack.c.l.b16 %v5476
        %v5727 = vunpack.c.h.b16 %v5476
        %v5728 = vunpack.c.l.b16 %v5477
        %v5729 = vunpack.c.h.b16 %v5477
        %v5730 = vunpack.c.l.b16 %v5478
        %v5731 = vunpack.c.h.b16 %v5478
        %v5732 = vunpack.c.l.b16 %v5479
        %v5733 = vunpack.c.h.b16 %v5479
        %v5734 = vunpack.c.l.b16 %v5480
        %v5735 = vunpack.c.h.b16 %v5480
        %v5736 = vunpack.c.l.b16 %v5481
        %v5737 = vunpack.c.h.b16 %v5481
        %v5738 = vunpack.c.l.b16 %v5482
        %v5739 = vunpack.c.h.b16 %v5482
        %v5740 = vunpack.c.l.b16 %v5483
        %v5741 = vunpack.c.h.b16 %v5483
        %v5742 = vunpack.c.l.b16 %v5484
        %v5743 = vunpack.c.h.b16 %v5484
        %v5744 = vunpack.c.l.b16 %v5485
        %v5745 = vunpack.c.h.b16 %v5485
        %v5746 = vunpack.c.l.b16 %v5486
        %v5747 = vunpack.c.h.b16 %v5486
        %v5748 = vunpack.c.l.b16 %v5487
        %v5749 = vunpack.c.h.b16 %v5487
        %v5750 = vunpack.c.l.b16 %v5488
        %v5751 = vunpack.c.h.b16 %v5488
        %v5752 = vunpack.c.l.b16 %v5489
        %v5753 = vunpack.c.h.b16 %v5489
        %v5754 = vunpack.c.l.b16 %v5490
        %v5755 = vunpack.c.h.b16 %v5490
        %v5756 = vunpack.c.l.b16 %v5491
        %v5757 = vunpack.c.h.b16 %v5491
        %v5758 = vunpack.c.l.b16 %v5492
        %v5759 = vunpack.c.h.b16 %v5492
        %v5760 = vunpack.c.l.b16 %v5493
        %v5761 = vunpack.c.h.b16 %v5493
        %v5762 = vunpack.c.l.b16 %v5494
        %v5763 = vunpack.c.h.b16 %v5494
        %v5764 = vunpack.c.l.b16 %v5495
        %v5765 = vunpack.c.h.b16 %v5495
        %v5766 = vunpack.c.l.b16 %v5496
        %v5767 = vunpack.c.h.b16 %v5496
        %v5768 = vunpack.c.l.b16 %v5497
        %v5769 = vunpack.c.h.b16 %v5497
        %v5770 = vunpack.c.l.b16 %v5498
        %v5771 = vunpack.c.h.b16 %v5498
        %v5772 = vunpack.c.l.b16 %v5499
        %v5773 = vunpack.c.h.b16 %v5499
        %v5774 = vunpack.c.l.b16 %v5500
        %v5775 = vunpack.c.h.b16 %v5500
        %v5776 = vunpack.c.l.b16 %v5501
        %v5777 = vunpack.c.h.b16 %v5501
        %v5778 = vunpack.c.l.b16 %v5502
        %v5779 = vunpack.c.h.b16 %v5502
        %v5780 = vunpack.c.l.b16 %v5503
        %v5781 = vunpack.c.h.b16 %v5503
        %v5782 = vunpack.c.l.b16 %v5504
        %v5783 = vunpack.c.h.b16 %v5504
        %v5784 = vunpack.c.l.b16 %v5505
        %v5785 = vunpack.c.h.b16 %v5505
        %v5786 = vunpack.c.l.b16 %v5506
        %v5787 = vunpack.c.h.b16 %v5506
        %v5788 = vunpack.c.l.b16 %v5507
        %v5789 = vunpack.c.h.b16 %v5507
        %v5790 = vunpack.c.l.b16 %v5508
        %v5791 = vunpack.c.h.b16 %v5508
        %v5792 = vunpack.c.l.b16 %v5509
        %v5793 = vunpack.c.h.b16 %v5509
        %v5794 = vunpack.c.l.b16 %v5510
        %v5795 = vunpack.c.h.b16 %v5510
        %v5796 = vunpack.c.l.b16 %v5511
        %v5797 = vunpack.c.h.b16 %v5511
        %v5798 = vunpack.c.l.b16 %v5512
        %v5799 = vunpack.c.h.b16 %v5512
        %v5800 = vunpack.c.l.b16 %v5513
        %v5801 = vunpack.c.h.b16 %v5513
        %v5802 = vpack.c.b16 %v5614, %v5610
        %v5803 = vpack.c.b16 %v5615, %v5611
        %v5804 = vpack.c.b16 %v5616, %v5612
        %v5805 = vpack.c.b16 %v5617, %v5613
        %v5806 = vpack.c.b16 %v5622, %v5618
        %v5807 = vpack.c.b16 %v5623, %v5619
        %v5808 = vpack.c.b16 %v5624, %v5620
        %v5809 = vpack.c.b16 %v5625, %v5621
        %v5810 = vpack.c.b16 %v5630, %v5626
        %v5811 = vpack.c.b16 %v5631, %v5627
        %v5812 = vpack.c.b16 %v5632, %v5628
        %v5813 = vpack.c.b16 %v5633, %v5629
        %v5814 = vpack.c.b16 %v5638, %v5634
        %v5815 = vpack.c.b16 %v5639, %v5635
        %v5816 = vpack.c.b16 %v5640, %v5636
        %v5817 = vpack.c.b16 %v5641, %v5637
        %v5818 = vpack.c.b16 %v5646, %v5642
        %v5819 = vpack.c.b16 %v5647, %v5643
        %v5820 = vpack.c.b16 %v5648, %v5644
        %v5821 = vpack.c.b16 %v5649, %v5645
        %v5822 = vpack.c.b16 %v5654, %v5650
        %v5823 = vpack.c.b16 %v5655, %v5651
        %v5824 = vpack.c.b16 %v5656, %v5652
        %v5825 = vpack.c.b16 %v5657, %v5653
        %v5826 = vpack.c.b16 %v5662, %v5658
        %v5827 = vpack.c.b16 %v5663, %v5659
        %v5828 = vpack.c.b16 %v5664, %v5660
        %v5829 = vpack.c.b16 %v5665, %v5661
        %v5830 = vpack.c.b16 %v5670, %v5666
        %v5831 = vpack.c.b16 %v5671, %v5667
        %v5832 = vpack.c.b16 %v5672, %v5668
        %v5833 = vpack.c.b16 %v5673, %v5669
        %v5834 = vpack.c.b16 %v5678, %v5674
        %v5835 = vpack.c.b16 %v5679, %v5675
        %v5836 = vpack.c.b16 %v5680, %v5676
        %v5837 = vpack.c.b16 %v5681, %v5677
        %v5838 = vpack.c.b16 %v5686, %v5682
        %v5839 = vpack.c.b16 %v5687, %v5683
        %v5840 = vpack.c.b16 %v5688, %v5684
        %v5841 = vpack.c.b16 %v5689, %v5685
        %v5842 = vpack.c.b16 %v5694, %v5690
        %v5843 = vpack.c.b16 %v5695, %v5691
        %v5844 = vpack.c.b16 %v5696, %v5692
        %v5845 = vpack.c.b16 %v5697, %v5693
        %v5846 = vpack.c.b16 %v5702, %v5698
        %v5847 = vpack.c.b16 %v5703, %v5699
        %v5848 = vpack.c.b16 %v5704, %v5700
        %v5849 = vpack.c.b16 %v5705, %v5701
        %v5850 = vpack.c.b16 %v5710, %v5706
        %v5851 = vpack.c.b16 %v5711, %v5707
        %v5852 = vpack.c.b16 %v5712, %v5708
        %v5853 = vpack.c.b16 %v5713, %v5709
        %v5854 = vpack.c.b16 %v5718, %v5714
        %v5855 = vpack.c.b16 %v5719, %v5715
        %v5856 = vpack.c.b16 %v5720, %v5716
        %v5857 = vpack.c.b16 %v5721, %v5717
        %v5858 = vpack.c.b16 %v5726, %v5722
        %v5859 = vpack.c.b16 %v5727, %v5723
        %v5860 = vpack.c.b16 %v5728, %v5724
        %v5861 = vpack.c.b16 %v5729, %v5725
        %v5862 = vpack.c.b16 %v5734, %v5730
        %v5863 = vpack.c.b16 %v5735, %v5731
        %v5864 = vpack.c.b16 %v5736, %v5732
        %v5865 = vpack.c.b16 %v5737, %v5733
        %v5866 = vpack.c.b16 %v5742, %v5738
        %v5867 = vpack.c.b16 %v5743, %v5739
        %v5868 = vpack.c.b16 %v5744, %v5740
        %v5869 = vpack.c.b16 %v5745, %v5741
        %v5870 = vpack.c.b16 %v5750, %v5746
        %v5871 = vpack.c.b16 %v5751, %v5747
        %v5872 = vpack.c.b16 %v5752, %v5748
        %v5873 = vpack.c.b16 %v5753, %v5749
        %v5874 = vpack.c.b16 %v5758, %v5754
        %v5875 = vpack.c.b16 %v5759, %v5755
        %v5876 = vpack.c.b16 %v5760, %v5756
        %v5877 = vpack.c.b16 %v5761, %v5757
        %v5878 = vpack.c.b16 %v5766, %v5762
        %v5879 = vpack.c.b16 %v5767, %v5763
        %v5880 = vpack.c.b16 %v5768, %v5764
        %v5881 = vpack.c.b16 %v5769, %v5765
        %v5882 = vpack.c.b16 %v5774, %v5770
        %v5883 = vpack.c.b16 %v5775, %v5771
        %v5884 = vpack.c.b16 %v5776, %v5772
        %v5885 = vpack.c.b16 %v5777, %v5773
        %v5886 = vpack.c.b16 %v5782, %v5778
        %v5887 = vpack.c.b16 %v5783, %v5779
        %v5888 = vpack.c.b16 %v5784, %v5780
        %v5889 = vpack.c.b16 %v5785, %v5781
        %v5890 = vpack.c.b16 %v5790, %v5786
        %v5891 = vpack.c.b16 %v5791, %v5787
        %v5892 = vpack.c.b16 %v5792, %v5788
        %v5893 = vpack.c.b16 %v5793, %v5789
        %v5894 = vpack.c.b16 %v5798, %v5794
        %v5895 = vpack.c.b16 %v5799, %v5795
        %v5896 = vpack.c.b16 %v5800, %v5796
        %v5897 = vpack.c.b16 %v5801, %v5797
        %5994 = vmatprep.subr.bf16.mxu0 %v5803
        %5995 = vmatpush1.bf16.msra.mxu0 %v5802
        %5996 = vmatprep.subr.bf16.mxu0 %v5807
        %5997 = vmatpush1.bf16.msra.mxu0 %v5806
        %5998 = vmatprep.subr.bf16.mxu0 %v5811
        %5999 = vmatpush1.bf16.msra.mxu0 %v5810
        %6000 = vmatprep.subr.bf16.mxu0 %v5815
        %6001 = vmatpush1.bf16.msra.mxu0 %v5814
        %6002 = vmatprep.subr.bf16.mxu0 %v5819
        %6003 = vmatpush1.bf16.msra.mxu0 %v5818
        %6004 = vmatprep.subr.bf16.mxu0 %v5823
        %6005 = vmatpush1.bf16.msra.mxu0 %v5822
        %6006 = vmatprep.subr.bf16.mxu0 %v5827
        %6007 = vmatpush1.bf16.msra.mxu0 %v5826
        %6008 = vmatprep.subr.bf16.mxu0 %v5831
        %6009 = vmatpush1.bf16.msra.mxu0 %v5830
        %6010 = vmatprep.subr.bf16.mxu0 %v5835
        %6011 = vmatpush1.bf16.msra.mxu0 %v5834
        %6012 = vmatprep.subr.bf16.mxu0 %v5839
        %6013 = vmatpush1.bf16.msra.mxu0 %v5838
        %6014 = vmatprep.subr.bf16.mxu0 %v5843
        %6015 = vmatpush1.bf16.msra.mxu0 %v5842
        %6016 = vmatprep.subr.bf16.mxu0 %v5847
        %6017 = vmatpush1.bf16.msra.mxu0 %v5846
        %6018 = vmatprep.subr.bf16.mxu0 %v5851
        %6019 = vmatpush1.bf16.msra.mxu0 %v5850
        %6020 = vmatprep.subr.bf16.mxu0 %v5855
        %6021 = vmatpush1.bf16.msra.mxu0 %v5854
        %6022 = vmatprep.subr.bf16.mxu0 %v5859
        %6023 = vmatpush1.bf16.msra.mxu0 %v5858
        %6024 = vmatprep.subr.bf16.mxu0 %v5863
        %6025 = vmatpush1.bf16.msra.mxu0 %v5862
        %6026 = vmatprep.mubr.bf16.mxu0 %v5416
        %6027 = vmatmul.mubr.bf16.gmra.mrb[0].mxu0 %v5415
        %v6028 = vpop.f32.mrb[0].mxu0
        %v6029 = vadd.f32 0.0, %v6028
        %v6030 = vpop.f32.mrb[0].mxu0
        %v6031 = vadd.f32 0.0, %v6030
        %v6032 = vpop.f32.mrb[0].mxu0
        %v6033 = vpop.f32.mrb[0].mxu0
        %6034 = vdwg.mxu0
        %6035 = vmatprep.subr.bf16.mxu0 %v5867
        %6036 = vmatpush1.bf16.msra.mxu0 %v5866
        %6037 = vmatprep.subr.bf16.mxu0 %v5871
        %6038 = vmatpush1.bf16.msra.mxu0 %v5870
        %6039 = vmatprep.subr.bf16.mxu0 %v5875
        %6040 = vmatpush1.bf16.msra.mxu0 %v5874
        %6041 = vmatprep.subr.bf16.mxu0 %v5879
        %6042 = vmatpush1.bf16.msra.mxu0 %v5878
        %6043 = vmatprep.subr.bf16.mxu0 %v5883
        %6044 = vmatpush1.bf16.msra.mxu0 %v5882
        %6045 = vmatprep.subr.bf16.mxu0 %v5887
        %6046 = vmatpush1.bf16.msra.mxu0 %v5886
        %6047 = vmatprep.subr.bf16.mxu0 %v5891
        %6048 = vmatpush1.bf16.msra.mxu0 %v5890
        %6049 = vmatprep.subr.bf16.mxu0 %v5895
        %6050 = vmatpush1.bf16.msra.mxu0 %v5894
        %6051 = vmatprep.subr.bf16.mxu0 0
        %6052 = vmatpush1.bf16.msra.mxu0 0
        %6053 = vmatprep.subr.bf16.mxu0 0
        %6054 = vmatpush1.bf16.msra.mxu0 0
        %6055 = vmatprep.subr.bf16.mxu0 0
        %6056 = vmatpush1.bf16.msra.mxu0 0
        %6057 = vmatprep.subr.bf16.mxu0 0
        %6058 = vmatpush1.bf16.msra.mxu0 0
        %6059 = vmatprep.subr.bf16.mxu0 0
        %6060 = vmatpush1.bf16.msra.mxu0 0
        %6061 = vmatprep.subr.bf16.mxu0 0
        %6062 = vmatpush1.bf16.msra.mxu0 0
        %6063 = vmatprep.subr.bf16.mxu0 0
        %6064 = vmatpush1.bf16.msra.mxu0 0
        %6065 = vmatprep.subr.bf16.mxu0 0
        %6066 = vmatpush1.bf16.msra.mxu0 0
        %6067 = vmatprep.mubr.bf16.mxu0 0
        %6068 = vmatmul.mubr.bf16.gmra.mrb[0].mxu0 %v5417
        %v6069 = vpop.f32.mrb[0].mxu0
        %v6070 = vadd.f32 %v6029, %v6069
        %v6071 = vpop.f32.mrb[0].mxu0
        %v6072 = vadd.f32 %v6031, %v6071
        %v6073 = vpop.f32.mrb[0].mxu0
        %v6074 = vpop.f32.mrb[0].mxu0
        %6075 = vdwg.mxu0
        %6076 = vmatprep.subr.bf16.mxu0 %v5805
        %6077 = vmatpush1.bf16.msra.mxu0 %v5804
        %6078 = vmatprep.subr.bf16.mxu0 %v5809
        %6079 = vmatpush1.bf16.msra.mxu0 %v5808
        %6080 = vmatprep.subr.bf16.mxu0 %v5813
        %6081 = vmatpush1.bf16.msra.mxu0 %v5812
        %6082 = vmatprep.subr.bf16.mxu0 %v5817
        %6083 = vmatpush1.bf16.msra.mxu0 %v5816
        %6084 = vmatprep.subr.bf16.mxu0 %v5821
        %6085 = vmatpush1.bf16.msra.mxu0 %v5820
        %6086 = vmatprep.subr.bf16.mxu0 %v5825
        %6087 = vmatpush1.bf16.msra.mxu0 %v5824
        %6088 = vmatprep.subr.bf16.mxu0 %v5829
        %6089 = vmatpush1.bf16.msra.mxu0 %v5828
        %6090 = vmatprep.subr.bf16.mxu0 %v5833
        %6091 = vmatpush1.bf16.msra.mxu0 %v5832
        %6092 = vmatprep.subr.bf16.mxu0 %v5837
        %6093 = vmatpush1.bf16.msra.mxu0 %v5836
        %6094 = vmatprep.subr.bf16.mxu0 %v5841
        %6095 = vmatpush1.bf16.msra.mxu0 %v5840
        %6096 = vmatprep.subr.bf16.mxu0 %v5845
        %6097 = vmatpush1.bf16.msra.mxu0 %v5844
        %6098 = vmatprep.subr.bf16.mxu0 %v5849
        %6099 = vmatpush1.bf16.msra.mxu0 %v5848
        %6100 = vmatprep.subr.bf16.mxu0 %v5853
        %6101 = vmatpush1.bf16.msra.mxu0 %v5852
        %6102 = vmatprep.subr.bf16.mxu0 %v5857
        %6103 = vmatpush1.bf16.msra.mxu0 %v5856
        %6104 = vmatprep.subr.bf16.mxu0 %v5861
        %6105 = vmatpush1.bf16.msra.mxu0 %v5860
        %6106 = vmatprep.subr.bf16.mxu0 %v5865
        %6107 = vmatpush1.bf16.msra.mxu0 %v5864
        %6108 = vmatprep.mubr.bf16.mxu0 %v5416
        %6109 = vmatmul.mubr.bf16.gmra.mrb[0].mxu0 %v5415
        %v6110 = vpop.f32.mrb[0].mxu0
        %v6111 = vadd.f32 0.0, %v6110
        %v6112 = vpop.f32.mrb[0].mxu0
        %v6113 = vadd.f32 0.0, %v6112
        %v6114 = vpop.f32.mrb[0].mxu0
        %v6115 = vpop.f32.mrb[0].mxu0
        %6116 = vdwg.mxu0
        %6117 = vmatprep.subr.bf16.mxu0 %v5869
        %6118 = vmatpush1.bf16.msra.mxu0 %v5868
        %6119 = vmatprep.subr.bf16.mxu0 %v5873
        %6120 = vmatpush1.bf16.msra.mxu0 %v5872
        %6121 = vmatprep.subr.bf16.mxu0 %v5877
        %6122 = vmatpush1.bf16.msra.mxu0 %v5876
        %6123 = vmatprep.subr.bf16.mxu0 %v5881
        %6124 = vmatpush1.bf16.msra.mxu0 %v5880
        %6125 = vmatprep.subr.bf16.mxu0 %v5885
        %6126 = vmatpush1.bf16.msra.mxu0 %v5884
        %6127 = vmatprep.subr.bf16.mxu0 %v5889
        %6128 = vmatpush1.bf16.msra.mxu0 %v5888
        %6129 = vmatprep.subr.bf16.mxu0 %v5893
        %6130 = vmatpush1.bf16.msra.mxu0 %v5892
        %6131 = vmatprep.subr.bf16.mxu0 %v5897
        %6132 = vmatpush1.bf16.msra.mxu0 %v5896
        %6133 = vmatprep.subr.bf16.mxu0 0
        %6134 = vmatpush1.bf16.msra.mxu0 0
        %6135 = vmatprep.subr.bf16.mxu0 0
        %6136 = vmatpush1.bf16.msra.mxu0 0
        %6137 = vmatprep.subr.bf16.mxu0 0
        %6138 = vmatpush1.bf16.msra.mxu0 0
        %6139 = vmatprep.subr.bf16.mxu0 0
        %6140 = vmatpush1.bf16.msra.mxu0 0
        %6141 = vmatprep.subr.bf16.mxu0 0
        %6142 = vmatpush1.bf16.msra.mxu0 0
        %6143 = vmatprep.subr.bf16.mxu0 0
        %6144 = vmatpush1.bf16.msra.mxu0 0
        %6145 = vmatprep.subr.bf16.mxu0 0
        %6146 = vmatpush1.bf16.msra.mxu0 0
        %6147 = vmatprep.subr.bf16.mxu0 0
        %6148 = vmatpush1.bf16.msra.mxu0 0
        %6149 = vmatprep.mubr.bf16.mxu0 0
        %6150 = vmatmul.mubr.bf16.gmra.mrb[0].mxu0 %v5417
        %v6151 = vpop.f32.mrb[0].mxu0
        %v6152 = vadd.f32 %v6111, %v6151
        %v6153 = vpop.f32.mrb[0].mxu0
        %v6154 = vadd.f32 %v6113, %v6153
        %v6155 = vpop.f32.mrb[0].mxu0
        %v6156 = vpop.f32.mrb[0].mxu0
        %6157 = vdwg.mxu0
        %v6158 = vmax.f32 %v6070, %v6152
        %v6159 = vmax.f32 %v6072, %v6154
        %v6160 = vld [vmem:[#allocation13] sm:$0x3]
        %v6162 = vlaneseq
        %v6163 = vshrl.u32 %v6162, 7
        %v6164 = vsub.s32 0, %v6163
        %v6165 = vrot.slane %v6160, %v6164
        %v6166 = vlaneseq
        %v6167 = vshrl.u32 %v6166, 7
        %v6168 = vsub.s32 1, %v6167
        %v6169 = vrot.slane %v6160, %v6168
        %v6172 = vadd.f32 %v6158, %v6165
        %v6173 = vadd.f32 %v6159, %v6169
        %v6174 = vmax.f32 %v6172, 0.0
        %v6175 = vmax.f32 %v6173, 0.0
        %v6176 = vpack.c.bf16 %v6174, %v6174
        %v6177 = vpack.c.bf16 %v6175, %v6175
        %v6178 = vld [vmem:[#allocation14] sm:$0xff]
        %v6179 = vld [vmem:[#allocation14 + $0x8] sm:$0xff]
        %v6180 = vld [vmem:[#allocation14 + $0x10] sm:$0xff]
        %v6181 = vld [vmem:[#allocation14 + $0x18] sm:$0xff]
        %v6182 = vld [vmem:[#allocation14 + $0x20] sm:$0xff]
        %v6183 = vld [vmem:[#allocation14 + $0x28] sm:$0xff]
        %v6184 = vld [vmem:[#allocation14 + $0x30] sm:$0xff]
        %v6185 = vld [vmem:[#allocation14 + $0x38] sm:$0xff]
        %v6186 = vld [vmem:[#allocation14 + $0x40] sm:$0xff]
        %v6187 = vld [vmem:[#allocation14 + $0x48] sm:$0xff]
        %v6188 = vld [vmem:[#allocation14 + $0x50] sm:$0xff]
        %v6189 = vld [vmem:[#allocation14 + $0x58] sm:$0xff]
        %v6190 = vld [vmem:[#allocation14 + $0x60] sm:$0xff]
        %v6191 = vld [vmem:[#allocation14 + $0x68] sm:$0xff]
        %v6192 = vld [vmem:[#allocation14 + $0x70] sm:$0xff]
        %v6193 = vld [vmem:[#allocation14 + $0x78] sm:$0xff]
        %v6194 = vld [vmem:[#allocation14 + $0x80] sm:$0xff]
        %v6195 = vld [vmem:[#allocation14 + $0x88] sm:$0xff]
        %v6196 = vld [vmem:[#allocation14 + $0x90] sm:$0xff]
        %v6197 = vld [vmem:[#allocation14 + $0x98] sm:$0xff]
        %v6198 = vld [vmem:[#allocation14 + $0xa0] sm:$0xff]
        %v6199 = vld [vmem:[#allocation14 + $0xa8] sm:$0xff]
        %v6200 = vld [vmem:[#allocation14 + $0xb0] sm:$0xff]
        %v6201 = vld [vmem:[#allocation14 + $0xb8] sm:$0xff]
        %v6202 = vld [vmem:[#allocation14 + $0xc0] sm:$0xff]
        %v6203 = vld [vmem:[#allocation14 + $0xc8] sm:$0xff]
        %v6204 = vld [vmem:[#allocation14 + $0xd0] sm:$0xff]
        %v6205 = vld [vmem:[#allocation14 + $0xd8] sm:$0xff]
        %v6206 = vld [vmem:[#allocation14 + $0xe0] sm:$0xff]
        %v6207 = vld [vmem:[#allocation14 + $0xe8] sm:$0xff]
        %v6208 = vld [vmem:[#allocation14 + $0xf0] sm:$0xff]
        %v6209 = vld [vmem:[#allocation14 + $0xf8] sm:$0xff]
        %v6210 = vld [vmem:[#allocation14 + $0x100] sm:$0xff]
        %v6211 = vld [vmem:[#allocation14 + $0x108] sm:$0xff]
        %v6212 = vld [vmem:[#allocation14 + $0x110] sm:$0xff]
        %v6213 = vld [vmem:[#allocation14 + $0x118] sm:$0xff]
        %v6214 = vld [vmem:[#allocation14 + $0x120] sm:$0xff]
        %v6215 = vld [vmem:[#allocation14 + $0x128] sm:$0xff]
        %v6216 = vld [vmem:[#allocation14 + $0x130] sm:$0xff]
        %v6217 = vld [vmem:[#allocation14 + $0x138] sm:$0xff]
        %v6218 = vld [vmem:[#allocation14 + $0x140] sm:$0xff]
        %v6219 = vld [vmem:[#allocation14 + $0x148] sm:$0xff]
        %v6220 = vld [vmem:[#allocation14 + $0x150] sm:$0xff]
        %v6221 = vld [vmem:[#allocation14 + $0x158] sm:$0xff]
        %v6222 = vld [vmem:[#allocation14 + $0x160] sm:$0xff]
        %v6223 = vld [vmem:[#allocation14 + $0x168] sm:$0xff]
        %v6224 = vld [vmem:[#allocation14 + $0x170] sm:$0xff]
        %v6225 = vld [vmem:[#allocation14 + $0x178] sm:$0xff]
        %v6226 = vld [vmem:[#allocation14 + $0x180] sm:$0xff]
        %v6227 = vld [vmem:[#allocation14 + $0x188] sm:$0xff]
        %v6228 = vld [vmem:[#allocation14 + $0x190] sm:$0xff]
        %v6229 = vld [vmem:[#allocation14 + $0x198] sm:$0xff]
        %v6230 = vld [vmem:[#allocation14 + $0x1a0] sm:$0xff]
        %v6231 = vld [vmem:[#allocation14 + $0x1a8] sm:$0xff]
        %v6232 = vld [vmem:[#allocation14 + $0x1b0] sm:$0xff]
        %v6233 = vld [vmem:[#allocation14 + $0x1b8] sm:$0xff]
        %v6234 = vld [vmem:[#allocation14 + $0x1c0] sm:$0xff]
        %v6235 = vld [vmem:[#allocation14 + $0x1c8] sm:$0xff]
        %v6236 = vld [vmem:[#allocation14 + $0x1d0] sm:$0xff]
        %v6237 = vld [vmem:[#allocation14 + $0x1d8] sm:$0xff]
        %v6238 = vld [vmem:[#allocation14 + $0x1e0] sm:$0xff]
        %v6239 = vld [vmem:[#allocation14 + $0x1e8] sm:$0xff]
        %v6240 = vld [vmem:[#allocation14 + $0x1f0] sm:$0xff]
        %v6241 = vld [vmem:[#allocation14 + $0x1f8] sm:$0xff]
        %v6242 = vld [vmem:[#allocation14 + $0x200] sm:$0xff]
        %v6243 = vld [vmem:[#allocation14 + $0x208] sm:$0xff]
        %v6244 = vld [vmem:[#allocation14 + $0x210] sm:$0xff]
        %v6245 = vld [vmem:[#allocation14 + $0x218] sm:$0xff]
        %v6246 = vld [vmem:[#allocation14 + $0x220] sm:$0xff]
        %v6247 = vld [vmem:[#allocation14 + $0x228] sm:$0xff]
        %v6248 = vld [vmem:[#allocation14 + $0x230] sm:$0xff]
        %v6249 = vld [vmem:[#allocation14 + $0x238] sm:$0xff]
        %v6250 = vld [vmem:[#allocation14 + $0x240] sm:$0xff]
        %v6251 = vld [vmem:[#allocation14 + $0x248] sm:$0xff]
        %v6252 = vld [vmem:[#allocation14 + $0x250] sm:$0xff]
        %v6253 = vld [vmem:[#allocation14 + $0x258] sm:$0xff]
        %v6254 = vld [vmem:[#allocation14 + $0x260] sm:$0xff]
        %v6255 = vld [vmem:[#allocation14 + $0x268] sm:$0xff]
        %v6256 = vld [vmem:[#allocation14 + $0x270] sm:$0xff]
        %v6257 = vld [vmem:[#allocation14 + $0x278] sm:$0xff]
        %v6258 = vld [vmem:[#allocation14 + $0x280] sm:$0xff]
        %v6259 = vld [vmem:[#allocation14 + $0x288] sm:$0xff]
        %v6260 = vld [vmem:[#allocation14 + $0x290] sm:$0xff]
        %v6261 = vld [vmem:[#allocation14 + $0x298] sm:$0xff]
        %v6262 = vld [vmem:[#allocation14 + $0x2a0] sm:$0xff]
        %v6263 = vld [vmem:[#allocation14 + $0x2a8] sm:$0xff]
        %v6264 = vld [vmem:[#allocation14 + $0x2b0] sm:$0xff]
        %v6265 = vld [vmem:[#allocation14 + $0x2b8] sm:$0xff]
        %v6266 = vld [vmem:[#allocation14 + $0x2c0] sm:$0xff]
        %v6267 = vld [vmem:[#allocation14 + $0x2c8] sm:$0xff]
        %v6268 = vld [vmem:[#allocation14 + $0x2d0] sm:$0xff]
        %v6269 = vld [vmem:[#allocation14 + $0x2d8] sm:$0xff]
        %v6270 = vld [vmem:[#allocation14 + $0x2e0] sm:$0xff]
        %v6271 = vld [vmem:[#allocation14 + $0x2e8] sm:$0xff]
        %v6272 = vld [vmem:[#allocation14 + $0x2f0] sm:$0xff]
        %v6273 = vld [vmem:[#allocation14 + $0x2f8] sm:$0xff]
        %v6274 = vld [vmem:[#allocation14 + $0x300] sm:$0xff]
        %v6275 = vld [vmem:[#allocation14 + $0x308] sm:$0xff]
        %v6276 = vld [vmem:[#allocation14 + $0x310] sm:$0xff]
        %v6277 = vld [vmem:[#allocation14 + $0x318] sm:$0xff]
        %v6278 = vld [vmem:[#allocation14 + $0x320] sm:$0xff]
        %v6279 = vld [vmem:[#allocation14 + $0x328] sm:$0xff]
        %v6280 = vld [vmem:[#allocation14 + $0x330] sm:$0xff]
        %v6281 = vld [vmem:[#allocation14 + $0x338] sm:$0xff]
        %v6282 = vld [vmem:[#allocation14 + $0x340] sm:$0xff]
        %v6283 = vld [vmem:[#allocation14 + $0x348] sm:$0xff]
        %v6284 = vld [vmem:[#allocation14 + $0x350] sm:$0xff]
        %v6285 = vld [vmem:[#allocation14 + $0x358] sm:$0xff]
        %v6286 = vld [vmem:[#allocation14 + $0x360] sm:$0xff]
        %v6287 = vld [vmem:[#allocation14 + $0x368] sm:$0xff]
        %v6288 = vld [vmem:[#allocation14 + $0x370] sm:$0xff]
        %v6289 = vld [vmem:[#allocation14 + $0x378] sm:$0xff]
        %v6290 = vld [vmem:[#allocation14 + $0x380] sm:$0xff]
        %v6291 = vld [vmem:[#allocation14 + $0x388] sm:$0xff]
        %v6292 = vld [vmem:[#allocation14 + $0x390] sm:$0xff]
        %v6293 = vld [vmem:[#allocation14 + $0x398] sm:$0xff]
        %v6294 = vld [vmem:[#allocation14 + $0x3a0] sm:$0xff]
        %v6295 = vld [vmem:[#allocation14 + $0x3a8] sm:$0xff]
        %v6296 = vld [vmem:[#allocation14 + $0x3b0] sm:$0xff]
        %v6297 = vld [vmem:[#allocation14 + $0x3b8] sm:$0xff]
        %v6298 = vld [vmem:[#allocation14 + $0x3c0] sm:$0xff]
        %v6299 = vld [vmem:[#allocation14 + $0x3c8] sm:$0xff]
        %v6300 = vld [vmem:[#allocation14 + $0x3d0] sm:$0xff]
        %v6301 = vld [vmem:[#allocation14 + $0x3d8] sm:$0xff]
        %v6302 = vld [vmem:[#allocation14 + $0x3e0] sm:$0xff]
        %v6303 = vld [vmem:[#allocation14 + $0x3e8] sm:$0xff]
        %v6304 = vld [vmem:[#allocation14 + $0x3f0] sm:$0xff]
        %v6305 = vld [vmem:[#allocation14 + $0x3f8] sm:$0xff]
        %v6306 = vld [vmem:[#allocation14 + $0x400] sm:$0xff]
        %v6307 = vld [vmem:[#allocation14 + $0x408] sm:$0xff]
        %v6308 = vld [vmem:[#allocation14 + $0x410] sm:$0xff]
        %v6309 = vld [vmem:[#allocation14 + $0x418] sm:$0xff]
        %v6310 = vld [vmem:[#allocation14 + $0x420] sm:$0xff]
        %v6311 = vld [vmem:[#allocation14 + $0x428] sm:$0xff]
        %v6312 = vld [vmem:[#allocation14 + $0x430] sm:$0xff]
        %v6313 = vld [vmem:[#allocation14 + $0x438] sm:$0xff]
        %v6314 = vld [vmem:[#allocation14 + $0x440] sm:$0xff]
        %v6315 = vld [vmem:[#allocation14 + $0x448] sm:$0xff]
        %v6316 = vld [vmem:[#allocation14 + $0x450] sm:$0xff]
        %v6317 = vld [vmem:[#allocation14 + $0x458] sm:$0xff]
        %v6318 = vld [vmem:[#allocation14 + $0x460] sm:$0xff]
        %v6319 = vld [vmem:[#allocation14 + $0x468] sm:$0xff]
        %v6320 = vld [vmem:[#allocation14 + $0x470] sm:$0xff]
        %v6321 = vld [vmem:[#allocation14 + $0x478] sm:$0xff]
        %v6322 = vld [vmem:[#allocation14 + $0x480] sm:$0xff]
        %v6323 = vld [vmem:[#allocation14 + $0x488] sm:$0xff]
        %v6324 = vld [vmem:[#allocation14 + $0x490] sm:$0xff]
        %v6325 = vld [vmem:[#allocation14 + $0x498] sm:$0xff]
        %v6326 = vld [vmem:[#allocation14 + $0x4a0] sm:$0xff]
        %v6327 = vld [vmem:[#allocation14 + $0x4a8] sm:$0xff]
        %v6328 = vld [vmem:[#allocation14 + $0x4b0] sm:$0xff]
        %v6329 = vld [vmem:[#allocation14 + $0x4b8] sm:$0xff]
        %v6330 = vld [vmem:[#allocation14 + $0x4c0] sm:$0xff]
        %v6331 = vld [vmem:[#allocation14 + $0x4c8] sm:$0xff]
        %v6332 = vld [vmem:[#allocation14 + $0x4d0] sm:$0xff]
        %v6333 = vld [vmem:[#allocation14 + $0x4d8] sm:$0xff]
        %v6334 = vld [vmem:[#allocation14 + $0x4e0] sm:$0xff]
        %v6335 = vld [vmem:[#allocation14 + $0x4e8] sm:$0xff]
        %v6336 = vld [vmem:[#allocation14 + $0x4f0] sm:$0xff]
        %v6337 = vld [vmem:[#allocation14 + $0x4f8] sm:$0xff]
        %v6338 = vld [vmem:[#allocation14 + $0x500] sm:$0xff]
        %v6339 = vld [vmem:[#allocation14 + $0x508] sm:$0xff]
        %v6340 = vld [vmem:[#allocation14 + $0x510] sm:$0xff]
        %v6341 = vld [vmem:[#allocation14 + $0x518] sm:$0xff]
        %v6342 = vld [vmem:[#allocation14 + $0x520] sm:$0xff]
        %v6343 = vld [vmem:[#allocation14 + $0x528] sm:$0xff]
        %v6344 = vld [vmem:[#allocation14 + $0x530] sm:$0xff]
        %v6345 = vld [vmem:[#allocation14 + $0x538] sm:$0xff]
        %v6346 = vld [vmem:[#allocation14 + $0x540] sm:$0xff]
        %v6347 = vld [vmem:[#allocation14 + $0x548] sm:$0xff]
        %v6348 = vld [vmem:[#allocation14 + $0x550] sm:$0xff]
        %v6349 = vld [vmem:[#allocation14 + $0x558] sm:$0xff]
        %v6350 = vld [vmem:[#allocation14 + $0x560] sm:$0xff]
        %v6351 = vld [vmem:[#allocation14 + $0x568] sm:$0xff]
        %v6352 = vld [vmem:[#allocation14 + $0x570] sm:$0xff]
        %v6353 = vld [vmem:[#allocation14 + $0x578] sm:$0xff]
        %v6354 = vld [vmem:[#allocation14 + $0x580] sm:$0xff]
        %v6355 = vld [vmem:[#allocation14 + $0x588] sm:$0xff]
        %v6356 = vld [vmem:[#allocation14 + $0x590] sm:$0xff]
        %v6357 = vld [vmem:[#allocation14 + $0x598] sm:$0xff]
        %v6358 = vld [vmem:[#allocation14 + $0x5a0] sm:$0xff]
        %v6359 = vld [vmem:[#allocation14 + $0x5a8] sm:$0xff]
        %v6360 = vld [vmem:[#allocation14 + $0x5b0] sm:$0xff]
        %v6361 = vld [vmem:[#allocation14 + $0x5b8] sm:$0xff]
        %v6362 = vld [vmem:[#allocation14 + $0x5c0] sm:$0xff]
        %v6363 = vld [vmem:[#allocation14 + $0x5c8] sm:$0xff]
        %v6364 = vld [vmem:[#allocation14 + $0x5d0] sm:$0xff]
        %v6365 = vld [vmem:[#allocation14 + $0x5d8] sm:$0xff]
        %v6366 = vld [vmem:[#allocation14 + $0x5e0] sm:$0xff]
        %v6367 = vld [vmem:[#allocation14 + $0x5e8] sm:$0xff]
        %v6368 = vld [vmem:[#allocation14 + $0x5f0] sm:$0xff]
        %v6369 = vld [vmem:[#allocation14 + $0x5f8] sm:$0xff]
        %v6370 = vld [vmem:[#allocation14 + $0x600] sm:$0xff]
        %v6371 = vld [vmem:[#allocation14 + $0x608] sm:$0xff]
        %v6372 = vld [vmem:[#allocation14 + $0x610] sm:$0xff]
        %v6373 = vld [vmem:[#allocation14 + $0x618] sm:$0xff]
        %v6374 = vld [vmem:[#allocation14 + $0x620] sm:$0xff]
        %v6375 = vld [vmem:[#allocation14 + $0x628] sm:$0xff]
        %v6376 = vld [vmem:[#allocation14 + $0x630] sm:$0xff]
        %v6377 = vld [vmem:[#allocation14 + $0x638] sm:$0xff]
        %v6378 = vld [vmem:[#allocation14 + $0x640] sm:$0xff]
        %v6379 = vld [vmem:[#allocation14 + $0x648] sm:$0xff]
        %v6380 = vld [vmem:[#allocation14 + $0x650] sm:$0xff]
        %v6381 = vld [vmem:[#allocation14 + $0x658] sm:$0xff]
        %v6382 = vld [vmem:[#allocation14 + $0x660] sm:$0xff]
        %v6383 = vld [vmem:[#allocation14 + $0x668] sm:$0xff]
        %v6384 = vld [vmem:[#allocation14 + $0x670] sm:$0xff]
        %v6385 = vld [vmem:[#allocation14 + $0x678] sm:$0xff]
        %v6386 = vld [vmem:[#allocation14 + $0x680] sm:$0xff]
        %v6387 = vld [vmem:[#allocation14 + $0x688] sm:$0xff]
        %v6388 = vld [vmem:[#allocation14 + $0x690] sm:$0xff]
        %v6389 = vld [vmem:[#allocation14 + $0x698] sm:$0xff]
        %v6390 = vld [vmem:[#allocation14 + $0x6a0] sm:$0xff]
        %v6391 = vld [vmem:[#allocation14 + $0x6a8] sm:$0xff]
        %v6392 = vld [vmem:[#allocation14 + $0x6b0] sm:$0xff]
        %v6393 = vld [vmem:[#allocation14 + $0x6b8] sm:$0xff]
        %v6394 = vld [vmem:[#allocation14 + $0x6c0] sm:$0xff]
        %v6395 = vld [vmem:[#allocation14 + $0x6c8] sm:$0xff]
        %v6396 = vld [vmem:[#allocation14 + $0x6d0] sm:$0xff]
        %v6397 = vld [vmem:[#allocation14 + $0x6d8] sm:$0xff]
        %v6398 = vld [vmem:[#allocation14 + $0x6e0] sm:$0xff]
        %v6399 = vld [vmem:[#allocation14 + $0x6e8] sm:$0xff]
        %v6400 = vld [vmem:[#allocation14 + $0x6f0] sm:$0xff]
        %v6401 = vld [vmem:[#allocation14 + $0x6f8] sm:$0xff]
        %v6402 = vld [vmem:[#allocation14 + $0x700] sm:$0xff]
        %v6403 = vld [vmem:[#allocation14 + $0x708] sm:$0xff]
        %v6404 = vld [vmem:[#allocation14 + $0x710] sm:$0xff]
        %v6405 = vld [vmem:[#allocation14 + $0x718] sm:$0xff]
        %v6406 = vld [vmem:[#allocation14 + $0x720] sm:$0xff]
        %v6407 = vld [vmem:[#allocation14 + $0x728] sm:$0xff]
        %v6408 = vld [vmem:[#allocation14 + $0x730] sm:$0xff]
        %v6409 = vld [vmem:[#allocation14 + $0x738] sm:$0xff]
        %v6410 = vld [vmem:[#allocation14 + $0x740] sm:$0xff]
        %v6411 = vld [vmem:[#allocation14 + $0x748] sm:$0xff]
        %v6412 = vld [vmem:[#allocation14 + $0x750] sm:$0xff]
        %v6413 = vld [vmem:[#allocation14 + $0x758] sm:$0xff]
        %v6414 = vld [vmem:[#allocation14 + $0x760] sm:$0xff]
        %v6415 = vld [vmem:[#allocation14 + $0x768] sm:$0xff]
        %v6416 = vld [vmem:[#allocation14 + $0x770] sm:$0xff]
        %v6417 = vld [vmem:[#allocation14 + $0x778] sm:$0xff]
        %v6418 = vld [vmem:[#allocation14 + $0x780] sm:$0xff]
        %v6419 = vld [vmem:[#allocation14 + $0x788] sm:$0xff]
        %v6420 = vld [vmem:[#allocation14 + $0x790] sm:$0xff]
        %v6421 = vld [vmem:[#allocation14 + $0x798] sm:$0xff]
        %v6422 = vld [vmem:[#allocation14 + $0x7a0] sm:$0xff]
        %v6423 = vld [vmem:[#allocation14 + $0x7a8] sm:$0xff]
        %v6424 = vld [vmem:[#allocation14 + $0x7b0] sm:$0xff]
        %v6425 = vld [vmem:[#allocation14 + $0x7b8] sm:$0xff]
        %v6426 = vld [vmem:[#allocation14 + $0x7c0] sm:$0xff]
        %v6427 = vld [vmem:[#allocation14 + $0x7c8] sm:$0xff]
        %v6428 = vld [vmem:[#allocation14 + $0x7d0] sm:$0xff]
        %v6429 = vld [vmem:[#allocation14 + $0x7d8] sm:$0xff]
        %v6430 = vld [vmem:[#allocation14 + $0x7e0] sm:$0xff]
        %v6431 = vld [vmem:[#allocation14 + $0x7e8] sm:$0xff]
        %v6432 = vld [vmem:[#allocation14 + $0x7f0] sm:$0xff]
        %v6433 = vld [vmem:[#allocation14 + $0x7f8] sm:$0xff]
        %v6434 = vld [vmem:[#allocation14 + $0x800] sm:$0xff]
        %v6435 = vld [vmem:[#allocation14 + $0x808] sm:$0xff]
        %v6436 = vld [vmem:[#allocation14 + $0x810] sm:$0xff]
        %v6437 = vld [vmem:[#allocation14 + $0x818] sm:$0xff]
        %v6438 = vld [vmem:[#allocation14 + $0x820] sm:$0xff]
        %v6439 = vld [vmem:[#allocation14 + $0x828] sm:$0xff]
        %v6440 = vld [vmem:[#allocation14 + $0x830] sm:$0xff]
        %v6441 = vld [vmem:[#allocation14 + $0x838] sm:$0xff]
        %v6442 = vld [vmem:[#allocation14 + $0x840] sm:$0xff]
        %v6443 = vld [vmem:[#allocation14 + $0x848] sm:$0xff]
        %v6444 = vld [vmem:[#allocation14 + $0x850] sm:$0xff]
        %v6445 = vld [vmem:[#allocation14 + $0x858] sm:$0xff]
        %v6446 = vld [vmem:[#allocation14 + $0x860] sm:$0xff]
        %v6447 = vld [vmem:[#allocation14 + $0x868] sm:$0xff]
        %v6448 = vld [vmem:[#allocation14 + $0x870] sm:$0xff]
        %v6449 = vld [vmem:[#allocation14 + $0x878] sm:$0xff]
        %v6450 = vld [vmem:[#allocation14 + $0x880] sm:$0xff]
        %v6451 = vld [vmem:[#allocation14 + $0x888] sm:$0xff]
        %v6452 = vld [vmem:[#allocation14 + $0x890] sm:$0xff]
        %v6453 = vld [vmem:[#allocation14 + $0x898] sm:$0xff]
        %v6454 = vld [vmem:[#allocation14 + $0x8a0] sm:$0xff]
        %v6455 = vld [vmem:[#allocation14 + $0x8a8] sm:$0xff]
        %v6456 = vld [vmem:[#allocation14 + $0x8b0] sm:$0xff]
        %v6457 = vld [vmem:[#allocation14 + $0x8b8] sm:$0xff]
        %v6458 = vld [vmem:[#allocation14 + $0x8c0] sm:$0xff]
        %v6459 = vld [vmem:[#allocation14 + $0x8c8] sm:$0xff]
        %v6460 = vld [vmem:[#allocation14 + $0x8d0] sm:$0xff]
        %v6461 = vld [vmem:[#allocation14 + $0x8d8] sm:$0xff]
        %v6462 = vld [vmem:[#allocation14 + $0x8e0] sm:$0xff]
        %v6463 = vld [vmem:[#allocation14 + $0x8e8] sm:$0xff]
        %v6464 = vld [vmem:[#allocation14 + $0x8f0] sm:$0xff]
        %v6465 = vld [vmem:[#allocation14 + $0x8f8] sm:$0xff]
        %v6466 = vld [vmem:[#allocation14 + $0x900] sm:$0xff]
        %v6467 = vld [vmem:[#allocation14 + $0x908] sm:$0xff]
        %v6468 = vld [vmem:[#allocation14 + $0x910] sm:$0xff]
        %v6469 = vld [vmem:[#allocation14 + $0x918] sm:$0xff]
        %v6470 = vld [vmem:[#allocation14 + $0x920] sm:$0xff]
        %v6471 = vld [vmem:[#allocation14 + $0x928] sm:$0xff]
        %v6472 = vld [vmem:[#allocation14 + $0x930] sm:$0xff]
        %v6473 = vld [vmem:[#allocation14 + $0x938] sm:$0xff]
        %v6474 = vld [vmem:[#allocation14 + $0x940] sm:$0xff]
        %v6475 = vld [vmem:[#allocation14 + $0x948] sm:$0xff]
        %v6476 = vld [vmem:[#allocation14 + $0x950] sm:$0xff]
        %v6477 = vld [vmem:[#allocation14 + $0x958] sm:$0xff]
        %v6478 = vld [vmem:[#allocation14 + $0x960] sm:$0xff]
        %v6479 = vld [vmem:[#allocation14 + $0x968] sm:$0xff]
        %v6480 = vld [vmem:[#allocation14 + $0x970] sm:$0xff]
        %v6481 = vld [vmem:[#allocation14 + $0x978] sm:$0xff]
        %v6482 = vld [vmem:[#allocation14 + $0x980] sm:$0xff]
        %v6483 = vld [vmem:[#allocation14 + $0x988] sm:$0xff]
        %v6484 = vld [vmem:[#allocation14 + $0x990] sm:$0xff]
        %v6485 = vld [vmem:[#allocation14 + $0x998] sm:$0xff]
        %v6486 = vld [vmem:[#allocation14 + $0x9a0] sm:$0xff]
        %v6487 = vld [vmem:[#allocation14 + $0x9a8] sm:$0xff]
        %v6488 = vld [vmem:[#allocation14 + $0x9b0] sm:$0xff]
        %v6489 = vld [vmem:[#allocation14 + $0x9b8] sm:$0xff]
        %v6490 = vld [vmem:[#allocation14 + $0x9c0] sm:$0xff]
        %v6491 = vld [vmem:[#allocation14 + $0x9c8] sm:$0xff]
        %v6492 = vld [vmem:[#allocation14 + $0x9d0] sm:$0xff]
        %v6493 = vld [vmem:[#allocation14 + $0x9d8] sm:$0xff]
        %v6494 = vld [vmem:[#allocation14 + $0x9e0] sm:$0xff]
        %v6495 = vld [vmem:[#allocation14 + $0x9e8] sm:$0xff]
        %v6496 = vld [vmem:[#allocation14 + $0x9f0] sm:$0xff]
        %v6497 = vld [vmem:[#allocation14 + $0x9f8] sm:$0xff]
        %v6498 = vld [vmem:[#allocation14 + $0xa00] sm:$0xff]
        %v6499 = vld [vmem:[#allocation14 + $0xa08] sm:$0xff]
        %v6500 = vld [vmem:[#allocation14 + $0xa10] sm:$0xff]
        %v6501 = vld [vmem:[#allocation14 + $0xa18] sm:$0xff]
        %v6502 = vld [vmem:[#allocation14 + $0xa20] sm:$0xff]
        %v6503 = vld [vmem:[#allocation14 + $0xa28] sm:$0xff]
        %v6504 = vld [vmem:[#allocation14 + $0xa30] sm:$0xff]
        %v6505 = vld [vmem:[#allocation14 + $0xa38] sm:$0xff]
        %v6506 = vld [vmem:[#allocation14 + $0xa40] sm:$0xff]
        %v6507 = vld [vmem:[#allocation14 + $0xa48] sm:$0xff]
        %v6508 = vld [vmem:[#allocation14 + $0xa50] sm:$0xff]
        %v6509 = vld [vmem:[#allocation14 + $0xa58] sm:$0xff]
        %v6510 = vld [vmem:[#allocation14 + $0xa60] sm:$0xff]
        %v6511 = vld [vmem:[#allocation14 + $0xa68] sm:$0xff]
        %v6512 = vld [vmem:[#allocation14 + $0xa70] sm:$0xff]
        %v6513 = vld [vmem:[#allocation14 + $0xa78] sm:$0xff]
        %v6514 = vld [vmem:[#allocation14 + $0xa80] sm:$0xff]
        %v6515 = vld [vmem:[#allocation14 + $0xa88] sm:$0xff]
        %v6516 = vld [vmem:[#allocation14 + $0xa90] sm:$0xff]
        %v6517 = vld [vmem:[#allocation14 + $0xa98] sm:$0xff]
        %v6518 = vld [vmem:[#allocation14 + $0xaa0] sm:$0xff]
        %v6519 = vld [vmem:[#allocation14 + $0xaa8] sm:$0xff]
        %v6520 = vld [vmem:[#allocation14 + $0xab0] sm:$0xff]
        %v6521 = vld [vmem:[#allocation14 + $0xab8] sm:$0xff]
        %v6522 = vld [vmem:[#allocation14 + $0xac0] sm:$0xff]
        %v6523 = vld [vmem:[#allocation14 + $0xac8] sm:$0xff]
        %v6524 = vld [vmem:[#allocation14 + $0xad0] sm:$0xff]
        %v6525 = vld [vmem:[#allocation14 + $0xad8] sm:$0xff]
        %v6526 = vld [vmem:[#allocation14 + $0xae0] sm:$0xff]
        %v6527 = vld [vmem:[#allocation14 + $0xae8] sm:$0xff]
        %v6528 = vld [vmem:[#allocation14 + $0xaf0] sm:$0xff]
        %v6529 = vld [vmem:[#allocation14 + $0xaf8] sm:$0xff]
        %v6530 = vld [vmem:[#allocation14 + $0xb00] sm:$0xff]
        %v6531 = vld [vmem:[#allocation14 + $0xb08] sm:$0xff]
        %v6532 = vld [vmem:[#allocation14 + $0xb10] sm:$0xff]
        %v6533 = vld [vmem:[#allocation14 + $0xb18] sm:$0xff]
        %v6534 = vld [vmem:[#allocation14 + $0xb20] sm:$0xff]
        %v6535 = vld [vmem:[#allocation14 + $0xb28] sm:$0xff]
        %v6536 = vld [vmem:[#allocation14 + $0xb30] sm:$0xff]
        %v6537 = vld [vmem:[#allocation14 + $0xb38] sm:$0xff]
        %v6538 = vld [vmem:[#allocation14 + $0xb40] sm:$0xff]
        %v6539 = vld [vmem:[#allocation14 + $0xb48] sm:$0xff]
        %v6540 = vld [vmem:[#allocation14 + $0xb50] sm:$0xff]
        %v6541 = vld [vmem:[#allocation14 + $0xb58] sm:$0xff]
        %v6542 = vld [vmem:[#allocation14 + $0xb60] sm:$0xff]
        %v6543 = vld [vmem:[#allocation14 + $0xb68] sm:$0xff]
        %v6544 = vld [vmem:[#allocation14 + $0xb70] sm:$0xff]
        %v6545 = vld [vmem:[#allocation14 + $0xb78] sm:$0xff]
        %v6546 = vld [vmem:[#allocation14 + $0xb80] sm:$0xff]
        %v6547 = vld [vmem:[#allocation14 + $0xb88] sm:$0xff]
        %v6548 = vld [vmem:[#allocation14 + $0xb90] sm:$0xff]
        %v6549 = vld [vmem:[#allocation14 + $0xb98] sm:$0xff]
        %v6550 = vld [vmem:[#allocation14 + $0xba0] sm:$0xff]
        %v6551 = vld [vmem:[#allocation14 + $0xba8] sm:$0xff]
        %v6552 = vld [vmem:[#allocation14 + $0xbb0] sm:$0xff]
        %v6553 = vld [vmem:[#allocation14 + $0xbb8] sm:$0xff]
        %v6554 = vld [vmem:[#allocation14 + $0xbc0] sm:$0xff]
        %v6555 = vld [vmem:[#allocation14 + $0xbc8] sm:$0xff]
        %v6556 = vld [vmem:[#allocation14 + $0xbd0] sm:$0xff]
        %v6557 = vld [vmem:[#allocation14 + $0xbd8] sm:$0xff]
        %v6558 = vld [vmem:[#allocation14 + $0xbe0] sm:$0xff]
        %v6559 = vld [vmem:[#allocation14 + $0xbe8] sm:$0xff]
        %v6560 = vld [vmem:[#allocation14 + $0xbf0] sm:$0xff]
        %v6561 = vld [vmem:[#allocation14 + $0xbf8] sm:$0xff]
        %v6562 = vld [vmem:[#allocation17] sm:$0xff]
        %v6563 = vld [vmem:[#allocation17 + $0x8] sm:$0xff]
        %v6564 = vld [vmem:[#allocation17 + $0x10] sm:$0xff]
        %v6568 = vlaneseq
        %v6569 = vshrl.u32 %v6568, 7
        %v6570 = vsub.s32 0, %v6569
        %v6571 = vrot.slane %v6562, %v6570
        %v6572 = vlaneseq
        %v6573 = vshrl.u32 %v6572, 7
        %v6574 = vsub.s32 1, %v6573
        %v6575 = vrot.slane %v6562, %v6574
        %v6576 = vlaneseq
        %v6577 = vshrl.u32 %v6576, 7
        %v6578 = vsub.s32 2, %v6577
        %v6579 = vrot.slane %v6562, %v6578
        %v6580 = vlaneseq
        %v6581 = vshrl.u32 %v6580, 7
        %v6582 = vsub.s32 3, %v6581
        %v6583 = vrot.slane %v6562, %v6582
        %v6584 = vlaneseq
        %v6585 = vshrl.u32 %v6584, 7
        %v6586 = vsub.s32 4, %v6585
        %v6587 = vrot.slane %v6562, %v6586
        %v6588 = vlaneseq
        %v6589 = vshrl.u32 %v6588, 7
        %v6590 = vsub.s32 5, %v6589
        %v6591 = vrot.slane %v6562, %v6590
        %v6592 = vlaneseq
        %v6593 = vshrl.u32 %v6592, 7
        %v6594 = vsub.s32 6, %v6593
        %v6595 = vrot.slane %v6562, %v6594
        %v6596 = vlaneseq
        %v6597 = vshrl.u32 %v6596, 7
        %v6598 = vsub.s32 7, %v6597
        %v6599 = vrot.slane %v6562, %v6598
        %v6600 = vlaneseq
        %v6601 = vshrl.u32 %v6600, 7
        %v6602 = vsub.s32 0, %v6601
        %v6603 = vrot.slane %v6563, %v6602
        %v6604 = vlaneseq
        %v6605 = vshrl.u32 %v6604, 7
        %v6606 = vsub.s32 1, %v6605
        %v6607 = vrot.slane %v6563, %v6606
        %v6608 = vlaneseq
        %v6609 = vshrl.u32 %v6608, 7
        %v6610 = vsub.s32 2, %v6609
        %v6611 = vrot.slane %v6563, %v6610
        %v6612 = vlaneseq
        %v6613 = vshrl.u32 %v6612, 7
        %v6614 = vsub.s32 3, %v6613
        %v6615 = vrot.slane %v6563, %v6614
        %v6616 = vlaneseq
        %v6617 = vshrl.u32 %v6616, 7
        %v6618 = vsub.s32 4, %v6617
        %v6619 = vrot.slane %v6563, %v6618
        %v6620 = vlaneseq
        %v6621 = vshrl.u32 %v6620, 7
        %v6622 = vsub.s32 5, %v6621
        %v6623 = vrot.slane %v6563, %v6622
        %v6624 = vlaneseq
        %v6625 = vshrl.u32 %v6624, 7
        %v6626 = vsub.s32 6, %v6625
        %v6627 = vrot.slane %v6563, %v6626
        %v6628 = vlaneseq
        %v6629 = vshrl.u32 %v6628, 7
        %v6630 = vsub.s32 7, %v6629
        %v6631 = vrot.slane %v6563, %v6630
        %v6632 = vlaneseq
        %v6633 = vshrl.u32 %v6632, 7
        %v6634 = vsub.s32 0, %v6633
        %v6635 = vrot.slane %v6564, %v6634
        %v6636 = vlaneseq
        %v6637 = vshrl.u32 %v6636, 7
        %v6638 = vsub.s32 1, %v6637
        %v6639 = vrot.slane %v6564, %v6638
        %v6640 = vlaneseq
        %v6641 = vshrl.u32 %v6640, 7
        %v6642 = vsub.s32 2, %v6641
        %v6643 = vrot.slane %v6564, %v6642
        %v6644 = vlaneseq
        %v6645 = vshrl.u32 %v6644, 7
        %v6646 = vsub.s32 3, %v6645
        %v6647 = vrot.slane %v6564, %v6646
        %v6648 = vlaneseq
        %v6649 = vshrl.u32 %v6648, 7
        %v6650 = vsub.s32 4, %v6649
        %v6651 = vrot.slane %v6564, %v6650
        %v6652 = vlaneseq
        %v6653 = vshrl.u32 %v6652, 7
        %v6654 = vsub.s32 5, %v6653
        %v6655 = vrot.slane %v6564, %v6654
        %v6656 = vlaneseq
        %v6657 = vshrl.u32 %v6656, 7
        %v6658 = vsub.s32 6, %v6657
        %v6659 = vrot.slane %v6564, %v6658
        %v6660 = vlaneseq
        %v6661 = vshrl.u32 %v6660, 7
        %v6662 = vsub.s32 7, %v6661
        %v6663 = vrot.slane %v6564, %v6662
        %v7072 = vunpack.c.l.b16 %v6178
        %v7073 = vunpack.c.h.b16 %v6178
        %v7074 = vunpack.c.l.b16 %v6179
        %v7075 = vunpack.c.h.b16 %v6179
        %v7076 = vunpack.c.l.b16 %v6180
        %v7077 = vunpack.c.h.b16 %v6180
        %v7078 = vunpack.c.l.b16 %v6181
        %v7079 = vunpack.c.h.b16 %v6181
        %v7080 = vunpack.c.l.b16 %v6182
        %v7081 = vunpack.c.h.b16 %v6182
        %v7082 = vunpack.c.l.b16 %v6183
        %v7083 = vunpack.c.h.b16 %v6183
        %v7084 = vunpack.c.l.b16 %v6184
        %v7085 = vunpack.c.h.b16 %v6184
        %v7086 = vunpack.c.l.b16 %v6185
        %v7087 = vunpack.c.h.b16 %v6185
        %v7088 = vunpack.c.l.b16 %v6186
        %v7089 = vunpack.c.h.b16 %v6186
        %v7090 = vunpack.c.l.b16 %v6187
        %v7091 = vunpack.c.h.b16 %v6187
        %v7092 = vunpack.c.l.b16 %v6188
        %v7093 = vunpack.c.h.b16 %v6188
        %v7094 = vunpack.c.l.b16 %v6189
        %v7095 = vunpack.c.h.b16 %v6189
        %v7096 = vunpack.c.l.b16 %v6190
        %v7097 = vunpack.c.h.b16 %v6190
        %v7098 = vunpack.c.l.b16 %v6191
        %v7099 = vunpack.c.h.b16 %v6191
        %v7100 = vunpack.c.l.b16 %v6192
        %v7101 = vunpack.c.h.b16 %v6192
        %v7102 = vunpack.c.l.b16 %v6193
        %v7103 = vunpack.c.h.b16 %v6193
        %v7104 = vunpack.c.l.b16 %v6194
        %v7105 = vunpack.c.h.b16 %v6194
        %v7106 = vunpack.c.l.b16 %v6195
        %v7107 = vunpack.c.h.b16 %v6195
        %v7108 = vunpack.c.l.b16 %v6196
        %v7109 = vunpack.c.h.b16 %v6196
        %v7110 = vunpack.c.l.b16 %v6197
        %v7111 = vunpack.c.h.b16 %v6197
        %v7112 = vunpack.c.l.b16 %v6198
        %v7113 = vunpack.c.h.b16 %v6198
        %v7114 = vunpack.c.l.b16 %v6199
        %v7115 = vunpack.c.h.b16 %v6199
        %v7116 = vunpack.c.l.b16 %v6200
        %v7117 = vunpack.c.h.b16 %v6200
        %v7118 = vunpack.c.l.b16 %v6201
        %v7119 = vunpack.c.h.b16 %v6201
        %v7120 = vunpack.c.l.b16 %v6202
        %v7121 = vunpack.c.h.b16 %v6202
        %v7122 = vunpack.c.l.b16 %v6203
        %v7123 = vunpack.c.h.b16 %v6203
        %v7124 = vunpack.c.l.b16 %v6204
        %v7125 = vunpack.c.h.b16 %v6204
        %v7126 = vunpack.c.l.b16 %v6205
        %v7127 = vunpack.c.h.b16 %v6205
        %v7128 = vunpack.c.l.b16 %v6206
        %v7129 = vunpack.c.h.b16 %v6206
        %v7130 = vunpack.c.l.b16 %v6207
        %v7131 = vunpack.c.h.b16 %v6207
        %v7132 = vunpack.c.l.b16 %v6208
        %v7133 = vunpack.c.h.b16 %v6208
        %v7134 = vunpack.c.l.b16 %v6209
        %v7135 = vunpack.c.h.b16 %v6209
        %v7136 = vunpack.c.l.b16 %v6210
        %v7137 = vunpack.c.h.b16 %v6210
        %v7138 = vunpack.c.l.b16 %v6211
        %v7139 = vunpack.c.h.b16 %v6211
        %v7140 = vunpack.c.l.b16 %v6212
        %v7141 = vunpack.c.h.b16 %v6212
        %v7142 = vunpack.c.l.b16 %v6213
        %v7143 = vunpack.c.h.b16 %v6213
        %v7144 = vunpack.c.l.b16 %v6214
        %v7145 = vunpack.c.h.b16 %v6214
        %v7146 = vunpack.c.l.b16 %v6215
        %v7147 = vunpack.c.h.b16 %v6215
        %v7148 = vunpack.c.l.b16 %v6216
        %v7149 = vunpack.c.h.b16 %v6216
        %v7150 = vunpack.c.l.b16 %v6217
        %v7151 = vunpack.c.h.b16 %v6217
        %v7152 = vunpack.c.l.b16 %v6218
        %v7153 = vunpack.c.h.b16 %v6218
        %v7154 = vunpack.c.l.b16 %v6219
        %v7155 = vunpack.c.h.b16 %v6219
        %v7156 = vunpack.c.l.b16 %v6220
        %v7157 = vunpack.c.h.b16 %v6220
        %v7158 = vunpack.c.l.b16 %v6221
        %v7159 = vunpack.c.h.b16 %v6221
        %v7160 = vunpack.c.l.b16 %v6222
        %v7161 = vunpack.c.h.b16 %v6222
        %v7162 = vunpack.c.l.b16 %v6223
        %v7163 = vunpack.c.h.b16 %v6223
        %v7164 = vunpack.c.l.b16 %v6224
        %v7165 = vunpack.c.h.b16 %v6224
        %v7166 = vunpack.c.l.b16 %v6225
        %v7167 = vunpack.c.h.b16 %v6225
        %v7168 = vunpack.c.l.b16 %v6226
        %v7169 = vunpack.c.h.b16 %v6226
        %v7170 = vunpack.c.l.b16 %v6227
        %v7171 = vunpack.c.h.b16 %v6227
        %v7172 = vunpack.c.l.b16 %v6228
        %v7173 = vunpack.c.h.b16 %v6228
        %v7174 = vunpack.c.l.b16 %v6229
        %v7175 = vunpack.c.h.b16 %v6229
        %v7176 = vunpack.c.l.b16 %v6230
        %v7177 = vunpack.c.h.b16 %v6230
        %v7178 = vunpack.c.l.b16 %v6231
        %v7179 = vunpack.c.h.b16 %v6231
        %v7180 = vunpack.c.l.b16 %v6232
        %v7181 = vunpack.c.h.b16 %v6232
        %v7182 = vunpack.c.l.b16 %v6233
        %v7183 = vunpack.c.h.b16 %v6233
        %v7184 = vunpack.c.l.b16 %v6234
        %v7185 = vunpack.c.h.b16 %v6234
        %v7186 = vunpack.c.l.b16 %v6235
        %v7187 = vunpack.c.h.b16 %v6235
        %v7188 = vunpack.c.l.b16 %v6236
        %v7189 = vunpack.c.h.b16 %v6236
        %v7190 = vunpack.c.l.b16 %v6237
        %v7191 = vunpack.c.h.b16 %v6237
        %v7192 = vunpack.c.l.b16 %v6238
        %v7193 = vunpack.c.h.b16 %v6238
        %v7194 = vunpack.c.l.b16 %v6239
        %v7195 = vunpack.c.h.b16 %v6239
        %v7196 = vunpack.c.l.b16 %v6240
        %v7197 = vunpack.c.h.b16 %v6240
        %v7198 = vunpack.c.l.b16 %v6241
        %v7199 = vunpack.c.h.b16 %v6241
        %v7200 = vunpack.c.l.b16 %v6242
        %v7201 = vunpack.c.h.b16 %v6242
        %v7202 = vunpack.c.l.b16 %v6243
        %v7203 = vunpack.c.h.b16 %v6243
        %v7204 = vunpack.c.l.b16 %v6244
        %v7205 = vunpack.c.h.b16 %v6244
        %v7206 = vunpack.c.l.b16 %v6245
        %v7207 = vunpack.c.h.b16 %v6245
        %v7208 = vunpack.c.l.b16 %v6246
        %v7209 = vunpack.c.h.b16 %v6246
        %v7210 = vunpack.c.l.b16 %v6247
        %v7211 = vunpack.c.h.b16 %v6247
        %v7212 = vunpack.c.l.b16 %v6248
        %v7213 = vunpack.c.h.b16 %v6248
        %v7214 = vunpack.c.l.b16 %v6249
        %v7215 = vunpack.c.h.b16 %v6249
        %v7216 = vunpack.c.l.b16 %v6250
        %v7217 = vunpack.c.h.b16 %v6250
        %v7218 = vunpack.c.l.b16 %v6251
        %v7219 = vunpack.c.h.b16 %v6251
        %v7220 = vunpack.c.l.b16 %v6252
        %v7221 = vunpack.c.h.b16 %v6252
        %v7222 = vunpack.c.l.b16 %v6253
        %v7223 = vunpack.c.h.b16 %v6253
        %v7224 = vunpack.c.l.b16 %v6254
        %v7225 = vunpack.c.h.b16 %v6254
        %v7226 = vunpack.c.l.b16 %v6255
        %v7227 = vunpack.c.h.b16 %v6255
        %v7228 = vunpack.c.l.b16 %v6256
        %v7229 = vunpack.c.h.b16 %v6256
        %v7230 = vunpack.c.l.b16 %v6257
        %v7231 = vunpack.c.h.b16 %v6257
        %v7232 = vunpack.c.l.b16 %v6258
        %v7233 = vunpack.c.h.b16 %v6258
        %v7234 = vunpack.c.l.b16 %v6259
        %v7235 = vunpack.c.h.b16 %v6259
        %v7236 = vunpack.c.l.b16 %v6260
        %v7237 = vunpack.c.h.b16 %v6260
        %v7238 = vunpack.c.l.b16 %v6261
        %v7239 = vunpack.c.h.b16 %v6261
        %v7240 = vunpack.c.l.b16 %v6262
        %v7241 = vunpack.c.h.b16 %v6262
        %v7242 = vunpack.c.l.b16 %v6263
        %v7243 = vunpack.c.h.b16 %v6263
        %v7244 = vunpack.c.l.b16 %v6264
        %v7245 = vunpack.c.h.b16 %v6264
        %v7246 = vunpack.c.l.b16 %v6265
        %v7247 = vunpack.c.h.b16 %v6265
        %v7248 = vunpack.c.l.b16 %v6266
        %v7249 = vunpack.c.h.b16 %v6266
        %v7250 = vunpack.c.l.b16 %v6267
        %v7251 = vunpack.c.h.b16 %v6267
        %v7252 = vunpack.c.l.b16 %v6268
        %v7253 = vunpack.c.h.b16 %v6268
        %v7254 = vunpack.c.l.b16 %v6269
        %v7255 = vunpack.c.h.b16 %v6269
        %v7256 = vunpack.c.l.b16 %v6270
        %v7257 = vunpack.c.h.b16 %v6270
        %v7258 = vunpack.c.l.b16 %v6271
        %v7259 = vunpack.c.h.b16 %v6271
        %v7260 = vunpack.c.l.b16 %v6272
        %v7261 = vunpack.c.h.b16 %v6272
        %v7262 = vunpack.c.l.b16 %v6273
        %v7263 = vunpack.c.h.b16 %v6273
        %v7264 = vunpack.c.l.b16 %v6274
        %v7265 = vunpack.c.h.b16 %v6274
        %v7266 = vunpack.c.l.b16 %v6275
        %v7267 = vunpack.c.h.b16 %v6275
        %v7268 = vunpack.c.l.b16 %v6276
        %v7269 = vunpack.c.h.b16 %v6276
        %v7270 = vunpack.c.l.b16 %v6277
        %v7271 = vunpack.c.h.b16 %v6277
        %v7272 = vunpack.c.l.b16 %v6278
        %v7273 = vunpack.c.h.b16 %v6278
        %v7274 = vunpack.c.l.b16 %v6279
        %v7275 = vunpack.c.h.b16 %v6279
        %v7276 = vunpack.c.l.b16 %v6280
        %v7277 = vunpack.c.h.b16 %v6280
        %v7278 = vunpack.c.l.b16 %v6281
        %v7279 = vunpack.c.h.b16 %v6281
        %v7280 = vunpack.c.l.b16 %v6282
        %v7281 = vunpack.c.h.b16 %v6282
        %v7282 = vunpack.c.l.b16 %v6283
        %v7283 = vunpack.c.h.b16 %v6283
        %v7284 = vunpack.c.l.b16 %v6284
        %v7285 = vunpack.c.h.b16 %v6284
        %v7286 = vunpack.c.l.b16 %v6285
        %v7287 = vunpack.c.h.b16 %v6285
        %v7288 = vunpack.c.l.b16 %v6286
        %v7289 = vunpack.c.h.b16 %v6286
        %v7290 = vunpack.c.l.b16 %v6287
        %v7291 = vunpack.c.h.b16 %v6287
        %v7292 = vunpack.c.l.b16 %v6288
        %v7293 = vunpack.c.h.b16 %v6288
        %v7294 = vunpack.c.l.b16 %v6289
        %v7295 = vunpack.c.h.b16 %v6289
        %v7296 = vunpack.c.l.b16 %v6290
        %v7297 = vunpack.c.h.b16 %v6290
        %v7298 = vunpack.c.l.b16 %v6291
        %v7299 = vunpack.c.h.b16 %v6291
        %v7300 = vunpack.c.l.b16 %v6292
        %v7301 = vunpack.c.h.b16 %v6292
        %v7302 = vunpack.c.l.b16 %v6293
        %v7303 = vunpack.c.h.b16 %v6293
        %v7304 = vunpack.c.l.b16 %v6294
        %v7305 = vunpack.c.h.b16 %v6294
        %v7306 = vunpack.c.l.b16 %v6295
        %v7307 = vunpack.c.h.b16 %v6295
        %v7308 = vunpack.c.l.b16 %v6296
        %v7309 = vunpack.c.h.b16 %v6296
        %v7310 = vunpack.c.l.b16 %v6297
        %v7311 = vunpack.c.h.b16 %v6297
        %v7312 = vunpack.c.l.b16 %v6298
        %v7313 = vunpack.c.h.b16 %v6298
        %v7314 = vunpack.c.l.b16 %v6299
        %v7315 = vunpack.c.h.b16 %v6299
        %v7316 = vunpack.c.l.b16 %v6300
        %v7317 = vunpack.c.h.b16 %v6300
        %v7318 = vunpack.c.l.b16 %v6301
        %v7319 = vunpack.c.h.b16 %v6301
        %v7320 = vunpack.c.l.b16 %v6302
        %v7321 = vunpack.c.h.b16 %v6302
        %v7322 = vunpack.c.l.b16 %v6303
        %v7323 = vunpack.c.h.b16 %v6303
        %v7324 = vunpack.c.l.b16 %v6304
        %v7325 = vunpack.c.h.b16 %v6304
        %v7326 = vunpack.c.l.b16 %v6305
        %v7327 = vunpack.c.h.b16 %v6305
        %v7328 = vunpack.c.l.b16 %v6306
        %v7329 = vunpack.c.h.b16 %v6306
        %v7330 = vunpack.c.l.b16 %v6307
        %v7331 = vunpack.c.h.b16 %v6307
        %v7332 = vunpack.c.l.b16 %v6308
        %v7333 = vunpack.c.h.b16 %v6308
        %v7334 = vunpack.c.l.b16 %v6309
        %v7335 = vunpack.c.h.b16 %v6309
        %v7336 = vunpack.c.l.b16 %v6310
        %v7337 = vunpack.c.h.b16 %v6310
        %v7338 = vunpack.c.l.b16 %v6311
        %v7339 = vunpack.c.h.b16 %v6311
        %v7340 = vunpack.c.l.b16 %v6312
        %v7341 = vunpack.c.h.b16 %v6312
        %v7342 = vunpack.c.l.b16 %v6313
        %v7343 = vunpack.c.h.b16 %v6313
        %v7344 = vunpack.c.l.b16 %v6314
        %v7345 = vunpack.c.h.b16 %v6314
        %v7346 = vunpack.c.l.b16 %v6315
        %v7347 = vunpack.c.h.b16 %v6315
        %v7348 = vunpack.c.l.b16 %v6316
        %v7349 = vunpack.c.h.b16 %v6316
        %v7350 = vunpack.c.l.b16 %v6317
        %v7351 = vunpack.c.h.b16 %v6317
        %v7352 = vunpack.c.l.b16 %v6318
        %v7353 = vunpack.c.h.b16 %v6318
        %v7354 = vunpack.c.l.b16 %v6319
        %v7355 = vunpack.c.h.b16 %v6319
        %v7356 = vunpack.c.l.b16 %v6320
        %v7357 = vunpack.c.h.b16 %v6320
        %v7358 = vunpack.c.l.b16 %v6321
        %v7359 = vunpack.c.h.b16 %v6321
        %v7360 = vunpack.c.l.b16 %v6322
        %v7361 = vunpack.c.h.b16 %v6322
        %v7362 = vunpack.c.l.b16 %v6323
        %v7363 = vunpack.c.h.b16 %v6323
        %v7364 = vunpack.c.l.b16 %v6324
        %v7365 = vunpack.c.h.b16 %v6324
        %v7366 = vunpack.c.l.b16 %v6325
        %v7367 = vunpack.c.h.b16 %v6325
        %v7368 = vunpack.c.l.b16 %v6326
        %v7369 = vunpack.c.h.b16 %v6326
        %v7370 = vunpack.c.l.b16 %v6327
        %v7371 = vunpack.c.h.b16 %v6327
        %v7372 = vunpack.c.l.b16 %v6328
        %v7373 = vunpack.c.h.b16 %v6328
        %v7374 = vunpack.c.l.b16 %v6329
        %v7375 = vunpack.c.h.b16 %v6329
        %v7376 = vunpack.c.l.b16 %v6330
        %v7377 = vunpack.c.h.b16 %v6330
        %v7378 = vunpack.c.l.b16 %v6331
        %v7379 = vunpack.c.h.b16 %v6331
        %v7380 = vunpack.c.l.b16 %v6332
        %v7381 = vunpack.c.h.b16 %v6332
        %v7382 = vunpack.c.l.b16 %v6333
        %v7383 = vunpack.c.h.b16 %v6333
        %v7384 = vunpack.c.l.b16 %v6334
        %v7385 = vunpack.c.h.b16 %v6334
        %v7386 = vunpack.c.l.b16 %v6335
        %v7387 = vunpack.c.h.b16 %v6335
        %v7388 = vunpack.c.l.b16 %v6336
        %v7389 = vunpack.c.h.b16 %v6336
        %v7390 = vunpack.c.l.b16 %v6337
        %v7391 = vunpack.c.h.b16 %v6337
        %v7392 = vunpack.c.l.b16 %v6338
        %v7393 = vunpack.c.h.b16 %v6338
        %v7394 = vunpack.c.l.b16 %v6339
        %v7395 = vunpack.c.h.b16 %v6339
        %v7396 = vunpack.c.l.b16 %v6340
        %v7397 = vunpack.c.h.b16 %v6340
        %v7398 = vunpack.c.l.b16 %v6341
        %v7399 = vunpack.c.h.b16 %v6341
        %v7400 = vunpack.c.l.b16 %v6342
        %v7401 = vunpack.c.h.b16 %v6342
        %v7402 = vunpack.c.l.b16 %v6343
        %v7403 = vunpack.c.h.b16 %v6343
        %v7404 = vunpack.c.l.b16 %v6344
        %v7405 = vunpack.c.h.b16 %v6344
        %v7406 = vunpack.c.l.b16 %v6345
        %v7407 = vunpack.c.h.b16 %v6345
        %v7408 = vunpack.c.l.b16 %v6346
        %v7409 = vunpack.c.h.b16 %v6346
        %v7410 = vunpack.c.l.b16 %v6347
        %v7411 = vunpack.c.h.b16 %v6347
        %v7412 = vunpack.c.l.b16 %v6348
        %v7413 = vunpack.c.h.b16 %v6348
        %v7414 = vunpack.c.l.b16 %v6349
        %v7415 = vunpack.c.h.b16 %v6349
        %v7416 = vunpack.c.l.b16 %v6350
        %v7417 = vunpack.c.h.b16 %v6350
        %v7418 = vunpack.c.l.b16 %v6351
        %v7419 = vunpack.c.h.b16 %v6351
        %v7420 = vunpack.c.l.b16 %v6352
        %v7421 = vunpack.c.h.b16 %v6352
        %v7422 = vunpack.c.l.b16 %v6353
        %v7423 = vunpack.c.h.b16 %v6353
        %v7424 = vunpack.c.l.b16 %v6354
        %v7425 = vunpack.c.h.b16 %v6354
        %v7426 = vunpack.c.l.b16 %v6355
        %v7427 = vunpack.c.h.b16 %v6355
        %v7428 = vunpack.c.l.b16 %v6356
        %v7429 = vunpack.c.h.b16 %v6356
        %v7430 = vunpack.c.l.b16 %v6357
        %v7431 = vunpack.c.h.b16 %v6357
        %v7432 = vunpack.c.l.b16 %v6358
        %v7433 = vunpack.c.h.b16 %v6358
        %v7434 = vunpack.c.l.b16 %v6359
        %v7435 = vunpack.c.h.b16 %v6359
        %v7436 = vunpack.c.l.b16 %v6360
        %v7437 = vunpack.c.h.b16 %v6360
        %v7438 = vunpack.c.l.b16 %v6361
        %v7439 = vunpack.c.h.b16 %v6361
        %v7440 = vunpack.c.l.b16 %v6362
        %v7441 = vunpack.c.h.b16 %v6362
        %v7442 = vunpack.c.l.b16 %v6363
        %v7443 = vunpack.c.h.b16 %v6363
        %v7444 = vunpack.c.l.b16 %v6364
        %v7445 = vunpack.c.h.b16 %v6364
        %v7446 = vunpack.c.l.b16 %v6365
        %v7447 = vunpack.c.h.b16 %v6365
        %v7448 = vunpack.c.l.b16 %v6366
        %v7449 = vunpack.c.h.b16 %v6366
        %v7450 = vunpack.c.l.b16 %v6367
        %v7451 = vunpack.c.h.b16 %v6367
        %v7452 = vunpack.c.l.b16 %v6368
        %v7453 = vunpack.c.h.b16 %v6368
        %v7454 = vunpack.c.l.b16 %v6369
        %v7455 = vunpack.c.h.b16 %v6369
        %v7456 = vunpack.c.l.b16 %v6370
        %v7457 = vunpack.c.h.b16 %v6370
        %v7458 = vunpack.c.l.b16 %v6371
        %v7459 = vunpack.c.h.b16 %v6371
        %v7460 = vunpack.c.l.b16 %v6372
        %v7461 = vunpack.c.h.b16 %v6372
        %v7462 = vunpack.c.l.b16 %v6373
        %v7463 = vunpack.c.h.b16 %v6373
        %v7464 = vunpack.c.l.b16 %v6374
        %v7465 = vunpack.c.h.b16 %v6374
        %v7466 = vunpack.c.l.b16 %v6375
        %v7467 = vunpack.c.h.b16 %v6375
        %v7468 = vunpack.c.l.b16 %v6376
        %v7469 = vunpack.c.h.b16 %v6376
        %v7470 = vunpack.c.l.b16 %v6377
        %v7471 = vunpack.c.h.b16 %v6377
        %v7472 = vunpack.c.l.b16 %v6378
        %v7473 = vunpack.c.h.b16 %v6378
        %v7474 = vunpack.c.l.b16 %v6379
        %v7475 = vunpack.c.h.b16 %v6379
        %v7476 = vunpack.c.l.b16 %v6380
        %v7477 = vunpack.c.h.b16 %v6380
        %v7478 = vunpack.c.l.b16 %v6381
        %v7479 = vunpack.c.h.b16 %v6381
        %v7480 = vunpack.c.l.b16 %v6382
        %v7481 = vunpack.c.h.b16 %v6382
        %v7482 = vunpack.c.l.b16 %v6383
        %v7483 = vunpack.c.h.b16 %v6383
        %v7484 = vunpack.c.l.b16 %v6384
        %v7485 = vunpack.c.h.b16 %v6384
        %v7486 = vunpack.c.l.b16 %v6385
        %v7487 = vunpack.c.h.b16 %v6385
        %v7488 = vunpack.c.l.b16 %v6386
        %v7489 = vunpack.c.h.b16 %v6386
        %v7490 = vunpack.c.l.b16 %v6387
        %v7491 = vunpack.c.h.b16 %v6387
        %v7492 = vunpack.c.l.b16 %v6388
        %v7493 = vunpack.c.h.b16 %v6388
        %v7494 = vunpack.c.l.b16 %v6389
        %v7495 = vunpack.c.h.b16 %v6389
        %v7496 = vunpack.c.l.b16 %v6390
        %v7497 = vunpack.c.h.b16 %v6390
        %v7498 = vunpack.c.l.b16 %v6391
        %v7499 = vunpack.c.h.b16 %v6391
        %v7500 = vunpack.c.l.b16 %v6392
        %v7501 = vunpack.c.h.b16 %v6392
        %v7502 = vunpack.c.l.b16 %v6393
        %v7503 = vunpack.c.h.b16 %v6393
        %v7504 = vunpack.c.l.b16 %v6394
        %v7505 = vunpack.c.h.b16 %v6394
        %v7506 = vunpack.c.l.b16 %v6395
        %v7507 = vunpack.c.h.b16 %v6395
        %v7508 = vunpack.c.l.b16 %v6396
        %v7509 = vunpack.c.h.b16 %v6396
        %v7510 = vunpack.c.l.b16 %v6397
        %v7511 = vunpack.c.h.b16 %v6397
        %v7512 = vunpack.c.l.b16 %v6398
        %v7513 = vunpack.c.h.b16 %v6398
        %v7514 = vunpack.c.l.b16 %v6399
        %v7515 = vunpack.c.h.b16 %v6399
        %v7516 = vunpack.c.l.b16 %v6400
        %v7517 = vunpack.c.h.b16 %v6400
        %v7518 = vunpack.c.l.b16 %v6401
        %v7519 = vunpack.c.h.b16 %v6401
        %v7520 = vunpack.c.l.b16 %v6402
        %v7521 = vunpack.c.h.b16 %v6402
        %v7522 = vunpack.c.l.b16 %v6403
        %v7523 = vunpack.c.h.b16 %v6403
        %v7524 = vunpack.c.l.b16 %v6404
        %v7525 = vunpack.c.h.b16 %v6404
        %v7526 = vunpack.c.l.b16 %v6405
        %v7527 = vunpack.c.h.b16 %v6405
        %v7528 = vunpack.c.l.b16 %v6406
        %v7529 = vunpack.c.h.b16 %v6406
        %v7530 = vunpack.c.l.b16 %v6407
        %v7531 = vunpack.c.h.b16 %v6407
        %v7532 = vunpack.c.l.b16 %v6408
        %v7533 = vunpack.c.h.b16 %v6408
        %v7534 = vunpack.c.l.b16 %v6409
        %v7535 = vunpack.c.h.b16 %v6409
        %v7536 = vunpack.c.l.b16 %v6410
        %v7537 = vunpack.c.h.b16 %v6410
        %v7538 = vunpack.c.l.b16 %v6411
        %v7539 = vunpack.c.h.b16 %v6411
        %v7540 = vunpack.c.l.b16 %v6412
        %v7541 = vunpack.c.h.b16 %v6412
        %v7542 = vunpack.c.l.b16 %v6413
        %v7543 = vunpack.c.h.b16 %v6413
        %v7544 = vunpack.c.l.b16 %v6414
        %v7545 = vunpack.c.h.b16 %v6414
        %v7546 = vunpack.c.l.b16 %v6415
        %v7547 = vunpack.c.h.b16 %v6415
        %v7548 = vunpack.c.l.b16 %v6416
        %v7549 = vunpack.c.h.b16 %v6416
        %v7550 = vunpack.c.l.b16 %v6417
        %v7551 = vunpack.c.h.b16 %v6417
        %v7552 = vunpack.c.l.b16 %v6418
        %v7553 = vunpack.c.h.b16 %v6418
        %v7554 = vunpack.c.l.b16 %v6419
        %v7555 = vunpack.c.h.b16 %v6419
        %v7556 = vunpack.c.l.b16 %v6420
        %v7557 = vunpack.c.h.b16 %v6420
        %v7558 = vunpack.c.l.b16 %v6421
        %v7559 = vunpack.c.h.b16 %v6421
        %v7560 = vunpack.c.l.b16 %v6422
        %v7561 = vunpack.c.h.b16 %v6422
        %v7562 = vunpack.c.l.b16 %v6423
        %v7563 = vunpack.c.h.b16 %v6423
        %v7564 = vunpack.c.l.b16 %v6424
        %v7565 = vunpack.c.h.b16 %v6424
        %v7566 = vunpack.c.l.b16 %v6425
        %v7567 = vunpack.c.h.b16 %v6425
        %v7568 = vunpack.c.l.b16 %v6426
        %v7569 = vunpack.c.h.b16 %v6426
        %v7570 = vunpack.c.l.b16 %v6427
        %v7571 = vunpack.c.h.b16 %v6427
        %v7572 = vunpack.c.l.b16 %v6428
        %v7573 = vunpack.c.h.b16 %v6428
        %v7574 = vunpack.c.l.b16 %v6429
        %v7575 = vunpack.c.h.b16 %v6429
        %v7576 = vunpack.c.l.b16 %v6430
        %v7577 = vunpack.c.h.b16 %v6430
        %v7578 = vunpack.c.l.b16 %v6431
        %v7579 = vunpack.c.h.b16 %v6431
        %v7580 = vunpack.c.l.b16 %v6432
        %v7581 = vunpack.c.h.b16 %v6432
        %v7582 = vunpack.c.l.b16 %v6433
        %v7583 = vunpack.c.h.b16 %v6433
        %v7584 = vunpack.c.l.b16 %v6434
        %v7585 = vunpack.c.h.b16 %v6434
        %v7586 = vunpack.c.l.b16 %v6435
        %v7587 = vunpack.c.h.b16 %v6435
        %v7588 = vunpack.c.l.b16 %v6436
        %v7589 = vunpack.c.h.b16 %v6436
        %v7590 = vunpack.c.l.b16 %v6437
        %v7591 = vunpack.c.h.b16 %v6437
        %v7592 = vunpack.c.l.b16 %v6438
        %v7593 = vunpack.c.h.b16 %v6438
        %v7594 = vunpack.c.l.b16 %v6439
        %v7595 = vunpack.c.h.b16 %v6439
        %v7596 = vunpack.c.l.b16 %v6440
        %v7597 = vunpack.c.h.b16 %v6440
        %v7598 = vunpack.c.l.b16 %v6441
        %v7599 = vunpack.c.h.b16 %v6441
        %v7600 = vunpack.c.l.b16 %v6442
        %v7601 = vunpack.c.h.b16 %v6442
        %v7602 = vunpack.c.l.b16 %v6443
        %v7603 = vunpack.c.h.b16 %v6443
        %v7604 = vunpack.c.l.b16 %v6444
        %v7605 = vunpack.c.h.b16 %v6444
        %v7606 = vunpack.c.l.b16 %v6445
        %v7607 = vunpack.c.h.b16 %v6445
        %v7608 = vunpack.c.l.b16 %v6446
        %v7609 = vunpack.c.h.b16 %v6446
        %v7610 = vunpack.c.l.b16 %v6447
        %v7611 = vunpack.c.h.b16 %v6447
        %v7612 = vunpack.c.l.b16 %v6448
        %v7613 = vunpack.c.h.b16 %v6448
        %v7614 = vunpack.c.l.b16 %v6449
        %v7615 = vunpack.c.h.b16 %v6449
        %v7616 = vunpack.c.l.b16 %v6450
        %v7617 = vunpack.c.h.b16 %v6450
        %v7618 = vunpack.c.l.b16 %v6451
        %v7619 = vunpack.c.h.b16 %v6451
        %v7620 = vunpack.c.l.b16 %v6452
        %v7621 = vunpack.c.h.b16 %v6452
        %v7622 = vunpack.c.l.b16 %v6453
        %v7623 = vunpack.c.h.b16 %v6453
        %v7624 = vunpack.c.l.b16 %v6454
        %v7625 = vunpack.c.h.b16 %v6454
        %v7626 = vunpack.c.l.b16 %v6455
        %v7627 = vunpack.c.h.b16 %v6455
        %v7628 = vunpack.c.l.b16 %v6456
        %v7629 = vunpack.c.h.b16 %v6456
        %v7630 = vunpack.c.l.b16 %v6457
        %v7631 = vunpack.c.h.b16 %v6457
        %v7632 = vunpack.c.l.b16 %v6458
        %v7633 = vunpack.c.h.b16 %v6458
        %v7634 = vunpack.c.l.b16 %v6459
        %v7635 = vunpack.c.h.b16 %v6459
        %v7636 = vunpack.c.l.b16 %v6460
        %v7637 = vunpack.c.h.b16 %v6460
        %v7638 = vunpack.c.l.b16 %v6461
        %v7639 = vunpack.c.h.b16 %v6461
        %v7640 = vunpack.c.l.b16 %v6462
        %v7641 = vunpack.c.h.b16 %v6462
        %v7642 = vunpack.c.l.b16 %v6463
        %v7643 = vunpack.c.h.b16 %v6463
        %v7644 = vunpack.c.l.b16 %v6464
        %v7645 = vunpack.c.h.b16 %v6464
        %v7646 = vunpack.c.l.b16 %v6465
        %v7647 = vunpack.c.h.b16 %v6465
        %v7648 = vunpack.c.l.b16 %v6466
        %v7649 = vunpack.c.h.b16 %v6466
        %v7650 = vunpack.c.l.b16 %v6467
        %v7651 = vunpack.c.h.b16 %v6467
        %v7652 = vunpack.c.l.b16 %v6468
        %v7653 = vunpack.c.h.b16 %v6468
        %v7654 = vunpack.c.l.b16 %v6469
        %v7655 = vunpack.c.h.b16 %v6469
        %v7656 = vunpack.c.l.b16 %v6470
        %v7657 = vunpack.c.h.b16 %v6470
        %v7658 = vunpack.c.l.b16 %v6471
        %v7659 = vunpack.c.h.b16 %v6471
        %v7660 = vunpack.c.l.b16 %v6472
        %v7661 = vunpack.c.h.b16 %v6472
        %v7662 = vunpack.c.l.b16 %v6473
        %v7663 = vunpack.c.h.b16 %v6473
        %v7664 = vunpack.c.l.b16 %v6474
        %v7665 = vunpack.c.h.b16 %v6474
        %v7666 = vunpack.c.l.b16 %v6475
        %v7667 = vunpack.c.h.b16 %v6475
        %v7668 = vunpack.c.l.b16 %v6476
        %v7669 = vunpack.c.h.b16 %v6476
        %v7670 = vunpack.c.l.b16 %v6477
        %v7671 = vunpack.c.h.b16 %v6477
        %v7672 = vunpack.c.l.b16 %v6478
        %v7673 = vunpack.c.h.b16 %v6478
        %v7674 = vunpack.c.l.b16 %v6479
        %v7675 = vunpack.c.h.b16 %v6479
        %v7676 = vunpack.c.l.b16 %v6480
        %v7677 = vunpack.c.h.b16 %v6480
        %v7678 = vunpack.c.l.b16 %v6481
        %v7679 = vunpack.c.h.b16 %v6481
        %v7680 = vunpack.c.l.b16 %v6482
        %v7681 = vunpack.c.h.b16 %v6482
        %v7682 = vunpack.c.l.b16 %v6483
        %v7683 = vunpack.c.h.b16 %v6483
        %v7684 = vunpack.c.l.b16 %v6484
        %v7685 = vunpack.c.h.b16 %v6484
        %v7686 = vunpack.c.l.b16 %v6485
        %v7687 = vunpack.c.h.b16 %v6485
        %v7688 = vunpack.c.l.b16 %v6486
        %v7689 = vunpack.c.h.b16 %v6486
        %v7690 = vunpack.c.l.b16 %v6487
        %v7691 = vunpack.c.h.b16 %v6487
        %v7692 = vunpack.c.l.b16 %v6488
        %v7693 = vunpack.c.h.b16 %v6488
        %v7694 = vunpack.c.l.b16 %v6489
        %v7695 = vunpack.c.h.b16 %v6489
        %v7696 = vunpack.c.l.b16 %v6490
        %v7697 = vunpack.c.h.b16 %v6490
        %v7698 = vunpack.c.l.b16 %v6491
        %v7699 = vunpack.c.h.b16 %v6491
        %v7700 = vunpack.c.l.b16 %v6492
        %v7701 = vunpack.c.h.b16 %v6492
        %v7702 = vunpack.c.l.b16 %v6493
        %v7703 = vunpack.c.h.b16 %v6493
        %v7704 = vunpack.c.l.b16 %v6494
        %v7705 = vunpack.c.h.b16 %v6494
        %v7706 = vunpack.c.l.b16 %v6495
        %v7707 = vunpack.c.h.b16 %v6495
        %v7708 = vunpack.c.l.b16 %v6496
        %v7709 = vunpack.c.h.b16 %v6496
        %v7710 = vunpack.c.l.b16 %v6497
        %v7711 = vunpack.c.h.b16 %v6497
        %v7712 = vunpack.c.l.b16 %v6498
        %v7713 = vunpack.c.h.b16 %v6498
        %v7714 = vunpack.c.l.b16 %v6499
        %v7715 = vunpack.c.h.b16 %v6499
        %v7716 = vunpack.c.l.b16 %v6500
        %v7717 = vunpack.c.h.b16 %v6500
        %v7718 = vunpack.c.l.b16 %v6501
        %v7719 = vunpack.c.h.b16 %v6501
        %v7720 = vunpack.c.l.b16 %v6502
        %v7721 = vunpack.c.h.b16 %v6502
        %v7722 = vunpack.c.l.b16 %v6503
        %v7723 = vunpack.c.h.b16 %v6503
        %v7724 = vunpack.c.l.b16 %v6504
        %v7725 = vunpack.c.h.b16 %v6504
        %v7726 = vunpack.c.l.b16 %v6505
        %v7727 = vunpack.c.h.b16 %v6505
        %v7728 = vunpack.c.l.b16 %v6506
        %v7729 = vunpack.c.h.b16 %v6506
        %v7730 = vunpack.c.l.b16 %v6507
        %v7731 = vunpack.c.h.b16 %v6507
        %v7732 = vunpack.c.l.b16 %v6508
        %v7733 = vunpack.c.h.b16 %v6508
        %v7734 = vunpack.c.l.b16 %v6509
        %v7735 = vunpack.c.h.b16 %v6509
        %v7736 = vunpack.c.l.b16 %v6510
        %v7737 = vunpack.c.h.b16 %v6510
        %v7738 = vunpack.c.l.b16 %v6511
        %v7739 = vunpack.c.h.b16 %v6511
        %v7740 = vunpack.c.l.b16 %v6512
        %v7741 = vunpack.c.h.b16 %v6512
        %v7742 = vunpack.c.l.b16 %v6513
        %v7743 = vunpack.c.h.b16 %v6513
        %v7744 = vunpack.c.l.b16 %v6514
        %v7745 = vunpack.c.h.b16 %v6514
        %v7746 = vunpack.c.l.b16 %v6515
        %v7747 = vunpack.c.h.b16 %v6515
        %v7748 = vunpack.c.l.b16 %v6516
        %v7749 = vunpack.c.h.b16 %v6516
        %v7750 = vunpack.c.l.b16 %v6517
        %v7751 = vunpack.c.h.b16 %v6517
        %v7752 = vunpack.c.l.b16 %v6518
        %v7753 = vunpack.c.h.b16 %v6518
        %v7754 = vunpack.c.l.b16 %v6519
        %v7755 = vunpack.c.h.b16 %v6519
        %v7756 = vunpack.c.l.b16 %v6520
        %v7757 = vunpack.c.h.b16 %v6520
        %v7758 = vunpack.c.l.b16 %v6521
        %v7759 = vunpack.c.h.b16 %v6521
        %v7760 = vunpack.c.l.b16 %v6522
        %v7761 = vunpack.c.h.b16 %v6522
        %v7762 = vunpack.c.l.b16 %v6523
        %v7763 = vunpack.c.h.b16 %v6523
        %v7764 = vunpack.c.l.b16 %v6524
        %v7765 = vunpack.c.h.b16 %v6524
        %v7766 = vunpack.c.l.b16 %v6525
        %v7767 = vunpack.c.h.b16 %v6525
        %v7768 = vunpack.c.l.b16 %v6526
        %v7769 = vunpack.c.h.b16 %v6526
        %v7770 = vunpack.c.l.b16 %v6527
        %v7771 = vunpack.c.h.b16 %v6527
        %v7772 = vunpack.c.l.b16 %v6528
        %v7773 = vunpack.c.h.b16 %v6528
        %v7774 = vunpack.c.l.b16 %v6529
        %v7775 = vunpack.c.h.b16 %v6529
        %v7776 = vunpack.c.l.b16 %v6530
        %v7777 = vunpack.c.h.b16 %v6530
        %v7778 = vunpack.c.l.b16 %v6531
        %v7779 = vunpack.c.h.b16 %v6531
        %v7780 = vunpack.c.l.b16 %v6532
        %v7781 = vunpack.c.h.b16 %v6532
        %v7782 = vunpack.c.l.b16 %v6533
        %v7783 = vunpack.c.h.b16 %v6533
        %v7784 = vunpack.c.l.b16 %v6534
        %v7785 = vunpack.c.h.b16 %v6534
        %v7786 = vunpack.c.l.b16 %v6535
        %v7787 = vunpack.c.h.b16 %v6535
        %v7788 = vunpack.c.l.b16 %v6536
        %v7789 = vunpack.c.h.b16 %v6536
        %v7790 = vunpack.c.l.b16 %v6537
        %v7791 = vunpack.c.h.b16 %v6537
        %v7792 = vunpack.c.l.b16 %v6538
        %v7793 = vunpack.c.h.b16 %v6538
        %v7794 = vunpack.c.l.b16 %v6539
        %v7795 = vunpack.c.h.b16 %v6539
        %v7796 = vunpack.c.l.b16 %v6540
        %v7797 = vunpack.c.h.b16 %v6540
        %v7798 = vunpack.c.l.b16 %v6541
        %v7799 = vunpack.c.h.b16 %v6541
        %v7800 = vunpack.c.l.b16 %v6542
        %v7801 = vunpack.c.h.b16 %v6542
        %v7802 = vunpack.c.l.b16 %v6543
        %v7803 = vunpack.c.h.b16 %v6543
        %v7804 = vunpack.c.l.b16 %v6544
        %v7805 = vunpack.c.h.b16 %v6544
        %v7806 = vunpack.c.l.b16 %v6545
        %v7807 = vunpack.c.h.b16 %v6545
        %v7808 = vunpack.c.l.b16 %v6546
        %v7809 = vunpack.c.h.b16 %v6546
        %v7810 = vunpack.c.l.b16 %v6547
        %v7811 = vunpack.c.h.b16 %v6547
        %v7812 = vunpack.c.l.b16 %v6548
        %v7813 = vunpack.c.h.b16 %v6548
        %v7814 = vunpack.c.l.b16 %v6549
        %v7815 = vunpack.c.h.b16 %v6549
        %v7816 = vunpack.c.l.b16 %v6550
        %v7817 = vunpack.c.h.b16 %v6550
        %v7818 = vunpack.c.l.b16 %v6551
        %v7819 = vunpack.c.h.b16 %v6551
        %v7820 = vunpack.c.l.b16 %v6552
        %v7821 = vunpack.c.h.b16 %v6552
        %v7822 = vunpack.c.l.b16 %v6553
        %v7823 = vunpack.c.h.b16 %v6553
        %v7824 = vunpack.c.l.b16 %v6554
        %v7825 = vunpack.c.h.b16 %v6554
        %v7826 = vunpack.c.l.b16 %v6555
        %v7827 = vunpack.c.h.b16 %v6555
        %v7828 = vunpack.c.l.b16 %v6556
        %v7829 = vunpack.c.h.b16 %v6556
        %v7830 = vunpack.c.l.b16 %v6557
        %v7831 = vunpack.c.h.b16 %v6557
        %v7832 = vunpack.c.l.b16 %v6558
        %v7833 = vunpack.c.h.b16 %v6558
        %v7834 = vunpack.c.l.b16 %v6559
        %v7835 = vunpack.c.h.b16 %v6559
        %v7836 = vunpack.c.l.b16 %v6560
        %v7837 = vunpack.c.h.b16 %v6560
        %v7838 = vunpack.c.l.b16 %v6561
        %v7839 = vunpack.c.h.b16 %v6561
        %v7840 = vpack.c.b16 %v7096, %v7072
        %v7841 = vpack.c.b16 %v7097, %v7073
        %v7842 = vpack.c.b16 %v7098, %v7074
        %v7843 = vpack.c.b16 %v7099, %v7075
        %v7844 = vpack.c.b16 %v7100, %v7076
        %v7845 = vpack.c.b16 %v7101, %v7077
        %v7846 = vpack.c.b16 %v7102, %v7078
        %v7847 = vpack.c.b16 %v7103, %v7079
        %v7848 = vpack.c.b16 %v7104, %v7080
        %v7849 = vpack.c.b16 %v7105, %v7081
        %v7850 = vpack.c.b16 %v7106, %v7082
        %v7851 = vpack.c.b16 %v7107, %v7083
        %v7852 = vpack.c.b16 %v7108, %v7084
        %v7853 = vpack.c.b16 %v7109, %v7085
        %v7854 = vpack.c.b16 %v7110, %v7086
        %v7855 = vpack.c.b16 %v7111, %v7087
        %v7856 = vpack.c.b16 %v7112, %v7088
        %v7857 = vpack.c.b16 %v7113, %v7089
        %v7858 = vpack.c.b16 %v7114, %v7090
        %v7859 = vpack.c.b16 %v7115, %v7091
        %v7860 = vpack.c.b16 %v7116, %v7092
        %v7861 = vpack.c.b16 %v7117, %v7093
        %v7862 = vpack.c.b16 %v7118, %v7094
        %v7863 = vpack.c.b16 %v7119, %v7095
        %v7864 = vpack.c.b16 %v7144, %v7120
        %v7865 = vpack.c.b16 %v7145, %v7121
        %v7866 = vpack.c.b16 %v7146, %v7122
        %v7867 = vpack.c.b16 %v7147, %v7123
        %v7868 = vpack.c.b16 %v7148, %v7124
        %v7869 = vpack.c.b16 %v7149, %v7125
        %v7870 = vpack.c.b16 %v7150, %v7126
        %v7871 = vpack.c.b16 %v7151, %v7127
        %v7872 = vpack.c.b16 %v7152, %v7128
        %v7873 = vpack.c.b16 %v7153, %v7129
        %v7874 = vpack.c.b16 %v7154, %v7130
        %v7875 = vpack.c.b16 %v7155, %v7131
        %v7876 = vpack.c.b16 %v7156, %v7132
        %v7877 = vpack.c.b16 %v7157, %v7133
        %v7878 = vpack.c.b16 %v7158, %v7134
        %v7879 = vpack.c.b16 %v7159, %v7135
        %v7880 = vpack.c.b16 %v7160, %v7136
        %v7881 = vpack.c.b16 %v7161, %v7137
        %v7882 = vpack.c.b16 %v7162, %v7138
        %v7883 = vpack.c.b16 %v7163, %v7139
        %v7884 = vpack.c.b16 %v7164, %v7140
        %v7885 = vpack.c.b16 %v7165, %v7141
        %v7886 = vpack.c.b16 %v7166, %v7142
        %v7887 = vpack.c.b16 %v7167, %v7143
        %v7888 = vpack.c.b16 %v7192, %v7168
        %v7889 = vpack.c.b16 %v7193, %v7169
        %v7890 = vpack.c.b16 %v7194, %v7170
        %v7891 = vpack.c.b16 %v7195, %v7171
        %v7892 = vpack.c.b16 %v7196, %v7172
        %v7893 = vpack.c.b16 %v7197, %v7173
        %v7894 = vpack.c.b16 %v7198, %v7174
        %v7895 = vpack.c.b16 %v7199, %v7175
        %v7896 = vpack.c.b16 %v7200, %v7176
        %v7897 = vpack.c.b16 %v7201, %v7177
        %v7898 = vpack.c.b16 %v7202, %v7178
        %v7899 = vpack.c.b16 %v7203, %v7179
        %v7900 = vpack.c.b16 %v7204, %v7180
        %v7901 = vpack.c.b16 %v7205, %v7181
        %v7902 = vpack.c.b16 %v7206, %v7182
        %v7903 = vpack.c.b16 %v7207, %v7183
        %v7904 = vpack.c.b16 %v7208, %v7184
        %v7905 = vpack.c.b16 %v7209, %v7185
        %v7906 = vpack.c.b16 %v7210, %v7186
        %v7907 = vpack.c.b16 %v7211, %v7187
        %v7908 = vpack.c.b16 %v7212, %v7188
        %v7909 = vpack.c.b16 %v7213, %v7189
        %v7910 = vpack.c.b16 %v7214, %v7190
        %v7911 = vpack.c.b16 %v7215, %v7191
        %v7912 = vpack.c.b16 %v7240, %v7216
        %v7913 = vpack.c.b16 %v7241, %v7217
        %v7914 = vpack.c.b16 %v7242, %v7218
        %v7915 = vpack.c.b16 %v7243, %v7219
        %v7916 = vpack.c.b16 %v7244, %v7220
        %v7917 = vpack.c.b16 %v7245, %v7221
        %v7918 = vpack.c.b16 %v7246, %v7222
        %v7919 = vpack.c.b16 %v7247, %v7223
        %v7920 = vpack.c.b16 %v7248, %v7224
        %v7921 = vpack.c.b16 %v7249, %v7225
        %v7922 = vpack.c.b16 %v7250, %v7226
        %v7923 = vpack.c.b16 %v7251, %v7227
        %v7924 = vpack.c.b16 %v7252, %v7228
        %v7925 = vpack.c.b16 %v7253, %v7229
        %v7926 = vpack.c.b16 %v7254, %v7230
        %v7927 = vpack.c.b16 %v7255, %v7231
        %v7928 = vpack.c.b16 %v7256, %v7232
        %v7929 = vpack.c.b16 %v7257, %v7233
        %v7930 = vpack.c.b16 %v7258, %v7234
        %v7931 = vpack.c.b16 %v7259, %v7235
        %v7932 = vpack.c.b16 %v7260, %v7236
        %v7933 = vpack.c.b16 %v7261, %v7237
        %v7934 = vpack.c.b16 %v7262, %v7238
        %v7935 = vpack.c.b16 %v7263, %v7239
        %v7936 = vpack.c.b16 %v7288, %v7264
        %v7937 = vpack.c.b16 %v7289, %v7265
        %v7938 = vpack.c.b16 %v7290, %v7266
        %v7939 = vpack.c.b16 %v7291, %v7267
        %v7940 = vpack.c.b16 %v7292, %v7268
        %v7941 = vpack.c.b16 %v7293, %v7269
        %v7942 = vpack.c.b16 %v7294, %v7270
        %v7943 = vpack.c.b16 %v7295, %v7271
        %v7944 = vpack.c.b16 %v7296, %v7272
        %v7945 = vpack.c.b16 %v7297, %v7273
        %v7946 = vpack.c.b16 %v7298, %v7274
        %v7947 = vpack.c.b16 %v7299, %v7275
        %v7948 = vpack.c.b16 %v7300, %v7276
        %v7949 = vpack.c.b16 %v7301, %v7277
        %v7950 = vpack.c.b16 %v7302, %v7278
        %v7951 = vpack.c.b16 %v7303, %v7279
        %v7952 = vpack.c.b16 %v7304, %v7280
        %v7953 = vpack.c.b16 %v7305, %v7281
        %v7954 = vpack.c.b16 %v7306, %v7282
        %v7955 = vpack.c.b16 %v7307, %v7283
        %v7956 = vpack.c.b16 %v7308, %v7284
        %v7957 = vpack.c.b16 %v7309, %v7285
        %v7958 = vpack.c.b16 %v7310, %v7286
        %v7959 = vpack.c.b16 %v7311, %v7287
        %v7960 = vpack.c.b16 %v7336, %v7312
        %v7961 = vpack.c.b16 %v7337, %v7313
        %v7962 = vpack.c.b16 %v7338, %v7314
        %v7963 = vpack.c.b16 %v7339, %v7315
        %v7964 = vpack.c.b16 %v7340, %v7316
        %v7965 = vpack.c.b16 %v7341, %v7317
        %v7966 = vpack.c.b16 %v7342, %v7318
        %v7967 = vpack.c.b16 %v7343, %v7319
        %v7968 = vpack.c.b16 %v7344, %v7320
        %v7969 = vpack.c.b16 %v7345, %v7321
        %v7970 = vpack.c.b16 %v7346, %v7322
        %v7971 = vpack.c.b16 %v7347, %v7323
        %v7972 = vpack.c.b16 %v7348, %v7324
        %v7973 = vpack.c.b16 %v7349, %v7325
        %v7974 = vpack.c.b16 %v7350, %v7326
        %v7975 = vpack.c.b16 %v7351, %v7327
        %v7976 = vpack.c.b16 %v7352, %v7328
        %v7977 = vpack.c.b16 %v7353, %v7329
        %v7978 = vpack.c.b16 %v7354, %v7330
        %v7979 = vpack.c.b16 %v7355, %v7331
        %v7980 = vpack.c.b16 %v7356, %v7332
        %v7981 = vpack.c.b16 %v7357, %v7333
        %v7982 = vpack.c.b16 %v7358, %v7334
        %v7983 = vpack.c.b16 %v7359, %v7335
        %v7984 = vpack.c.b16 %v7384, %v7360
        %v7985 = vpack.c.b16 %v7385, %v7361
        %v7986 = vpack.c.b16 %v7386, %v7362
        %v7987 = vpack.c.b16 %v7387, %v7363
        %v7988 = vpack.c.b16 %v7388, %v7364
        %v7989 = vpack.c.b16 %v7389, %v7365
        %v7990 = vpack.c.b16 %v7390, %v7366
        %v7991 = vpack.c.b16 %v7391, %v7367
        %v7992 = vpack.c.b16 %v7392, %v7368
        %v7993 = vpack.c.b16 %v7393, %v7369
        %v7994 = vpack.c.b16 %v7394, %v7370
        %v7995 = vpack.c.b16 %v7395, %v7371
        %v7996 = vpack.c.b16 %v7396, %v7372
        %v7997 = vpack.c.b16 %v7397, %v7373
        %v7998 = vpack.c.b16 %v7398, %v7374
        %v7999 = vpack.c.b16 %v7399, %v7375
        %v8000 = vpack.c.b16 %v7400, %v7376
        %v8001 = vpack.c.b16 %v7401, %v7377
        %v8002 = vpack.c.b16 %v7402, %v7378
        %v8003 = vpack.c.b16 %v7403, %v7379
        %v8004 = vpack.c.b16 %v7404, %v7380
        %v8005 = vpack.c.b16 %v7405, %v7381
        %v8006 = vpack.c.b16 %v7406, %v7382
        %v8007 = vpack.c.b16 %v7407, %v7383
        %v8008 = vpack.c.b16 %v7432, %v7408
        %v8009 = vpack.c.b16 %v7433, %v7409
        %v8010 = vpack.c.b16 %v7434, %v7410
        %v8011 = vpack.c.b16 %v7435, %v7411
        %v8012 = vpack.c.b16 %v7436, %v7412
        %v8013 = vpack.c.b16 %v7437, %v7413
        %v8014 = vpack.c.b16 %v7438, %v7414
        %v8015 = vpack.c.b16 %v7439, %v7415
        %v8016 = vpack.c.b16 %v7440, %v7416
        %v8017 = vpack.c.b16 %v7441, %v7417
        %v8018 = vpack.c.b16 %v7442, %v7418
        %v8019 = vpack.c.b16 %v7443, %v7419
        %v8020 = vpack.c.b16 %v7444, %v7420
        %v8021 = vpack.c.b16 %v7445, %v7421
        %v8022 = vpack.c.b16 %v7446, %v7422
        %v8023 = vpack.c.b16 %v7447, %v7423
        %v8024 = vpack.c.b16 %v7448, %v7424
        %v8025 = vpack.c.b16 %v7449, %v7425
        %v8026 = vpack.c.b16 %v7450, %v7426
        %v8027 = vpack.c.b16 %v7451, %v7427
        %v8028 = vpack.c.b16 %v7452, %v7428
        %v8029 = vpack.c.b16 %v7453, %v7429
        %v8030 = vpack.c.b16 %v7454, %v7430
        %v8031 = vpack.c.b16 %v7455, %v7431
        %v8032 = vpack.c.b16 %v7480, %v7456
        %v8033 = vpack.c.b16 %v7481, %v7457
        %v8034 = vpack.c.b16 %v7482, %v7458
        %v8035 = vpack.c.b16 %v7483, %v7459
        %v8036 = vpack.c.b16 %v7484, %v7460
        %v8037 = vpack.c.b16 %v7485, %v7461
        %v8038 = vpack.c.b16 %v7486, %v7462
        %v8039 = vpack.c.b16 %v7487, %v7463
        %v8040 = vpack.c.b16 %v7488, %v7464
        %v8041 = vpack.c.b16 %v7489, %v7465
        %v8042 = vpack.c.b16 %v7490, %v7466
        %v8043 = vpack.c.b16 %v7491, %v7467
        %v8044 = vpack.c.b16 %v7492, %v7468
        %v8045 = vpack.c.b16 %v7493, %v7469
        %v8046 = vpack.c.b16 %v7494, %v7470
        %v8047 = vpack.c.b16 %v7495, %v7471
        %v8048 = vpack.c.b16 %v7496, %v7472
        %v8049 = vpack.c.b16 %v7497, %v7473
        %v8050 = vpack.c.b16 %v7498, %v7474
        %v8051 = vpack.c.b16 %v7499, %v7475
        %v8052 = vpack.c.b16 %v7500, %v7476
        %v8053 = vpack.c.b16 %v7501, %v7477
        %v8054 = vpack.c.b16 %v7502, %v7478
        %v8055 = vpack.c.b16 %v7503, %v7479
        %v8056 = vpack.c.b16 %v7528, %v7504
        %v8057 = vpack.c.b16 %v7529, %v7505
        %v8058 = vpack.c.b16 %v7530, %v7506
        %v8059 = vpack.c.b16 %v7531, %v7507
        %v8060 = vpack.c.b16 %v7532, %v7508
        %v8061 = vpack.c.b16 %v7533, %v7509
        %v8062 = vpack.c.b16 %v7534, %v7510
        %v8063 = vpack.c.b16 %v7535, %v7511
        %v8064 = vpack.c.b16 %v7536, %v7512
        %v8065 = vpack.c.b16 %v7537, %v7513
        %v8066 = vpack.c.b16 %v7538, %v7514
        %v8067 = vpack.c.b16 %v7539, %v7515
        %v8068 = vpack.c.b16 %v7540, %v7516
        %v8069 = vpack.c.b16 %v7541, %v7517
        %v8070 = vpack.c.b16 %v7542, %v7518
        %v8071 = vpack.c.b16 %v7543, %v7519
        %v8072 = vpack.c.b16 %v7544, %v7520
        %v8073 = vpack.c.b16 %v7545, %v7521
        %v8074 = vpack.c.b16 %v7546, %v7522
        %v8075 = vpack.c.b16 %v7547, %v7523
        %v8076 = vpack.c.b16 %v7548, %v7524
        %v8077 = vpack.c.b16 %v7549, %v7525
        %v8078 = vpack.c.b16 %v7550, %v7526
        %v8079 = vpack.c.b16 %v7551, %v7527
        %v8080 = vpack.c.b16 %v7576, %v7552
        %v8081 = vpack.c.b16 %v7577, %v7553
        %v8082 = vpack.c.b16 %v7578, %v7554
        %v8083 = vpack.c.b16 %v7579, %v7555
        %v8084 = vpack.c.b16 %v7580, %v7556
        %v8085 = vpack.c.b16 %v7581, %v7557
        %v8086 = vpack.c.b16 %v7582, %v7558
        %v8087 = vpack.c.b16 %v7583, %v7559
        %v8088 = vpack.c.b16 %v7584, %v7560
        %v8089 = vpack.c.b16 %v7585, %v7561
        %v8090 = vpack.c.b16 %v7586, %v7562
        %v8091 = vpack.c.b16 %v7587, %v7563
        %v8092 = vpack.c.b16 %v7588, %v7564
        %v8093 = vpack.c.b16 %v7589, %v7565
        %v8094 = vpack.c.b16 %v7590, %v7566
        %v8095 = vpack.c.b16 %v7591, %v7567
        %v8096 = vpack.c.b16 %v7592, %v7568
        %v8097 = vpack.c.b16 %v7593, %v7569
        %v8098 = vpack.c.b16 %v7594, %v7570
        %v8099 = vpack.c.b16 %v7595, %v7571
        %v8100 = vpack.c.b16 %v7596, %v7572
        %v8101 = vpack.c.b16 %v7597, %v7573
        %v8102 = vpack.c.b16 %v7598, %v7574
        %v8103 = vpack.c.b16 %v7599, %v7575
        %v8104 = vpack.c.b16 %v7624, %v7600
        %v8105 = vpack.c.b16 %v7625, %v7601
        %v8106 = vpack.c.b16 %v7626, %v7602
        %v8107 = vpack.c.b16 %v7627, %v7603
        %v8108 = vpack.c.b16 %v7628, %v7604
        %v8109 = vpack.c.b16 %v7629, %v7605
        %v8110 = vpack.c.b16 %v7630, %v7606
        %v8111 = vpack.c.b16 %v7631, %v7607
        %v8112 = vpack.c.b16 %v7632, %v7608
        %v8113 = vpack.c.b16 %v7633, %v7609
        %v8114 = vpack.c.b16 %v7634, %v7610
        %v8115 = vpack.c.b16 %v7635, %v7611
        %v8116 = vpack.c.b16 %v7636, %v7612
        %v8117 = vpack.c.b16 %v7637, %v7613
        %v8118 = vpack.c.b16 %v7638, %v7614
        %v8119 = vpack.c.b16 %v7639, %v7615
        %v8120 = vpack.c.b16 %v7640, %v7616
        %v8121 = vpack.c.b16 %v7641, %v7617
        %v8122 = vpack.c.b16 %v7642, %v7618
        %v8123 = vpack.c.b16 %v7643, %v7619
        %v8124 = vpack.c.b16 %v7644, %v7620
        %v8125 = vpack.c.b16 %v7645, %v7621
        %v8126 = vpack.c.b16 %v7646, %v7622
        %v8127 = vpack.c.b16 %v7647, %v7623
        %v8128 = vpack.c.b16 %v7672, %v7648
        %v8129 = vpack.c.b16 %v7673, %v7649
        %v8130 = vpack.c.b16 %v7674, %v7650
        %v8131 = vpack.c.b16 %v7675, %v7651
        %v8132 = vpack.c.b16 %v7676, %v7652
        %v8133 = vpack.c.b16 %v7677, %v7653
        %v8134 = vpack.c.b16 %v7678, %v7654
        %v8135 = vpack.c.b16 %v7679, %v7655
        %v8136 = vpack.c.b16 %v7680, %v7656
        %v8137 = vpack.c.b16 %v7681, %v7657
        %v8138 = vpack.c.b16 %v7682, %v7658
        %v8139 = vpack.c.b16 %v7683, %v7659
        %v8140 = vpack.c.b16 %v7684, %v7660
        %v8141 = vpack.c.b16 %v7685, %v7661
        %v8142 = vpack.c.b16 %v7686, %v7662
        %v8143 = vpack.c.b16 %v7687, %v7663
        %v8144 = vpack.c.b16 %v7688, %v7664
        %v8145 = vpack.c.b16 %v7689, %v7665
        %v8146 = vpack.c.b16 %v7690, %v7666
        %v8147 = vpack.c.b16 %v7691, %v7667
        %v8148 = vpack.c.b16 %v7692, %v7668
        %v8149 = vpack.c.b16 %v7693, %v7669
        %v8150 = vpack.c.b16 %v7694, %v7670
        %v8151 = vpack.c.b16 %v7695, %v7671
        %v8152 = vpack.c.b16 %v7720, %v7696
        %v8153 = vpack.c.b16 %v7721, %v7697
        %v8154 = vpack.c.b16 %v7722, %v7698
        %v8155 = vpack.c.b16 %v7723, %v7699
        %v8156 = vpack.c.b16 %v7724, %v7700
        %v8157 = vpack.c.b16 %v7725, %v7701
        %v8158 = vpack.c.b16 %v7726, %v7702
        %v8159 = vpack.c.b16 %v7727, %v7703
        %v8160 = vpack.c.b16 %v7728, %v7704
        %v8161 = vpack.c.b16 %v7729, %v7705
        %v8162 = vpack.c.b16 %v7730, %v7706
        %v8163 = vpack.c.b16 %v7731, %v7707
        %v8164 = vpack.c.b16 %v7732, %v7708
        %v8165 = vpack.c.b16 %v7733, %v7709
        %v8166 = vpack.c.b16 %v7734, %v7710
        %v8167 = vpack.c.b16 %v7735, %v7711
        %v8168 = vpack.c.b16 %v7736, %v7712
        %v8169 = vpack.c.b16 %v7737, %v7713
        %v8170 = vpack.c.b16 %v7738, %v7714
        %v8171 = vpack.c.b16 %v7739, %v7715
        %v8172 = vpack.c.b16 %v7740, %v7716
        %v8173 = vpack.c.b16 %v7741, %v7717
        %v8174 = vpack.c.b16 %v7742, %v7718
        %v8175 = vpack.c.b16 %v7743, %v7719
        %v8176 = vpack.c.b16 %v7768, %v7744
        %v8177 = vpack.c.b16 %v7769, %v7745
        %v8178 = vpack.c.b16 %v7770, %v7746
        %v8179 = vpack.c.b16 %v7771, %v7747
        %v8180 = vpack.c.b16 %v7772, %v7748
        %v8181 = vpack.c.b16 %v7773, %v7749
        %v8182 = vpack.c.b16 %v7774, %v7750
        %v8183 = vpack.c.b16 %v7775, %v7751
        %v8184 = vpack.c.b16 %v7776, %v7752
        %v8185 = vpack.c.b16 %v7777, %v7753
        %v8186 = vpack.c.b16 %v7778, %v7754
        %v8187 = vpack.c.b16 %v7779, %v7755
        %v8188 = vpack.c.b16 %v7780, %v7756
        %v8189 = vpack.c.b16 %v7781, %v7757
        %v8190 = vpack.c.b16 %v7782, %v7758
        %v8191 = vpack.c.b16 %v7783, %v7759
        %v8192 = vpack.c.b16 %v7784, %v7760
        %v8193 = vpack.c.b16 %v7785, %v7761
        %v8194 = vpack.c.b16 %v7786, %v7762
        %v8195 = vpack.c.b16 %v7787, %v7763
        %v8196 = vpack.c.b16 %v7788, %v7764
        %v8197 = vpack.c.b16 %v7789, %v7765
        %v8198 = vpack.c.b16 %v7790, %v7766
        %v8199 = vpack.c.b16 %v7791, %v7767
        %v8200 = vpack.c.b16 %v7816, %v7792
        %v8201 = vpack.c.b16 %v7817, %v7793
        %v8202 = vpack.c.b16 %v7818, %v7794
        %v8203 = vpack.c.b16 %v7819, %v7795
        %v8204 = vpack.c.b16 %v7820, %v7796
        %v8205 = vpack.c.b16 %v7821, %v7797
        %v8206 = vpack.c.b16 %v7822, %v7798
        %v8207 = vpack.c.b16 %v7823, %v7799
        %v8208 = vpack.c.b16 %v7824, %v7800
        %v8209 = vpack.c.b16 %v7825, %v7801
        %v8210 = vpack.c.b16 %v7826, %v7802
        %v8211 = vpack.c.b16 %v7827, %v7803
        %v8212 = vpack.c.b16 %v7828, %v7804
        %v8213 = vpack.c.b16 %v7829, %v7805
        %v8214 = vpack.c.b16 %v7830, %v7806
        %v8215 = vpack.c.b16 %v7831, %v7807
        %v8216 = vpack.c.b16 %v7832, %v7808
        %v8217 = vpack.c.b16 %v7833, %v7809
        %v8218 = vpack.c.b16 %v7834, %v7810
        %v8219 = vpack.c.b16 %v7835, %v7811
        %v8220 = vpack.c.b16 %v7836, %v7812
        %v8221 = vpack.c.b16 %v7837, %v7813
        %v8222 = vpack.c.b16 %v7838, %v7814
        %v8223 = vpack.c.b16 %v7839, %v7815
        %8608 = vmatprep.subr.bf16.mxu0 %v7841
        %8609 = vmatpush1.bf16.msra.mxu0 %v7840
        %8610 = vmatprep.subr.bf16.mxu0 %v7865
        %8611 = vmatpush1.bf16.msra.mxu0 %v7864
        %8612 = vmatprep.subr.bf16.mxu0 %v7889
        %8613 = vmatpush1.bf16.msra.mxu0 %v7888
        %8614 = vmatprep.subr.bf16.mxu0 %v7913
        %8615 = vmatpush1.bf16.msra.mxu0 %v7912
        %8616 = vmatprep.subr.bf16.mxu0 %v7937
        %8617 = vmatpush1.bf16.msra.mxu0 %v7936
        %8618 = vmatprep.subr.bf16.mxu0 %v7961
        %8619 = vmatpush1.bf16.msra.mxu0 %v7960
        %8620 = vmatprep.subr.bf16.mxu0 %v7985
        %8621 = vmatpush1.bf16.msra.mxu0 %v7984
        %8622 = vmatprep.subr.bf16.mxu0 %v8009
        %8623 = vmatpush1.bf16.msra.mxu0 %v8008
        %8624 = vmatprep.subr.bf16.mxu0 %v8033
        %8625 = vmatpush1.bf16.msra.mxu0 %v8032
        %8626 = vmatprep.subr.bf16.mxu0 %v8057
        %8627 = vmatpush1.bf16.msra.mxu0 %v8056
        %8628 = vmatprep.subr.bf16.mxu0 %v8081
        %8629 = vmatpush1.bf16.msra.mxu0 %v8080
        %8630 = vmatprep.subr.bf16.mxu0 %v8105
        %8631 = vmatpush1.bf16.msra.mxu0 %v8104
        %8632 = vmatprep.subr.bf16.mxu0 %v8129
        %8633 = vmatpush1.bf16.msra.mxu0 %v8128
        %8634 = vmatprep.subr.bf16.mxu0 %v8153
        %8635 = vmatpush1.bf16.msra.mxu0 %v8152
        %8636 = vmatprep.subr.bf16.mxu0 %v8177
        %8637 = vmatpush1.bf16.msra.mxu0 %v8176
        %8638 = vmatprep.subr.bf16.mxu0 %v8201
        %8639 = vmatpush1.bf16.msra.mxu0 %v8200
        %8640 = vmatprep.mubr.bf16.mxu0 %v6177
        %8641 = vmatmul.mubr.bf16.gmra.mrb[0].mxu0 %v6176
        %v8642 = vpop.f32.mrb[0].mxu0
        %v8643 = vadd.f32 %v6571, %v8642
        %v8644 = vpop.f32.mrb[0].mxu0
        %v8645 = vadd.f32 %v6575, %v8644
        %v8646 = vpop.f32.mrb[0].mxu0
        %v8647 = vpop.f32.mrb[0].mxu0
        %8648 = vdwg.mxu0
        %8649 = vmatprep.subr.bf16.mxu0 %v7843
        %8650 = vmatpush1.bf16.msra.mxu0 %v7842
        %8651 = vmatprep.subr.bf16.mxu0 %v7867
        %8652 = vmatpush1.bf16.msra.mxu0 %v7866
        %8653 = vmatprep.subr.bf16.mxu0 %v7891
        %8654 = vmatpush1.bf16.msra.mxu0 %v7890
        %8655 = vmatprep.subr.bf16.mxu0 %v7915
        %8656 = vmatpush1.bf16.msra.mxu0 %v7914
        %8657 = vmatprep.subr.bf16.mxu0 %v7939
        %8658 = vmatpush1.bf16.msra.mxu0 %v7938
        %8659 = vmatprep.subr.bf16.mxu0 %v7963
        %8660 = vmatpush1.bf16.msra.mxu0 %v7962
        %8661 = vmatprep.subr.bf16.mxu0 %v7987
        %8662 = vmatpush1.bf16.msra.mxu0 %v7986
        %8663 = vmatprep.subr.bf16.mxu0 %v8011
        %8664 = vmatpush1.bf16.msra.mxu0 %v8010
        %8665 = vmatprep.subr.bf16.mxu0 %v8035
        %8666 = vmatpush1.bf16.msra.mxu0 %v8034
        %8667 = vmatprep.subr.bf16.mxu0 %v8059
        %8668 = vmatpush1.bf16.msra.mxu0 %v8058
        %8669 = vmatprep.subr.bf16.mxu0 %v8083
        %8670 = vmatpush1.bf16.msra.mxu0 %v8082
        %8671 = vmatprep.subr.bf16.mxu0 %v8107
        %8672 = vmatpush1.bf16.msra.mxu0 %v8106
        %8673 = vmatprep.subr.bf16.mxu0 %v8131
        %8674 = vmatpush1.bf16.msra.mxu0 %v8130
        %8675 = vmatprep.subr.bf16.mxu0 %v8155
        %8676 = vmatpush1.bf16.msra.mxu0 %v8154
        %8677 = vmatprep.subr.bf16.mxu0 %v8179
        %8678 = vmatpush1.bf16.msra.mxu0 %v8178
        %8679 = vmatprep.subr.bf16.mxu0 %v8203
        %8680 = vmatpush1.bf16.msra.mxu0 %v8202
        %8681 = vmatprep.mubr.bf16.mxu0 %v6177
        %8682 = vmatmul.mubr.bf16.gmra.mrb[0].mxu0 %v6176
        %v8683 = vpop.f32.mrb[0].mxu0
        %v8684 = vadd.f32 %v6579, %v8683
        %v8685 = vpop.f32.mrb[0].mxu0
        %v8686 = vadd.f32 %v6583, %v8685
        %v8687 = vpop.f32.mrb[0].mxu0
        %v8688 = vpop.f32.mrb[0].mxu0
        %8689 = vdwg.mxu0
        %8690 = vmatprep.subr.bf16.mxu0 %v7845
        %8691 = vmatpush1.bf16.msra.mxu0 %v7844
        %8692 = vmatprep.subr.bf16.mxu0 %v7869
        %8693 = vmatpush1.bf16.msra.mxu0 %v7868
        %8694 = vmatprep.subr.bf16.mxu0 %v7893
        %8695 = vmatpush1.bf16.msra.mxu0 %v7892
        %8696 = vmatprep.subr.bf16.mxu0 %v7917
        %8697 = vmatpush1.bf16.msra.mxu0 %v7916
        %8698 = vmatprep.subr.bf16.mxu0 %v7941
        %8699 = vmatpush1.bf16.msra.mxu0 %v7940
        %8700 = vmatprep.subr.bf16.mxu0 %v7965
        %8701 = vmatpush1.bf16.msra.mxu0 %v7964
        %8702 = vmatprep.subr.bf16.mxu0 %v7989
        %8703 = vmatpush1.bf16.msra.mxu0 %v7988
        %8704 = vmatprep.subr.bf16.mxu0 %v8013
        %8705 = vmatpush1.bf16.msra.mxu0 %v8012
        %8706 = vmatprep.subr.bf16.mxu0 %v8037
        %8707 = vmatpush1.bf16.msra.mxu0 %v8036
        %8708 = vmatprep.subr.bf16.mxu0 %v8061
        %8709 = vmatpush1.bf16.msra.mxu0 %v8060
        %8710 = vmatprep.subr.bf16.mxu0 %v8085
        %8711 = vmatpush1.bf16.msra.mxu0 %v8084
        %8712 = vmatprep.subr.bf16.mxu0 %v8109
        %8713 = vmatpush1.bf16.msra.mxu0 %v8108
        %8714 = vmatprep.subr.bf16.mxu0 %v8133
        %8715 = vmatpush1.bf16.msra.mxu0 %v8132
        %8716 = vmatprep.subr.bf16.mxu0 %v8157
        %8717 = vmatpush1.bf16.msra.mxu0 %v8156
        %8718 = vmatprep.subr.bf16.mxu0 %v8181
        %8719 = vmatpush1.bf16.msra.mxu0 %v8180
        %8720 = vmatprep.subr.bf16.mxu0 %v8205
        %8721 = vmatpush1.bf16.msra.mxu0 %v8204
        %8722 = vmatprep.mubr.bf16.mxu0 %v6177
        %8723 = vmatmul.mubr.bf16.gmra.mrb[0].mxu0 %v6176
        %v8724 = vpop.f32.mrb[0].mxu0
        %v8725 = vadd.f32 %v6587, %v8724
        %v8726 = vpop.f32.mrb[0].mxu0
        %v8727 = vadd.f32 %v6591, %v8726
        %v8728 = vpop.f32.mrb[0].mxu0
        %v8729 = vpop.f32.mrb[0].mxu0
        %8730 = vdwg.mxu0
        %8731 = vmatprep.subr.bf16.mxu0 %v7847
        %8732 = vmatpush1.bf16.msra.mxu0 %v7846
        %8733 = vmatprep.subr.bf16.mxu0 %v7871
        %8734 = vmatpush1.bf16.msra.mxu0 %v7870
        %8735 = vmatprep.subr.bf16.mxu0 %v7895
        %8736 = vmatpush1.bf16.msra.mxu0 %v7894
        %8737 = vmatprep.subr.bf16.mxu0 %v7919
        %8738 = vmatpush1.bf16.msra.mxu0 %v7918
        %8739 = vmatprep.subr.bf16.mxu0 %v7943
        %8740 = vmatpush1.bf16.msra.mxu0 %v7942
        %8741 = vmatprep.subr.bf16.mxu0 %v7967
        %8742 = vmatpush1.bf16.msra.mxu0 %v7966
        %8743 = vmatprep.subr.bf16.mxu0 %v7991
        %8744 = vmatpush1.bf16.msra.mxu0 %v7990
        %8745 = vmatprep.subr.bf16.mxu0 %v8015
        %8746 = vmatpush1.bf16.msra.mxu0 %v8014
        %8747 = vmatprep.subr.bf16.mxu0 %v8039
        %8748 = vmatpush1.bf16.msra.mxu0 %v8038
        %8749 = vmatprep.subr.bf16.mxu0 %v8063
        %8750 = vmatpush1.bf16.msra.mxu0 %v8062
        %8751 = vmatprep.subr.bf16.mxu0 %v8087
        %8752 = vmatpush1.bf16.msra.mxu0 %v8086
        %8753 = vmatprep.subr.bf16.mxu0 %v8111
        %8754 = vmatpush1.bf16.msra.mxu0 %v8110
        %8755 = vmatprep.subr.bf16.mxu0 %v8135
        %8756 = vmatpush1.bf16.msra.mxu0 %v8134
        %8757 = vmatprep.subr.bf16.mxu0 %v8159
        %8758 = vmatpush1.bf16.msra.mxu0 %v8158
        %8759 = vmatprep.subr.bf16.mxu0 %v8183
        %8760 = vmatpush1.bf16.msra.mxu0 %v8182
        %8761 = vmatprep.subr.bf16.mxu0 %v8207
        %8762 = vmatpush1.bf16.msra.mxu0 %v8206
        %8763 = vmatprep.mubr.bf16.mxu0 %v6177
        %8764 = vmatmul.mubr.bf16.gmra.mrb[0].mxu0 %v6176
        %v8765 = vpop.f32.mrb[0].mxu0
        %v8766 = vadd.f32 %v6595, %v8765
        %v8767 = vpop.f32.mrb[0].mxu0
        %v8768 = vadd.f32 %v6599, %v8767
        %v8769 = vpop.f32.mrb[0].mxu0
        %v8770 = vpop.f32.mrb[0].mxu0
        %8771 = vdwg.mxu0
        %8772 = vmatprep.subr.bf16.mxu0 %v7849
        %8773 = vmatpush1.bf16.msra.mxu0 %v7848
        %8774 = vmatprep.subr.bf16.mxu0 %v7873
        %8775 = vmatpush1.bf16.msra.mxu0 %v7872
        %8776 = vmatprep.subr.bf16.mxu0 %v7897
        %8777 = vmatpush1.bf16.msra.mxu0 %v7896
        %8778 = vmatprep.subr.bf16.mxu0 %v7921
        %8779 = vmatpush1.bf16.msra.mxu0 %v7920
        %8780 = vmatprep.subr.bf16.mxu0 %v7945
        %8781 = vmatpush1.bf16.msra.mxu0 %v7944
        %8782 = vmatprep.subr.bf16.mxu0 %v7969
        %8783 = vmatpush1.bf16.msra.mxu0 %v7968
        %8784 = vmatprep.subr.bf16.mxu0 %v7993
        %8785 = vmatpush1.bf16.msra.mxu0 %v7992
        %8786 = vmatprep.subr.bf16.mxu0 %v8017
        %8787 = vmatpush1.bf16.msra.mxu0 %v8016
        %8788 = vmatprep.subr.bf16.mxu0 %v8041
        %8789 = vmatpush1.bf16.msra.mxu0 %v8040
        %8790 = vmatprep.subr.bf16.mxu0 %v8065
        %8791 = vmatpush1.bf16.msra.mxu0 %v8064
        %8792 = vmatprep.subr.bf16.mxu0 %v8089
        %8793 = vmatpush1.bf16.msra.mxu0 %v8088
        %8794 = vmatprep.subr.bf16.mxu0 %v8113
        %8795 = vmatpush1.bf16.msra.mxu0 %v8112
        %8796 = vmatprep.subr.bf16.mxu0 %v8137
        %8797 = vmatpush1.bf16.msra.mxu0 %v8136
        %8798 = vmatprep.subr.bf16.mxu0 %v8161
        %8799 = vmatpush1.bf16.msra.mxu0 %v8160
        %8800 = vmatprep.subr.bf16.mxu0 %v8185
        %8801 = vmatpush1.bf16.msra.mxu0 %v8184
        %8802 = vmatprep.subr.bf16.mxu0 %v8209
        %8803 = vmatpush1.bf16.msra.mxu0 %v8208
        %8804 = vmatprep.mubr.bf16.mxu0 %v6177
        %8805 = vmatmul.mubr.bf16.gmra.mrb[0].mxu0 %v6176
        %v8806 = vpop.f32.mrb[0].mxu0
        %v8807 = vadd.f32 %v6603, %v8806
        %v8808 = vpop.f32.mrb[0].mxu0
        %v8809 = vadd.f32 %v6607, %v8808
        %v8810 = vpop.f32.mrb[0].mxu0
        %v8811 = vpop.f32.mrb[0].mxu0
        %8812 = vdwg.mxu0
        %8813 = vmatprep.subr.bf16.mxu0 %v7851
        %8814 = vmatpush1.bf16.msra.mxu0 %v7850
        %8815 = vmatprep.subr.bf16.mxu0 %v7875
        %8816 = vmatpush1.bf16.msra.mxu0 %v7874
        %8817 = vmatprep.subr.bf16.mxu0 %v7899
        %8818 = vmatpush1.bf16.msra.mxu0 %v7898
        %8819 = vmatprep.subr.bf16.mxu0 %v7923
        %8820 = vmatpush1.bf16.msra.mxu0 %v7922
        %8821 = vmatprep.subr.bf16.mxu0 %v7947
        %8822 = vmatpush1.bf16.msra.mxu0 %v7946
        %8823 = vmatprep.subr.bf16.mxu0 %v7971
        %8824 = vmatpush1.bf16.msra.mxu0 %v7970
        %8825 = vmatprep.subr.bf16.mxu0 %v7995
        %8826 = vmatpush1.bf16.msra.mxu0 %v7994
        %8827 = vmatprep.subr.bf16.mxu0 %v8019
        %8828 = vmatpush1.bf16.msra.mxu0 %v8018
        %8829 = vmatprep.subr.bf16.mxu0 %v8043
        %8830 = vmatpush1.bf16.msra.mxu0 %v8042
        %8831 = vmatprep.subr.bf16.mxu0 %v8067
        %8832 = vmatpush1.bf16.msra.mxu0 %v8066
        %8833 = vmatprep.subr.bf16.mxu0 %v8091
        %8834 = vmatpush1.bf16.msra.mxu0 %v8090
        %8835 = vmatprep.subr.bf16.mxu0 %v8115
        %8836 = vmatpush1.bf16.msra.mxu0 %v8114
        %8837 = vmatprep.subr.bf16.mxu0 %v8139
        %8838 = vmatpush1.bf16.msra.mxu0 %v8138
        %8839 = vmatprep.subr.bf16.mxu0 %v8163
        %8840 = vmatpush1.bf16.msra.mxu0 %v8162
        %8841 = vmatprep.subr.bf16.mxu0 %v8187
        %8842 = vmatpush1.bf16.msra.mxu0 %v8186
        %8843 = vmatprep.subr.bf16.mxu0 %v8211
        %8844 = vmatpush1.bf16.msra.mxu0 %v8210
        %8845 = vmatprep.mubr.bf16.mxu0 %v6177
        %8846 = vmatmul.mubr.bf16.gmra.mrb[0].mxu0 %v6176
        %v8847 = vpop.f32.mrb[0].mxu0
        %v8848 = vadd.f32 %v6611, %v8847
        %v8849 = vpop.f32.mrb[0].mxu0
        %v8850 = vadd.f32 %v6615, %v8849
        %v8851 = vpop.f32.mrb[0].mxu0
        %v8852 = vpop.f32.mrb[0].mxu0
        %8853 = vdwg.mxu0
        %8854 = vmatprep.subr.bf16.mxu0 %v7853
        %8855 = vmatpush1.bf16.msra.mxu0 %v7852
        %8856 = vmatprep.subr.bf16.mxu0 %v7877
        %8857 = vmatpush1.bf16.msra.mxu0 %v7876
        %8858 = vmatprep.subr.bf16.mxu0 %v7901
        %8859 = vmatpush1.bf16.msra.mxu0 %v7900
        %8860 = vmatprep.subr.bf16.mxu0 %v7925
        %8861 = vmatpush1.bf16.msra.mxu0 %v7924
        %8862 = vmatprep.subr.bf16.mxu0 %v7949
        %8863 = vmatpush1.bf16.msra.mxu0 %v7948
        %8864 = vmatprep.subr.bf16.mxu0 %v7973
        %8865 = vmatpush1.bf16.msra.mxu0 %v7972
        %8866 = vmatprep.subr.bf16.mxu0 %v7997
        %8867 = vmatpush1.bf16.msra.mxu0 %v7996
        %8868 = vmatprep.subr.bf16.mxu0 %v8021
        %8869 = vmatpush1.bf16.msra.mxu0 %v8020
        %8870 = vmatprep.subr.bf16.mxu0 %v8045
        %8871 = vmatpush1.bf16.msra.mxu0 %v8044
        %8872 = vmatprep.subr.bf16.mxu0 %v8069
        %8873 = vmatpush1.bf16.msra.mxu0 %v8068
        %8874 = vmatprep.subr.bf16.mxu0 %v8093
        %8875 = vmatpush1.bf16.msra.mxu0 %v8092
        %8876 = vmatprep.subr.bf16.mxu0 %v8117
        %8877 = vmatpush1.bf16.msra.mxu0 %v8116
        %8878 = vmatprep.subr.bf16.mxu0 %v8141
        %8879 = vmatpush1.bf16.msra.mxu0 %v8140
        %8880 = vmatprep.subr.bf16.mxu0 %v8165
        %8881 = vmatpush1.bf16.msra.mxu0 %v8164
        %8882 = vmatprep.subr.bf16.mxu0 %v8189
        %8883 = vmatpush1.bf16.msra.mxu0 %v8188
        %8884 = vmatprep.subr.bf16.mxu0 %v8213
        %8885 = vmatpush1.bf16.msra.mxu0 %v8212
        %8886 = vmatprep.mubr.bf16.mxu0 %v6177
        %8887 = vmatmul.mubr.bf16.gmra.mrb[0].mxu0 %v6176
        %v8888 = vpop.f32.mrb[0].mxu0
        %v8889 = vadd.f32 %v6619, %v8888
        %v8890 = vpop.f32.mrb[0].mxu0
        %v8891 = vadd.f32 %v6623, %v8890
        %v8892 = vpop.f32.mrb[0].mxu0
        %v8893 = vpop.f32.mrb[0].mxu0
        %8894 = vdwg.mxu0
        %8895 = vmatprep.subr.bf16.mxu0 %v7855
        %8896 = vmatpush1.bf16.msra.mxu0 %v7854
        %8897 = vmatprep.subr.bf16.mxu0 %v7879
        %8898 = vmatpush1.bf16.msra.mxu0 %v7878
        %8899 = vmatprep.subr.bf16.mxu0 %v7903
        %8900 = vmatpush1.bf16.msra.mxu0 %v7902
        %8901 = vmatprep.subr.bf16.mxu0 %v7927
        %8902 = vmatpush1.bf16.msra.mxu0 %v7926
        %8903 = vmatprep.subr.bf16.mxu0 %v7951
        %8904 = vmatpush1.bf16.msra.mxu0 %v7950
        %8905 = vmatprep.subr.bf16.mxu0 %v7975
        %8906 = vmatpush1.bf16.msra.mxu0 %v7974
        %8907 = vmatprep.subr.bf16.mxu0 %v7999
        %8908 = vmatpush1.bf16.msra.mxu0 %v7998
        %8909 = vmatprep.subr.bf16.mxu0 %v8023
        %8910 = vmatpush1.bf16.msra.mxu0 %v8022
        %8911 = vmatprep.subr.bf16.mxu0 %v8047
        %8912 = vmatpush1.bf16.msra.mxu0 %v8046
        %8913 = vmatprep.subr.bf16.mxu0 %v8071
        %8914 = vmatpush1.bf16.msra.mxu0 %v8070
        %8915 = vmatprep.subr.bf16.mxu0 %v8095
        %8916 = vmatpush1.bf16.msra.mxu0 %v8094
        %8917 = vmatprep.subr.bf16.mxu0 %v8119
        %8918 = vmatpush1.bf16.msra.mxu0 %v8118
        %8919 = vmatprep.subr.bf16.mxu0 %v8143
        %8920 = vmatpush1.bf16.msra.mxu0 %v8142
        %8921 = vmatprep.subr.bf16.mxu0 %v8167
        %8922 = vmatpush1.bf16.msra.mxu0 %v8166
        %8923 = vmatprep.subr.bf16.mxu0 %v8191
        %8924 = vmatpush1.bf16.msra.mxu0 %v8190
        %8925 = vmatprep.subr.bf16.mxu0 %v8215
        %8926 = vmatpush1.bf16.msra.mxu0 %v8214
        %8927 = vmatprep.mubr.bf16.mxu0 %v6177
        %8928 = vmatmul.mubr.bf16.gmra.mrb[0].mxu0 %v6176
        %v8929 = vpop.f32.mrb[0].mxu0
        %v8930 = vadd.f32 %v6627, %v8929
        %v8931 = vpop.f32.mrb[0].mxu0
        %v8932 = vadd.f32 %v6631, %v8931
        %v8933 = vpop.f32.mrb[0].mxu0
        %v8934 = vpop.f32.mrb[0].mxu0
        %8935 = vdwg.mxu0
        %8936 = vmatprep.subr.bf16.mxu0 %v7857
        %8937 = vmatpush1.bf16.msra.mxu0 %v7856
        %8938 = vmatprep.subr.bf16.mxu0 %v7881
        %8939 = vmatpush1.bf16.msra.mxu0 %v7880
        %8940 = vmatprep.subr.bf16.mxu0 %v7905
        %8941 = vmatpush1.bf16.msra.mxu0 %v7904
        %8942 = vmatprep.subr.bf16.mxu0 %v7929
        %8943 = vmatpush1.bf16.msra.mxu0 %v7928
        %8944 = vmatprep.subr.bf16.mxu0 %v7953
        %8945 = vmatpush1.bf16.msra.mxu0 %v7952
        %8946 = vmatprep.subr.bf16.mxu0 %v7977
        %8947 = vmatpush1.bf16.msra.mxu0 %v7976
        %8948 = vmatprep.subr.bf16.mxu0 %v8001
        %8949 = vmatpush1.bf16.msra.mxu0 %v8000
        %8950 = vmatprep.subr.bf16.mxu0 %v8025
        %8951 = vmatpush1.bf16.msra.mxu0 %v8024
        %8952 = vmatprep.subr.bf16.mxu0 %v8049
        %8953 = vmatpush1.bf16.msra.mxu0 %v8048
        %8954 = vmatprep.subr.bf16.mxu0 %v8073
        %8955 = vmatpush1.bf16.msra.mxu0 %v8072
        %8956 = vmatprep.subr.bf16.mxu0 %v8097
        %8957 = vmatpush1.bf16.msra.mxu0 %v8096
        %8958 = vmatprep.subr.bf16.mxu0 %v8121
        %8959 = vmatpush1.bf16.msra.mxu0 %v8120
        %8960 = vmatprep.subr.bf16.mxu0 %v8145
        %8961 = vmatpush1.bf16.msra.mxu0 %v8144
        %8962 = vmatprep.subr.bf16.mxu0 %v8169
        %8963 = vmatpush1.bf16.msra.mxu0 %v8168
        %8964 = vmatprep.subr.bf16.mxu0 %v8193
        %8965 = vmatpush1.bf16.msra.mxu0 %v8192
        %8966 = vmatprep.subr.bf16.mxu0 %v8217
        %8967 = vmatpush1.bf16.msra.mxu0 %v8216
        %8968 = vmatprep.mubr.bf16.mxu0 %v6177
        %8969 = vmatmul.mubr.bf16.gmra.mrb[0].mxu0 %v6176
        %v8970 = vpop.f32.mrb[0].mxu0
        %v8971 = vadd.f32 %v6635, %v8970
        %v8972 = vpop.f32.mrb[0].mxu0
        %v8973 = vadd.f32 %v6639, %v8972
        %v8974 = vpop.f32.mrb[0].mxu0
        %v8975 = vpop.f32.mrb[0].mxu0
        %8976 = vdwg.mxu0
        %8977 = vmatprep.subr.bf16.mxu0 %v7859
        %8978 = vmatpush1.bf16.msra.mxu0 %v7858
        %8979 = vmatprep.subr.bf16.mxu0 %v7883
        %8980 = vmatpush1.bf16.msra.mxu0 %v7882
        %8981 = vmatprep.subr.bf16.mxu0 %v7907
        %8982 = vmatpush1.bf16.msra.mxu0 %v7906
        %8983 = vmatprep.subr.bf16.mxu0 %v7931
        %8984 = vmatpush1.bf16.msra.mxu0 %v7930
        %8985 = vmatprep.subr.bf16.mxu0 %v7955
        %8986 = vmatpush1.bf16.msra.mxu0 %v7954
        %8987 = vmatprep.subr.bf16.mxu0 %v7979
        %8988 = vmatpush1.bf16.msra.mxu0 %v7978
        %8989 = vmatprep.subr.bf16.mxu0 %v8003
        %8990 = vmatpush1.bf16.msra.mxu0 %v8002
        %8991 = vmatprep.subr.bf16.mxu0 %v8027
        %8992 = vmatpush1.bf16.msra.mxu0 %v8026
        %8993 = vmatprep.subr.bf16.mxu0 %v8051
        %8994 = vmatpush1.bf16.msra.mxu0 %v8050
        %8995 = vmatprep.subr.bf16.mxu0 %v8075
        %8996 = vmatpush1.bf16.msra.mxu0 %v8074
        %8997 = vmatprep.subr.bf16.mxu0 %v8099
        %8998 = vmatpush1.bf16.msra.mxu0 %v8098
        %8999 = vmatprep.subr.bf16.mxu0 %v8123
        %9000 = vmatpush1.bf16.msra.mxu0 %v8122
        %9001 = vmatprep.subr.bf16.mxu0 %v8147
        %9002 = vmatpush1.bf16.msra.mxu0 %v8146
        %9003 = vmatprep.subr.bf16.mxu0 %v8171
        %9004 = vmatpush1.bf16.msra.mxu0 %v8170
        %9005 = vmatprep.subr.bf16.mxu0 %v8195
        %9006 = vmatpush1.bf16.msra.mxu0 %v8194
        %9007 = vmatprep.subr.bf16.mxu0 %v8219
        %9008 = vmatpush1.bf16.msra.mxu0 %v8218
        %9009 = vmatprep.mubr.bf16.mxu0 %v6177
        %9010 = vmatmul.mubr.bf16.gmra.mrb[0].mxu0 %v6176
        %v9011 = vpop.f32.mrb[0].mxu0
        %v9012 = vadd.f32 %v6643, %v9011
        %v9013 = vpop.f32.mrb[0].mxu0
        %v9014 = vadd.f32 %v6647, %v9013
        %v9015 = vpop.f32.mrb[0].mxu0
        %v9016 = vpop.f32.mrb[0].mxu0
        %9017 = vdwg.mxu0
        %9018 = vmatprep.subr.bf16.mxu0 %v7861
        %9019 = vmatpush1.bf16.msra.mxu0 %v7860
        %9020 = vmatprep.subr.bf16.mxu0 %v7885
        %9021 = vmatpush1.bf16.msra.mxu0 %v7884
        %9022 = vmatprep.subr.bf16.mxu0 %v7909
        %9023 = vmatpush1.bf16.msra.mxu0 %v7908
        %9024 = vmatprep.subr.bf16.mxu0 %v7933
        %9025 = vmatpush1.bf16.msra.mxu0 %v7932
        %9026 = vmatprep.subr.bf16.mxu0 %v7957
        %9027 = vmatpush1.bf16.msra.mxu0 %v7956
        %9028 = vmatprep.subr.bf16.mxu0 %v7981
        %9029 = vmatpush1.bf16.msra.mxu0 %v7980
        %9030 = vmatprep.subr.bf16.mxu0 %v8005
        %9031 = vmatpush1.bf16.msra.mxu0 %v8004
        %9032 = vmatprep.subr.bf16.mxu0 %v8029
        %9033 = vmatpush1.bf16.msra.mxu0 %v8028
        %9034 = vmatprep.subr.bf16.mxu0 %v8053
        %9035 = vmatpush1.bf16.msra.mxu0 %v8052
        %9036 = vmatprep.subr.bf16.mxu0 %v8077
        %9037 = vmatpush1.bf16.msra.mxu0 %v8076
        %9038 = vmatprep.subr.bf16.mxu0 %v8101
        %9039 = vmatpush1.bf16.msra.mxu0 %v8100
        %9040 = vmatprep.subr.bf16.mxu0 %v8125
        %9041 = vmatpush1.bf16.msra.mxu0 %v8124
        %9042 = vmatprep.subr.bf16.mxu0 %v8149
        %9043 = vmatpush1.bf16.msra.mxu0 %v8148
        %9044 = vmatprep.subr.bf16.mxu0 %v8173
        %9045 = vmatpush1.bf16.msra.mxu0 %v8172
        %9046 = vmatprep.subr.bf16.mxu0 %v8197
        %9047 = vmatpush1.bf16.msra.mxu0 %v8196
        %9048 = vmatprep.subr.bf16.mxu0 %v8221
        %9049 = vmatpush1.bf16.msra.mxu0 %v8220
        %9050 = vmatprep.mubr.bf16.mxu0 %v6177
        %9051 = vmatmul.mubr.bf16.gmra.mrb[0].mxu0 %v6176
        %v9052 = vpop.f32.mrb[0].mxu0
        %v9053 = vadd.f32 %v6651, %v9052
        %v9054 = vpop.f32.mrb[0].mxu0
        %v9055 = vadd.f32 %v6655, %v9054
        %v9056 = vpop.f32.mrb[0].mxu0
        %v9057 = vpop.f32.mrb[0].mxu0
        %9058 = vdwg.mxu0
        %9059 = vmatprep.subr.bf16.mxu0 %v7863
        %9060 = vmatpush1.bf16.msra.mxu0 %v7862
        %9061 = vmatprep.subr.bf16.mxu0 %v7887
        %9062 = vmatpush1.bf16.msra.mxu0 %v7886
        %9063 = vmatprep.subr.bf16.mxu0 %v7911
        %9064 = vmatpush1.bf16.msra.mxu0 %v7910
        %9065 = vmatprep.subr.bf16.mxu0 %v7935
        %9066 = vmatpush1.bf16.msra.mxu0 %v7934
        %9067 = vmatprep.subr.bf16.mxu0 %v7959
        %9068 = vmatpush1.bf16.msra.mxu0 %v7958
        %9069 = vmatprep.subr.bf16.mxu0 %v7983
        %9070 = vmatpush1.bf16.msra.mxu0 %v7982
        %9071 = vmatprep.subr.bf16.mxu0 %v8007
        %9072 = vmatpush1.bf16.msra.mxu0 %v8006
        %9073 = vmatprep.subr.bf16.mxu0 %v8031
        %9074 = vmatpush1.bf16.msra.mxu0 %v8030
        %9075 = vmatprep.subr.bf16.mxu0 %v8055
        %9076 = vmatpush1.bf16.msra.mxu0 %v8054
        %9077 = vmatprep.subr.bf16.mxu0 %v8079
        %9078 = vmatpush1.bf16.msra.mxu0 %v8078
        %9079 = vmatprep.subr.bf16.mxu0 %v8103
        %9080 = vmatpush1.bf16.msra.mxu0 %v8102
        %9081 = vmatprep.subr.bf16.mxu0 %v8127
        %9082 = vmatpush1.bf16.msra.mxu0 %v8126
        %9083 = vmatprep.subr.bf16.mxu0 %v8151
        %9084 = vmatpush1.bf16.msra.mxu0 %v8150
        %9085 = vmatprep.subr.bf16.mxu0 %v8175
        %9086 = vmatpush1.bf16.msra.mxu0 %v8174
        %9087 = vmatprep.subr.bf16.mxu0 %v8199
        %9088 = vmatpush1.bf16.msra.mxu0 %v8198
        %9089 = vmatprep.subr.bf16.mxu0 %v8223
        %9090 = vmatpush1.bf16.msra.mxu0 %v8222
        %9091 = vmatprep.mubr.bf16.mxu0 %v6177
        %9092 = vmatmul.mubr.bf16.gmra.mrb[0].mxu0 %v6176
        %v9093 = vpop.f32.mrb[0].mxu0
        %v9094 = vadd.f32 %v6659, %v9093
        %v9095 = vpop.f32.mrb[0].mxu0
        %v9096 = vadd.f32 %v6663, %v9095
        %v9097 = vpop.f32.mrb[0].mxu0
        %v9098 = vpop.f32.mrb[0].mxu0
        %9099 = vdwg.mxu0
        %v9100 = vld [vmem:[#allocation16] sm:$0xff]
        %v9101 = vld [vmem:[#allocation16 + $0x8] sm:$0xff]
        %v9102 = vld [vmem:[#allocation16 + $0x10] sm:$0xff]
        %v9103 = vld [vmem:[#allocation16 + $0x18] sm:$0xff]
        %v9104 = vld [vmem:[#allocation16 + $0x20] sm:$0xff]
        %v9105 = vld [vmem:[#allocation16 + $0x28] sm:$0xff]
        %v9106 = vld [vmem:[#allocation16 + $0x30] sm:$0xff]
        %v9107 = vld [vmem:[#allocation16 + $0x38] sm:$0xff]
        %v9108 = vld [vmem:[#allocation16 + $0x40] sm:$0xff]
        %v9109 = vld [vmem:[#allocation16 + $0x48] sm:$0xff]
        %v9110 = vld [vmem:[#allocation16 + $0x50] sm:$0xff]
        %v9111 = vld [vmem:[#allocation16 + $0x58] sm:$0xff]
        %v9112 = vld [vmem:[#allocation16 + $0x60] sm:$0xff]
        %v9113 = vld [vmem:[#allocation16 + $0x68] sm:$0xff]
        %v9114 = vld [vmem:[#allocation16 + $0x70] sm:$0xff]
        %v9115 = vld [vmem:[#allocation16 + $0x78] sm:$0xff]
        %v9116 = vld [vmem:[#allocation16 + $0x80] sm:$0xff]
        %v9117 = vld [vmem:[#allocation16 + $0x88] sm:$0xff]
        %v9118 = vld [vmem:[#allocation16 + $0x90] sm:$0xff]
        %v9119 = vld [vmem:[#allocation16 + $0x98] sm:$0xff]
        %v9120 = vld [vmem:[#allocation16 + $0xa0] sm:$0xff]
        %v9121 = vld [vmem:[#allocation16 + $0xa8] sm:$0xff]
        %v9122 = vld [vmem:[#allocation16 + $0xb0] sm:$0xff]
        %v9123 = vld [vmem:[#allocation16 + $0xb8] sm:$0xff]
        %v9124 = vld [vmem:[#allocation16 + $0xc0] sm:$0xff]
        %v9125 = vld [vmem:[#allocation16 + $0xc8] sm:$0xff]
        %v9126 = vld [vmem:[#allocation16 + $0xd0] sm:$0xff]
        %v9127 = vld [vmem:[#allocation16 + $0xd8] sm:$0xff]
        %v9128 = vld [vmem:[#allocation16 + $0xe0] sm:$0xff]
        %v9129 = vld [vmem:[#allocation16 + $0xe8] sm:$0xff]
        %v9130 = vld [vmem:[#allocation16 + $0xf0] sm:$0xff]
        %v9131 = vld [vmem:[#allocation16 + $0xf8] sm:$0xff]
        %v9132 = vld [vmem:[#allocation16 + $0x100] sm:$0xff]
        %v9133 = vld [vmem:[#allocation16 + $0x108] sm:$0xff]
        %v9134 = vld [vmem:[#allocation16 + $0x110] sm:$0xff]
        %v9135 = vld [vmem:[#allocation16 + $0x118] sm:$0xff]
        %v9136 = vld [vmem:[#allocation16 + $0x120] sm:$0xff]
        %v9137 = vld [vmem:[#allocation16 + $0x128] sm:$0xff]
        %v9138 = vld [vmem:[#allocation16 + $0x130] sm:$0xff]
        %v9139 = vld [vmem:[#allocation16 + $0x138] sm:$0xff]
        %v9140 = vld [vmem:[#allocation16 + $0x140] sm:$0xff]
        %v9141 = vld [vmem:[#allocation16 + $0x148] sm:$0xff]
        %v9142 = vld [vmem:[#allocation16 + $0x150] sm:$0xff]
        %v9143 = vld [vmem:[#allocation16 + $0x158] sm:$0xff]
        %v9144 = vld [vmem:[#allocation16 + $0x160] sm:$0xff]
        %v9145 = vld [vmem:[#allocation16 + $0x168] sm:$0xff]
        %v9146 = vld [vmem:[#allocation16 + $0x170] sm:$0xff]
        %v9147 = vld [vmem:[#allocation16 + $0x178] sm:$0xff]
        %v9148 = vld [vmem:[#allocation16 + $0x180] sm:$0xff]
        %v9149 = vld [vmem:[#allocation16 + $0x188] sm:$0xff]
        %v9150 = vld [vmem:[#allocation16 + $0x190] sm:$0xff]
        %v9151 = vld [vmem:[#allocation16 + $0x198] sm:$0xff]
        %v9152 = vld [vmem:[#allocation16 + $0x1a0] sm:$0xff]
        %v9153 = vld [vmem:[#allocation16 + $0x1a8] sm:$0xff]
        %v9154 = vld [vmem:[#allocation16 + $0x1b0] sm:$0xff]
        %v9155 = vld [vmem:[#allocation16 + $0x1b8] sm:$0xff]
        %v9156 = vld [vmem:[#allocation16 + $0x1c0] sm:$0xff]
        %v9157 = vld [vmem:[#allocation16 + $0x1c8] sm:$0xff]
        %v9158 = vld [vmem:[#allocation16 + $0x1d0] sm:$0xff]
        %v9159 = vld [vmem:[#allocation16 + $0x1d8] sm:$0xff]
        %v9160 = vld [vmem:[#allocation16 + $0x1e0] sm:$0xff]
        %v9161 = vld [vmem:[#allocation16 + $0x1e8] sm:$0xff]
        %v9162 = vld [vmem:[#allocation16 + $0x1f0] sm:$0xff]
        %v9163 = vld [vmem:[#allocation16 + $0x1f8] sm:$0xff]
        %v9164 = vld [vmem:[#allocation16 + $0x200] sm:$0xff]
        %v9165 = vld [vmem:[#allocation16 + $0x208] sm:$0xff]
        %v9166 = vld [vmem:[#allocation16 + $0x210] sm:$0xff]
        %v9167 = vld [vmem:[#allocation16 + $0x218] sm:$0xff]
        %v9168 = vld [vmem:[#allocation16 + $0x220] sm:$0xff]
        %v9169 = vld [vmem:[#allocation16 + $0x228] sm:$0xff]
        %v9170 = vld [vmem:[#allocation16 + $0x230] sm:$0xff]
        %v9171 = vld [vmem:[#allocation16 + $0x238] sm:$0xff]
        %v9172 = vld [vmem:[#allocation16 + $0x240] sm:$0xff]
        %v9173 = vld [vmem:[#allocation16 + $0x248] sm:$0xff]
        %v9174 = vld [vmem:[#allocation16 + $0x250] sm:$0xff]
        %v9175 = vld [vmem:[#allocation16 + $0x258] sm:$0xff]
        %v9176 = vld [vmem:[#allocation16 + $0x260] sm:$0xff]
        %v9177 = vld [vmem:[#allocation16 + $0x268] sm:$0xff]
        %v9178 = vld [vmem:[#allocation16 + $0x270] sm:$0xff]
        %v9179 = vld [vmem:[#allocation16 + $0x278] sm:$0xff]
        %v9180 = vld [vmem:[#allocation16 + $0x280] sm:$0xff]
        %v9181 = vld [vmem:[#allocation16 + $0x288] sm:$0xff]
        %v9182 = vld [vmem:[#allocation16 + $0x290] sm:$0xff]
        %v9183 = vld [vmem:[#allocation16 + $0x298] sm:$0xff]
        %v9184 = vld [vmem:[#allocation16 + $0x2a0] sm:$0xff]
        %v9185 = vld [vmem:[#allocation16 + $0x2a8] sm:$0xff]
        %v9186 = vld [vmem:[#allocation16 + $0x2b0] sm:$0xff]
        %v9187 = vld [vmem:[#allocation16 + $0x2b8] sm:$0xff]
        %v9188 = vld [vmem:[#allocation16 + $0x2c0] sm:$0xff]
        %v9189 = vld [vmem:[#allocation16 + $0x2c8] sm:$0xff]
        %v9190 = vld [vmem:[#allocation16 + $0x2d0] sm:$0xff]
        %v9191 = vld [vmem:[#allocation16 + $0x2d8] sm:$0xff]
        %v9192 = vld [vmem:[#allocation16 + $0x2e0] sm:$0xff]
        %v9193 = vld [vmem:[#allocation16 + $0x2e8] sm:$0xff]
        %v9194 = vld [vmem:[#allocation16 + $0x2f0] sm:$0xff]
        %v9195 = vld [vmem:[#allocation16 + $0x2f8] sm:$0xff]
        %v9196 = vld [vmem:[#allocation16 + $0x300] sm:$0xff]
        %v9197 = vld [vmem:[#allocation16 + $0x308] sm:$0xff]
        %v9198 = vld [vmem:[#allocation16 + $0x310] sm:$0xff]
        %v9199 = vld [vmem:[#allocation16 + $0x318] sm:$0xff]
        %v9200 = vld [vmem:[#allocation16 + $0x320] sm:$0xff]
        %v9201 = vld [vmem:[#allocation16 + $0x328] sm:$0xff]
        %v9202 = vld [vmem:[#allocation16 + $0x330] sm:$0xff]
        %v9203 = vld [vmem:[#allocation16 + $0x338] sm:$0xff]
        %v9204 = vld [vmem:[#allocation16 + $0x340] sm:$0xff]
        %v9205 = vld [vmem:[#allocation16 + $0x348] sm:$0xff]
        %v9206 = vld [vmem:[#allocation16 + $0x350] sm:$0xff]
        %v9207 = vld [vmem:[#allocation16 + $0x358] sm:$0xff]
        %v9208 = vld [vmem:[#allocation16 + $0x360] sm:$0xff]
        %v9209 = vld [vmem:[#allocation16 + $0x368] sm:$0xff]
        %v9210 = vld [vmem:[#allocation16 + $0x370] sm:$0xff]
        %v9211 = vld [vmem:[#allocation16 + $0x378] sm:$0xff]
        %v9212 = vld [vmem:[#allocation16 + $0x380] sm:$0xff]
        %v9213 = vld [vmem:[#allocation16 + $0x388] sm:$0xff]
        %v9214 = vld [vmem:[#allocation16 + $0x390] sm:$0xff]
        %v9215 = vld [vmem:[#allocation16 + $0x398] sm:$0xff]
        %v9216 = vld [vmem:[#allocation16 + $0x3a0] sm:$0xff]
        %v9217 = vld [vmem:[#allocation16 + $0x3a8] sm:$0xff]
        %v9218 = vld [vmem:[#allocation16 + $0x3b0] sm:$0xff]
        %v9219 = vld [vmem:[#allocation16 + $0x3b8] sm:$0xff]
        %v9220 = vld [vmem:[#allocation16 + $0x3c0] sm:$0xff]
        %v9221 = vld [vmem:[#allocation16 + $0x3c8] sm:$0xff]
        %v9222 = vld [vmem:[#allocation16 + $0x3d0] sm:$0xff]
        %v9223 = vld [vmem:[#allocation16 + $0x3d8] sm:$0xff]
        %v9224 = vld [vmem:[#allocation16 + $0x3e0] sm:$0xff]
        %v9225 = vld [vmem:[#allocation16 + $0x3e8] sm:$0xff]
        %v9226 = vld [vmem:[#allocation16 + $0x3f0] sm:$0xff]
        %v9227 = vld [vmem:[#allocation16 + $0x3f8] sm:$0xff]
        %v9228 = vmul.f32 %v8643, 0.5
        %v9229 = vmul.f32 %v8645, 0.5
        %v9230 = vtanh.pop %v9228
        %v9231 = vtanh.pop %v9229
        %v9232 = vmul.f32 %v9230, 0.5
        %v9233 = vmul.f32 %v9231, 0.5
        %v9234 = vadd.f32 %v9232, 0.5
        %v9235 = vadd.f32 %v9233, 0.5
        %v9236 = vmul.f32 %v8684, 0.5
        %v9237 = vmul.f32 %v8686, 0.5
        %v9238 = vtanh.pop %v9236
        %v9239 = vtanh.pop %v9237
        %v9240 = vmul.f32 %v9238, 0.5
        %v9241 = vmul.f32 %v9239, 0.5
        %v9242 = vadd.f32 %v9240, 0.5
        %v9243 = vadd.f32 %v9241, 0.5
        %v9244 = vtanh.pop %v8725
        %v9245 = vtanh.pop %v8727
        %v9246 = vmul.f32 %v8766, 0.5
        %v9247 = vmul.f32 %v8768, 0.5
        %v9248 = vtanh.pop %v9246
        %v9249 = vtanh.pop %v9247
        %v9250 = vmul.f32 %v9248, 0.5
        %v9251 = vmul.f32 %v9249, 0.5
        %v9252 = vadd.f32 %v9250, 0.5
        %v9253 = vadd.f32 %v9251, 0.5
        %v9254 = vmul.f32 %v9242, 0.0
        %v9255 = vmul.f32 %v9243, 0.0
        %v9256 = vmul.f32 %v9234, %v9244
        %v9257 = vmul.f32 %v9235, %v9245
        %v9258 = vadd.f32 %v9254, %v9256
        %v9259 = vadd.f32 %v9255, %v9257
        %v9260 = vtanh.pop %v9258
        %v9261 = vtanh.pop %v9259
        %v9262 = vmul.f32 %v9252, %v9260
        %v9263 = vmul.f32 %v9253, %v9261
        %v9264 = vpack.c.bf16 %v9262, %v9262
        %v9265 = vpack.c.bf16 %v9263, %v9263
        %v9394 = vunpack.c.l.b16 %v9100
        %v9395 = vunpack.c.h.b16 %v9100
        %v9396 = vunpack.c.l.b16 %v9101
        %v9397 = vunpack.c.h.b16 %v9101
        %v9398 = vunpack.c.l.b16 %v9102
        %v9399 = vunpack.c.h.b16 %v9102
        %v9400 = vunpack.c.l.b16 %v9103
        %v9401 = vunpack.c.h.b16 %v9103
        %v9402 = vunpack.c.l.b16 %v9104
        %v9403 = vunpack.c.h.b16 %v9104
        %v9404 = vunpack.c.l.b16 %v9105
        %v9405 = vunpack.c.h.b16 %v9105
        %v9406 = vunpack.c.l.b16 %v9106
        %v9407 = vunpack.c.h.b16 %v9106
        %v9408 = vunpack.c.l.b16 %v9107
        %v9409 = vunpack.c.h.b16 %v9107
        %v9410 = vunpack.c.l.b16 %v9108
        %v9411 = vunpack.c.h.b16 %v9108
        %v9412 = vunpack.c.l.b16 %v9109
        %v9413 = vunpack.c.h.b16 %v9109
        %v9414 = vunpack.c.l.b16 %v9110
        %v9415 = vunpack.c.h.b16 %v9110
        %v9416 = vunpack.c.l.b16 %v9111
        %v9417 = vunpack.c.h.b16 %v9111
        %v9418 = vunpack.c.l.b16 %v9112
        %v9419 = vunpack.c.h.b16 %v9112
        %v9420 = vunpack.c.l.b16 %v9113
        %v9421 = vunpack.c.h.b16 %v9113
        %v9422 = vunpack.c.l.b16 %v9114
        %v9423 = vunpack.c.h.b16 %v9114
        %v9424 = vunpack.c.l.b16 %v9115
        %v9425 = vunpack.c.h.b16 %v9115
        %v9426 = vunpack.c.l.b16 %v9116
        %v9427 = vunpack.c.h.b16 %v9116
        %v9428 = vunpack.c.l.b16 %v9117
        %v9429 = vunpack.c.h.b16 %v9117
        %v9430 = vunpack.c.l.b16 %v9118
        %v9431 = vunpack.c.h.b16 %v9118
        %v9432 = vunpack.c.l.b16 %v9119
        %v9433 = vunpack.c.h.b16 %v9119
        %v9434 = vunpack.c.l.b16 %v9120
        %v9435 = vunpack.c.h.b16 %v9120
        %v9436 = vunpack.c.l.b16 %v9121
        %v9437 = vunpack.c.h.b16 %v9121
        %v9438 = vunpack.c.l.b16 %v9122
        %v9439 = vunpack.c.h.b16 %v9122
        %v9440 = vunpack.c.l.b16 %v9123
        %v9441 = vunpack.c.h.b16 %v9123
        %v9442 = vunpack.c.l.b16 %v9124
        %v9443 = vunpack.c.h.b16 %v9124
        %v9444 = vunpack.c.l.b16 %v9125
        %v9445 = vunpack.c.h.b16 %v9125
        %v9446 = vunpack.c.l.b16 %v9126
        %v9447 = vunpack.c.h.b16 %v9126
        %v9448 = vunpack.c.l.b16 %v9127
        %v9449 = vunpack.c.h.b16 %v9127
        %v9450 = vunpack.c.l.b16 %v9128
        %v9451 = vunpack.c.h.b16 %v9128
        %v9452 = vunpack.c.l.b16 %v9129
        %v9453 = vunpack.c.h.b16 %v9129
        %v9454 = vunpack.c.l.b16 %v9130
        %v9455 = vunpack.c.h.b16 %v9130
        %v9456 = vunpack.c.l.b16 %v9131
        %v9457 = vunpack.c.h.b16 %v9131
        %v9458 = vunpack.c.l.b16 %v9132
        %v9459 = vunpack.c.h.b16 %v9132
        %v9460 = vunpack.c.l.b16 %v9133
        %v9461 = vunpack.c.h.b16 %v9133
        %v9462 = vunpack.c.l.b16 %v9134
        %v9463 = vunpack.c.h.b16 %v9134
        %v9464 = vunpack.c.l.b16 %v9135
        %v9465 = vunpack.c.h.b16 %v9135
        %v9466 = vunpack.c.l.b16 %v9136
        %v9467 = vunpack.c.h.b16 %v9136
        %v9468 = vunpack.c.l.b16 %v9137
        %v9469 = vunpack.c.h.b16 %v9137
        %v9470 = vunpack.c.l.b16 %v9138
        %v9471 = vunpack.c.h.b16 %v9138
        %v9472 = vunpack.c.l.b16 %v9139
        %v9473 = vunpack.c.h.b16 %v9139
        %v9474 = vunpack.c.l.b16 %v9140
        %v9475 = vunpack.c.h.b16 %v9140
        %v9476 = vunpack.c.l.b16 %v9141
        %v9477 = vunpack.c.h.b16 %v9141
        %v9478 = vunpack.c.l.b16 %v9142
        %v9479 = vunpack.c.h.b16 %v9142
        %v9480 = vunpack.c.l.b16 %v9143
        %v9481 = vunpack.c.h.b16 %v9143
        %v9482 = vunpack.c.l.b16 %v9144
        %v9483 = vunpack.c.h.b16 %v9144
        %v9484 = vunpack.c.l.b16 %v9145
        %v9485 = vunpack.c.h.b16 %v9145
        %v9486 = vunpack.c.l.b16 %v9146
        %v9487 = vunpack.c.h.b16 %v9146
        %v9488 = vunpack.c.l.b16 %v9147
        %v9489 = vunpack.c.h.b16 %v9147
        %v9490 = vunpack.c.l.b16 %v9148
        %v9491 = vunpack.c.h.b16 %v9148
        %v9492 = vunpack.c.l.b16 %v9149
        %v9493 = vunpack.c.h.b16 %v9149
        %v9494 = vunpack.c.l.b16 %v9150
        %v9495 = vunpack.c.h.b16 %v9150
        %v9496 = vunpack.c.l.b16 %v9151
        %v9497 = vunpack.c.h.b16 %v9151
        %v9498 = vunpack.c.l.b16 %v9152
        %v9499 = vunpack.c.h.b16 %v9152
        %v9500 = vunpack.c.l.b16 %v9153
        %v9501 = vunpack.c.h.b16 %v9153
        %v9502 = vunpack.c.l.b16 %v9154
        %v9503 = vunpack.c.h.b16 %v9154
        %v9504 = vunpack.c.l.b16 %v9155
        %v9505 = vunpack.c.h.b16 %v9155
        %v9506 = vunpack.c.l.b16 %v9156
        %v9507 = vunpack.c.h.b16 %v9156
        %v9508 = vunpack.c.l.b16 %v9157
        %v9509 = vunpack.c.h.b16 %v9157
        %v9510 = vunpack.c.l.b16 %v9158
        %v9511 = vunpack.c.h.b16 %v9158
        %v9512 = vunpack.c.l.b16 %v9159
        %v9513 = vunpack.c.h.b16 %v9159
        %v9514 = vunpack.c.l.b16 %v9160
        %v9515 = vunpack.c.h.b16 %v9160
        %v9516 = vunpack.c.l.b16 %v9161
        %v9517 = vunpack.c.h.b16 %v9161
        %v9518 = vunpack.c.l.b16 %v9162
        %v9519 = vunpack.c.h.b16 %v9162
        %v9520 = vunpack.c.l.b16 %v9163
        %v9521 = vunpack.c.h.b16 %v9163
        %v9522 = vunpack.c.l.b16 %v9164
        %v9523 = vunpack.c.h.b16 %v9164
        %v9524 = vunpack.c.l.b16 %v9165
        %v9525 = vunpack.c.h.b16 %v9165
        %v9526 = vunpack.c.l.b16 %v9166
        %v9527 = vunpack.c.h.b16 %v9166
        %v9528 = vunpack.c.l.b16 %v9167
        %v9529 = vunpack.c.h.b16 %v9167
        %v9530 = vunpack.c.l.b16 %v9168
        %v9531 = vunpack.c.h.b16 %v9168
        %v9532 = vunpack.c.l.b16 %v9169
        %v9533 = vunpack.c.h.b16 %v9169
        %v9534 = vunpack.c.l.b16 %v9170
        %v9535 = vunpack.c.h.b16 %v9170
        %v9536 = vunpack.c.l.b16 %v9171
        %v9537 = vunpack.c.h.b16 %v9171
        %v9538 = vunpack.c.l.b16 %v9172
        %v9539 = vunpack.c.h.b16 %v9172
        %v9540 = vunpack.c.l.b16 %v9173
        %v9541 = vunpack.c.h.b16 %v9173
        %v9542 = vunpack.c.l.b16 %v9174
        %v9543 = vunpack.c.h.b16 %v9174
        %v9544 = vunpack.c.l.b16 %v9175
        %v9545 = vunpack.c.h.b16 %v9175
        %v9546 = vunpack.c.l.b16 %v9176
        %v9547 = vunpack.c.h.b16 %v9176
        %v9548 = vunpack.c.l.b16 %v9177
        %v9549 = vunpack.c.h.b16 %v9177
        %v9550 = vunpack.c.l.b16 %v9178
        %v9551 = vunpack.c.h.b16 %v9178
        %v9552 = vunpack.c.l.b16 %v9179
        %v9553 = vunpack.c.h.b16 %v9179
        %v9554 = vunpack.c.l.b16 %v9180
        %v9555 = vunpack.c.h.b16 %v9180
        %v9556 = vunpack.c.l.b16 %v9181
        %v9557 = vunpack.c.h.b16 %v9181
        %v9558 = vunpack.c.l.b16 %v9182
        %v9559 = vunpack.c.h.b16 %v9182
        %v9560 = vunpack.c.l.b16 %v9183
        %v9561 = vunpack.c.h.b16 %v9183
        %v9562 = vunpack.c.l.b16 %v9184
        %v9563 = vunpack.c.h.b16 %v9184
        %v9564 = vunpack.c.l.b16 %v9185
        %v9565 = vunpack.c.h.b16 %v9185
        %v9566 = vunpack.c.l.b16 %v9186
        %v9567 = vunpack.c.h.b16 %v9186
        %v9568 = vunpack.c.l.b16 %v9187
        %v9569 = vunpack.c.h.b16 %v9187
        %v9570 = vunpack.c.l.b16 %v9188
        %v9571 = vunpack.c.h.b16 %v9188
        %v9572 = vunpack.c.l.b16 %v9189
        %v9573 = vunpack.c.h.b16 %v9189
        %v9574 = vunpack.c.l.b16 %v9190
        %v9575 = vunpack.c.h.b16 %v9190
        %v9576 = vunpack.c.l.b16 %v9191
        %v9577 = vunpack.c.h.b16 %v9191
        %v9578 = vunpack.c.l.b16 %v9192
        %v9579 = vunpack.c.h.b16 %v9192
        %v9580 = vunpack.c.l.b16 %v9193
        %v9581 = vunpack.c.h.b16 %v9193
        %v9582 = vunpack.c.l.b16 %v9194
        %v9583 = vunpack.c.h.b16 %v9194
        %v9584 = vunpack.c.l.b16 %v9195
        %v9585 = vunpack.c.h.b16 %v9195
        %v9586 = vunpack.c.l.b16 %v9196
        %v9587 = vunpack.c.h.b16 %v9196
        %v9588 = vunpack.c.l.b16 %v9197
        %v9589 = vunpack.c.h.b16 %v9197
        %v9590 = vunpack.c.l.b16 %v9198
        %v9591 = vunpack.c.h.b16 %v9198
        %v9592 = vunpack.c.l.b16 %v9199
        %v9593 = vunpack.c.h.b16 %v9199
        %v9594 = vunpack.c.l.b16 %v9200
        %v9595 = vunpack.c.h.b16 %v9200
        %v9596 = vunpack.c.l.b16 %v9201
        %v9597 = vunpack.c.h.b16 %v9201
        %v9598 = vunpack.c.l.b16 %v9202
        %v9599 = vunpack.c.h.b16 %v9202
        %v9600 = vunpack.c.l.b16 %v9203
        %v9601 = vunpack.c.h.b16 %v9203
        %v9602 = vunpack.c.l.b16 %v9204
        %v9603 = vunpack.c.h.b16 %v9204
        %v9604 = vunpack.c.l.b16 %v9205
        %v9605 = vunpack.c.h.b16 %v9205
        %v9606 = vunpack.c.l.b16 %v9206
        %v9607 = vunpack.c.h.b16 %v9206
        %v9608 = vunpack.c.l.b16 %v9207
        %v9609 = vunpack.c.h.b16 %v9207
        %v9610 = vunpack.c.l.b16 %v9208
        %v9611 = vunpack.c.h.b16 %v9208
        %v9612 = vunpack.c.l.b16 %v9209
        %v9613 = vunpack.c.h.b16 %v9209
        %v9614 = vunpack.c.l.b16 %v9210
        %v9615 = vunpack.c.h.b16 %v9210
        %v9616 = vunpack.c.l.b16 %v9211
        %v9617 = vunpack.c.h.b16 %v9211
        %v9618 = vunpack.c.l.b16 %v9212
        %v9619 = vunpack.c.h.b16 %v9212
        %v9620 = vunpack.c.l.b16 %v9213
        %v9621 = vunpack.c.h.b16 %v9213
        %v9622 = vunpack.c.l.b16 %v9214
        %v9623 = vunpack.c.h.b16 %v9214
        %v9624 = vunpack.c.l.b16 %v9215
        %v9625 = vunpack.c.h.b16 %v9215
        %v9626 = vunpack.c.l.b16 %v9216
        %v9627 = vunpack.c.h.b16 %v9216
        %v9628 = vunpack.c.l.b16 %v9217
        %v9629 = vunpack.c.h.b16 %v9217
        %v9630 = vunpack.c.l.b16 %v9218
        %v9631 = vunpack.c.h.b16 %v9218
        %v9632 = vunpack.c.l.b16 %v9219
        %v9633 = vunpack.c.h.b16 %v9219
        %v9634 = vunpack.c.l.b16 %v9220
        %v9635 = vunpack.c.h.b16 %v9220
        %v9636 = vunpack.c.l.b16 %v9221
        %v9637 = vunpack.c.h.b16 %v9221
        %v9638 = vunpack.c.l.b16 %v9222
        %v9639 = vunpack.c.h.b16 %v9222
        %v9640 = vunpack.c.l.b16 %v9223
        %v9641 = vunpack.c.h.b16 %v9223
        %v9642 = vunpack.c.l.b16 %v9224
        %v9643 = vunpack.c.h.b16 %v9224
        %v9644 = vunpack.c.l.b16 %v9225
        %v9645 = vunpack.c.h.b16 %v9225
        %v9646 = vunpack.c.l.b16 %v9226
        %v9647 = vunpack.c.h.b16 %v9226
        %v9648 = vunpack.c.l.b16 %v9227
        %v9649 = vunpack.c.h.b16 %v9227
        %v9650 = vpack.c.b16 %v9402, %v9394
        %v9651 = vpack.c.b16 %v9403, %v9395
        %v9652 = vpack.c.b16 %v9404, %v9396
        %v9653 = vpack.c.b16 %v9405, %v9397
        %v9654 = vpack.c.b16 %v9406, %v9398
        %v9655 = vpack.c.b16 %v9407, %v9399
        %v9656 = vpack.c.b16 %v9408, %v9400
        %v9657 = vpack.c.b16 %v9409, %v9401
        %v9658 = vpack.c.b16 %v9418, %v9410
        %v9659 = vpack.c.b16 %v9419, %v9411
        %v9660 = vpack.c.b16 %v9420, %v9412
        %v9661 = vpack.c.b16 %v9421, %v9413
        %v9662 = vpack.c.b16 %v9422, %v9414
        %v9663 = vpack.c.b16 %v9423, %v9415
        %v9664 = vpack.c.b16 %v9424, %v9416
        %v9665 = vpack.c.b16 %v9425, %v9417
        %v9666 = vpack.c.b16 %v9434, %v9426
        %v9667 = vpack.c.b16 %v9435, %v9427
        %v9668 = vpack.c.b16 %v9436, %v9428
        %v9669 = vpack.c.b16 %v9437, %v9429
        %v9670 = vpack.c.b16 %v9438, %v9430
        %v9671 = vpack.c.b16 %v9439, %v9431
        %v9672 = vpack.c.b16 %v9440, %v9432
        %v9673 = vpack.c.b16 %v9441, %v9433
        %v9674 = vpack.c.b16 %v9450, %v9442
        %v9675 = vpack.c.b16 %v9451, %v9443
        %v9676 = vpack.c.b16 %v9452, %v9444
        %v9677 = vpack.c.b16 %v9453, %v9445
        %v9678 = vpack.c.b16 %v9454, %v9446
        %v9679 = vpack.c.b16 %v9455, %v9447
        %v9680 = vpack.c.b16 %v9456, %v9448
        %v9681 = vpack.c.b16 %v9457, %v9449
        %v9682 = vpack.c.b16 %v9466, %v9458
        %v9683 = vpack.c.b16 %v9467, %v9459
        %v9684 = vpack.c.b16 %v9468, %v9460
        %v9685 = vpack.c.b16 %v9469, %v9461
        %v9686 = vpack.c.b16 %v9470, %v9462
        %v9687 = vpack.c.b16 %v9471, %v9463
        %v9688 = vpack.c.b16 %v9472, %v9464
        %v9689 = vpack.c.b16 %v9473, %v9465
        %v9690 = vpack.c.b16 %v9482, %v9474
        %v9691 = vpack.c.b16 %v9483, %v9475
        %v9692 = vpack.c.b16 %v9484, %v9476
        %v9693 = vpack.c.b16 %v9485, %v9477
        %v9694 = vpack.c.b16 %v9486, %v9478
        %v9695 = vpack.c.b16 %v9487, %v9479
        %v9696 = vpack.c.b16 %v9488, %v9480
        %v9697 = vpack.c.b16 %v9489, %v9481
        %v9698 = vpack.c.b16 %v9498, %v9490
        %v9699 = vpack.c.b16 %v9499, %v9491
        %v9700 = vpack.c.b16 %v9500, %v9492
        %v9701 = vpack.c.b16 %v9501, %v9493
        %v9702 = vpack.c.b16 %v9502, %v9494
        %v9703 = vpack.c.b16 %v9503, %v9495
        %v9704 = vpack.c.b16 %v9504, %v9496
        %v9705 = vpack.c.b16 %v9505, %v9497
        %v9706 = vpack.c.b16 %v9514, %v9506
        %v9707 = vpack.c.b16 %v9515, %v9507
        %v9708 = vpack.c.b16 %v9516, %v9508
        %v9709 = vpack.c.b16 %v9517, %v9509
        %v9710 = vpack.c.b16 %v9518, %v9510
        %v9711 = vpack.c.b16 %v9519, %v9511
        %v9712 = vpack.c.b16 %v9520, %v9512
        %v9713 = vpack.c.b16 %v9521, %v9513
        %v9714 = vpack.c.b16 %v9530, %v9522
        %v9715 = vpack.c.b16 %v9531, %v9523
        %v9716 = vpack.c.b16 %v9532, %v9524
        %v9717 = vpack.c.b16 %v9533, %v9525
        %v9718 = vpack.c.b16 %v9534, %v9526
        %v9719 = vpack.c.b16 %v9535, %v9527
        %v9720 = vpack.c.b16 %v9536, %v9528
        %v9721 = vpack.c.b16 %v9537, %v9529
        %v9722 = vpack.c.b16 %v9546, %v9538
        %v9723 = vpack.c.b16 %v9547, %v9539
        %v9724 = vpack.c.b16 %v9548, %v9540
        %v9725 = vpack.c.b16 %v9549, %v9541
        %v9726 = vpack.c.b16 %v9550, %v9542
        %v9727 = vpack.c.b16 %v9551, %v9543
        %v9728 = vpack.c.b16 %v9552, %v9544
        %v9729 = vpack.c.b16 %v9553, %v9545
        %v9730 = vpack.c.b16 %v9562, %v9554
        %v9731 = vpack.c.b16 %v9563, %v9555
        %v9732 = vpack.c.b16 %v9564, %v9556
        %v9733 = vpack.c.b16 %v9565, %v9557
        %v9734 = vpack.c.b16 %v9566, %v9558
        %v9735 = vpack.c.b16 %v9567, %v9559
        %v9736 = vpack.c.b16 %v9568, %v9560
        %v9737 = vpack.c.b16 %v9569, %v9561
        %v9738 = vpack.c.b16 %v9578, %v9570
        %v9739 = vpack.c.b16 %v9579, %v9571
        %v9740 = vpack.c.b16 %v9580, %v9572
        %v9741 = vpack.c.b16 %v9581, %v9573
        %v9742 = vpack.c.b16 %v9582, %v9574
        %v9743 = vpack.c.b16 %v9583, %v9575
        %v9744 = vpack.c.b16 %v9584, %v9576
        %v9745 = vpack.c.b16 %v9585, %v9577
        %v9746 = vpack.c.b16 %v9594, %v9586
        %v9747 = vpack.c.b16 %v9595, %v9587
        %v9748 = vpack.c.b16 %v9596, %v9588
        %v9749 = vpack.c.b16 %v9597, %v9589
        %v9750 = vpack.c.b16 %v9598, %v9590
        %v9751 = vpack.c.b16 %v9599, %v9591
        %v9752 = vpack.c.b16 %v9600, %v9592
        %v9753 = vpack.c.b16 %v9601, %v9593
        %v9754 = vpack.c.b16 %v9610, %v9602
        %v9755 = vpack.c.b16 %v9611, %v9603
        %v9756 = vpack.c.b16 %v9612, %v9604
        %v9757 = vpack.c.b16 %v9613, %v9605
        %v9758 = vpack.c.b16 %v9614, %v9606
        %v9759 = vpack.c.b16 %v9615, %v9607
        %v9760 = vpack.c.b16 %v9616, %v9608
        %v9761 = vpack.c.b16 %v9617, %v9609
        %v9762 = vpack.c.b16 %v9626, %v9618
        %v9763 = vpack.c.b16 %v9627, %v9619
        %v9764 = vpack.c.b16 %v9628, %v9620
        %v9765 = vpack.c.b16 %v9629, %v9621
        %v9766 = vpack.c.b16 %v9630, %v9622
        %v9767 = vpack.c.b16 %v9631, %v9623
        %v9768 = vpack.c.b16 %v9632, %v9624
        %v9769 = vpack.c.b16 %v9633, %v9625
        %v9770 = vpack.c.b16 %v9642, %v9634
        %v9771 = vpack.c.b16 %v9643, %v9635
        %v9772 = vpack.c.b16 %v9644, %v9636
        %v9773 = vpack.c.b16 %v9645, %v9637
        %v9774 = vpack.c.b16 %v9646, %v9638
        %v9775 = vpack.c.b16 %v9647, %v9639
        %v9776 = vpack.c.b16 %v9648, %v9640
        %v9777 = vpack.c.b16 %v9649, %v9641
        %9906 = vmatprep.subr.bf16.mxu0 %v9651
        %9907 = vmatpush1.bf16.msra.mxu0 %v9650
        %9908 = vmatprep.subr.bf16.mxu0 %v9659
        %9909 = vmatpush1.bf16.msra.mxu0 %v9658
        %9910 = vmatprep.subr.bf16.mxu0 %v9667
        %9911 = vmatpush1.bf16.msra.mxu0 %v9666
        %9912 = vmatprep.subr.bf16.mxu0 %v9675
        %9913 = vmatpush1.bf16.msra.mxu0 %v9674
        %9914 = vmatprep.subr.bf16.mxu0 %v9683
        %9915 = vmatpush1.bf16.msra.mxu0 %v9682
        %9916 = vmatprep.subr.bf16.mxu0 %v9691
        %9917 = vmatpush1.bf16.msra.mxu0 %v9690
        %9918 = vmatprep.subr.bf16.mxu0 %v9699
        %9919 = vmatpush1.bf16.msra.mxu0 %v9698
        %9920 = vmatprep.subr.bf16.mxu0 %v9707
        %9921 = vmatpush1.bf16.msra.mxu0 %v9706
        %9922 = vmatprep.subr.bf16.mxu0 %v9715
        %9923 = vmatpush1.bf16.msra.mxu0 %v9714
        %9924 = vmatprep.subr.bf16.mxu0 %v9723
        %9925 = vmatpush1.bf16.msra.mxu0 %v9722
        %9926 = vmatprep.subr.bf16.mxu0 %v9731
        %9927 = vmatpush1.bf16.msra.mxu0 %v9730
        %9928 = vmatprep.subr.bf16.mxu0 %v9739
        %9929 = vmatpush1.bf16.msra.mxu0 %v9738
        %9930 = vmatprep.subr.bf16.mxu0 %v9747
        %9931 = vmatpush1.bf16.msra.mxu0 %v9746
        %9932 = vmatprep.subr.bf16.mxu0 %v9755
        %9933 = vmatpush1.bf16.msra.mxu0 %v9754
        %9934 = vmatprep.subr.bf16.mxu0 %v9763
        %9935 = vmatpush1.bf16.msra.mxu0 %v9762
        %9936 = vmatprep.subr.bf16.mxu0 %v9771
        %9937 = vmatpush1.bf16.msra.mxu0 %v9770
        %9938 = vmatprep.mubr.bf16.mxu0 %v9265
        %9939 = vmatmul.mubr.bf16.gmra.mrb[0].mxu0 %v9264
        %v9940 = vpop.f32.mrb[0].mxu0
        %v9941 = vadd.f32 0.0, %v9940
        %v9942 = vpop.f32.mrb[0].mxu0
        %v9943 = vadd.f32 0.0, %v9942
        %v9944 = vpop.f32.mrb[0].mxu0
        %v9945 = vpop.f32.mrb[0].mxu0
        %9946 = vdwg.mxu0
        %9947 = vmatprep.subr.bf16.mxu0 %v9653
        %9948 = vmatpush1.bf16.msra.mxu0 %v9652
        %9949 = vmatprep.subr.bf16.mxu0 %v9661
        %9950 = vmatpush1.bf16.msra.mxu0 %v9660
        %9951 = vmatprep.subr.bf16.mxu0 %v9669
        %9952 = vmatpush1.bf16.msra.mxu0 %v9668
        %9953 = vmatprep.subr.bf16.mxu0 %v9677
        %9954 = vmatpush1.bf16.msra.mxu0 %v9676
        %9955 = vmatprep.subr.bf16.mxu0 %v9685
        %9956 = vmatpush1.bf16.msra.mxu0 %v9684
        %9957 = vmatprep.subr.bf16.mxu0 %v9693
        %9958 = vmatpush1.bf16.msra.mxu0 %v9692
        %9959 = vmatprep.subr.bf16.mxu0 %v9701
        %9960 = vmatpush1.bf16.msra.mxu0 %v9700
        %9961 = vmatprep.subr.bf16.mxu0 %v9709
        %9962 = vmatpush1.bf16.msra.mxu0 %v9708
        %9963 = vmatprep.subr.bf16.mxu0 %v9717
        %9964 = vmatpush1.bf16.msra.mxu0 %v9716
        %9965 = vmatprep.subr.bf16.mxu0 %v9725
        %9966 = vmatpush1.bf16.msra.mxu0 %v9724
        %9967 = vmatprep.subr.bf16.mxu0 %v9733
        %9968 = vmatpush1.bf16.msra.mxu0 %v9732
        %9969 = vmatprep.subr.bf16.mxu0 %v9741
        %9970 = vmatpush1.bf16.msra.mxu0 %v9740
        %9971 = vmatprep.subr.bf16.mxu0 %v9749
        %9972 = vmatpush1.bf16.msra.mxu0 %v9748
        %9973 = vmatprep.subr.bf16.mxu0 %v9757
        %9974 = vmatpush1.bf16.msra.mxu0 %v9756
        %9975 = vmatprep.subr.bf16.mxu0 %v9765
        %9976 = vmatpush1.bf16.msra.mxu0 %v9764
        %9977 = vmatprep.subr.bf16.mxu0 %v9773
        %9978 = vmatpush1.bf16.msra.mxu0 %v9772
        %9979 = vmatprep.mubr.bf16.mxu0 %v9265
        %9980 = vmatmul.mubr.bf16.gmra.mrb[0].mxu0 %v9264
        %v9981 = vpop.f32.mrb[0].mxu0
        %v9982 = vadd.f32 0.0, %v9981
        %v9983 = vpop.f32.mrb[0].mxu0
        %v9984 = vadd.f32 0.0, %v9983
        %v9985 = vpop.f32.mrb[0].mxu0
        %v9986 = vpop.f32.mrb[0].mxu0
        %9987 = vdwg.mxu0
        %9988 = vmatprep.subr.bf16.mxu0 %v9655
        %9989 = vmatpush1.bf16.msra.mxu0 %v9654
        %9990 = vmatprep.subr.bf16.mxu0 %v9663
        %9991 = vmatpush1.bf16.msra.mxu0 %v9662
        %9992 = vmatprep.subr.bf16.mxu0 %v9671
        %9993 = vmatpush1.bf16.msra.mxu0 %v9670
        %9994 = vmatprep.subr.bf16.mxu0 %v9679
        %9995 = vmatpush1.bf16.msra.mxu0 %v9678
        %9996 = vmatprep.subr.bf16.mxu0 %v9687
        %9997 = vmatpush1.bf16.msra.mxu0 %v9686
        %9998 = vmatprep.subr.bf16.mxu0 %v9695
        %9999 = vmatpush1.bf16.msra.mxu0 %v9694
        %10000 = vmatprep.subr.bf16.mxu0 %v9703
        %10001 = vmatpush1.bf16.msra.mxu0 %v9702
        %10002 = vmatprep.subr.bf16.mxu0 %v9711
        %10003 = vmatpush1.bf16.msra.mxu0 %v9710
        %10004 = vmatprep.subr.bf16.mxu0 %v9719
        %10005 = vmatpush1.bf16.msra.mxu0 %v9718
        %10006 = vmatprep.subr.bf16.mxu0 %v9727
        %10007 = vmatpush1.bf16.msra.mxu0 %v9726
        %10008 = vmatprep.subr.bf16.mxu0 %v9735
        %10009 = vmatpush1.bf16.msra.mxu0 %v9734
        %10010 = vmatprep.subr.bf16.mxu0 %v9743
        %10011 = vmatpush1.bf16.msra.mxu0 %v9742
        %10012 = vmatprep.subr.bf16.mxu0 %v9751
        %10013 = vmatpush1.bf16.msra.mxu0 %v9750
        %10014 = vmatprep.subr.bf16.mxu0 %v9759
        %10015 = vmatpush1.bf16.msra.mxu0 %v9758
        %10016 = vmatprep.subr.bf16.mxu0 %v9767
        %10017 = vmatpush1.bf16.msra.mxu0 %v9766
        %10018 = vmatprep.subr.bf16.mxu0 %v9775
        %10019 = vmatpush1.bf16.msra.mxu0 %v9774
        %10020 = vmatprep.mubr.bf16.mxu0 %v9265
        %10021 = vmatmul.mubr.bf16.gmra.mrb[0].mxu0 %v9264
        %v10022 = vpop.f32.mrb[0].mxu0
        %v10023 = vadd.f32 0.0, %v10022
        %v10024 = vpop.f32.mrb[0].mxu0
        %v10025 = vadd.f32 0.0, %v10024
        %v10026 = vpop.f32.mrb[0].mxu0
        %v10027 = vpop.f32.mrb[0].mxu0
        %10028 = vdwg.mxu0
        %10029 = vmatprep.subr.bf16.mxu0 %v9657
        %10030 = vmatpush1.bf16.msra.mxu0 %v9656
        %10031 = vmatprep.subr.bf16.mxu0 %v9665
        %10032 = vmatpush1.bf16.msra.mxu0 %v9664
        %10033 = vmatprep.subr.bf16.mxu0 %v9673
        %10034 = vmatpush1.bf16.msra.mxu0 %v9672
        %10035 = vmatprep.subr.bf16.mxu0 %v9681
        %10036 = vmatpush1.bf16.msra.mxu0 %v9680
        %10037 = vmatprep.subr.bf16.mxu0 %v9689
        %10038 = vmatpush1.bf16.msra.mxu0 %v9688
        %10039 = vmatprep.subr.bf16.mxu0 %v9697
        %10040 = vmatpush1.bf16.msra.mxu0 %v9696
        %10041 = vmatprep.subr.bf16.mxu0 %v9705
        %10042 = vmatpush1.bf16.msra.mxu0 %v9704
        %10043 = vmatprep.subr.bf16.mxu0 %v9713
        %10044 = vmatpush1.bf16.msra.mxu0 %v9712
        %10045 = vmatprep.subr.bf16.mxu0 %v9721
        %10046 = vmatpush1.bf16.msra.mxu0 %v9720
        %10047 = vmatprep.subr.bf16.mxu0 %v9729
        %10048 = vmatpush1.bf16.msra.mxu0 %v9728
        %10049 = vmatprep.subr.bf16.mxu0 %v9737
        %10050 = vmatpush1.bf16.msra.mxu0 %v9736
        %10051 = vmatprep.subr.bf16.mxu0 %v9745
        %10052 = vmatpush1.bf16.msra.mxu0 %v9744
        %10053 = vmatprep.subr.bf16.mxu0 %v9753
        %10054 = vmatpush1.bf16.msra.mxu0 %v9752
        %10055 = vmatprep.subr.bf16.mxu0 %v9761
        %10056 = vmatpush1.bf16.msra.mxu0 %v9760
        %10057 = vmatprep.subr.bf16.mxu0 %v9769
        %10058 = vmatpush1.bf16.msra.mxu0 %v9768
        %10059 = vmatprep.subr.bf16.mxu0 %v9777
        %10060 = vmatpush1.bf16.msra.mxu0 %v9776
        %10061 = vmatprep.mubr.bf16.mxu0 %v9265
        %10062 = vmatmul.mubr.bf16.gmra.mrb[0].mxu0 %v9264
        %v10063 = vpop.f32.mrb[0].mxu0
        %v10064 = vadd.f32 0.0, %v10063
        %v10065 = vpop.f32.mrb[0].mxu0
        %v10066 = vadd.f32 0.0, %v10065
        %v10067 = vpop.f32.mrb[0].mxu0
        %v10068 = vpop.f32.mrb[0].mxu0
        %10069 = vdwg.mxu0
        %v10070 = vadd.f32 %v8807, %v9941
        %v10071 = vadd.f32 %v8809, %v9943
        %v10072 = vadd.f32 %v8848, %v9982
        %v10073 = vadd.f32 %v8850, %v9984
        %v10074 = vadd.f32 %v8889, %v10023
        %v10075 = vadd.f32 %v8891, %v10025
        %v10076 = vadd.f32 %v8930, %v10064
        %v10077 = vadd.f32 %v8932, %v10066
        %v10078 = vmul.f32 %v10070, 0.5
        %v10079 = vmul.f32 %v10071, 0.5
        %v10080 = vtanh.pop %v10078
        %v10081 = vtanh.pop %v10079
        %v10082 = vmul.f32 %v10080, 0.5
        %v10083 = vmul.f32 %v10081, 0.5
        %v10084 = vadd.f32 %v10082, 0.5
        %v10085 = vadd.f32 %v10083, 0.5
        %v10086 = vmul.f32 %v10072, 0.5
        %v10087 = vmul.f32 %v10073, 0.5
        %v10088 = vtanh.pop %v10086
        %v10089 = vtanh.pop %v10087
        %v10090 = vmul.f32 %v10088, 0.5
        %v10091 = vmul.f32 %v10089, 0.5
        %v10092 = vadd.f32 %v10090, 0.5
        %v10093 = vadd.f32 %v10091, 0.5
        %v10094 = vtanh.pop %v10074
        %v10095 = vtanh.pop %v10075
        %v10096 = vmul.f32 %v10076, 0.5
        %v10097 = vmul.f32 %v10077, 0.5
        %v10098 = vtanh.pop %v10096
        %v10099 = vtanh.pop %v10097
        %v10100 = vmul.f32 %v10098, 0.5
        %v10101 = vmul.f32 %v10099, 0.5
        %v10102 = vadd.f32 %v10100, 0.5
        %v10103 = vadd.f32 %v10101, 0.5
        %v10104 = vmul.f32 %v10092, %v9258
        %v10105 = vmul.f32 %v10093, %v9259
        %v10106 = vmul.f32 %v10084, %v10094
        %v10107 = vmul.f32 %v10085, %v10095
        %v10108 = vadd.f32 %v10104, %v10106
        %v10109 = vadd.f32 %v10105, %v10107
        %v10110 = vtanh.pop %v10108
        %v10111 = vtanh.pop %v10109
        %v10112 = vmul.f32 %v10102, %v10110
        %v10113 = vmul.f32 %v10103, %v10111
        %v10114 = vpack.c.bf16 %v10112, %v10112
        %v10115 = vpack.c.bf16 %v10113, %v10113
        %10116 = vmatprep.subr.bf16.mxu0 %v9651
        %10117 = vmatpush1.bf16.msra.mxu0 %v9650
        %10118 = vmatprep.subr.bf16.mxu0 %v9659
        %10119 = vmatpush1.bf16.msra.mxu0 %v9658
        %10120 = vmatprep.subr.bf16.mxu0 %v9667
        %10121 = vmatpush1.bf16.msra.mxu0 %v9666
        %10122 = vmatprep.subr.bf16.mxu0 %v9675
        %10123 = vmatpush1.bf16.msra.mxu0 %v9674
        %10124 = vmatprep.subr.bf16.mxu0 %v9683
        %10125 = vmatpush1.bf16.msra.mxu0 %v9682
        %10126 = vmatprep.subr.bf16.mxu0 %v9691
        %10127 = vmatpush1.bf16.msra.mxu0 %v9690
        %10128 = vmatprep.subr.bf16.mxu0 %v9699
        %10129 = vmatpush1.bf16.msra.mxu0 %v9698
        %10130 = vmatprep.subr.bf16.mxu0 %v9707
        %10131 = vmatpush1.bf16.msra.mxu0 %v9706
        %10132 = vmatprep.subr.bf16.mxu0 %v9715
        %10133 = vmatpush1.bf16.msra.mxu0 %v9714
        %10134 = vmatprep.subr.bf16.mxu0 %v9723
        %10135 = vmatpush1.bf16.msra.mxu0 %v9722
        %10136 = vmatprep.subr.bf16.mxu0 %v9731
        %10137 = vmatpush1.bf16.msra.mxu0 %v9730
        %10138 = vmatprep.subr.bf16.mxu0 %v9739
        %10139 = vmatpush1.bf16.msra.mxu0 %v9738
        %10140 = vmatprep.subr.bf16.mxu0 %v9747
        %10141 = vmatpush1.bf16.msra.mxu0 %v9746
        %10142 = vmatprep.subr.bf16.mxu0 %v9755
        %10143 = vmatpush1.bf16.msra.mxu0 %v9754
        %10144 = vmatprep.subr.bf16.mxu0 %v9763
        %10145 = vmatpush1.bf16.msra.mxu0 %v9762
        %10146 = vmatprep.subr.bf16.mxu0 %v9771
        %10147 = vmatpush1.bf16.msra.mxu0 %v9770
        %10148 = vmatprep.mubr.bf16.mxu0 %v10115
        %10149 = vmatmul.mubr.bf16.gmra.mrb[0].mxu0 %v10114
        %v10150 = vpop.f32.mrb[0].mxu0
        %v10151 = vadd.f32 0.0, %v10150
        %v10152 = vpop.f32.mrb[0].mxu0
        %v10153 = vadd.f32 0.0, %v10152
        %v10154 = vpop.f32.mrb[0].mxu0
        %v10155 = vpop.f32.mrb[0].mxu0
        %10156 = vdwg.mxu0
        %10157 = vmatprep.subr.bf16.mxu0 %v9653
        %10158 = vmatpush1.bf16.msra.mxu0 %v9652
        %10159 = vmatprep.subr.bf16.mxu0 %v9661
        %10160 = vmatpush1.bf16.msra.mxu0 %v9660
        %10161 = vmatprep.subr.bf16.mxu0 %v9669
        %10162 = vmatpush1.bf16.msra.mxu0 %v9668
        %10163 = vmatprep.subr.bf16.mxu0 %v9677
        %10164 = vmatpush1.bf16.msra.mxu0 %v9676
        %10165 = vmatprep.subr.bf16.mxu0 %v9685
        %10166 = vmatpush1.bf16.msra.mxu0 %v9684
        %10167 = vmatprep.subr.bf16.mxu0 %v9693
        %10168 = vmatpush1.bf16.msra.mxu0 %v9692
        %10169 = vmatprep.subr.bf16.mxu0 %v9701
        %10170 = vmatpush1.bf16.msra.mxu0 %v9700
        %10171 = vmatprep.subr.bf16.mxu0 %v9709
        %10172 = vmatpush1.bf16.msra.mxu0 %v9708
        %10173 = vmatprep.subr.bf16.mxu0 %v9717
        %10174 = vmatpush1.bf16.msra.mxu0 %v9716
        %10175 = vmatprep.subr.bf16.mxu0 %v9725
        %10176 = vmatpush1.bf16.msra.mxu0 %v9724
        %10177 = vmatprep.subr.bf16.mxu0 %v9733
        %10178 = vmatpush1.bf16.msra.mxu0 %v9732
        %10179 = vmatprep.subr.bf16.mxu0 %v9741
        %10180 = vmatpush1.bf16.msra.mxu0 %v9740
        %10181 = vmatprep.subr.bf16.mxu0 %v9749
        %10182 = vmatpush1.bf16.msra.mxu0 %v9748
        %10183 = vmatprep.subr.bf16.mxu0 %v9757
        %10184 = vmatpush1.bf16.msra.mxu0 %v9756
        %10185 = vmatprep.subr.bf16.mxu0 %v9765
        %10186 = vmatpush1.bf16.msra.mxu0 %v9764
        %10187 = vmatprep.subr.bf16.mxu0 %v9773
        %10188 = vmatpush1.bf16.msra.mxu0 %v9772
        %10189 = vmatprep.mubr.bf16.mxu0 %v10115
        %10190 = vmatmul.mubr.bf16.gmra.mrb[0].mxu0 %v10114
        %v10191 = vpop.f32.mrb[0].mxu0
        %v10192 = vadd.f32 0.0, %v10191
        %v10193 = vpop.f32.mrb[0].mxu0
        %v10194 = vadd.f32 0.0, %v10193
        %v10195 = vpop.f32.mrb[0].mxu0
        %v10196 = vpop.f32.mrb[0].mxu0
        %10197 = vdwg.mxu0
        %10198 = vmatprep.subr.bf16.mxu0 %v9655
        %10199 = vmatpush1.bf16.msra.mxu0 %v9654
        %10200 = vmatprep.subr.bf16.mxu0 %v9663
        %10201 = vmatpush1.bf16.msra.mxu0 %v9662
        %10202 = vmatprep.subr.bf16.mxu0 %v9671
        %10203 = vmatpush1.bf16.msra.mxu0 %v9670
        %10204 = vmatprep.subr.bf16.mxu0 %v9679
        %10205 = vmatpush1.bf16.msra.mxu0 %v9678
        %10206 = vmatprep.subr.bf16.mxu0 %v9687
        %10207 = vmatpush1.bf16.msra.mxu0 %v9686
        %10208 = vmatprep.subr.bf16.mxu0 %v9695
        %10209 = vmatpush1.bf16.msra.mxu0 %v9694
        %10210 = vmatprep.subr.bf16.mxu0 %v9703
        %10211 = vmatpush1.bf16.msra.mxu0 %v9702
        %10212 = vmatprep.subr.bf16.mxu0 %v9711
        %10213 = vmatpush1.bf16.msra.mxu0 %v9710
        %10214 = vmatprep.subr.bf16.mxu0 %v9719
        %10215 = vmatpush1.bf16.msra.mxu0 %v9718
        %10216 = vmatprep.subr.bf16.mxu0 %v9727
        %10217 = vmatpush1.bf16.msra.mxu0 %v9726
        %10218 = vmatprep.subr.bf16.mxu0 %v9735
        %10219 = vmatpush1.bf16.msra.mxu0 %v9734
        %10220 = vmatprep.subr.bf16.mxu0 %v9743
        %10221 = vmatpush1.bf16.msra.mxu0 %v9742
        %10222 = vmatprep.subr.bf16.mxu0 %v9751
        %10223 = vmatpush1.bf16.msra.mxu0 %v9750
        %10224 = vmatprep.subr.bf16.mxu0 %v9759
        %10225 = vmatpush1.bf16.msra.mxu0 %v9758
        %10226 = vmatprep.subr.bf16.mxu0 %v9767
        %10227 = vmatpush1.bf16.msra.mxu0 %v9766
        %10228 = vmatprep.subr.bf16.mxu0 %v9775
        %10229 = vmatpush1.bf16.msra.mxu0 %v9774
        %10230 = vmatprep.mubr.bf16.mxu0 %v10115
        %10231 = vmatmul.mubr.bf16.gmra.mrb[0].mxu0 %v10114
        %v10232 = vpop.f32.mrb[0].mxu0
        %v10233 = vadd.f32 0.0, %v10232
        %v10234 = vpop.f32.mrb[0].mxu0
        %v10235 = vadd.f32 0.0, %v10234
        %v10236 = vpop.f32.mrb[0].mxu0
        %v10237 = vpop.f32.mrb[0].mxu0
        %10238 = vdwg.mxu0
        %10239 = vmatprep.subr.bf16.mxu0 %v9657
        %10240 = vmatpush1.bf16.msra.mxu0 %v9656
        %10241 = vmatprep.subr.bf16.mxu0 %v9665
        %10242 = vmatpush1.bf16.msra.mxu0 %v9664
        %10243 = vmatprep.subr.bf16.mxu0 %v9673
        %10244 = vmatpush1.bf16.msra.mxu0 %v9672
        %10245 = vmatprep.subr.bf16.mxu0 %v9681
        %10246 = vmatpush1.bf16.msra.mxu0 %v9680
        %10247 = vmatprep.subr.bf16.mxu0 %v9689
        %10248 = vmatpush1.bf16.msra.mxu0 %v9688
        %10249 = vmatprep.subr.bf16.mxu0 %v9697
        %10250 = vmatpush1.bf16.msra.mxu0 %v9696
        %10251 = vmatprep.subr.bf16.mxu0 %v9705
        %10252 = vmatpush1.bf16.msra.mxu0 %v9704
        %10253 = vmatprep.subr.bf16.mxu0 %v9713
        %10254 = vmatpush1.bf16.msra.mxu0 %v9712
        %10255 = vmatprep.subr.bf16.mxu0 %v9721
        %10256 = vmatpush1.bf16.msra.mxu0 %v9720
        %10257 = vmatprep.subr.bf16.mxu0 %v9729
        %10258 = vmatpush1.bf16.msra.mxu0 %v9728
        %10259 = vmatprep.subr.bf16.mxu0 %v9737
        %10260 = vmatpush1.bf16.msra.mxu0 %v9736
        %10261 = vmatprep.subr.bf16.mxu0 %v9745
        %10262 = vmatpush1.bf16.msra.mxu0 %v9744
        %10263 = vmatprep.subr.bf16.mxu0 %v9753
        %10264 = vmatpush1.bf16.msra.mxu0 %v9752
        %10265 = vmatprep.subr.bf16.mxu0 %v9761
        %10266 = vmatpush1.bf16.msra.mxu0 %v9760
        %10267 = vmatprep.subr.bf16.mxu0 %v9769
        %10268 = vmatpush1.bf16.msra.mxu0 %v9768
        %10269 = vmatprep.subr.bf16.mxu0 %v9777
        %10270 = vmatpush1.bf16.msra.mxu0 %v9776
        %10271 = vmatprep.mubr.bf16.mxu0 %v10115
        %10272 = vmatmul.mubr.bf16.gmra.mrb[0].mxu0 %v10114
        %v10273 = vpop.f32.mrb[0].mxu0
        %v10274 = vadd.f32 0.0, %v10273
        %v10275 = vpop.f32.mrb[0].mxu0
        %v10276 = vadd.f32 0.0, %v10275
        %v10277 = vpop.f32.mrb[0].mxu0
        %v10278 = vpop.f32.mrb[0].mxu0
        %10279 = vdwg.mxu0
        %v10280 = vadd.f32 %v8971, %v10151
        %v10281 = vadd.f32 %v8973, %v10153
        %v10282 = vadd.f32 %v9012, %v10192
        %v10283 = vadd.f32 %v9014, %v10194
        %v10284 = vadd.f32 %v9053, %v10233
        %v10285 = vadd.f32 %v9055, %v10235
        %v10286 = vadd.f32 %v9094, %v10274
        %v10287 = vadd.f32 %v9096, %v10276
        %v10288 = vmul.f32 %v10280, 0.5
        %v10289 = vmul.f32 %v10281, 0.5
        %v10290 = vtanh.pop %v10288
        %v10291 = vtanh.pop %v10289
        %v10292 = vmul.f32 %v10290, 0.5
        %v10293 = vmul.f32 %v10291, 0.5
        %v10294 = vadd.f32 %v10292, 0.5
        %v10295 = vadd.f32 %v10293, 0.5
        %v10296 = vmul.f32 %v10282, 0.5
        %v10297 = vmul.f32 %v10283, 0.5
        %v10298 = vtanh.pop %v10296
        %v10299 = vtanh.pop %v10297
        %v10300 = vmul.f32 %v10298, 0.5
        %v10301 = vmul.f32 %v10299, 0.5
        %v10302 = vadd.f32 %v10300, 0.5
        %v10303 = vadd.f32 %v10301, 0.5
        %v10304 = vtanh.pop %v10284
        %v10305 = vtanh.pop %v10285
        %v10306 = vmul.f32 %v10286, 0.5
        %v10307 = vmul.f32 %v10287, 0.5
        %v10308 = vtanh.pop %v10306
        %v10309 = vtanh.pop %v10307
        %v10310 = vmul.f32 %v10308, 0.5
        %v10311 = vmul.f32 %v10309, 0.5
        %v10312 = vadd.f32 %v10310, 0.5
        %v10313 = vadd.f32 %v10311, 0.5
        %v10314 = vmul.f32 %v10302, %v10108
        %v10315 = vmul.f32 %v10303, %v10109
        %v10316 = vmul.f32 %v10294, %v10304
        %v10317 = vmul.f32 %v10295, %v10305
        %v10318 = vadd.f32 %v10314, %v10316
        %v10319 = vadd.f32 %v10315, %v10317
        %v10320 = vtanh.pop %v10318
        %v10321 = vtanh.pop %v10319
        %v10322 = vmul.f32 %v10312, %v10320
        %v10323 = vmul.f32 %v10313, %v10321
        %v10324 = vpack.c.bf16 %v10322, %v10322
        %v10325 = vpack.c.bf16 %v10323, %v10323
        %v10326 = vld [vmem:[#allocation19] sm:$0xf]
        %v10327 = vld [vmem:[#allocation19 + $0x4] sm:$0xf]
        %v10328 = vld [vmem:[#allocation19 + $0x8] sm:$0xf]
        %v10329 = vld [vmem:[#allocation19 + $0xc] sm:$0xf]
        %v10330 = vld [vmem:[#allocation19 + $0x10] sm:$0xf]
        %v10331 = vld [vmem:[#allocation19 + $0x14] sm:$0xf]
        %v10332 = vld [vmem:[#allocation19 + $0x18] sm:$0xf]
        %v10333 = vld [vmem:[#allocation19 + $0x1c] sm:$0xf]
        %v10334 = vld [vmem:[#allocation19 + $0x20] sm:$0xf]
        %v10335 = vld [vmem:[#allocation19 + $0x24] sm:$0xf]
        %v10336 = vld [vmem:[#allocation19 + $0x28] sm:$0xf]
        %v10337 = vld [vmem:[#allocation19 + $0x2c] sm:$0xf]
        %v10338 = vld [vmem:[#allocation19 + $0x30] sm:$0xf]
        %v10339 = vld [vmem:[#allocation19 + $0x34] sm:$0xf]
        %v10340 = vld [vmem:[#allocation19 + $0x38] sm:$0xf]
        %v10341 = vld [vmem:[#allocation19 + $0x3c] sm:$0xf]
        %v10342 = vld [vmem:[#allocation19 + $0x40] sm:$0xf]
        %v10343 = vld [vmem:[#allocation19 + $0x44] sm:$0xf]
        %v10344 = vld [vmem:[#allocation19 + $0x48] sm:$0xf]
        %v10345 = vld [vmem:[#allocation19 + $0x4c] sm:$0xf]
        %v10346 = vld [vmem:[#allocation19 + $0x50] sm:$0xf]
        %v10347 = vld [vmem:[#allocation19 + $0x54] sm:$0xf]
        %v10348 = vld [vmem:[#allocation19 + $0x58] sm:$0xf]
        %v10349 = vld [vmem:[#allocation19 + $0x5c] sm:$0xf]
        %v10350 = vld [vmem:[#allocation19 + $0x60] sm:$0xf]
        %v10351 = vld [vmem:[#allocation19 + $0x64] sm:$0xf]
        %v10352 = vld [vmem:[#allocation19 + $0x68] sm:$0xf]
        %v10353 = vld [vmem:[#allocation19 + $0x6c] sm:$0xf]
        %v10354 = vld [vmem:[#allocation19 + $0x70] sm:$0xf]
        %v10355 = vld [vmem:[#allocation19 + $0x74] sm:$0xf]
        %v10356 = vld [vmem:[#allocation19 + $0x78] sm:$0xf]
        %v10357 = vld [vmem:[#allocation19 + $0x7c] sm:$0xf]
        %v10358 = vld [vmem:[#allocation20] sm:$0x1]
        %v10360 = vlaneseq
        %v10361 = vshrl.u32 %v10360, 7
        %v10362 = vsub.s32 0, %v10361
        %v10363 = vrot.slane %v10358, %v10362
        %v10397 = vunpack.c.l.b16 %v10326
        %v10398 = vunpack.c.l.b16 %v10327
        %v10399 = vunpack.c.l.b16 %v10328
        %v10400 = vunpack.c.l.b16 %v10329
        %v10401 = vunpack.c.l.b16 %v10330
        %v10402 = vunpack.c.l.b16 %v10331
        %v10403 = vunpack.c.l.b16 %v10332
        %v10404 = vunpack.c.l.b16 %v10333
        %v10405 = vunpack.c.l.b16 %v10334
        %v10406 = vunpack.c.l.b16 %v10335
        %v10407 = vunpack.c.l.b16 %v10336
        %v10408 = vunpack.c.l.b16 %v10337
        %v10409 = vunpack.c.l.b16 %v10338
        %v10410 = vunpack.c.l.b16 %v10339
        %v10411 = vunpack.c.l.b16 %v10340
        %v10412 = vunpack.c.l.b16 %v10341
        %v10413 = vunpack.c.l.b16 %v10342
        %v10414 = vunpack.c.l.b16 %v10343
        %v10415 = vunpack.c.l.b16 %v10344
        %v10416 = vunpack.c.l.b16 %v10345
        %v10417 = vunpack.c.l.b16 %v10346
        %v10418 = vunpack.c.l.b16 %v10347
        %v10419 = vunpack.c.l.b16 %v10348
        %v10420 = vunpack.c.l.b16 %v10349
        %v10421 = vunpack.c.l.b16 %v10350
        %v10422 = vunpack.c.l.b16 %v10351
        %v10423 = vunpack.c.l.b16 %v10352
        %v10424 = vunpack.c.l.b16 %v10353
        %v10425 = vunpack.c.l.b16 %v10354
        %v10426 = vunpack.c.l.b16 %v10355
        %v10427 = vunpack.c.l.b16 %v10356
        %v10428 = vunpack.c.l.b16 %v10357
        %v10429 = vpack.c.b16 %v10398, %v10397
        %v10430 = vpack.c.b16 %v10400, %v10399
        %v10431 = vpack.c.b16 %v10402, %v10401
        %v10432 = vpack.c.b16 %v10404, %v10403
        %v10433 = vpack.c.b16 %v10406, %v10405
        %v10434 = vpack.c.b16 %v10408, %v10407
        %v10435 = vpack.c.b16 %v10410, %v10409
        %v10436 = vpack.c.b16 %v10412, %v10411
        %v10437 = vpack.c.b16 %v10414, %v10413
        %v10438 = vpack.c.b16 %v10416, %v10415
        %v10439 = vpack.c.b16 %v10418, %v10417
        %v10440 = vpack.c.b16 %v10420, %v10419
        %v10441 = vpack.c.b16 %v10422, %v10421
        %v10442 = vpack.c.b16 %v10424, %v10423
        %v10443 = vpack.c.b16 %v10426, %v10425
        %v10444 = vpack.c.b16 %v10428, %v10427
        %10461 = vmatprep.subr.bf16.mxu0 0
        %10462 = vmatpush1.bf16.msra.mxu0 %v10429
        %10463 = vmatprep.subr.bf16.mxu0 0
        %10464 = vmatpush1.bf16.msra.mxu0 %v10430
        %10465 = vmatprep.subr.bf16.mxu0 0
        %10466 = vmatpush1.bf16.msra.mxu0 %v10431
        %10467 = vmatprep.subr.bf16.mxu0 0
        %10468 = vmatpush1.bf16.msra.mxu0 %v10432
        %10469 = vmatprep.subr.bf16.mxu0 0
        %10470 = vmatpush1.bf16.msra.mxu0 %v10433
        %10471 = vmatprep.subr.bf16.mxu0 0
        %10472 = vmatpush1.bf16.msra.mxu0 %v10434
        %10473 = vmatprep.subr.bf16.mxu0 0
        %10474 = vmatpush1.bf16.msra.mxu0 %v10435
        %10475 = vmatprep.subr.bf16.mxu0 0
        %10476 = vmatpush1.bf16.msra.mxu0 %v10436
        %10477 = vmatprep.subr.bf16.mxu0 0
        %10478 = vmatpush1.bf16.msra.mxu0 %v10437
        %10479 = vmatprep.subr.bf16.mxu0 0
        %10480 = vmatpush1.bf16.msra.mxu0 %v10438
        %10481 = vmatprep.subr.bf16.mxu0 0
        %10482 = vmatpush1.bf16.msra.mxu0 %v10439
        %10483 = vmatprep.subr.bf16.mxu0 0
        %10484 = vmatpush1.bf16.msra.mxu0 %v10440
        %10485 = vmatprep.subr.bf16.mxu0 0
        %10486 = vmatpush1.bf16.msra.mxu0 %v10441
        %10487 = vmatprep.subr.bf16.mxu0 0
        %10488 = vmatpush1.bf16.msra.mxu0 %v10442
        %10489 = vmatprep.subr.bf16.mxu0 0
        %10490 = vmatpush1.bf16.msra.mxu0 %v10443
        %10491 = vmatprep.subr.bf16.mxu0 0
        %10492 = vmatpush1.bf16.msra.mxu0 %v10444
        %10493 = vmatprep.mubr.bf16.mxu0 %v10325
        %10494 = vmatmul.mubr.bf16.gmra.mrb[0].mxu0 %v10324
        %v10495 = vpop.f32.mrb[0].mxu0
        %v10496 = vadd.f32 %v10363, %v10495
        %v10497 = vpop.f32.mrb[0].mxu0
        %v10498 = vpop.f32.mrb[0].mxu0
        %v10499 = vpop.f32.mrb[0].mxu0
        %10500 = vdwg.mxu0
        %v10501 = vmax.f32 %v10496, 0.0
        %v10502 = vpack.c.bf16 %v10501, %v10501
        %v10503 = vld [vmem:[#allocation22] sm:$0xf]
        %v10504 = vld [vmem:[#allocation22 + $0x4] sm:$0xf]
        %v10505 = vld [vmem:[#allocation22 + $0x8] sm:$0xf]
        %v10506 = vld [vmem:[#allocation22 + $0xc] sm:$0xf]
        %v10507 = vld [vmem:[#allocation22 + $0x10] sm:$0xf]
        %v10508 = vld [vmem:[#allocation22 + $0x14] sm:$0xf]
        %v10509 = vld [vmem:[#allocation22 + $0x18] sm:$0xf]
        %v10510 = vld [vmem:[#allocation22 + $0x1c] sm:$0xf]
        %v10511 = vld [vmem:[#allocation22 + $0x20] sm:$0xf]
        %v10512 = vld [vmem:[#allocation22 + $0x24] sm:$0xf]
        %v10513 = vld [vmem:[#allocation22 + $0x28] sm:$0xf]
        %v10514 = vld [vmem:[#allocation22 + $0x2c] sm:$0xf]
        %v10515 = vld [vmem:[#allocation22 + $0x30] sm:$0xf]
        %v10516 = vld [vmem:[#allocation22 + $0x34] sm:$0xf]
        %v10517 = vld [vmem:[#allocation22 + $0x38] sm:$0xf]
        %v10518 = vld [vmem:[#allocation22 + $0x3c] sm:$0xf]
        %v10519 = vld [vmem:[#allocation23] sm:$0x1]
        %v10521 = vlaneseq
        %v10522 = vshrl.u32 %v10521, 7
        %v10523 = vsub.s32 0, %v10522
        %v10524 = vrot.slane %v10519, %v10523
        %v10542 = vunpack.c.l.b16 %v10503
        %v10543 = vunpack.c.l.b16 %v10504
        %v10544 = vunpack.c.l.b16 %v10505
        %v10545 = vunpack.c.l.b16 %v10506
        %v10546 = vunpack.c.l.b16 %v10507
        %v10547 = vunpack.c.l.b16 %v10508
        %v10548 = vunpack.c.l.b16 %v10509
        %v10549 = vunpack.c.l.b16 %v10510
        %v10550 = vunpack.c.l.b16 %v10511
        %v10551 = vunpack.c.l.b16 %v10512
        %v10552 = vunpack.c.l.b16 %v10513
        %v10553 = vunpack.c.l.b16 %v10514
        %v10554 = vunpack.c.l.b16 %v10515
        %v10555 = vunpack.c.l.b16 %v10516
        %v10556 = vunpack.c.l.b16 %v10517
        %v10557 = vunpack.c.l.b16 %v10518
        %v10558 = vpack.c.b16 %v10543, %v10542
        %v10559 = vpack.c.b16 %v10545, %v10544
        %v10560 = vpack.c.b16 %v10547, %v10546
        %v10561 = vpack.c.b16 %v10549, %v10548
        %v10562 = vpack.c.b16 %v10551, %v10550
        %v10563 = vpack.c.b16 %v10553, %v10552
        %v10564 = vpack.c.b16 %v10555, %v10554
        %v10565 = vpack.c.b16 %v10557, %v10556
        %10574 = vmatprep.subr.bf16.mxu0 0
        %10575 = vmatpush1.bf16.msra.mxu0 %v10558
        %10576 = vmatprep.subr.bf16.mxu0 0
        %10577 = vmatpush1.bf16.msra.mxu0 %v10559
        %10578 = vmatprep.subr.bf16.mxu0 0
        %10579 = vmatpush1.bf16.msra.mxu0 %v10560
        %10580 = vmatprep.subr.bf16.mxu0 0
        %10581 = vmatpush1.bf16.msra.mxu0 %v10561
        %10582 = vmatprep.subr.bf16.mxu0 0
        %10583 = vmatpush1.bf16.msra.mxu0 %v10562
        %10584 = vmatprep.subr.bf16.mxu0 0
        %10585 = vmatpush1.bf16.msra.mxu0 %v10563
        %10586 = vmatprep.subr.bf16.mxu0 0
        %10587 = vmatpush1.bf16.msra.mxu0 %v10564
        %10588 = vmatprep.subr.bf16.mxu0 0
        %10589 = vmatpush1.bf16.msra.mxu0 %v10565
        %10590 = vmatprep.subr.bf16.mxu0 0
        %10591 = vmatpush1.bf16.msra.mxu0 0
        %10592 = vmatprep.subr.bf16.mxu0 0
        %10593 = vmatpush1.bf16.msra.mxu0 0
        %10594 = vmatprep.subr.bf16.mxu0 0
        %10595 = vmatpush1.bf16.msra.mxu0 0
        %10596 = vmatprep.subr.bf16.mxu0 0
        %10597 = vmatpush1.bf16.msra.mxu0 0
        %10598 = vmatprep.subr.bf16.mxu0 0
        %10599 = vmatpush1.bf16.msra.mxu0 0
        %10600 = vmatprep.subr.bf16.mxu0 0
        %10601 = vmatpush1.bf16.msra.mxu0 0
        %10602 = vmatprep.subr.bf16.mxu0 0
        %10603 = vmatpush1.bf16.msra.mxu0 0
        %10604 = vmatprep.subr.bf16.mxu0 0
        %10605 = vmatpush1.bf16.msra.mxu0 0
        %10606 = vmatprep.mubr.bf16.mxu0 0
        %10607 = vmatmul.mubr.bf16.gmra.mrb[0].mxu0 %v10502
        %v10608 = vpop.f32.mrb[0].mxu0
        %v10609 = vadd.f32 %v10524, %v10608
        %v10610 = vpop.f32.mrb[0].mxu0
        %v10611 = vpop.f32.mrb[0].mxu0
        %v10612 = vpop.f32.mrb[0].mxu0
        %10613 = vdwg.mxu0
        %v10614 = vmax.f32 %v10609, 0.0
        %v10615 = vpack.c.bf16 %v10614, %v10614
        %v10616 = vld [vmem:[#allocation25] sm:$0xf]
        %v10617 = vld [vmem:[#allocation25 + $0x4] sm:$0xf]
        %v10618 = vld [vmem:[#allocation25 + $0x8] sm:$0xf]
        %v10619 = vld [vmem:[#allocation25 + $0xc] sm:$0xf]
        %v10620 = vld [vmem:[#allocation25 + $0x10] sm:$0xf]
        %v10621 = vld [vmem:[#allocation25 + $0x14] sm:$0xf]
        %v10622 = vld [vmem:[#allocation25 + $0x18] sm:$0xf]
        %v10623 = vld [vmem:[#allocation25 + $0x1c] sm:$0xf]
        %v10624 = vld [vmem:[#allocation25 + $0x20] sm:$0xf]
        %v10625 = vld [vmem:[#allocation25 + $0x24] sm:$0xf]
        %v10626 = vld [vmem:[#allocation25 + $0x28] sm:$0xf]
        %v10627 = vld [vmem:[#allocation25 + $0x2c] sm:$0xf]
        %v10628 = vld [vmem:[#allocation25 + $0x30] sm:$0xf]
        %v10629 = vld [vmem:[#allocation25 + $0x34] sm:$0xf]
        %v10630 = vld [vmem:[#allocation25 + $0x38] sm:$0xf]
        %v10631 = vld [vmem:[#allocation25 + $0x3c] sm:$0xf]
        %v10632 = vld [vmem:[#allocation26] sm:$0x1]
        %v10634 = vlaneseq
        %v10635 = vshrl.u32 %v10634, 7
        %v10636 = vsub.s32 0, %v10635
        %v10637 = vrot.slane %v10632, %v10636
        %v10655 = vunpack.c.l.b16 %v10616
        %v10656 = vunpack.c.l.b16 %v10617
        %v10657 = vunpack.c.l.b16 %v10618
        %v10658 = vunpack.c.l.b16 %v10619
        %v10659 = vunpack.c.l.b16 %v10620
        %v10660 = vunpack.c.l.b16 %v10621
        %v10661 = vunpack.c.l.b16 %v10622
        %v10662 = vunpack.c.l.b16 %v10623
        %v10663 = vunpack.c.l.b16 %v10624
        %v10664 = vunpack.c.l.b16 %v10625
        %v10665 = vunpack.c.l.b16 %v10626
        %v10666 = vunpack.c.l.b16 %v10627
        %v10667 = vunpack.c.l.b16 %v10628
        %v10668 = vunpack.c.l.b16 %v10629
        %v10669 = vunpack.c.l.b16 %v10630
        %v10670 = vunpack.c.l.b16 %v10631
        %v10671 = vpack.c.b16 %v10656, %v10655
        %v10672 = vpack.c.b16 %v10658, %v10657
        %v10673 = vpack.c.b16 %v10660, %v10659
        %v10674 = vpack.c.b16 %v10662, %v10661
        %v10675 = vpack.c.b16 %v10664, %v10663
        %v10676 = vpack.c.b16 %v10666, %v10665
        %v10677 = vpack.c.b16 %v10668, %v10667
        %v10678 = vpack.c.b16 %v10670, %v10669
        %10687 = vmatprep.subr.bf16.mxu0 0
        %10688 = vmatpush1.bf16.msra.mxu0 %v10671
        %10689 = vmatprep.subr.bf16.mxu0 0
        %10690 = vmatpush1.bf16.msra.mxu0 %v10672
        %10691 = vmatprep.subr.bf16.mxu0 0
        %10692 = vmatpush1.bf16.msra.mxu0 %v10673
        %10693 = vmatprep.subr.bf16.mxu0 0
        %10694 = vmatpush1.bf16.msra.mxu0 %v10674
        %10695 = vmatprep.subr.bf16.mxu0 0
        %10696 = vmatpush1.bf16.msra.mxu0 %v10675
        %10697 = vmatprep.subr.bf16.mxu0 0
        %10698 = vmatpush1.bf16.msra.mxu0 %v10676
        %10699 = vmatprep.subr.bf16.mxu0 0
        %10700 = vmatpush1.bf16.msra.mxu0 %v10677
        %10701 = vmatprep.subr.bf16.mxu0 0
        %10702 = vmatpush1.bf16.msra.mxu0 %v10678
        %10703 = vmatprep.subr.bf16.mxu0 0
        %10704 = vmatpush1.bf16.msra.mxu0 0
        %10705 = vmatprep.subr.bf16.mxu0 0
        %10706 = vmatpush1.bf16.msra.mxu0 0
        %10707 = vmatprep.subr.bf16.mxu0 0
        %10708 = vmatpush1.bf16.msra.mxu0 0
        %10709 = vmatprep.subr.bf16.mxu0 0
        %10710 = vmatpush1.bf16.msra.mxu0 0
        %10711 = vmatprep.subr.bf16.mxu0 0
        %10712 = vmatpush1.bf16.msra.mxu0 0
        %10713 = vmatprep.subr.bf16.mxu0 0
        %10714 = vmatpush1.bf16.msra.mxu0 0
        %10715 = vmatprep.subr.bf16.mxu0 0
        %10716 = vmatpush1.bf16.msra.mxu0 0
        %10717 = vmatprep.subr.bf16.mxu0 0
        %10718 = vmatpush1.bf16.msra.mxu0 0
        %10719 = vmatprep.mubr.bf16.mxu0 0
        %10720 = vmatmul.mubr.bf16.gmra.mrb[0].mxu0 %v10615
        %v10721 = vpop.f32.mrb[0].mxu0
        %v10722 = vadd.f32 %v10637, %v10721
        %v10723 = vpop.f32.mrb[0].mxu0
        %v10724 = vpop.f32.mrb[0].mxu0
        %v10725 = vpop.f32.mrb[0].mxu0
        %10726 = vdwg.mxu0
        %10727 = vst [vmem:[%s741] sm:$0xff] %v10722
        %s10728 = sand.u32 %s390, 1
        %s10729 = scalar_lea.sflag [#allocation4], %s10728
        %s10730 = sand.u32 %s390, 1
        %s10731 = smul.addr %s10730, 8
        %s10732 = scalar_lea.vmem [#allocation28], %s10731
        // Predicated region
        $region149: #{tpu_custom_call.1} parent=83 // pred_check
          %p10733 = pneg %p400
        $region150: #{tpu_custom_call.1} parent=83 // pred_check_branch
          %10735 = sbr.rel (%p10733) target = $region152
        $region151: #{tpu_custom_call.1} parent=83 // pred_region
          %s10737 = ssub.s32 128, 128
          %10738 = vsyncadd %s10729, %s10737
          %s10739 = smul.addr %s41, 128
          %s10740 = scalar_lea.hbm %s16, %s10739
          %s10742 = sshll.u32 %s10732, 4
          %s10743 = int_to_ptr.vmem [resolvable:$true] %s10742
          %10745 = dma.vmem_to_hbm [thread:$0]  %s10743, 128, %s10740, %s10729
        $region152: #{tpu_custom_call.1} parent=83 // pred_fallthru
          _
      $region84: #{tpu_custom_call.1} parent=5 // pred_fallthru
        _
      %p10746 = scmp.le.s32.totalorder 2, %s36
      // Predicated region
      $region153: #{tpu_custom_call.1} parent=5 // pred_check
        %p10747 = pneg %p10746
      $region154: #{tpu_custom_call.1} parent=5 // pred_check_branch
        %10749 = sbr.rel (%p10747) target = $region156
      $region155: #{tpu_custom_call.1} parent=5 // pred_region
        %s10750 = ssub.s32 %s36, 2
        // Predicated region
        $region157: #{tpu_custom_call.1} parent=155 // pred_check
          %p10751 = pneg %p406
        $region158: #{tpu_custom_call.1} parent=155 // pred_check_branch
          %10753 = sbr.rel (%p10751) target = $region160
        $region159: #{tpu_custom_call.1} parent=155 // pred_region
          %s10754 = sand.u32 %s391, 1
          %s10755 = scalar_lea.sflag [#allocation4], %s10754
          %s10756 = sand.u32 %s391, 1
          %s10757 = smul.addr %s10756, 8
          %s10758 = scalar_lea.vmem [#allocation28], %s10757
          %10759 = dma.done %s10755, 128
        $region160: #{tpu_custom_call.1} parent=155 // pred_fallthru
          _
      $region156: #{tpu_custom_call.1} parent=5 // pred_fallthru
        _
    $region6: #{tpu_custom_call.1} parent=1 // loop_footer
      %s40 = sadd.s32 1, %s36
    $region7: #{tpu_custom_call.1} parent=1 // loop_footer_branch
      %35 = sbr.rel target = $region3
    $region8: #{tpu_custom_call.1} parent=1 // loop_exit
      _
    %10760 = vsyncpa [#allocation3], 1
    %s10761 = scalar_lea.sflag [#allocation3], 1
    %10762 = vsyncpa %s10761, 1
    %10763 = vsyncpa [#allocation6], 1
    %10764 = vsyncpa [#allocation9], 1
    %10765 = vsyncpa [#allocation12], 1
    %10766 = vsyncpa [#allocation15], 1
    %10767 = vsyncpa [#allocation18], 1
    %10768 = vsyncpa [#allocation21], 1
    %10769 = vsyncpa [#allocation24], 1
    %10770 = vsyncpa [#allocation27], 1
    %10771 = vsyncpa [#allocation4], 1
    %s10772 = scalar_lea.sflag [#allocation4], 1
    %10773 = vsyncpa %s10772, 1

</llo_original>
